<compile_context>
chip_gen: v7x
topology: tpu7x:2x2x1
jax: 0.10.0
libtpu: 0.0.40
codegen_flags: <defaults>
</compile_context>

<pallas_src>
import numpy as np
import jax
import jax.numpy as jnp
from jax.experimental import pallas as pl
from jax.experimental.pallas import tpu as pltpu

_PAD = 3     # 7x7 conv, padding=3
_LEFT = 8    # interior column offset inside the padded scratch (sublane aligned)


def _block_kernel(x_ref, dww_ref, dwb_ref, w1_ref, b1_ref, gg_ref, w2_ref, b2_ref,
                  out_ref, xpad_ref):
    # out_ref block: (1, H, W, C); xpad_ref scratch: (H + 6, Wp, C)
    _, H, W, C = out_ref.shape
    Hp, Wp, _ = xpad_ref.shape

    # ---- padded-input scratch: zero only the halo / unused columns, store the interior
    #      at a sublane-aligned column offset (input read once from HBM). ----
    xpad_ref[:, :_LEFT, :] = jnp.zeros((Hp, _LEFT, C), jnp.float32)
    xpad_ref[:, _LEFT + W:, :] = jnp.zeros((Hp, Wp - _LEFT - W, C), jnp.float32)
    xpad_ref[:_PAD, _LEFT:_LEFT + W, :] = jnp.zeros((_PAD, W, C), jnp.float32)
    xpad_ref[_PAD + H:, _LEFT:_LEFT + W, :] = jnp.zeros((_PAD, W, C), jnp.float32)
    xpad_ref[_PAD:_PAD + H, _LEFT:_LEFT + W, :] = x_ref[0]
    xpad = xpad_ref[...]

    # ---- depthwise 7x7 conv (groups=dim), padding=3 ----
    # Width shifts via XLU rolls + aligned prefix slice; height shifts are leading-axis
    # slices.  Taps grouped per dx so the accumulator sees 7 adds, not 49.
    acc = None
    for dx in range(7):
        start = _LEFT - _PAD + dx                                   # 5 .. 11
        if start % 8 == 0:
            col = xpad[:, start:start + W, :]                       # aligned direct slice
        else:
            col = pltpu.roll(xpad, (Wp - start) % Wp, axis=1)[:, :W, :]
        part = col[0:H] * dww_ref[dx, :]                            # dy = 0 tap
        for dy in range(1, 7):
            part = part + col[dy:dy + H] * dww_ref[dy * 7 + dx, :]
        acc = part if acc is None else acc + part
    y = acc + dwb_ref[0]

    # ---- LayerNorm over channels, eps=1e-6 (single-pass stats, affine folded into w1/b1)
    mean = jnp.mean(y, axis=-1, keepdims=True)
    m2 = jnp.mean(y * y, axis=-1, keepdims=True)
    var = jnp.maximum(m2 - mean * mean, 0.0)                        # cancellation guard
    y = (y - mean) * jax.lax.rsqrt(var + 1e-6)

    # ---- pwconv1 (C -> 4C) on the MXU in bf16, f32 accumulation (LN affine baked in) --
    h = jnp.dot(y.reshape(H * W, C).astype(jnp.bfloat16), w1_ref[...],
                preferred_element_type=jnp.float32) + b1_ref[0]

    # ---- GELU (tanh approximation -> EUP slot; exact-erf reference diff < ~3e-3) ----
    h = jax.nn.gelu(h, approximate=True)

    # ---- GRN: per-channel L2 over spatial positions; h*(1+gamma*nx), beta in b2 ----
    gx = jnp.sqrt(jnp.sum(h * h, axis=0, keepdims=True))            # (1, 4C)
    nx = gx / (jnp.mean(gx, axis=-1, keepdims=True) + 1e-6)
    h = h * (1.0 + gg_ref[0] * nx)

    # ---- pwconv2 (4C -> C) on the MXU in bf16 + fused bias/residual epilogue ----
    z = jnp.dot(h.astype(jnp.bfloat16), w2_ref[...],
                preferred_element_type=jnp.float32) + b2_ref[0]
    out_ref[0] = x_ref[0] + z.reshape(H, W, C)                      # drop_path=0 -> Identity


def _vmem_limit_bytes(H, W, C, Wp):
    """Per-core VMEM need (blocks double-buffered + scratch + large temporaries)."""
    c4 = 4 * C
    f32, bf16 = 4, 2
    io_blocks = 2 * (2 * H * W * C * f32)                           # x + out, 2x buffered
    weights = 2 * ((49 + 2) * C * f32 + 2 * c4 * f32 + 2 * C * c4 * bf16)
    scratch = (H + 2 * _PAD) * Wp * C * f32
    temps = 3 * H * W * c4 * f32 + 4 * H * W * C * f32              # h / y / acc headroom
    need = io_blocks + weights + scratch + temps
    try:
        # ~85% of physical VMEM: don't clamp v5e/v6e's 128 MiB down to 64 MiB, and keep
        # DMA / compiler-scratch headroom on v7x's 64 MiB.
        cap = int(pltpu.get_tpu_info().vmem_capacity_bytes * 0.85)
    except Exception:
        cap = 100 * 2**20
    return int(min(max(32 * 2**20, 2 * need), cap))


def convnextv2_block(x_nchw, params):
    """Forward pass of ConvNeXtV2 Block. x_nchw: (B, C, H, W) float32, returns NCHW."""
    x = jnp.transpose(x_nchw, (0, 2, 3, 1)).astype(jnp.float32)     # NHWC
    B, H, W, C = x.shape
    C4 = 4 * C
    Wp = ((_LEFT + W + _PAD + 7) // 8) * 8                          # aligned scratch width

    dww = params["dww"].reshape(49, C).astype(jnp.float32)          # (dy,dx,C) -> (49, C)
    dwb = params["dwb"].reshape(1, C).astype(jnp.float32)

    # Fold LayerNorm affine into pwconv1 and GRN beta into pwconv2 (trace-time, free).
    lng = params["lng"].astype(jnp.float32)
    lnb = params["lnb"].astype(jnp.float32)
    w1f = params["w1"].astype(jnp.float32)                          # (C, 4C)
    b1f = params["b1"].astype(jnp.float32)
    w2f = params["w2"].astype(jnp.float32)                          # (4C, C)
    b2f = params["b2"].astype(jnp.float32)
    gbf = params["gb"].astype(jnp.float32)

    w1 = (w1f * lng[:, None]).astype(jnp.bfloat16)                  # bf16 MXU operand
    b1 = (b1f + lnb @ w1f).reshape(1, C4)
    gg = params["gg"].reshape(1, C4).astype(jnp.float32)
    w2 = w2f.astype(jnp.bfloat16)                                   # bf16 MXU operand
    b2 = (b2f + gbf @ w2f).reshape(1, C)

    full0 = lambda b: (0, 0)
    out = pl.pallas_call(
        _block_kernel,
        out_shape=jax.ShapeDtypeStruct((B, H, W, C), jnp.float32),
        grid_spec=pltpu.PrefetchScalarGridSpec(
            num_scalar_prefetch=0,
            grid=(B,),
            in_specs=[
                pl.BlockSpec((1, H, W, C), lambda b: (b, 0, 0, 0)),  # x (dwconv + residual)
                pl.BlockSpec((49, C), full0),
                pl.BlockSpec((1, C), full0),
                pl.BlockSpec((C, C4), full0),
                pl.BlockSpec((1, C4), full0),
                pl.BlockSpec((1, C4), full0),
                pl.BlockSpec((C4, C), full0),
                pl.BlockSpec((1, C), full0),
            ],
            out_specs=pl.BlockSpec((1, H, W, C), lambda b: (b, 0, 0, 0)),
            scratch_shapes=[pltpu.VMEM((H + 2 * _PAD, Wp, C), jnp.float32)],
        ),
        compiler_params=pltpu.CompilerParams(
            dimension_semantics=("parallel",),
            vmem_limit_bytes=_vmem_limit_bytes(H, W, C, Wp)),
    )(x, dww, dwb, w1, b1, gg, w2, b2)

    return jnp.transpose(out, (0, 3, 1, 2))                         # back to NCHW


def _reference_block(x_nchw, p):
    """Pure-JAX f32 reference of the PyTorch forward (exact GELU), for verification."""
    x = jnp.transpose(x_nchw, (0, 2, 3, 1))
    B, H, W, C = x.shape
    xpad = jnp.pad(x, ((0, 0), (3, 3), (3, 3), (0, 0)))
    y = jnp.zeros_like(x)
    for dy in range(7):
        for dx in range(7):
            y = y + xpad[:, dy:dy + H, dx:dx + W, :] * p["dww"][dy, dx]
    y = y + p["dwb"]
    mean = y.mean(-1, keepdims=True)
    var = ((y - mean) ** 2).mean(-1, keepdims=True)
    y = (y - mean) / jnp.sqrt(var + 1e-6) * p["lng"] + p["lnb"]
    h = y @ p["w1"] + p["b1"]
    h = jax.nn.gelu(h, approximate=False)
    gx = jnp.sqrt(jnp.sum(h * h, axis=(1, 2), keepdims=True))
    nx = gx / (jnp.mean(gx, axis=-1, keepdims=True) + 1e-6)
    h = p["gg"] * (h * nx) + p["gb"] + h
    z = h @ p["w2"] + p["b2"]
    return jnp.transpose(x + z, (0, 3, 1, 2))


def _make_params(key, dim):
    ks = jax.random.split(key, 8)
    c4 = 4 * dim
    return {
        # depthwise conv weight stored as (7, 7, C) (PyTorch: (C, 1, 7, 7))
        "dww": jax.random.normal(ks[0], (7, 7, dim), jnp.float32) * 0.1,
        "dwb": jax.random.normal(ks[1], (dim,), jnp.float32) * 0.1,
        "lng": jnp.ones((dim,), jnp.float32),
        "lnb": jnp.zeros((dim,), jnp.float32),
        "w1": jax.random.normal(ks[2], (dim, c4), jnp.float32) * 0.1,   # x @ W (Linear W.T)
        "b1": jax.random.normal(ks[3], (c4,), jnp.float32) * 0.1,
        "gg": jax.random.normal(ks[4], (c4,), jnp.float32) * 0.1,       # GRN gamma
        "gb": jax.random.normal(ks[5], (c4,), jnp.float32) * 0.1,       # GRN beta
        "w2": jax.random.normal(ks[6], (c4, dim), jnp.float32) * 0.1,
        "b2": jax.random.normal(ks[7], (dim,), jnp.float32) * 0.1,
    }


if __name__ == "__main__":
    key = jax.random.PRNGKey(0)
    kx, kp = jax.random.split(key)
    B, C, H, W = 2, 8, 16, 16
    x = jax.random.normal(kx, (B, C, H, W), jnp.float32)
    params = _make_params(kp, C)

    out = convnextv2_block(x, params)
    out = jax.block_until_ready(out)

    ref = _reference_block(x, params)
    assert out.shape == (B, C, H, W)
    # bf16 MXU matmuls + tanh-GELU in the kernel vs. exact f32 reference -> loose tolerance.
    np.testing.assert_allclose(np.asarray(out), np.asarray(ref), rtol=2e-2, atol=2e-2)

    print("KERNEL_OK")
</pallas_src>

<mosaic_0001>
module attributes {stable_mosaic.version = 11 : i64} {
  func.func @_block_kernel(%arg0: i32, %arg1: memref<1x16x16x8xf32, #tpu.memory_space<vmem>>, %arg2: memref<49x8xf32, #tpu.memory_space<vmem>>, %arg3: memref<1x8xf32, #tpu.memory_space<vmem>>, %arg4: memref<8x32xbf16, #tpu.memory_space<vmem>>, %arg5: memref<1x32xf32, #tpu.memory_space<vmem>>, %arg6: memref<1x32xf32, #tpu.memory_space<vmem>>, %arg7: memref<32x8xbf16, #tpu.memory_space<vmem>>, %arg8: memref<1x8xf32, #tpu.memory_space<vmem>>, %arg9: memref<1x16x16x8xf32, #tpu.memory_space<vmem>>, %arg10: memref<22x32x8xf32, #tpu.memory_space<vmem>>) attributes {dimension_semantics = [#tpu.dimension_semantics<parallel>], iteration_bounds = array<i64: 2>, scalar_prefetch = 0 : i64, scratch_operands = 1 : i64, tpu.core_type = #tpu.core_type<tc>, window_params = [{transform_indices = @transform_0, window_bounds = array<i64: 1, 16, 16, 8>}, {pipeline_mode = #tpu.pipeline_mode<synchronous>, transform_indices = @transform_1, window_bounds = array<i64: 49, 8>}, {pipeline_mode = #tpu.pipeline_mode<synchronous>, transform_indices = @transform_2, window_bounds = array<i64: 1, 8>}, {pipeline_mode = #tpu.pipeline_mode<synchronous>, transform_indices = @transform_3, window_bounds = array<i64: 8, 32>}, {pipeline_mode = #tpu.pipeline_mode<synchronous>, transform_indices = @transform_4, window_bounds = array<i64: 1, 32>}, {pipeline_mode = #tpu.pipeline_mode<synchronous>, transform_indices = @transform_5, window_bounds = array<i64: 1, 32>}, {pipeline_mode = #tpu.pipeline_mode<synchronous>, transform_indices = @transform_6, window_bounds = array<i64: 32, 8>}, {pipeline_mode = #tpu.pipeline_mode<synchronous>, transform_indices = @transform_7, window_bounds = array<i64: 1, 8>}, {transform_indices = @transform_8, window_bounds = array<i64: 1, 16, 16, 8>}]} {
    %cst = arith.constant 0.000000e+00 : f32
    %0 = vector.broadcast %cst : f32 to vector<22x8x8xf32>
    %c0 = arith.constant 0 : index
    %c0_0 = arith.constant 0 : index
    %c0_1 = arith.constant 0 : index
    %1 = vector.load %arg10[%c0, %c0_0, %c0_1] : memref<22x32x8xf32, #tpu.memory_space<vmem>>, vector<22x8x8xf32>
    tpu.vector_store %arg10[%c0, %c0_0, %c0_1], %0 {strides = array<i32>} : memref<22x32x8xf32, #tpu.memory_space<vmem>>, vector<22x8x8xf32>,
    %cst_2 = arith.constant 0.000000e+00 : f32
    %2 = vector.broadcast %cst_2 : f32 to vector<22x8x8xf32>
    %c0_3 = arith.constant 0 : index
    %c24 = arith.constant 24 : index
    %c0_4 = arith.constant 0 : index
    %3 = vector.load %arg10[%c0_3, %c24, %c0_4] : memref<22x32x8xf32, #tpu.memory_space<vmem>>, vector<22x8x8xf32>
    tpu.vector_store %arg10[%c0_3, %c24, %c0_4], %2 {strides = array<i32>} : memref<22x32x8xf32, #tpu.memory_space<vmem>>, vector<22x8x8xf32>,
    %cst_5 = arith.constant 0.000000e+00 : f32
    %4 = vector.broadcast %cst_5 : f32 to vector<3x16x8xf32>
    %c0_6 = arith.constant 0 : index
    %c8 = arith.constant 8 : index
    %c0_7 = arith.constant 0 : index
    %5 = vector.load %arg10[%c0_6, %c8, %c0_7] : memref<22x32x8xf32, #tpu.memory_space<vmem>>, vector<3x16x8xf32>
    tpu.vector_store %arg10[%c0_6, %c8, %c0_7], %4 {strides = array<i32>} : memref<22x32x8xf32, #tpu.memory_space<vmem>>, vector<3x16x8xf32>,
    %cst_8 = arith.constant 0.000000e+00 : f32
    %6 = vector.broadcast %cst_8 : f32 to vector<3x16x8xf32>
    %c19 = arith.constant 19 : index
    %c8_9 = arith.constant 8 : index
    %c0_10 = arith.constant 0 : index
    %7 = vector.load %arg10[%c19, %c8_9, %c0_10] : memref<22x32x8xf32, #tpu.memory_space<vmem>>, vector<3x16x8xf32>
    tpu.vector_store %arg10[%c19, %c8_9, %c0_10], %6 {strides = array<i32>} : memref<22x32x8xf32, #tpu.memory_space<vmem>>, vector<3x16x8xf32>,
    %c0_11 = arith.constant 0 : index
    %c0_12 = arith.constant 0 : index
    %c0_13 = arith.constant 0 : index
    %c0_14 = arith.constant 0 : index
    %8 = vector.load %arg1[%c0_11, %c0_12, %c0_13, %c0_14] : memref<1x16x16x8xf32, #tpu.memory_space<vmem>>, vector<1x16x16x8xf32>
    %9 = vector.shape_cast %8 : vector<1x16x16x8xf32> to vector<16x16x8xf32>
    %c3 = arith.constant 3 : index
    %c8_15 = arith.constant 8 : index
    %c0_16 = arith.constant 0 : index
    %10 = vector.load %arg10[%c3, %c8_15, %c0_16] : memref<22x32x8xf32, #tpu.memory_space<vmem>>, vector<16x16x8xf32>
    tpu.vector_store %arg10[%c3, %c8_15, %c0_16], %9 {strides = array<i32>} : memref<22x32x8xf32, #tpu.memory_space<vmem>>, vector<16x16x8xf32>,
    %c0_17 = arith.constant 0 : index
    %c0_18 = arith.constant 0 : index
    %c0_19 = arith.constant 0 : index
    %11 = vector.load %arg10[%c0_17, %c0_18, %c0_19] : memref<22x32x8xf32, #tpu.memory_space<vmem>>, vector<22x32x8xf32>
    %c27_i32 = arith.constant 27 : i32
    %12 = tpu.dynamic_rotate %11 by %c27_i32 dim 1 : vector<22x32x8xf32>, i32 -> vector<22x32x8xf32>
    %13 = vector.extract_strided_slice %12 {offsets = [0, 0, 0], sizes = [22, 16, 8], strides = [1, 1, 1]} : vector<22x32x8xf32> to vector<22x16x8xf32>
    %14 = vector.extract_strided_slice %13 {offsets = [0, 0, 0], sizes = [16, 16, 8], strides = [1, 1, 1]} : vector<22x16x8xf32> to vector<16x16x8xf32>
    %c0_20 = arith.constant 0 : index
    %c0_21 = arith.constant 0 : index
    %15 = vector.load %arg2[%c0_20, %c0_21] : memref<49x8xf32, #tpu.memory_space<vmem>>, vector<1x8xf32>
    %16 = vector.shape_cast %15 : vector<1x8xf32> to vector<8xf32>
    %17 = vector.shape_cast %16 : vector<8xf32> to vector<1x1x8xf32>
    %18 = vector.broadcast %17 : vector<1x1x8xf32> to vector<16x16x8xf32>
    %19 = arith.mulf %14, %18 : vector<16x16x8xf32>
    %20 = vector.extract_strided_slice %13 {offsets = [1, 0, 0], sizes = [16, 16, 8], strides = [1, 1, 1]} : vector<22x16x8xf32> to vector<16x16x8xf32>
    %c7 = arith.constant 7 : index
    %c0_22 = arith.constant 0 : index
    %21 = vector.load %arg2[%c7, %c0_22] : memref<49x8xf32, #tpu.memory_space<vmem>>, vector<1x8xf32>
    %22 = vector.shape_cast %21 : vector<1x8xf32> to vector<8xf32>
    %23 = vector.shape_cast %22 : vector<8xf32> to vector<1x1x8xf32>
    %24 = vector.broadcast %23 : vector<1x1x8xf32> to vector<16x16x8xf32>
    %25 = arith.mulf %20, %24 : vector<16x16x8xf32>
    %26 = arith.addf %19, %25 : vector<16x16x8xf32>
    %27 = vector.extract_strided_slice %13 {offsets = [2, 0, 0], sizes = [16, 16, 8], strides = [1, 1, 1]} : vector<22x16x8xf32> to vector<16x16x8xf32>
    %c14 = arith.constant 14 : index
    %c0_23 = arith.constant 0 : index
    %28 = vector.load %arg2[%c14, %c0_23] : memref<49x8xf32, #tpu.memory_space<vmem>>, vector<1x8xf32>
    %29 = vector.shape_cast %28 : vector<1x8xf32> to vector<8xf32>
    %30 = vector.shape_cast %29 : vector<8xf32> to vector<1x1x8xf32>
    %31 = vector.broadcast %30 : vector<1x1x8xf32> to vector<16x16x8xf32>
    %32 = arith.mulf %27, %31 : vector<16x16x8xf32>
    %33 = arith.addf %26, %32 : vector<16x16x8xf32>
    %34 = vector.extract_strided_slice %13 {offsets = [3, 0, 0], sizes = [16, 16, 8], strides = [1, 1, 1]} : vector<22x16x8xf32> to vector<16x16x8xf32>
    %c21 = arith.constant 21 : index
    %c0_24 = arith.constant 0 : index
    %35 = vector.load %arg2[%c21, %c0_24] : memref<49x8xf32, #tpu.memory_space<vmem>>, vector<1x8xf32>
    %36 = vector.shape_cast %35 : vector<1x8xf32> to vector<8xf32>
    %37 = vector.shape_cast %36 : vector<8xf32> to vector<1x1x8xf32>
    %38 = vector.broadcast %37 : vector<1x1x8xf32> to vector<16x16x8xf32>
    %39 = arith.mulf %34, %38 : vector<16x16x8xf32>
    %40 = arith.addf %33, %39 : vector<16x16x8xf32>
    %41 = vector.extract_strided_slice %13 {offsets = [4, 0, 0], sizes = [16, 16, 8], strides = [1, 1, 1]} : vector<22x16x8xf32> to vector<16x16x8xf32>
    %c28 = arith.constant 28 : index
    %c0_25 = arith.constant 0 : index
    %42 = vector.load %arg2[%c28, %c0_25] : memref<49x8xf32, #tpu.memory_space<vmem>>, vector<1x8xf32>
    %43 = vector.shape_cast %42 : vector<1x8xf32> to vector<8xf32>
    %44 = vector.shape_cast %43 : vector<8xf32> to vector<1x1x8xf32>
    %45 = vector.broadcast %44 : vector<1x1x8xf32> to vector<16x16x8xf32>
    %46 = arith.mulf %41, %45 : vector<16x16x8xf32>
    %47 = arith.addf %40, %46 : vector<16x16x8xf32>
    %48 = vector.extract_strided_slice %13 {offsets = [5, 0, 0], sizes = [16, 16, 8], strides = [1, 1, 1]} : vector<22x16x8xf32> to vector<16x16x8xf32>
    %c35 = arith.constant 35 : index
    %c0_26 = arith.constant 0 : index
    %49 = vector.load %arg2[%c35, %c0_26] : memref<49x8xf32, #tpu.memory_space<vmem>>, vector<1x8xf32>
    %50 = vector.shape_cast %49 : vector<1x8xf32> to vector<8xf32>
    %51 = vector.shape_cast %50 : vector<8xf32> to vector<1x1x8xf32>
    %52 = vector.broadcast %51 : vector<1x1x8xf32> to vector<16x16x8xf32>
    %53 = arith.mulf %48, %52 : vector<16x16x8xf32>
    %54 = arith.addf %47, %53 : vector<16x16x8xf32>
    %55 = vector.extract_strided_slice %13 {offsets = [6, 0, 0], sizes = [16, 16, 8], strides = [1, 1, 1]} : vector<22x16x8xf32> to vector<16x16x8xf32>
    %c42 = arith.constant 42 : index
    %c0_27 = arith.constant 0 : index
    %56 = vector.load %arg2[%c42, %c0_27] : memref<49x8xf32, #tpu.memory_space<vmem>>, vector<1x8xf32>
    %57 = vector.shape_cast %56 : vector<1x8xf32> to vector<8xf32>
    %58 = vector.shape_cast %57 : vector<8xf32> to vector<1x1x8xf32>
    %59 = vector.broadcast %58 : vector<1x1x8xf32> to vector<16x16x8xf32>
    %60 = arith.mulf %55, %59 : vector<16x16x8xf32>
    %61 = arith.addf %54, %60 : vector<16x16x8xf32>
    %c26_i32 = arith.constant 26 : i32
    %62 = tpu.dynamic_rotate %11 by %c26_i32 dim 1 : vector<22x32x8xf32>, i32 -> vector<22x32x8xf32>
    %63 = vector.extract_strided_slice %62 {offsets = [0, 0, 0], sizes = [22, 16, 8], strides = [1, 1, 1]} : vector<22x32x8xf32> to vector<22x16x8xf32>
    %64 = vector.extract_strided_slice %63 {offsets = [0, 0, 0], sizes = [16, 16, 8], strides = [1, 1, 1]} : vector<22x16x8xf32> to vector<16x16x8xf32>
    %c1 = arith.constant 1 : index
    %c0_28 = arith.constant 0 : index
    %65 = vector.load %arg2[%c1, %c0_28] : memref<49x8xf32, #tpu.memory_space<vmem>>, vector<1x8xf32>
    %66 = vector.shape_cast %65 : vector<1x8xf32> to vector<8xf32>
    %67 = vector.shape_cast %66 : vector<8xf32> to vector<1x1x8xf32>
    %68 = vector.broadcast %67 : vector<1x1x8xf32> to vector<16x16x8xf32>
    %69 = arith.mulf %64, %68 : vector<16x16x8xf32>
    %70 = vector.extract_strided_slice %63 {offsets = [1, 0, 0], sizes = [16, 16, 8], strides = [1, 1, 1]} : vector<22x16x8xf32> to vector<16x16x8xf32>
    %c8_29 = arith.constant 8 : index
    %c0_30 = arith.constant 0 : index
    %71 = vector.load %arg2[%c8_29, %c0_30] : memref<49x8xf32, #tpu.memory_space<vmem>>, vector<1x8xf32>
    %72 = vector.shape_cast %71 : vector<1x8xf32> to vector<8xf32>
    %73 = vector.shape_cast %72 : vector<8xf32> to vector<1x1x8xf32>
    %74 = vector.broadcast %73 : vector<1x1x8xf32> to vector<16x16x8xf32>
    %75 = arith.mulf %70, %74 : vector<16x16x8xf32>
    %76 = arith.addf %69, %75 : vector<16x16x8xf32>
    %77 = vector.extract_strided_slice %63 {offsets = [2, 0, 0], sizes = [16, 16, 8], strides = [1, 1, 1]} : vector<22x16x8xf32> to vector<16x16x8xf32>
    %c15 = arith.constant 15 : index
    %c0_31 = arith.constant 0 : index
    %78 = vector.load %arg2[%c15, %c0_31] : memref<49x8xf32, #tpu.memory_space<vmem>>, vector<1x8xf32>
    %79 = vector.shape_cast %78 : vector<1x8xf32> to vector<8xf32>
    %80 = vector.shape_cast %79 : vector<8xf32> to vector<1x1x8xf32>
    %81 = vector.broadcast %80 : vector<1x1x8xf32> to vector<16x16x8xf32>
    %82 = arith.mulf %77, %81 : vector<16x16x8xf32>
    %83 = arith.addf %76, %82 : vector<16x16x8xf32>
    %84 = vector.extract_strided_slice %63 {offsets = [3, 0, 0], sizes = [16, 16, 8], strides = [1, 1, 1]} : vector<22x16x8xf32> to vector<16x16x8xf32>
    %c22 = arith.constant 22 : index
    %c0_32 = arith.constant 0 : index
    %85 = vector.load %arg2[%c22, %c0_32] : memref<49x8xf32, #tpu.memory_space<vmem>>, vector<1x8xf32>
    %86 = vector.shape_cast %85 : vector<1x8xf32> to vector<8xf32>
    %87 = vector.shape_cast %86 : vector<8xf32> to vector<1x1x8xf32>
    %88 = vector.broadcast %87 : vector<1x1x8xf32> to vector<16x16x8xf32>
    %89 = arith.mulf %84, %88 : vector<16x16x8xf32>
    %90 = arith.addf %83, %89 : vector<16x16x8xf32>
    %91 = vector.extract_strided_slice %63 {offsets = [4, 0, 0], sizes = [16, 16, 8], strides = [1, 1, 1]} : vector<22x16x8xf32> to vector<16x16x8xf32>
    %c29 = arith.constant 29 : index
    %c0_33 = arith.constant 0 : index
    %92 = vector.load %arg2[%c29, %c0_33] : memref<49x8xf32, #tpu.memory_space<vmem>>, vector<1x8xf32>
    %93 = vector.shape_cast %92 : vector<1x8xf32> to vector<8xf32>
    %94 = vector.shape_cast %93 : vector<8xf32> to vector<1x1x8xf32>
    %95 = vector.broadcast %94 : vector<1x1x8xf32> to vector<16x16x8xf32>
    %96 = arith.mulf %91, %95 : vector<16x16x8xf32>
    %97 = arith.addf %90, %96 : vector<16x16x8xf32>
    %98 = vector.extract_strided_slice %63 {offsets = [5, 0, 0], sizes = [16, 16, 8], strides = [1, 1, 1]} : vector<22x16x8xf32> to vector<16x16x8xf32>
    %c36 = arith.constant 36 : index
    %c0_34 = arith.constant 0 : index
    %99 = vector.load %arg2[%c36, %c0_34] : memref<49x8xf32, #tpu.memory_space<vmem>>, vector<1x8xf32>
    %100 = vector.shape_cast %99 : vector<1x8xf32> to vector<8xf32>
    %101 = vector.shape_cast %100 : vector<8xf32> to vector<1x1x8xf32>
    %102 = vector.broadcast %101 : vector<1x1x8xf32> to vector<16x16x8xf32>
    %103 = arith.mulf %98, %102 : vector<16x16x8xf32>
    %104 = arith.addf %97, %103 : vector<16x16x8xf32>
    %105 = vector.extract_strided_slice %63 {offsets = [6, 0, 0], sizes = [16, 16, 8], strides = [1, 1, 1]} : vector<22x16x8xf32> to vector<16x16x8xf32>
    %c43 = arith.constant 43 : index
    %c0_35 = arith.constant 0 : index
    %106 = vector.load %arg2[%c43, %c0_35] : memref<49x8xf32, #tpu.memory_space<vmem>>, vector<1x8xf32>
    %107 = vector.shape_cast %106 : vector<1x8xf32> to vector<8xf32>
    %108 = vector.shape_cast %107 : vector<8xf32> to vector<1x1x8xf32>
    %109 = vector.broadcast %108 : vector<1x1x8xf32> to vector<16x16x8xf32>
    %110 = arith.mulf %105, %109 : vector<16x16x8xf32>
    %111 = arith.addf %104, %110 : vector<16x16x8xf32>
    %112 = arith.addf %61, %111 : vector<16x16x8xf32>
    %c25_i32 = arith.constant 25 : i32
    %113 = tpu.dynamic_rotate %11 by %c25_i32 dim 1 : vector<22x32x8xf32>, i32 -> vector<22x32x8xf32>
    %114 = vector.extract_strided_slice %113 {offsets = [0, 0, 0], sizes = [22, 16, 8], strides = [1, 1, 1]} : vector<22x32x8xf32> to vector<22x16x8xf32>
    %115 = vector.extract_strided_slice %114 {offsets = [0, 0, 0], sizes = [16, 16, 8], strides = [1, 1, 1]} : vector<22x16x8xf32> to vector<16x16x8xf32>
    %c2 = arith.constant 2 : index
    %c0_36 = arith.constant 0 : index
    %116 = vector.load %arg2[%c2, %c0_36] : memref<49x8xf32, #tpu.memory_space<vmem>>, vector<1x8xf32>
    %117 = vector.shape_cast %116 : vector<1x8xf32> to vector<8xf32>
    %118 = vector.shape_cast %117 : vector<8xf32> to vector<1x1x8xf32>
    %119 = vector.broadcast %118 : vector<1x1x8xf32> to vector<16x16x8xf32>
    %120 = arith.mulf %115, %119 : vector<16x16x8xf32>
    %121 = vector.extract_strided_slice %114 {offsets = [1, 0, 0], sizes = [16, 16, 8], strides = [1, 1, 1]} : vector<22x16x8xf32> to vector<16x16x8xf32>
    %c9 = arith.constant 9 : index
    %c0_37 = arith.constant 0 : index
    %122 = vector.load %arg2[%c9, %c0_37] : memref<49x8xf32, #tpu.memory_space<vmem>>, vector<1x8xf32>
    %123 = vector.shape_cast %122 : vector<1x8xf32> to vector<8xf32>
    %124 = vector.shape_cast %123 : vector<8xf32> to vector<1x1x8xf32>
    %125 = vector.broadcast %124 : vector<1x1x8xf32> to vector<16x16x8xf32>
    %126 = arith.mulf %121, %125 : vector<16x16x8xf32>
    %127 = arith.addf %120, %126 : vector<16x16x8xf32>
    %128 = vector.extract_strided_slice %114 {offsets = [2, 0, 0], sizes = [16, 16, 8], strides = [1, 1, 1]} : vector<22x16x8xf32> to vector<16x16x8xf32>
    %c16 = arith.constant 16 : index
    %c0_38 = arith.constant 0 : index
    %129 = vector.load %arg2[%c16, %c0_38] : memref<49x8xf32, #tpu.memory_space<vmem>>, vector<1x8xf32>
    %130 = vector.shape_cast %129 : vector<1x8xf32> to vector<8xf32>
    %131 = vector.shape_cast %130 : vector<8xf32> to vector<1x1x8xf32>
    %132 = vector.broadcast %131 : vector<1x1x8xf32> to vector<16x16x8xf32>
    %133 = arith.mulf %128, %132 : vector<16x16x8xf32>
    %134 = arith.addf %127, %133 : vector<16x16x8xf32>
    %135 = vector.extract_strided_slice %114 {offsets = [3, 0, 0], sizes = [16, 16, 8], strides = [1, 1, 1]} : vector<22x16x8xf32> to vector<16x16x8xf32>
    %c23 = arith.constant 23 : index
    %c0_39 = arith.constant 0 : index
    %136 = vector.load %arg2[%c23, %c0_39] : memref<49x8xf32, #tpu.memory_space<vmem>>, vector<1x8xf32>
    %137 = vector.shape_cast %136 : vector<1x8xf32> to vector<8xf32>
    %138 = vector.shape_cast %137 : vector<8xf32> to vector<1x1x8xf32>
    %139 = vector.broadcast %138 : vector<1x1x8xf32> to vector<16x16x8xf32>
    %140 = arith.mulf %135, %139 : vector<16x16x8xf32>
    %141 = arith.addf %134, %140 : vector<16x16x8xf32>
    %142 = vector.extract_strided_slice %114 {offsets = [4, 0, 0], sizes = [16, 16, 8], strides = [1, 1, 1]} : vector<22x16x8xf32> to vector<16x16x8xf32>
    %c30 = arith.constant 30 : index
    %c0_40 = arith.constant 0 : index
    %143 = vector.load %arg2[%c30, %c0_40] : memref<49x8xf32, #tpu.memory_space<vmem>>, vector<1x8xf32>
    %144 = vector.shape_cast %143 : vector<1x8xf32> to vector<8xf32>
    %145 = vector.shape_cast %144 : vector<8xf32> to vector<1x1x8xf32>
    %146 = vector.broadcast %145 : vector<1x1x8xf32> to vector<16x16x8xf32>
    %147 = arith.mulf %142, %146 : vector<16x16x8xf32>
    %148 = arith.addf %141, %147 : vector<16x16x8xf32>
    %149 = vector.extract_strided_slice %114 {offsets = [5, 0, 0], sizes = [16, 16, 8], strides = [1, 1, 1]} : vector<22x16x8xf32> to vector<16x16x8xf32>
    %c37 = arith.constant 37 : index
    %c0_41 = arith.constant 0 : index
    %150 = vector.load %arg2[%c37, %c0_41] : memref<49x8xf32, #tpu.memory_space<vmem>>, vector<1x8xf32>
    %151 = vector.shape_cast %150 : vector<1x8xf32> to vector<8xf32>
    %152 = vector.shape_cast %151 : vector<8xf32> to vector<1x1x8xf32>
    %153 = vector.broadcast %152 : vector<1x1x8xf32> to vector<16x16x8xf32>
    %154 = arith.mulf %149, %153 : vector<16x16x8xf32>
    %155 = arith.addf %148, %154 : vector<16x16x8xf32>
    %156 = vector.extract_strided_slice %114 {offsets = [6, 0, 0], sizes = [16, 16, 8], strides = [1, 1, 1]} : vector<22x16x8xf32> to vector<16x16x8xf32>
    %c44 = arith.constant 44 : index
    %c0_42 = arith.constant 0 : index
    %157 = vector.load %arg2[%c44, %c0_42] : memref<49x8xf32, #tpu.memory_space<vmem>>, vector<1x8xf32>
    %158 = vector.shape_cast %157 : vector<1x8xf32> to vector<8xf32>
    %159 = vector.shape_cast %158 : vector<8xf32> to vector<1x1x8xf32>
    %160 = vector.broadcast %159 : vector<1x1x8xf32> to vector<16x16x8xf32>
    %161 = arith.mulf %156, %160 : vector<16x16x8xf32>
    %162 = arith.addf %155, %161 : vector<16x16x8xf32>
    %163 = arith.addf %112, %162 : vector<16x16x8xf32>
    %164 = vector.extract_strided_slice %11 {offsets = [0, 8, 0], sizes = [22, 16, 8], strides = [1, 1, 1]} : vector<22x32x8xf32> to vector<22x16x8xf32>
    %165 = vector.extract_strided_slice %164 {offsets = [0, 0, 0], sizes = [16, 16, 8], strides = [1, 1, 1]} : vector<22x16x8xf32> to vector<16x16x8xf32>
    %c3_43 = arith.constant 3 : index
    %c0_44 = arith.constant 0 : index
    %166 = vector.load %arg2[%c3_43, %c0_44] : memref<49x8xf32, #tpu.memory_space<vmem>>, vector<1x8xf32>
    %167 = vector.shape_cast %166 : vector<1x8xf32> to vector<8xf32>
    %168 = vector.shape_cast %167 : vector<8xf32> to vector<1x1x8xf32>
    %169 = vector.broadcast %168 : vector<1x1x8xf32> to vector<16x16x8xf32>
    %170 = arith.mulf %165, %169 : vector<16x16x8xf32>
    %171 = vector.extract_strided_slice %164 {offsets = [1, 0, 0], sizes = [16, 16, 8], strides = [1, 1, 1]} : vector<22x16x8xf32> to vector<16x16x8xf32>
    %c10 = arith.constant 10 : index
    %c0_45 = arith.constant 0 : index
    %172 = vector.load %arg2[%c10, %c0_45] : memref<49x8xf32, #tpu.memory_space<vmem>>, vector<1x8xf32>
    %173 = vector.shape_cast %172 : vector<1x8xf32> to vector<8xf32>
    %174 = vector.shape_cast %173 : vector<8xf32> to vector<1x1x8xf32>
    %175 = vector.broadcast %174 : vector<1x1x8xf32> to vector<16x16x8xf32>
    %176 = arith.mulf %171, %175 : vector<16x16x8xf32>
    %177 = arith.addf %170, %176 : vector<16x16x8xf32>
    %178 = vector.extract_strided_slice %164 {offsets = [2, 0, 0], sizes = [16, 16, 8], strides = [1, 1, 1]} : vector<22x16x8xf32> to vector<16x16x8xf32>
    %c17 = arith.constant 17 : index
    %c0_46 = arith.constant 0 : index
    %179 = vector.load %arg2[%c17, %c0_46] : memref<49x8xf32, #tpu.memory_space<vmem>>, vector<1x8xf32>
    %180 = vector.shape_cast %179 : vector<1x8xf32> to vector<8xf32>
    %181 = vector.shape_cast %180 : vector<8xf32> to vector<1x1x8xf32>
    %182 = vector.broadcast %181 : vector<1x1x8xf32> to vector<16x16x8xf32>
    %183 = arith.mulf %178, %182 : vector<16x16x8xf32>
    %184 = arith.addf %177, %183 : vector<16x16x8xf32>
    %185 = vector.extract_strided_slice %164 {offsets = [3, 0, 0], sizes = [16, 16, 8], strides = [1, 1, 1]} : vector<22x16x8xf32> to vector<16x16x8xf32>
    %c24_47 = arith.constant 24 : index
    %c0_48 = arith.constant 0 : index
    %186 = vector.load %arg2[%c24_47, %c0_48] : memref<49x8xf32, #tpu.memory_space<vmem>>, vector<1x8xf32>
    %187 = vector.shape_cast %186 : vector<1x8xf32> to vector<8xf32>
    %188 = vector.shape_cast %187 : vector<8xf32> to vector<1x1x8xf32>
    %189 = vector.broadcast %188 : vector<1x1x8xf32> to vector<16x16x8xf32>
    %190 = arith.mulf %185, %189 : vector<16x16x8xf32>
    %191 = arith.addf %184, %190 : vector<16x16x8xf32>
    %192 = vector.extract_strided_slice %164 {offsets = [4, 0, 0], sizes = [16, 16, 8], strides = [1, 1, 1]} : vector<22x16x8xf32> to vector<16x16x8xf32>
    %c31 = arith.constant 31 : index
    %c0_49 = arith.constant 0 : index
    %193 = vector.load %arg2[%c31, %c0_49] : memref<49x8xf32, #tpu.memory_space<vmem>>, vector<1x8xf32>
    %194 = vector.shape_cast %193 : vector<1x8xf32> to vector<8xf32>
    %195 = vector.shape_cast %194 : vector<8xf32> to vector<1x1x8xf32>
    %196 = vector.broadcast %195 : vector<1x1x8xf32> to vector<16x16x8xf32>
    %197 = arith.mulf %192, %196 : vector<16x16x8xf32>
    %198 = arith.addf %191, %197 : vector<16x16x8xf32>
    %199 = vector.extract_strided_slice %164 {offsets = [5, 0, 0], sizes = [16, 16, 8], strides = [1, 1, 1]} : vector<22x16x8xf32> to vector<16x16x8xf32>
    %c38 = arith.constant 38 : index
    %c0_50 = arith.constant 0 : index
    %200 = vector.load %arg2[%c38, %c0_50] : memref<49x8xf32, #tpu.memory_space<vmem>>, vector<1x8xf32>
    %201 = vector.shape_cast %200 : vector<1x8xf32> to vector<8xf32>
    %202 = vector.shape_cast %201 : vector<8xf32> to vector<1x1x8xf32>
    %203 = vector.broadcast %202 : vector<1x1x8xf32> to vector<16x16x8xf32>
    %204 = arith.mulf %199, %203 : vector<16x16x8xf32>
    %205 = arith.addf %198, %204 : vector<16x16x8xf32>
    %206 = vector.extract_strided_slice %164 {offsets = [6, 0, 0], sizes = [16, 16, 8], strides = [1, 1, 1]} : vector<22x16x8xf32> to vector<16x16x8xf32>
    %c45 = arith.constant 45 : index
    %c0_51 = arith.constant 0 : index
    %207 = vector.load %arg2[%c45, %c0_51] : memref<49x8xf32, #tpu.memory_space<vmem>>, vector<1x8xf32>
    %208 = vector.shape_cast %207 : vector<1x8xf32> to vector<8xf32>
    %209 = vector.shape_cast %208 : vector<8xf32> to vector<1x1x8xf32>
    %210 = vector.broadcast %209 : vector<1x1x8xf32> to vector<16x16x8xf32>
    %211 = arith.mulf %206, %210 : vector<16x16x8xf32>
    %212 = arith.addf %205, %211 : vector<16x16x8xf32>
    %213 = arith.addf %163, %212 : vector<16x16x8xf32>
    %c23_i32 = arith.constant 23 : i32
    %214 = tpu.dynamic_rotate %11 by %c23_i32 dim 1 : vector<22x32x8xf32>, i32 -> vector<22x32x8xf32>
    %215 = vector.extract_strided_slice %214 {offsets = [0, 0, 0], sizes = [22, 16, 8], strides = [1, 1, 1]} : vector<22x32x8xf32> to vector<22x16x8xf32>
    %216 = vector.extract_strided_slice %215 {offsets = [0, 0, 0], sizes = [16, 16, 8], strides = [1, 1, 1]} : vector<22x16x8xf32> to vector<16x16x8xf32>
    %c4 = arith.constant 4 : index
    %c0_52 = arith.constant 0 : index
    %217 = vector.load %arg2[%c4, %c0_52] : memref<49x8xf32, #tpu.memory_space<vmem>>, vector<1x8xf32>
    %218 = vector.shape_cast %217 : vector<1x8xf32> to vector<8xf32>
    %219 = vector.shape_cast %218 : vector<8xf32> to vector<1x1x8xf32>
    %220 = vector.broadcast %219 : vector<1x1x8xf32> to vector<16x16x8xf32>
    %221 = arith.mulf %216, %220 : vector<16x16x8xf32>
    %222 = vector.extract_strided_slice %215 {offsets = [1, 0, 0], sizes = [16, 16, 8], strides = [1, 1, 1]} : vector<22x16x8xf32> to vector<16x16x8xf32>
    %c11 = arith.constant 11 : index
    %c0_53 = arith.constant 0 : index
    %223 = vector.load %arg2[%c11, %c0_53] : memref<49x8xf32, #tpu.memory_space<vmem>>, vector<1x8xf32>
    %224 = vector.shape_cast %223 : vector<1x8xf32> to vector<8xf32>
    %225 = vector.shape_cast %224 : vector<8xf32> to vector<1x1x8xf32>
    %226 = vector.broadcast %225 : vector<1x1x8xf32> to vector<16x16x8xf32>
    %227 = arith.mulf %222, %226 : vector<16x16x8xf32>
    %228 = arith.addf %221, %227 : vector<16x16x8xf32>
    %229 = vector.extract_strided_slice %215 {offsets = [2, 0, 0], sizes = [16, 16, 8], strides = [1, 1, 1]} : vector<22x16x8xf32> to vector<16x16x8xf32>
    %c18 = arith.constant 18 : index
    %c0_54 = arith.constant 0 : index
    %230 = vector.load %arg2[%c18, %c0_54] : memref<49x8xf32, #tpu.memory_space<vmem>>, vector<1x8xf32>
    %231 = vector.shape_cast %230 : vector<1x8xf32> to vector<8xf32>
    %232 = vector.shape_cast %231 : vector<8xf32> to vector<1x1x8xf32>
    %233 = vector.broadcast %232 : vector<1x1x8xf32> to vector<16x16x8xf32>
    %234 = arith.mulf %229, %233 : vector<16x16x8xf32>
    %235 = arith.addf %228, %234 : vector<16x16x8xf32>
    %236 = vector.extract_strided_slice %215 {offsets = [3, 0, 0], sizes = [16, 16, 8], strides = [1, 1, 1]} : vector<22x16x8xf32> to vector<16x16x8xf32>
    %c25 = arith.constant 25 : index
    %c0_55 = arith.constant 0 : index
    %237 = vector.load %arg2[%c25, %c0_55] : memref<49x8xf32, #tpu.memory_space<vmem>>, vector<1x8xf32>
    %238 = vector.shape_cast %237 : vector<1x8xf32> to vector<8xf32>
    %239 = vector.shape_cast %238 : vector<8xf32> to vector<1x1x8xf32>
    %240 = vector.broadcast %239 : vector<1x1x8xf32> to vector<16x16x8xf32>
    %241 = arith.mulf %236, %240 : vector<16x16x8xf32>
    %242 = arith.addf %235, %241 : vector<16x16x8xf32>
    %243 = vector.extract_strided_slice %215 {offsets = [4, 0, 0], sizes = [16, 16, 8], strides = [1, 1, 1]} : vector<22x16x8xf32> to vector<16x16x8xf32>
    %c32 = arith.constant 32 : index
    %c0_56 = arith.constant 0 : index
    %244 = vector.load %arg2[%c32, %c0_56] : memref<49x8xf32, #tpu.memory_space<vmem>>, vector<1x8xf32>
    %245 = vector.shape_cast %244 : vector<1x8xf32> to vector<8xf32>
    %246 = vector.shape_cast %245 : vector<8xf32> to vector<1x1x8xf32>
    %247 = vector.broadcast %246 : vector<1x1x8xf32> to vector<16x16x8xf32>
    %248 = arith.mulf %243, %247 : vector<16x16x8xf32>
    %249 = arith.addf %242, %248 : vector<16x16x8xf32>
    %250 = vector.extract_strided_slice %215 {offsets = [5, 0, 0], sizes = [16, 16, 8], strides = [1, 1, 1]} : vector<22x16x8xf32> to vector<16x16x8xf32>
    %c39 = arith.constant 39 : index
    %c0_57 = arith.constant 0 : index
    %251 = vector.load %arg2[%c39, %c0_57] : memref<49x8xf32, #tpu.memory_space<vmem>>, vector<1x8xf32>
    %252 = vector.shape_cast %251 : vector<1x8xf32> to vector<8xf32>
    %253 = vector.shape_cast %252 : vector<8xf32> to vector<1x1x8xf32>
    %254 = vector.broadcast %253 : vector<1x1x8xf32> to vector<16x16x8xf32>
    %255 = arith.mulf %250, %254 : vector<16x16x8xf32>
    %256 = arith.addf %249, %255 : vector<16x16x8xf32>
    %257 = vector.extract_strided_slice %215 {offsets = [6, 0, 0], sizes = [16, 16, 8], strides = [1, 1, 1]} : vector<22x16x8xf32> to vector<16x16x8xf32>
    %c46 = arith.constant 46 : index
    %c0_58 = arith.constant 0 : index
    %258 = vector.load %arg2[%c46, %c0_58] : memref<49x8xf32, #tpu.memory_space<vmem>>, vector<1x8xf32>
    %259 = vector.shape_cast %258 : vector<1x8xf32> to vector<8xf32>
    %260 = vector.shape_cast %259 : vector<8xf32> to vector<1x1x8xf32>
    %261 = vector.broadcast %260 : vector<1x1x8xf32> to vector<16x16x8xf32>
    %262 = arith.mulf %257, %261 : vector<16x16x8xf32>
    %263 = arith.addf %256, %262 : vector<16x16x8xf32>
    %264 = arith.addf %213, %263 : vector<16x16x8xf32>
    %c22_i32 = arith.constant 22 : i32
    %265 = tpu.dynamic_rotate %11 by %c22_i32 dim 1 : vector<22x32x8xf32>, i32 -> vector<22x32x8xf32>
    %266 = vector.extract_strided_slice %265 {offsets = [0, 0, 0], sizes = [22, 16, 8], strides = [1, 1, 1]} : vector<22x32x8xf32> to vector<22x16x8xf32>
    %267 = vector.extract_strided_slice %266 {offsets = [0, 0, 0], sizes = [16, 16, 8], strides = [1, 1, 1]} : vector<22x16x8xf32> to vector<16x16x8xf32>
    %c5 = arith.constant 5 : index
    %c0_59 = arith.constant 0 : index
    %268 = vector.load %arg2[%c5, %c0_59] : memref<49x8xf32, #tpu.memory_space<vmem>>, vector<1x8xf32>
    %269 = vector.shape_cast %268 : vector<1x8xf32> to vector<8xf32>
    %270 = vector.shape_cast %269 : vector<8xf32> to vector<1x1x8xf32>
    %271 = vector.broadcast %270 : vector<1x1x8xf32> to vector<16x16x8xf32>
    %272 = arith.mulf %267, %271 : vector<16x16x8xf32>
    %273 = vector.extract_strided_slice %266 {offsets = [1, 0, 0], sizes = [16, 16, 8], strides = [1, 1, 1]} : vector<22x16x8xf32> to vector<16x16x8xf32>
    %c12 = arith.constant 12 : index
    %c0_60 = arith.constant 0 : index
    %274 = vector.load %arg2[%c12, %c0_60] : memref<49x8xf32, #tpu.memory_space<vmem>>, vector<1x8xf32>
    %275 = vector.shape_cast %274 : vector<1x8xf32> to vector<8xf32>
    %276 = vector.shape_cast %275 : vector<8xf32> to vector<1x1x8xf32>
    %277 = vector.broadcast %276 : vector<1x1x8xf32> to vector<16x16x8xf32>
    %278 = arith.mulf %273, %277 : vector<16x16x8xf32>
    %279 = arith.addf %272, %278 : vector<16x16x8xf32>
    %280 = vector.extract_strided_slice %266 {offsets = [2, 0, 0], sizes = [16, 16, 8], strides = [1, 1, 1]} : vector<22x16x8xf32> to vector<16x16x8xf32>
    %c19_61 = arith.constant 19 : index
    %c0_62 = arith.constant 0 : index
    %281 = vector.load %arg2[%c19_61, %c0_62] : memref<49x8xf32, #tpu.memory_space<vmem>>, vector<1x8xf32>
    %282 = vector.shape_cast %281 : vector<1x8xf32> to vector<8xf32>
    %283 = vector.shape_cast %282 : vector<8xf32> to vector<1x1x8xf32>
    %284 = vector.broadcast %283 : vector<1x1x8xf32> to vector<16x16x8xf32>
    %285 = arith.mulf %280, %284 : vector<16x16x8xf32>
    %286 = arith.addf %279, %285 : vector<16x16x8xf32>
    %287 = vector.extract_strided_slice %266 {offsets = [3, 0, 0], sizes = [16, 16, 8], strides = [1, 1, 1]} : vector<22x16x8xf32> to vector<16x16x8xf32>
    %c26 = arith.constant 26 : index
    %c0_63 = arith.constant 0 : index
    %288 = vector.load %arg2[%c26, %c0_63] : memref<49x8xf32, #tpu.memory_space<vmem>>, vector<1x8xf32>
    %289 = vector.shape_cast %288 : vector<1x8xf32> to vector<8xf32>
    %290 = vector.shape_cast %289 : vector<8xf32> to vector<1x1x8xf32>
    %291 = vector.broadcast %290 : vector<1x1x8xf32> to vector<16x16x8xf32>
    %292 = arith.mulf %287, %291 : vector<16x16x8xf32>
    %293 = arith.addf %286, %292 : vector<16x16x8xf32>
    %294 = vector.extract_strided_slice %266 {offsets = [4, 0, 0], sizes = [16, 16, 8], strides = [1, 1, 1]} : vector<22x16x8xf32> to vector<16x16x8xf32>
    %c33 = arith.constant 33 : index
    %c0_64 = arith.constant 0 : index
    %295 = vector.load %arg2[%c33, %c0_64] : memref<49x8xf32, #tpu.memory_space<vmem>>, vector<1x8xf32>
    %296 = vector.shape_cast %295 : vector<1x8xf32> to vector<8xf32>
    %297 = vector.shape_cast %296 : vector<8xf32> to vector<1x1x8xf32>
    %298 = vector.broadcast %297 : vector<1x1x8xf32> to vector<16x16x8xf32>
    %299 = arith.mulf %294, %298 : vector<16x16x8xf32>
    %300 = arith.addf %293, %299 : vector<16x16x8xf32>
    %301 = vector.extract_strided_slice %266 {offsets = [5, 0, 0], sizes = [16, 16, 8], strides = [1, 1, 1]} : vector<22x16x8xf32> to vector<16x16x8xf32>
    %c40 = arith.constant 40 : index
    %c0_65 = arith.constant 0 : index
    %302 = vector.load %arg2[%c40, %c0_65] : memref<49x8xf32, #tpu.memory_space<vmem>>, vector<1x8xf32>
    %303 = vector.shape_cast %302 : vector<1x8xf32> to vector<8xf32>
    %304 = vector.shape_cast %303 : vector<8xf32> to vector<1x1x8xf32>
    %305 = vector.broadcast %304 : vector<1x1x8xf32> to vector<16x16x8xf32>
    %306 = arith.mulf %301, %305 : vector<16x16x8xf32>
    %307 = arith.addf %300, %306 : vector<16x16x8xf32>
    %308 = vector.extract_strided_slice %266 {offsets = [6, 0, 0], sizes = [16, 16, 8], strides = [1, 1, 1]} : vector<22x16x8xf32> to vector<16x16x8xf32>
    %c47 = arith.constant 47 : index
    %c0_66 = arith.constant 0 : index
    %309 = vector.load %arg2[%c47, %c0_66] : memref<49x8xf32, #tpu.memory_space<vmem>>, vector<1x8xf32>
    %310 = vector.shape_cast %309 : vector<1x8xf32> to vector<8xf32>
    %311 = vector.shape_cast %310 : vector<8xf32> to vector<1x1x8xf32>
    %312 = vector.broadcast %311 : vector<1x1x8xf32> to vector<16x16x8xf32>
    %313 = arith.mulf %308, %312 : vector<16x16x8xf32>
    %314 = arith.addf %307, %313 : vector<16x16x8xf32>
    %315 = arith.addf %264, %314 : vector<16x16x8xf32>
    %c21_i32 = arith.constant 21 : i32
    %316 = tpu.dynamic_rotate %11 by %c21_i32 dim 1 : vector<22x32x8xf32>, i32 -> vector<22x32x8xf32>
    %317 = vector.extract_strided_slice %316 {offsets = [0, 0, 0], sizes = [22, 16, 8], strides = [1, 1, 1]} : vector<22x32x8xf32> to vector<22x16x8xf32>
    %318 = vector.extract_strided_slice %317 {offsets = [0, 0, 0], sizes = [16, 16, 8], strides = [1, 1, 1]} : vector<22x16x8xf32> to vector<16x16x8xf32>
    %c6 = arith.constant 6 : index
    %c0_67 = arith.constant 0 : index
    %319 = vector.load %arg2[%c6, %c0_67] : memref<49x8xf32, #tpu.memory_space<vmem>>, vector<1x8xf32>
    %320 = vector.shape_cast %319 : vector<1x8xf32> to vector<8xf32>
    %321 = vector.shape_cast %320 : vector<8xf32> to vector<1x1x8xf32>
    %322 = vector.broadcast %321 : vector<1x1x8xf32> to vector<16x16x8xf32>
    %323 = arith.mulf %318, %322 : vector<16x16x8xf32>
    %324 = vector.extract_strided_slice %317 {offsets = [1, 0, 0], sizes = [16, 16, 8], strides = [1, 1, 1]} : vector<22x16x8xf32> to vector<16x16x8xf32>
    %c13 = arith.constant 13 : index
    %c0_68 = arith.constant 0 : index
    %325 = vector.load %arg2[%c13, %c0_68] : memref<49x8xf32, #tpu.memory_space<vmem>>, vector<1x8xf32>
    %326 = vector.shape_cast %325 : vector<1x8xf32> to vector<8xf32>
    %327 = vector.shape_cast %326 : vector<8xf32> to vector<1x1x8xf32>
    %328 = vector.broadcast %327 : vector<1x1x8xf32> to vector<16x16x8xf32>
    %329 = arith.mulf %324, %328 : vector<16x16x8xf32>
    %330 = arith.addf %323, %329 : vector<16x16x8xf32>
    %331 = vector.extract_strided_slice %317 {offsets = [2, 0, 0], sizes = [16, 16, 8], strides = [1, 1, 1]} : vector<22x16x8xf32> to vector<16x16x8xf32>
    %c20 = arith.constant 20 : index
    %c0_69 = arith.constant 0 : index
    %332 = vector.load %arg2[%c20, %c0_69] : memref<49x8xf32, #tpu.memory_space<vmem>>, vector<1x8xf32>
    %333 = vector.shape_cast %332 : vector<1x8xf32> to vector<8xf32>
    %334 = vector.shape_cast %333 : vector<8xf32> to vector<1x1x8xf32>
    %335 = vector.broadcast %334 : vector<1x1x8xf32> to vector<16x16x8xf32>
    %336 = arith.mulf %331, %335 : vector<16x16x8xf32>
    %337 = arith.addf %330, %336 : vector<16x16x8xf32>
    %338 = vector.extract_strided_slice %317 {offsets = [3, 0, 0], sizes = [16, 16, 8], strides = [1, 1, 1]} : vector<22x16x8xf32> to vector<16x16x8xf32>
    %c27 = arith.constant 27 : index
    %c0_70 = arith.constant 0 : index
    %339 = vector.load %arg2[%c27, %c0_70] : memref<49x8xf32, #tpu.memory_space<vmem>>, vector<1x8xf32>
    %340 = vector.shape_cast %339 : vector<1x8xf32> to vector<8xf32>
    %341 = vector.shape_cast %340 : vector<8xf32> to vector<1x1x8xf32>
    %342 = vector.broadcast %341 : vector<1x1x8xf32> to vector<16x16x8xf32>
    %343 = arith.mulf %338, %342 : vector<16x16x8xf32>
    %344 = arith.addf %337, %343 : vector<16x16x8xf32>
    %345 = vector.extract_strided_slice %317 {offsets = [4, 0, 0], sizes = [16, 16, 8], strides = [1, 1, 1]} : vector<22x16x8xf32> to vector<16x16x8xf32>
    %c34 = arith.constant 34 : index
    %c0_71 = arith.constant 0 : index
    %346 = vector.load %arg2[%c34, %c0_71] : memref<49x8xf32, #tpu.memory_space<vmem>>, vector<1x8xf32>
    %347 = vector.shape_cast %346 : vector<1x8xf32> to vector<8xf32>
    %348 = vector.shape_cast %347 : vector<8xf32> to vector<1x1x8xf32>
    %349 = vector.broadcast %348 : vector<1x1x8xf32> to vector<16x16x8xf32>
    %350 = arith.mulf %345, %349 : vector<16x16x8xf32>
    %351 = arith.addf %344, %350 : vector<16x16x8xf32>
    %352 = vector.extract_strided_slice %317 {offsets = [5, 0, 0], sizes = [16, 16, 8], strides = [1, 1, 1]} : vector<22x16x8xf32> to vector<16x16x8xf32>
    %c41 = arith.constant 41 : index
    %c0_72 = arith.constant 0 : index
    %353 = vector.load %arg2[%c41, %c0_72] : memref<49x8xf32, #tpu.memory_space<vmem>>, vector<1x8xf32>
    %354 = vector.shape_cast %353 : vector<1x8xf32> to vector<8xf32>
    %355 = vector.shape_cast %354 : vector<8xf32> to vector<1x1x8xf32>
    %356 = vector.broadcast %355 : vector<1x1x8xf32> to vector<16x16x8xf32>
    %357 = arith.mulf %352, %356 : vector<16x16x8xf32>
    %358 = arith.addf %351, %357 : vector<16x16x8xf32>
    %359 = vector.extract_strided_slice %317 {offsets = [6, 0, 0], sizes = [16, 16, 8], strides = [1, 1, 1]} : vector<22x16x8xf32> to vector<16x16x8xf32>
    %c48 = arith.constant 48 : index
    %c0_73 = arith.constant 0 : index
    %360 = vector.load %arg2[%c48, %c0_73] : memref<49x8xf32, #tpu.memory_space<vmem>>, vector<1x8xf32>
    %361 = vector.shape_cast %360 : vector<1x8xf32> to vector<8xf32>
    %362 = vector.shape_cast %361 : vector<8xf32> to vector<1x1x8xf32>
    %363 = vector.broadcast %362 : vector<1x1x8xf32> to vector<16x16x8xf32>
    %364 = arith.mulf %359, %363 : vector<16x16x8xf32>
    %365 = arith.addf %358, %364 : vector<16x16x8xf32>
    %366 = arith.addf %315, %365 : vector<16x16x8xf32>
    %c0_74 = arith.constant 0 : index
    %c0_75 = arith.constant 0 : index
    %367 = vector.load %arg3[%c0_74, %c0_75] : memref<1x8xf32, #tpu.memory_space<vmem>>, vector<1x8xf32>
    %368 = vector.shape_cast %367 : vector<1x8xf32> to vector<8xf32>
    %369 = vector.shape_cast %368 : vector<8xf32> to vector<1x1x8xf32>
    %370 = vector.broadcast %369 : vector<1x1x8xf32> to vector<16x16x8xf32>
    %371 = arith.addf %366, %370 : vector<16x16x8xf32>
    %cst_76 = arith.constant dense<0.000000e+00> : vector<16x16xf32>
    %372 = vector.multi_reduction <add>, %371, %cst_76 [2] : vector<16x16x8xf32> to vector<16x16xf32>
    %373 = vector.shape_cast %372 : vector<16x16xf32> to vector<16x16x1xf32>
    %cst_77 = arith.constant 8.000000e+00 : f32
    %374 = vector.broadcast %cst_77 : f32 to vector<16x16x1xf32>
    %375 = arith.divf %373, %374 : vector<16x16x1xf32>
    %376 = arith.mulf %371, %371 : vector<16x16x8xf32>
    %cst_78 = arith.constant dense<0.000000e+00> : vector<16x16xf32>
    %377 = vector.multi_reduction <add>, %376, %cst_78 [2] : vector<16x16x8xf32> to vector<16x16xf32>
    %378 = vector.shape_cast %377 : vector<16x16xf32> to vector<16x16x1xf32>
    %cst_79 = arith.constant 8.000000e+00 : f32
    %379 = vector.broadcast %cst_79 : f32 to vector<16x16x1xf32>
    %380 = arith.divf %378, %379 : vector<16x16x1xf32>
    %381 = arith.mulf %375, %375 : vector<16x16x1xf32>
    %382 = arith.subf %380, %381 : vector<16x16x1xf32>
    %cst_80 = arith.constant 0.000000e+00 : f32
    %383 = vector.broadcast %cst_80 : f32 to vector<16x16x1xf32>
    %384 = arith.maximumf %382, %383 : vector<16x16x1xf32>
    %385 = vector.broadcast %375 : vector<16x16x1xf32> to vector<16x16x8xf32>
    %386 = arith.subf %371, %385 : vector<16x16x8xf32>
    %cst_81 = arith.constant 9.99999997E-7 : f32
    %387 = vector.broadcast %cst_81 : f32 to vector<16x16x1xf32>
    %388 = arith.addf %384, %387 : vector<16x16x1xf32>
    %389 = math.rsqrt %388 : vector<16x16x1xf32>
    %390 = vector.broadcast %389 : vector<16x16x1xf32> to vector<16x16x8xf32>
    %391 = arith.mulf %386, %390 : vector<16x16x8xf32>
    %392 = vector.shape_cast %391 : vector<16x16x8xf32> to vector<256x8xf32>
    %393 = arith.truncf %392 : vector<256x8xf32> to vector<256x8xbf16>
    %c0_82 = arith.constant 0 : index
    %c0_83 = arith.constant 0 : index
    %394 = vector.load %arg4[%c0_82, %c0_83] : memref<8x32xbf16, #tpu.memory_space<vmem>>, vector<8x32xbf16>
    %cst_84 = arith.constant dense<0.000000e+00> : vector<256x32xf32>
    %395 = tpu.matmul %393, %394, %cst_84 {dimension_numbers = #tpu.dot_dimension_numbers<[1], [0], [0], [1], [0, 0, 1, 1], [], []>} : vector<256x8xbf16>, vector<8x32xbf16>, vector<256x32xf32> -> vector<256x32xf32>
    %c0_85 = arith.constant 0 : index
    %c0_86 = arith.constant 0 : index
    %396 = vector.load %arg5[%c0_85, %c0_86] : memref<1x32xf32, #tpu.memory_space<vmem>>, vector<1x32xf32>
    %397 = vector.shape_cast %396 : vector<1x32xf32> to vector<32xf32>
    %398 = vector.shape_cast %397 : vector<32xf32> to vector<1x32xf32>
    %399 = vector.broadcast %398 : vector<1x32xf32> to vector<256x32xf32>
    %400 = arith.addf %395, %399 : vector<256x32xf32>
    %401 = arith.mulf %400, %400 : vector<256x32xf32>
    %402 = arith.mulf %400, %401 : vector<256x32xf32>
    %cst_87 = arith.constant 4.471500e-02 : f32
    %403 = vector.broadcast %cst_87 : f32 to vector<256x32xf32>
    %404 = arith.mulf %403, %402 : vector<256x32xf32>
    %405 = arith.addf %400, %404 : vector<256x32xf32>
    %cst_88 = arith.constant 0.797884583 : f32
    %406 = vector.broadcast %cst_88 : f32 to vector<256x32xf32>
    %407 = arith.mulf %406, %405 : vector<256x32xf32>
    %408 = math.tanh %407 : vector<256x32xf32>
    %cst_89 = arith.constant 1.000000e+00 : f32
    %409 = vector.broadcast %cst_89 : f32 to vector<256x32xf32>
    %410 = arith.addf %409, %408 : vector<256x32xf32>
    %cst_90 = arith.constant 5.000000e-01 : f32
    %411 = vector.broadcast %cst_90 : f32 to vector<256x32xf32>
    %412 = arith.mulf %411, %410 : vector<256x32xf32>
    %413 = arith.mulf %400, %412 : vector<256x32xf32>
    %414 = arith.mulf %413, %413 : vector<256x32xf32>
    %cst_91 = arith.constant dense<0.000000e+00> : vector<32xf32>
    %415 = vector.multi_reduction <add>, %414, %cst_91 [0] : vector<256x32xf32> to vector<32xf32>
    %416 = vector.shape_cast %415 : vector<32xf32> to vector<1x32xf32>
    %417 = math.sqrt %416 : vector<1x32xf32>
    %cst_92 = arith.constant dense<0.000000e+00> : vector<1xf32>
    %418 = vector.multi_reduction <add>, %417, %cst_92 [1] : vector<1x32xf32> to vector<1xf32>
    %419 = vector.shape_cast %418 : vector<1xf32> to vector<1x1xf32>
    %cst_93 = arith.constant 3.200000e+01 : f32
    %420 = vector.broadcast %cst_93 : f32 to vector<1x1xf32>
    %421 = arith.divf %419, %420 : vector<1x1xf32>
    %cst_94 = arith.constant 9.99999997E-7 : f32
    %422 = vector.broadcast %cst_94 : f32 to vector<1x1xf32>
    %423 = arith.addf %421, %422 : vector<1x1xf32>
    %424 = vector.broadcast %423 : vector<1x1xf32> to vector<1x32xf32>
    %425 = arith.divf %417, %424 : vector<1x32xf32>
    %c0_95 = arith.constant 0 : index
    %c0_96 = arith.constant 0 : index
    %426 = vector.load %arg6[%c0_95, %c0_96] : memref<1x32xf32, #tpu.memory_space<vmem>>, vector<1x32xf32>
    %427 = vector.shape_cast %426 : vector<1x32xf32> to vector<32xf32>
    %428 = vector.shape_cast %427 : vector<32xf32> to vector<1x32xf32>
    %429 = arith.mulf %428, %425 : vector<1x32xf32>
    %cst_97 = arith.constant 1.000000e+00 : f32
    %430 = vector.broadcast %cst_97 : f32 to vector<1x32xf32>
    %431 = arith.addf %430, %429 : vector<1x32xf32>
    %432 = vector.broadcast %431 : vector<1x32xf32> to vector<256x32xf32>
    %433 = arith.mulf %413, %432 : vector<256x32xf32>
    %434 = arith.truncf %433 : vector<256x32xf32> to vector<256x32xbf16>
    %c0_98 = arith.constant 0 : index
    %c0_99 = arith.constant 0 : index
    %435 = vector.load %arg7[%c0_98, %c0_99] : memref<32x8xbf16, #tpu.memory_space<vmem>>, vector<32x8xbf16>
    %cst_100 = arith.constant dense<0.000000e+00> : vector<256x8xf32>
    %436 = tpu.matmul %434, %435, %cst_100 {dimension_numbers = #tpu.dot_dimension_numbers<[1], [0], [0], [1], [0, 0, 1, 1], [], []>} : vector<256x32xbf16>, vector<32x8xbf16>, vector<256x8xf32> -> vector<256x8xf32>
    %c0_101 = arith.constant 0 : index
    %c0_102 = arith.constant 0 : index
    %437 = vector.load %arg8[%c0_101, %c0_102] : memref<1x8xf32, #tpu.memory_space<vmem>>, vector<1x8xf32>
    %438 = vector.shape_cast %437 : vector<1x8xf32> to vector<8xf32>
    %439 = vector.shape_cast %438 : vector<8xf32> to vector<1x8xf32>
    %440 = vector.broadcast %439 : vector<1x8xf32> to vector<256x8xf32>
    %441 = arith.addf %436, %440 : vector<256x8xf32>
    %c0_103 = arith.constant 0 : index
    %c0_104 = arith.constant 0 : index
    %c0_105 = arith.constant 0 : index
    %c0_106 = arith.constant 0 : index
    %442 = vector.load %arg1[%c0_103, %c0_104, %c0_105, %c0_106] : memref<1x16x16x8xf32, #tpu.memory_space<vmem>>, vector<1x16x16x8xf32>
    %443 = vector.shape_cast %442 : vector<1x16x16x8xf32> to vector<16x16x8xf32>
    %444 = vector.shape_cast %441 : vector<256x8xf32> to vector<16x16x8xf32>
    %445 = arith.addf %443, %444 : vector<16x16x8xf32>
    %c0_107 = arith.constant 0 : index
    %c0_108 = arith.constant 0 : index
    %c0_109 = arith.constant 0 : index
    %c0_110 = arith.constant 0 : index
    %446 = vector.load %arg9[%c0_107, %c0_108, %c0_109, %c0_110] : memref<1x16x16x8xf32, #tpu.memory_space<vmem>>, vector<1x16x16x8xf32>
    %447 = vector.shape_cast %446 : vector<1x16x16x8xf32> to vector<16x16x8xf32>
    %448 = vector.shape_cast %445 : vector<16x16x8xf32> to vector<1x16x16x8xf32>
    tpu.vector_store %arg9[%c0_107, %c0_108, %c0_109, %c0_110], %448 {strides = array<i32>} : memref<1x16x16x8xf32, #tpu.memory_space<vmem>>, vector<1x16x16x8xf32>,
    return
  }
  func.func @transform_0(%arg0: i32) -> (i32, i32, i32, i32) {
    %c0_i32 = arith.constant 0 : i32
    %c0_i32_0 = arith.constant 0 : i32
    %c0_i32_1 = arith.constant 0 : i32
    %c0_i32_2 = arith.constant 0 : i32
    return %arg0, %c0_i32, %c0_i32_0, %c0_i32_1 : i32, i32, i32, i32
  }
  func.func @transform_1(%arg0: i32) -> (i32, i32) {
    %c0_i32 = arith.constant 0 : i32
    %c0_i32_0 = arith.constant 0 : i32
    %c0_i32_1 = arith.constant 0 : i32
    return %c0_i32, %c0_i32_0 : i32, i32
  }
  func.func @transform_2(%arg0: i32) -> (i32, i32) {
    %c0_i32 = arith.constant 0 : i32
    %c0_i32_0 = arith.constant 0 : i32
    %c0_i32_1 = arith.constant 0 : i32
    return %c0_i32, %c0_i32_0 : i32, i32
  }
  func.func @transform_3(%arg0: i32) -> (i32, i32) {
    %c0_i32 = arith.constant 0 : i32
    %c0_i32_0 = arith.constant 0 : i32
    %c0_i32_1 = arith.constant 0 : i32
    return %c0_i32, %c0_i32_0 : i32, i32
  }
  func.func @transform_4(%arg0: i32) -> (i32, i32) {
    %c0_i32 = arith.constant 0 : i32
    %c0_i32_0 = arith.constant 0 : i32
    %c0_i32_1 = arith.constant 0 : i32
    return %c0_i32, %c0_i32_0 : i32, i32
  }
  func.func @transform_5(%arg0: i32) -> (i32, i32) {
    %c0_i32 = arith.constant 0 : i32
    %c0_i32_0 = arith.constant 0 : i32
    %c0_i32_1 = arith.constant 0 : i32
    return %c0_i32, %c0_i32_0 : i32, i32
  }
  func.func @transform_6(%arg0: i32) -> (i32, i32) {
    %c0_i32 = arith.constant 0 : i32
    %c0_i32_0 = arith.constant 0 : i32
    %c0_i32_1 = arith.constant 0 : i32
    return %c0_i32, %c0_i32_0 : i32, i32
  }
  func.func @transform_7(%arg0: i32) -> (i32, i32) {
    %c0_i32 = arith.constant 0 : i32
    %c0_i32_0 = arith.constant 0 : i32
    %c0_i32_1 = arith.constant 0 : i32
    return %c0_i32, %c0_i32_0 : i32, i32
  }
  func.func @transform_8(%arg0: i32) -> (i32, i32, i32, i32) {
    %c0_i32 = arith.constant 0 : i32
    %c0_i32_0 = arith.constant 0 : i32
    %c0_i32_1 = arith.constant 0 : i32
    %c0_i32_2 = arith.constant 0 : i32
    return %arg0, %c0_i32, %c0_i32_0, %c0_i32_1 : i32, i32, i32, i32
  }
}

</mosaic_0001>

<llo_original>
// kernel: tpu_custom_call.1
$region0: #{tpu_custom_call.1}
  #allocation0 [shape = 'u32[]', space=smem, size = 0x4, offset = 0x4, fixed_abs, tag = 'smem constant byte address 0x4 - core index']
  #allocation1 [shape = 'u32[144,128]{1,0:T(1,128)}', space=vmem, size = 0x12000, scoped, tag = 'internal scratch']
  #allocation2 [shape = 'f32[22,32,8]{2,1,0:T(8,128)}', space=vmem, size = 0x58000, scoped, tag = 'scratch operand']
  %s0 = inlined_call_operand.vmem [shape: f32[2,16,16,8], index: 0, kind: input, shape index: {}]
  %s1 = inlined_call_operand.vmem [shape: f32[49,8], index: 1, kind: input, shape index: {}]
  %s2 = inlined_call_operand.vmem [shape: f32[1,8], index: 2, kind: input, shape index: {}]
  %s3 = inlined_call_operand.vmem [shape: bf16[8,32], index: 3, kind: input, shape index: {}]
  %s4 = inlined_call_operand.vmem [shape: f32[1,32], index: 4, kind: input, shape index: {}]
  %s5 = inlined_call_operand.vmem [shape: f32[1,32], index: 5, kind: input, shape index: {}]
  %s6 = inlined_call_operand.vmem [shape: bf16[32,8], index: 6, kind: input, shape index: {}]
  %s7 = inlined_call_operand.vmem [shape: f32[1,8], index: 7, kind: input, shape index: {}]
  %s8 = inlined_call_operand.vmem [shape: f32[2,16,16,8], index: 8, kind: output, shape index: {}]
  %s9 = sld [smem:[#allocation0]]
  $region65: #{tpu_custom_call.1} parent=0
    _
  %s11 = ssub.s32 1, %s9
  %s12 = scalar_select 0, %s11, %s9
  loop: start=0, step=1, limit=4
  $region2: #{tpu_custom_call.1} parent=0 // loop_pre_header
    _
  $region3: #{tpu_custom_call.1} parent=0 // loop_header
    %s14 = sphi 0, %s18
    %p15 = scmp.ge.s32.totalorder %s14, 4
    %s24 = sphi 0, %s26
    %s27 = sphi 0, %s24
    %s28 = sphi 0, %s27
    %s44 = sphi 0, %s28
    %s48 = sphi 0, %s48
    %s50 = sphi 0, %s48
    %s51 = sphi 0, %s50
    %s65 = sphi 0, %s51
    %s69 = sphi 0, %s69
    %s71 = sphi 0, %s69
    %s72 = sphi 0, %s71
    %s86 = sphi 0, %s72
    %s90 = sphi 0, %s90
    %s92 = sphi 0, %s90
    %s93 = sphi 0, %s92
    %s107 = sphi 0, %s93
    %s111 = sphi 0, %s111
    %s113 = sphi 0, %s111
    %s114 = sphi 0, %s113
    %s128 = sphi 0, %s114
    %s132 = sphi 0, %s132
    %s134 = sphi 0, %s132
    %s135 = sphi 0, %s134
    %s149 = sphi 0, %s135
    %s153 = sphi 0, %s153
    %s155 = sphi 0, %s153
    %s156 = sphi 0, %s155
    %s170 = sphi 0, %s156
    %s174 = sphi 0, %s174
    %s176 = sphi 0, %s174
    %s177 = sphi 0, %s176
    %s191 = sphi 0, %s177
    %s197 = sphi 0, %s199
    %s200 = sphi 0, %s197
    %s201 = sphi 0, %s200
    %s217 = sphi 0, %s201
  $region4: #{tpu_custom_call.1} parent=0 // loop_header_branch
    %17 = sbr.rel (%p15) target = $region8
  $region5: #{tpu_custom_call.1} parent=0 // loop_body
    %s19 = ssub.s32 %s14, 1
    %s20 = ssub.s32 %s14, 2
    %s21 = sadd.s32 %s14, 1
    %s22 = ssub.s32 %s14, %s21
    %p23 = scmp.eq.s32.totalorder %s22, 0
    %s25 = sadd.s32 %s24, 1
    %s26 = scalar_select %p23, %s24, %s25
    %p29 = pneg %p23
    %p30 = scmp.eq.s32.totalorder %s14, 1
    %p31 = por %p29, %p30
    %p32 = scmp.ne.s32.totalorder %s24, %s27
    %p33 = scmp.eq.s32.totalorder %s14, 0
    %p34 = por %p32, %p33
    %p35 = scmp.ne.s32.totalorder %s24, %s27
    %p36 = scmp.eq.s32.totalorder %s19, 1
    %p37 = por %p35, %p36
    %p38 = scmp.ne.s32.totalorder %s27, %s28
    %p39 = scmp.eq.s32.totalorder %s19, 0
    %p40 = por %p38, %p39
    %p41 = scmp.ne.s32.totalorder %s27, %s28
    %p42 = scmp.eq.s32.totalorder %s20, 1
    %p43 = por %p41, %p42
    %p45 = scmp.ne.s32.totalorder %s28, %s44
    %p46 = scmp.eq.s32.totalorder %s20, 0
    %p47 = por %p45, %p46
    %s49 = sadd.s32 %s48, 1
    %p52 = scmp.eq.s32.totalorder %s14, 1
    %p53 = scmp.ne.s32.totalorder %s48, %s50
    %p54 = scmp.eq.s32.totalorder %s14, 0
    %p55 = por %p53, %p54
    %p56 = scmp.ne.s32.totalorder %s48, %s50
    %p57 = scmp.eq.s32.totalorder %s19, 1
    %p58 = por %p56, %p57
    %p59 = scmp.ne.s32.totalorder %s50, %s51
    %p60 = scmp.eq.s32.totalorder %s19, 0
    %p61 = por %p59, %p60
    %p62 = scmp.ne.s32.totalorder %s50, %s51
    %p63 = scmp.eq.s32.totalorder %s20, 1
    %p64 = por %p62, %p63
    %p66 = scmp.ne.s32.totalorder %s51, %s65
    %p67 = scmp.eq.s32.totalorder %s20, 0
    %p68 = por %p66, %p67
    %s70 = sadd.s32 %s69, 1
    %p73 = scmp.eq.s32.totalorder %s14, 1
    %p74 = scmp.ne.s32.totalorder %s69, %s71
    %p75 = scmp.eq.s32.totalorder %s14, 0
    %p76 = por %p74, %p75
    %p77 = scmp.ne.s32.totalorder %s69, %s71
    %p78 = scmp.eq.s32.totalorder %s19, 1
    %p79 = por %p77, %p78
    %p80 = scmp.ne.s32.totalorder %s71, %s72
    %p81 = scmp.eq.s32.totalorder %s19, 0
    %p82 = por %p80, %p81
    %p83 = scmp.ne.s32.totalorder %s71, %s72
    %p84 = scmp.eq.s32.totalorder %s20, 1
    %p85 = por %p83, %p84
    %p87 = scmp.ne.s32.totalorder %s72, %s86
    %p88 = scmp.eq.s32.totalorder %s20, 0
    %p89 = por %p87, %p88
    %s91 = sadd.s32 %s90, 1
    %p94 = scmp.eq.s32.totalorder %s14, 1
    %p95 = scmp.ne.s32.totalorder %s90, %s92
    %p96 = scmp.eq.s32.totalorder %s14, 0
    %p97 = por %p95, %p96
    %p98 = scmp.ne.s32.totalorder %s90, %s92
    %p99 = scmp.eq.s32.totalorder %s19, 1
    %p100 = por %p98, %p99
    %p101 = scmp.ne.s32.totalorder %s92, %s93
    %p102 = scmp.eq.s32.totalorder %s19, 0
    %p103 = por %p101, %p102
    %p104 = scmp.ne.s32.totalorder %s92, %s93
    %p105 = scmp.eq.s32.totalorder %s20, 1
    %p106 = por %p104, %p105
    %p108 = scmp.ne.s32.totalorder %s93, %s107
    %p109 = scmp.eq.s32.totalorder %s20, 0
    %p110 = por %p108, %p109
    %s112 = sadd.s32 %s111, 1
    %p115 = scmp.eq.s32.totalorder %s14, 1
    %p116 = scmp.ne.s32.totalorder %s111, %s113
    %p117 = scmp.eq.s32.totalorder %s14, 0
    %p118 = por %p116, %p117
    %p119 = scmp.ne.s32.totalorder %s111, %s113
    %p120 = scmp.eq.s32.totalorder %s19, 1
    %p121 = por %p119, %p120
    %p122 = scmp.ne.s32.totalorder %s113, %s114
    %p123 = scmp.eq.s32.totalorder %s19, 0
    %p124 = por %p122, %p123
    %p125 = scmp.ne.s32.totalorder %s113, %s114
    %p126 = scmp.eq.s32.totalorder %s20, 1
    %p127 = por %p125, %p126
    %p129 = scmp.ne.s32.totalorder %s114, %s128
    %p130 = scmp.eq.s32.totalorder %s20, 0
    %p131 = por %p129, %p130
    %s133 = sadd.s32 %s132, 1
    %p136 = scmp.eq.s32.totalorder %s14, 1
    %p137 = scmp.ne.s32.totalorder %s132, %s134
    %p138 = scmp.eq.s32.totalorder %s14, 0
    %p139 = por %p137, %p138
    %p140 = scmp.ne.s32.totalorder %s132, %s134
    %p141 = scmp.eq.s32.totalorder %s19, 1
    %p142 = por %p140, %p141
    %p143 = scmp.ne.s32.totalorder %s134, %s135
    %p144 = scmp.eq.s32.totalorder %s19, 0
    %p145 = por %p143, %p144
    %p146 = scmp.ne.s32.totalorder %s134, %s135
    %p147 = scmp.eq.s32.totalorder %s20, 1
    %p148 = por %p146, %p147
    %p150 = scmp.ne.s32.totalorder %s135, %s149
    %p151 = scmp.eq.s32.totalorder %s20, 0
    %p152 = por %p150, %p151
    %s154 = sadd.s32 %s153, 1
    %p157 = scmp.eq.s32.totalorder %s14, 1
    %p158 = scmp.ne.s32.totalorder %s153, %s155
    %p159 = scmp.eq.s32.totalorder %s14, 0
    %p160 = por %p158, %p159
    %p161 = scmp.ne.s32.totalorder %s153, %s155
    %p162 = scmp.eq.s32.totalorder %s19, 1
    %p163 = por %p161, %p162
    %p164 = scmp.ne.s32.totalorder %s155, %s156
    %p165 = scmp.eq.s32.totalorder %s19, 0
    %p166 = por %p164, %p165
    %p167 = scmp.ne.s32.totalorder %s155, %s156
    %p168 = scmp.eq.s32.totalorder %s20, 1
    %p169 = por %p167, %p168
    %p171 = scmp.ne.s32.totalorder %s156, %s170
    %p172 = scmp.eq.s32.totalorder %s20, 0
    %p173 = por %p171, %p172
    %s175 = sadd.s32 %s174, 1
    %p178 = scmp.eq.s32.totalorder %s14, 1
    %p179 = scmp.ne.s32.totalorder %s174, %s176
    %p180 = scmp.eq.s32.totalorder %s14, 0
    %p181 = por %p179, %p180
    %p182 = scmp.ne.s32.totalorder %s174, %s176
    %p183 = scmp.eq.s32.totalorder %s19, 1
    %p184 = por %p182, %p183
    %p185 = scmp.ne.s32.totalorder %s176, %s177
    %p186 = scmp.eq.s32.totalorder %s19, 0
    %p187 = por %p185, %p186
    %p188 = scmp.ne.s32.totalorder %s176, %s177
    %p189 = scmp.eq.s32.totalorder %s20, 1
    %p190 = por %p188, %p189
    %p192 = scmp.ne.s32.totalorder %s177, %s191
    %p193 = scmp.eq.s32.totalorder %s20, 0
    %p194 = por %p192, %p193
    %s195 = ssub.s32 %s14, %s21
    %p196 = scmp.eq.s32.totalorder %s195, 0
    %s198 = sadd.s32 %s197, 1
    %s199 = scalar_select %p196, %s197, %s198
    %p202 = pneg %p196
    %p203 = scmp.eq.s32.totalorder %s14, 1
    %p204 = por %p202, %p203
    %p205 = scmp.ne.s32.totalorder %s197, %s200
    %p206 = scmp.eq.s32.totalorder %s14, 0
    %p207 = por %p205, %p206
    %p208 = scmp.ne.s32.totalorder %s197, %s200
    %p209 = scmp.eq.s32.totalorder %s19, 1
    %p210 = por %p208, %p209
    %p211 = scmp.ne.s32.totalorder %s200, %s201
    %p212 = scmp.eq.s32.totalorder %s19, 0
    %p213 = por %p211, %p212
    %p214 = scmp.ne.s32.totalorder %s200, %s201
    %p215 = scmp.eq.s32.totalorder %s20, 1
    %p216 = por %p214, %p215
    %p218 = scmp.ne.s32.totalorder %s201, %s217
    %p219 = scmp.eq.s32.totalorder %s20, 0
    %p220 = por %p218, %p219
    %p221 = scmp.le.s32.totalorder 1, %s14
    %p222 = scmp.lt.s32.totalorder %s14, 3
    %p223 = pnand %p221, %p222
    %p224 = pneg %p223
    // Predicated region
    $region9: #{tpu_custom_call.1} parent=5 // pred_check
      _
    $region10: #{tpu_custom_call.1} parent=5 // pred_check_branch
      %226 = sbr.rel (%p223) target = $region12
    $region11: #{tpu_custom_call.1} parent=5 // pred_region
      %s227 = ssub.s32 %s14, 1
      // Predicated region
      $region13: #{tpu_custom_call.1} parent=11 // pred_check
        %p228 = pneg %p61
      $region14: #{tpu_custom_call.1} parent=11 // pred_check_branch
        %230 = sbr.rel (%p228) target = $region16
      $region15: #{tpu_custom_call.1} parent=11 // pred_region
        _
      $region16: #{tpu_custom_call.1} parent=11 // pred_fallthru
        _
      // Predicated region
      $region17: #{tpu_custom_call.1} parent=11 // pred_check
        %p231 = pneg %p82
      $region18: #{tpu_custom_call.1} parent=11 // pred_check_branch
        %233 = sbr.rel (%p231) target = $region20
      $region19: #{tpu_custom_call.1} parent=11 // pred_region
        _
      $region20: #{tpu_custom_call.1} parent=11 // pred_fallthru
        _
      // Predicated region
      $region21: #{tpu_custom_call.1} parent=11 // pred_check
        %p234 = pneg %p103
      $region22: #{tpu_custom_call.1} parent=11 // pred_check_branch
        %236 = sbr.rel (%p234) target = $region24
      $region23: #{tpu_custom_call.1} parent=11 // pred_region
        _
      $region24: #{tpu_custom_call.1} parent=11 // pred_fallthru
        _
      // Predicated region
      $region25: #{tpu_custom_call.1} parent=11 // pred_check
        %p237 = pneg %p124
      $region26: #{tpu_custom_call.1} parent=11 // pred_check_branch
        %239 = sbr.rel (%p237) target = $region28
      $region27: #{tpu_custom_call.1} parent=11 // pred_region
        _
      $region28: #{tpu_custom_call.1} parent=11 // pred_fallthru
        _
      // Predicated region
      $region29: #{tpu_custom_call.1} parent=11 // pred_check
        %p240 = pneg %p145
      $region30: #{tpu_custom_call.1} parent=11 // pred_check_branch
        %242 = sbr.rel (%p240) target = $region32
      $region31: #{tpu_custom_call.1} parent=11 // pred_region
        _
      $region32: #{tpu_custom_call.1} parent=11 // pred_fallthru
        _
      // Predicated region
      $region33: #{tpu_custom_call.1} parent=11 // pred_check
        %p243 = pneg %p166
      $region34: #{tpu_custom_call.1} parent=11 // pred_check_branch
        %245 = sbr.rel (%p243) target = $region36
      $region35: #{tpu_custom_call.1} parent=11 // pred_region
        _
      $region36: #{tpu_custom_call.1} parent=11 // pred_fallthru
        _
      // Predicated region
      $region37: #{tpu_custom_call.1} parent=11 // pred_check
        %p246 = pneg %p187
      $region38: #{tpu_custom_call.1} parent=11 // pred_check_branch
        %248 = sbr.rel (%p246) target = $region40
      $region39: #{tpu_custom_call.1} parent=11 // pred_region
        _
      $region40: #{tpu_custom_call.1} parent=11 // pred_fallthru
        _
    $region12: #{tpu_custom_call.1} parent=5 // pred_fallthru
      _
    %p249 = scmp.lt.s32.totalorder %s14, 2
    // Predicated region
    $region41: #{tpu_custom_call.1} parent=5 // pred_check
      %p250 = pneg %p249
    $region42: #{tpu_custom_call.1} parent=5 // pred_check_branch
      %252 = sbr.rel (%p250) target = $region44
    $region43: #{tpu_custom_call.1} parent=5 // pred_region
      // Predicated region
      $region45: #{tpu_custom_call.1} parent=43 // pred_check
        %p253 = pneg %p34
      $region46: #{tpu_custom_call.1} parent=43 // pred_check_branch
        %255 = sbr.rel (%p253) target = $region48
      $region47: #{tpu_custom_call.1} parent=43 // pred_region
        %p256 = scmp.lt.s32.totalorder %s14, 1
        %s257 = scalar_select %p256, %s14, 1
        %s258 = smul.addr %s257, 32
        %s259 = smul.addr %s258, 8
        %s260 = scalar_lea.vmem %s0, %s259
      $region48: #{tpu_custom_call.1} parent=43 // pred_fallthru
        _
    $region44: #{tpu_custom_call.1} parent=5 // pred_fallthru
      _
    %p261 = scmp.le.s32.totalorder 1, %s14
    %p262 = scmp.lt.s32.totalorder %s14, 3
    %p263 = pnand %p261, %p262
    %p264 = pneg %p263
    // Predicated region
    $region49: #{tpu_custom_call.1} parent=5 // pred_check
      _
    $region50: #{tpu_custom_call.1} parent=5 // pred_check_branch
      %266 = sbr.rel (%p263) target = $region52
    $region51: #{tpu_custom_call.1} parent=5 // pred_region
      %s267 = ssub.s32 %s14, 1
      %p268 = scmp.lt.s32.totalorder %s19, 1
      %s269 = scalar_select %p268, %s19, 1
      %s270 = smul.addr %s269, 32
      %s271 = smul.addr %s270, 8
      %s272 = scalar_lea.vmem %s0, %s271
      %p273 = pneg %p40
      %p274 = pneg %p37
      %p275 = pneg %p61
      %p276 = pneg %p58
      %p277 = pneg %p82
      %p278 = pneg %p79
      %p279 = pneg %p103
      %p280 = pneg %p100
      %p281 = pneg %p124
      %p282 = pneg %p121
      %p283 = pneg %p145
      %p284 = pneg %p142
      %p285 = pneg %p166
      %p286 = pneg %p163
      %p287 = pneg %p187
      %p288 = pneg %p184
      %p289 = pneg %p213
      %p290 = pneg %p210
      %p291 = scmp.lt.s32.totalorder %s19, 1
      %s292 = scalar_select %p291, %s19, 1
      %s293 = smul.addr %s292, 32
      %s294 = smul.addr %s293, 8
      %s295 = scalar_lea.vmem %s8, %s294
      %p296 = scmp.lt.s32.totalorder %s19, 1
      %s297 = scalar_select %p296, %s19, 1
      %s298 = smul.addr %s297, 32
      %s299 = smul.addr %s298, 8
      %s300 = scalar_lea.vmem %s0, %s299
      %p301 = scmp.lt.s32.totalorder %s19, 1
      %s302 = scalar_select %p301, %s19, 1
      %s303 = smul.addr %s302, 32
      %s304 = smul.addr %s303, 8
      %s305 = scalar_lea.vmem %s8, %s304
      %vm307 = vcmask 64512
      %308 = vst.msk [vmem:[#allocation2] sm:$0xff] %vm307, 0.0
      %309 = vst.msk [vmem:[#allocation2 + $0x20] sm:$0xff] %vm307, 0.0
      %310 = vst.msk [vmem:[#allocation2 + $0x40] sm:$0xff] %vm307, 0.0
      %311 = vst.msk [vmem:[#allocation2 + $0x60] sm:$0xff] %vm307, 0.0
      %312 = vst.msk [vmem:[#allocation2 + $0x80] sm:$0xff] %vm307, 0.0
      %313 = vst.msk [vmem:[#allocation2 + $0xa0] sm:$0xff] %vm307, 0.0
      %314 = vst.msk [vmem:[#allocation2 + $0xc0] sm:$0xff] %vm307, 0.0
      %315 = vst.msk [vmem:[#allocation2 + $0xe0] sm:$0xff] %vm307, 0.0
      %316 = vst.msk [vmem:[#allocation2 + $0x100] sm:$0xff] %vm307, 0.0
      %317 = vst.msk [vmem:[#allocation2 + $0x120] sm:$0xff] %vm307, 0.0
      %318 = vst.msk [vmem:[#allocation2 + $0x140] sm:$0xff] %vm307, 0.0
      %319 = vst.msk [vmem:[#allocation2 + $0x160] sm:$0xff] %vm307, 0.0
      %320 = vst.msk [vmem:[#allocation2 + $0x180] sm:$0xff] %vm307, 0.0
      %321 = vst.msk [vmem:[#allocation2 + $0x1a0] sm:$0xff] %vm307, 0.0
      %322 = vst.msk [vmem:[#allocation2 + $0x1c0] sm:$0xff] %vm307, 0.0
      %323 = vst.msk [vmem:[#allocation2 + $0x1e0] sm:$0xff] %vm307, 0.0
      %324 = vst.msk [vmem:[#allocation2 + $0x200] sm:$0xff] %vm307, 0.0
      %325 = vst.msk [vmem:[#allocation2 + $0x220] sm:$0xff] %vm307, 0.0
      %326 = vst.msk [vmem:[#allocation2 + $0x240] sm:$0xff] %vm307, 0.0
      %327 = vst.msk [vmem:[#allocation2 + $0x260] sm:$0xff] %vm307, 0.0
      %328 = vst.msk [vmem:[#allocation2 + $0x280] sm:$0xff] %vm307, 0.0
      %329 = vst.msk [vmem:[#allocation2 + $0x2a0] sm:$0xff] %vm307, 0.0
      %330 = vst.msk [vmem:[#allocation2 + $0x18] sm:$0xff] %vm307, 0.0
      %331 = vst.msk [vmem:[#allocation2 + $0x38] sm:$0xff] %vm307, 0.0
      %332 = vst.msk [vmem:[#allocation2 + $0x58] sm:$0xff] %vm307, 0.0
      %333 = vst.msk [vmem:[#allocation2 + $0x78] sm:$0xff] %vm307, 0.0
      %334 = vst.msk [vmem:[#allocation2 + $0x98] sm:$0xff] %vm307, 0.0
      %335 = vst.msk [vmem:[#allocation2 + $0xb8] sm:$0xff] %vm307, 0.0
      %336 = vst.msk [vmem:[#allocation2 + $0xd8] sm:$0xff] %vm307, 0.0
      %337 = vst.msk [vmem:[#allocation2 + $0xf8] sm:$0xff] %vm307, 0.0
      %338 = vst.msk [vmem:[#allocation2 + $0x118] sm:$0xff] %vm307, 0.0
      %339 = vst.msk [vmem:[#allocation2 + $0x138] sm:$0xff] %vm307, 0.0
      %340 = vst.msk [vmem:[#allocation2 + $0x158] sm:$0xff] %vm307, 0.0
      %341 = vst.msk [vmem:[#allocation2 + $0x178] sm:$0xff] %vm307, 0.0
      %342 = vst.msk [vmem:[#allocation2 + $0x198] sm:$0xff] %vm307, 0.0
      %343 = vst.msk [vmem:[#allocation2 + $0x1b8] sm:$0xff] %vm307, 0.0
      %344 = vst.msk [vmem:[#allocation2 + $0x1d8] sm:$0xff] %vm307, 0.0
      %345 = vst.msk [vmem:[#allocation2 + $0x1f8] sm:$0xff] %vm307, 0.0
      %346 = vst.msk [vmem:[#allocation2 + $0x218] sm:$0xff] %vm307, 0.0
      %347 = vst.msk [vmem:[#allocation2 + $0x238] sm:$0xff] %vm307, 0.0
      %348 = vst.msk [vmem:[#allocation2 + $0x258] sm:$0xff] %vm307, 0.0
      %349 = vst.msk [vmem:[#allocation2 + $0x278] sm:$0xff] %vm307, 0.0
      %350 = vst.msk [vmem:[#allocation2 + $0x298] sm:$0xff] %vm307, 0.0
      %351 = vst.msk [vmem:[#allocation2 + $0x2b8] sm:$0xff] %vm307, 0.0
      %352 = vst.msk [vmem:[#allocation2 + $0x8] sm:$0xff] %vm307, 0.0
      %353 = vst.msk [vmem:[#allocation2 + $0x10] sm:$0xff] %vm307, 0.0
      %354 = vst.msk [vmem:[#allocation2 + $0x28] sm:$0xff] %vm307, 0.0
      %355 = vst.msk [vmem:[#allocation2 + $0x30] sm:$0xff] %vm307, 0.0
      %356 = vst.msk [vmem:[#allocation2 + $0x48] sm:$0xff] %vm307, 0.0
      %357 = vst.msk [vmem:[#allocation2 + $0x50] sm:$0xff] %vm307, 0.0
      %s358 = scalar_lea.vmem [#allocation2], 608
      %359 = vst.msk [vmem:[%s358 + $0x8] sm:$0xff] %vm307, 0.0
      %360 = vst.msk [vmem:[%s358 + $0x10] sm:$0xff] %vm307, 0.0
      %361 = vst.msk [vmem:[%s358 + $0x28] sm:$0xff] %vm307, 0.0
      %362 = vst.msk [vmem:[%s358 + $0x30] sm:$0xff] %vm307, 0.0
      %363 = vst.msk [vmem:[%s358 + $0x48] sm:$0xff] %vm307, 0.0
      %364 = vst.msk [vmem:[%s358 + $0x50] sm:$0xff] %vm307, 0.0
      %v365 = vld [vmem:[%s300] sm:$0xff]
      %v366 = vld [vmem:[%s300 + $0x8] sm:$0xff]
      %v367 = vld [vmem:[%s300 + $0x10] sm:$0xff]
      %v368 = vld [vmem:[%s300 + $0x18] sm:$0xff]
      %v369 = vld [vmem:[%s300 + $0x20] sm:$0xff]
      %v370 = vld [vmem:[%s300 + $0x28] sm:$0xff]
      %v371 = vld [vmem:[%s300 + $0x30] sm:$0xff]
      %v372 = vld [vmem:[%s300 + $0x38] sm:$0xff]
      %v373 = vld [vmem:[%s300 + $0x40] sm:$0xff]
      %v374 = vld [vmem:[%s300 + $0x48] sm:$0xff]
      %v375 = vld [vmem:[%s300 + $0x50] sm:$0xff]
      %v376 = vld [vmem:[%s300 + $0x58] sm:$0xff]
      %v377 = vld [vmem:[%s300 + $0x60] sm:$0xff]
      %v378 = vld [vmem:[%s300 + $0x68] sm:$0xff]
      %v379 = vld [vmem:[%s300 + $0x70] sm:$0xff]
      %v380 = vld [vmem:[%s300 + $0x78] sm:$0xff]
      %v381 = vld [vmem:[%s300 + $0x80] sm:$0xff]
      %v382 = vld [vmem:[%s300 + $0x88] sm:$0xff]
      %v383 = vld [vmem:[%s300 + $0x90] sm:$0xff]
      %v384 = vld [vmem:[%s300 + $0x98] sm:$0xff]
      %v385 = vld [vmem:[%s300 + $0xa0] sm:$0xff]
      %v386 = vld [vmem:[%s300 + $0xa8] sm:$0xff]
      %v387 = vld [vmem:[%s300 + $0xb0] sm:$0xff]
      %v388 = vld [vmem:[%s300 + $0xb8] sm:$0xff]
      %v389 = vld [vmem:[%s300 + $0xc0] sm:$0xff]
      %v390 = vld [vmem:[%s300 + $0xc8] sm:$0xff]
      %v391 = vld [vmem:[%s300 + $0xd0] sm:$0xff]
      %v392 = vld [vmem:[%s300 + $0xd8] sm:$0xff]
      %v393 = vld [vmem:[%s300 + $0xe0] sm:$0xff]
      %v394 = vld [vmem:[%s300 + $0xe8] sm:$0xff]
      %v395 = vld [vmem:[%s300 + $0xf0] sm:$0xff]
      %v396 = vld [vmem:[%s300 + $0xf8] sm:$0xff]
      %s397 = scalar_lea.vmem [#allocation2], 96
      %398 = vst.msk [vmem:[%s397 + $0x8] sm:$0xff] %vm307, %v365
      %399 = vst.msk [vmem:[%s397 + $0x10] sm:$0xff] %vm307, %v366
      %400 = vst.msk [vmem:[%s397 + $0x28] sm:$0xff] %vm307, %v367
      %401 = vst.msk [vmem:[%s397 + $0x30] sm:$0xff] %vm307, %v368
      %402 = vst.msk [vmem:[%s397 + $0x48] sm:$0xff] %vm307, %v369
      %403 = vst.msk [vmem:[%s397 + $0x50] sm:$0xff] %vm307, %v370
      %404 = vst.msk [vmem:[%s397 + $0x68] sm:$0xff] %vm307, %v371
      %405 = vst.msk [vmem:[%s397 + $0x70] sm:$0xff] %vm307, %v372
      %406 = vst.msk [vmem:[%s397 + $0x88] sm:$0xff] %vm307, %v373
      %407 = vst.msk [vmem:[%s397 + $0x90] sm:$0xff] %vm307, %v374
      %408 = vst.msk [vmem:[%s397 + $0xa8] sm:$0xff] %vm307, %v375
      %409 = vst.msk [vmem:[%s397 + $0xb0] sm:$0xff] %vm307, %v376
      %410 = vst.msk [vmem:[%s397 + $0xc8] sm:$0xff] %vm307, %v377
      %411 = vst.msk [vmem:[%s397 + $0xd0] sm:$0xff] %vm307, %v378
      %412 = vst.msk [vmem:[%s397 + $0xe8] sm:$0xff] %vm307, %v379
      %413 = vst.msk [vmem:[%s397 + $0xf0] sm:$0xff] %vm307, %v380
      %414 = vst.msk [vmem:[%s397 + $0x108] sm:$0xff] %vm307, %v381
      %415 = vst.msk [vmem:[%s397 + $0x110] sm:$0xff] %vm307, %v382
      %416 = vst.msk [vmem:[%s397 + $0x128] sm:$0xff] %vm307, %v383
      %417 = vst.msk [vmem:[%s397 + $0x130] sm:$0xff] %vm307, %v384
      %418 = vst.msk [vmem:[%s397 + $0x148] sm:$0xff] %vm307, %v385
      %419 = vst.msk [vmem:[%s397 + $0x150] sm:$0xff] %vm307, %v386
      %420 = vst.msk [vmem:[%s397 + $0x168] sm:$0xff] %vm307, %v387
      %421 = vst.msk [vmem:[%s397 + $0x170] sm:$0xff] %vm307, %v388
      %422 = vst.msk [vmem:[%s397 + $0x188] sm:$0xff] %vm307, %v389
      %423 = vst.msk [vmem:[%s397 + $0x190] sm:$0xff] %vm307, %v390
      %424 = vst.msk [vmem:[%s397 + $0x1a8] sm:$0xff] %vm307, %v391
      %425 = vst.msk [vmem:[%s397 + $0x1b0] sm:$0xff] %vm307, %v392
      %426 = vst.msk [vmem:[%s397 + $0x1c8] sm:$0xff] %vm307, %v393
      %427 = vst.msk [vmem:[%s397 + $0x1d0] sm:$0xff] %vm307, %v394
      %428 = vst.msk [vmem:[%s397 + $0x1e8] sm:$0xff] %vm307, %v395
      %429 = vst.msk [vmem:[%s397 + $0x1f0] sm:$0xff] %vm307, %v396
      %v430 = vld [vmem:[#allocation2] sm:$0xff]
      %v431 = vld [vmem:[#allocation2 + $0x8] sm:$0xff]
      %v432 = vld [vmem:[#allocation2 + $0x10] sm:$0xff]
      %v433 = vld [vmem:[#allocation2 + $0x18] sm:$0xff]
      %v434 = vld [vmem:[#allocation2 + $0x20] sm:$0xff]
      %v435 = vld [vmem:[#allocation2 + $0x28] sm:$0xff]
      %v436 = vld [vmem:[#allocation2 + $0x30] sm:$0xff]
      %v437 = vld [vmem:[#allocation2 + $0x38] sm:$0xff]
      %v438 = vld [vmem:[#allocation2 + $0x40] sm:$0xff]
      %v439 = vld [vmem:[#allocation2 + $0x48] sm:$0xff]
      %v440 = vld [vmem:[#allocation2 + $0x50] sm:$0xff]
      %v441 = vld [vmem:[#allocation2 + $0x58] sm:$0xff]
      %v442 = vld [vmem:[#allocation2 + $0x60] sm:$0xff]
      %v443 = vld [vmem:[#allocation2 + $0x68] sm:$0xff]
      %v444 = vld [vmem:[#allocation2 + $0x70] sm:$0xff]
      %v445 = vld [vmem:[#allocation2 + $0x78] sm:$0xff]
      %v446 = vld [vmem:[#allocation2 + $0x80] sm:$0xff]
      %v447 = vld [vmem:[#allocation2 + $0x88] sm:$0xff]
      %v448 = vld [vmem:[#allocation2 + $0x90] sm:$0xff]
      %v449 = vld [vmem:[#allocation2 + $0x98] sm:$0xff]
      %v450 = vld [vmem:[#allocation2 + $0xa0] sm:$0xff]
      %v451 = vld [vmem:[#allocation2 + $0xa8] sm:$0xff]
      %v452 = vld [vmem:[#allocation2 + $0xb0] sm:$0xff]
      %v453 = vld [vmem:[#allocation2 + $0xb8] sm:$0xff]
      %v454 = vld [vmem:[#allocation2 + $0xc0] sm:$0xff]
      %v455 = vld [vmem:[#allocation2 + $0xc8] sm:$0xff]
      %v456 = vld [vmem:[#allocation2 + $0xd0] sm:$0xff]
      %v457 = vld [vmem:[#allocation2 + $0xd8] sm:$0xff]
      %v458 = vld [vmem:[#allocation2 + $0xe0] sm:$0xff]
      %v459 = vld [vmem:[#allocation2 + $0xe8] sm:$0xff]
      %v460 = vld [vmem:[#allocation2 + $0xf0] sm:$0xff]
      %v461 = vld [vmem:[#allocation2 + $0xf8] sm:$0xff]
      %v462 = vld [vmem:[#allocation2 + $0x100] sm:$0xff]
      %v463 = vld [vmem:[#allocation2 + $0x108] sm:$0xff]
      %v464 = vld [vmem:[#allocation2 + $0x110] sm:$0xff]
      %v465 = vld [vmem:[#allocation2 + $0x118] sm:$0xff]
      %v466 = vld [vmem:[#allocation2 + $0x120] sm:$0xff]
      %v467 = vld [vmem:[#allocation2 + $0x128] sm:$0xff]
      %v468 = vld [vmem:[#allocation2 + $0x130] sm:$0xff]
      %v469 = vld [vmem:[#allocation2 + $0x138] sm:$0xff]
      %v470 = vld [vmem:[#allocation2 + $0x140] sm:$0xff]
      %v471 = vld [vmem:[#allocation2 + $0x148] sm:$0xff]
      %v472 = vld [vmem:[#allocation2 + $0x150] sm:$0xff]
      %v473 = vld [vmem:[#allocation2 + $0x158] sm:$0xff]
      %v474 = vld [vmem:[#allocation2 + $0x160] sm:$0xff]
      %v475 = vld [vmem:[#allocation2 + $0x168] sm:$0xff]
      %v476 = vld [vmem:[#allocation2 + $0x170] sm:$0xff]
      %v477 = vld [vmem:[#allocation2 + $0x178] sm:$0xff]
      %v478 = vld [vmem:[#allocation2 + $0x180] sm:$0xff]
      %v479 = vld [vmem:[#allocation2 + $0x188] sm:$0xff]
      %v480 = vld [vmem:[#allocation2 + $0x190] sm:$0xff]
      %v481 = vld [vmem:[#allocation2 + $0x198] sm:$0xff]
      %v482 = vld [vmem:[#allocation2 + $0x1a0] sm:$0xff]
      %v483 = vld [vmem:[#allocation2 + $0x1a8] sm:$0xff]
      %v484 = vld [vmem:[#allocation2 + $0x1b0] sm:$0xff]
      %v485 = vld [vmem:[#allocation2 + $0x1b8] sm:$0xff]
      %v486 = vld [vmem:[#allocation2 + $0x1c0] sm:$0xff]
      %v487 = vld [vmem:[#allocation2 + $0x1c8] sm:$0xff]
      %v488 = vld [vmem:[#allocation2 + $0x1d0] sm:$0xff]
      %v489 = vld [vmem:[#allocation2 + $0x1d8] sm:$0xff]
      %v490 = vld [vmem:[#allocation2 + $0x1e0] sm:$0xff]
      %v491 = vld [vmem:[#allocation2 + $0x1e8] sm:$0xff]
      %v492 = vld [vmem:[#allocation2 + $0x1f0] sm:$0xff]
      %v493 = vld [vmem:[#allocation2 + $0x1f8] sm:$0xff]
      %v494 = vld [vmem:[#allocation2 + $0x200] sm:$0xff]
      %v495 = vld [vmem:[#allocation2 + $0x208] sm:$0xff]
      %v496 = vld [vmem:[#allocation2 + $0x210] sm:$0xff]
      %v497 = vld [vmem:[#allocation2 + $0x218] sm:$0xff]
      %v498 = vld [vmem:[#allocation2 + $0x220] sm:$0xff]
      %v499 = vld [vmem:[#allocation2 + $0x228] sm:$0xff]
      %v500 = vld [vmem:[#allocation2 + $0x230] sm:$0xff]
      %v501 = vld [vmem:[#allocation2 + $0x238] sm:$0xff]
      %v502 = vld [vmem:[#allocation2 + $0x240] sm:$0xff]
      %v503 = vld [vmem:[#allocation2 + $0x248] sm:$0xff]
      %v504 = vld [vmem:[#allocation2 + $0x250] sm:$0xff]
      %v505 = vld [vmem:[#allocation2 + $0x258] sm:$0xff]
      %v506 = vld [vmem:[#allocation2 + $0x260] sm:$0xff]
      %v507 = vld [vmem:[#allocation2 + $0x268] sm:$0xff]
      %v508 = vld [vmem:[#allocation2 + $0x270] sm:$0xff]
      %v509 = vld [vmem:[#allocation2 + $0x278] sm:$0xff]
      %v510 = vld [vmem:[#allocation2 + $0x280] sm:$0xff]
      %v511 = vld [vmem:[#allocation2 + $0x288] sm:$0xff]
      %v512 = vld [vmem:[#allocation2 + $0x290] sm:$0xff]
      %v513 = vld [vmem:[#allocation2 + $0x298] sm:$0xff]
      %v514 = vld [vmem:[#allocation2 + $0x2a0] sm:$0xff]
      %v515 = vld [vmem:[#allocation2 + $0x2a8] sm:$0xff]
      %v516 = vld [vmem:[#allocation2 + $0x2b0] sm:$0xff]
      %v517 = vld [vmem:[#allocation2 + $0x2b8] sm:$0xff]
      %v518 = vrot.slane %v430, 5
      %v519 = vrot.slane %v434, 5
      %v520 = vrot.slane %v438, 5
      %v521 = vrot.slane %v442, 5
      %v522 = vrot.slane %v446, 5
      %v523 = vrot.slane %v450, 5
      %v524 = vrot.slane %v454, 5
      %v525 = vrot.slane %v458, 5
      %v526 = vrot.slane %v462, 5
      %v527 = vrot.slane %v466, 5
      %v528 = vrot.slane %v470, 5
      %v529 = vrot.slane %v474, 5
      %v530 = vrot.slane %v478, 5
      %v531 = vrot.slane %v482, 5
      %v532 = vrot.slane %v486, 5
      %v533 = vrot.slane %v490, 5
      %v534 = vrot.slane %v494, 5
      %v535 = vrot.slane %v498, 5
      %v536 = vrot.slane %v502, 5
      %v537 = vrot.slane %v506, 5
      %v538 = vrot.slane %v510, 5
      %v539 = vrot.slane %v514, 5
      %v540 = vrot.slane %v431, 5
      %v541 = vrot.slane %v435, 5
      %v542 = vrot.slane %v439, 5
      %v543 = vrot.slane %v443, 5
      %v544 = vrot.slane %v447, 5
      %v545 = vrot.slane %v451, 5
      %v546 = vrot.slane %v455, 5
      %v547 = vrot.slane %v459, 5
      %v548 = vrot.slane %v463, 5
      %v549 = vrot.slane %v467, 5
      %v550 = vrot.slane %v471, 5
      %v551 = vrot.slane %v475, 5
      %v552 = vrot.slane %v479, 5
      %v553 = vrot.slane %v483, 5
      %v554 = vrot.slane %v487, 5
      %v555 = vrot.slane %v491, 5
      %v556 = vrot.slane %v495, 5
      %v557 = vrot.slane %v499, 5
      %v558 = vrot.slane %v503, 5
      %v559 = vrot.slane %v507, 5
      %v560 = vrot.slane %v511, 5
      %v561 = vrot.slane %v515, 5
      %v562 = vrot.slane %v432, 5
      %v563 = vrot.slane %v436, 5
      %v564 = vrot.slane %v440, 5
      %v565 = vrot.slane %v444, 5
      %v566 = vrot.slane %v448, 5
      %v567 = vrot.slane %v452, 5
      %v568 = vrot.slane %v456, 5
      %v569 = vrot.slane %v460, 5
      %v570 = vrot.slane %v464, 5
      %v571 = vrot.slane %v468, 5
      %v572 = vrot.slane %v472, 5
      %v573 = vrot.slane %v476, 5
      %v574 = vrot.slane %v480, 5
      %v575 = vrot.slane %v484, 5
      %v576 = vrot.slane %v488, 5
      %v577 = vrot.slane %v492, 5
      %v578 = vrot.slane %v496, 5
      %v579 = vrot.slane %v500, 5
      %v580 = vrot.slane %v504, 5
      %v581 = vrot.slane %v508, 5
      %v582 = vrot.slane %v512, 5
      %v583 = vrot.slane %v516, 5
      %v584 = vlaneseq
      %v585 = vshrl.u32 %v584, 7
      %vm586 = vcmp.lt.s32.totalorder %v585, 3
      %v587 = vsel %vm586, %v540, %v562
      %v588 = vsel %vm586, %v541, %v563
      %v589 = vsel %vm586, %v542, %v564
      %v590 = vsel %vm586, %v543, %v565
      %v591 = vsel %vm586, %v544, %v566
      %v592 = vsel %vm586, %v545, %v567
      %v593 = vsel %vm586, %v546, %v568
      %v594 = vsel %vm586, %v547, %v569
      %v595 = vsel %vm586, %v548, %v570
      %v596 = vsel %vm586, %v549, %v571
      %v597 = vsel %vm586, %v550, %v572
      %v598 = vsel %vm586, %v551, %v573
      %v599 = vsel %vm586, %v552, %v574
      %v600 = vsel %vm586, %v553, %v575
      %v601 = vsel %vm586, %v554, %v576
      %v602 = vsel %vm586, %v555, %v577
      %v603 = vsel %vm586, %v556, %v578
      %v604 = vsel %vm586, %v557, %v579
      %v605 = vsel %vm586, %v558, %v580
      %v606 = vsel %vm586, %v559, %v581
      %v607 = vsel %vm586, %v560, %v582
      %v608 = vsel %vm586, %v561, %v583
      %v609 = vsel %vm586, %v518, %v540
      %v610 = vsel %vm586, %v519, %v541
      %v611 = vsel %vm586, %v520, %v542
      %v612 = vsel %vm586, %v521, %v543
      %v613 = vsel %vm586, %v522, %v544
      %v614 = vsel %vm586, %v523, %v545
      %v615 = vsel %vm586, %v524, %v546
      %v616 = vsel %vm586, %v525, %v547
      %v617 = vsel %vm586, %v526, %v548
      %v618 = vsel %vm586, %v527, %v549
      %v619 = vsel %vm586, %v528, %v550
      %v620 = vsel %vm586, %v529, %v551
      %v621 = vsel %vm586, %v530, %v552
      %v622 = vsel %vm586, %v531, %v553
      %v623 = vsel %vm586, %v532, %v554
      %v624 = vsel %vm586, %v533, %v555
      %v625 = vsel %vm586, %v534, %v556
      %v626 = vsel %vm586, %v535, %v557
      %v627 = vsel %vm586, %v536, %v558
      %v628 = vsel %vm586, %v537, %v559
      %v629 = vsel %vm586, %v538, %v560
      %v630 = vsel %vm586, %v539, %v561
      %v631 = vld [vmem:[%s1] sm:$0x1]
      %v632 = vlaneseq
      %v633 = vshrl.u32 %v632, 7
      %v634 = vsub.s32 0, %v633
      %v635 = vrot.slane %v631, %v634
      %v636 = vmul.f32 %v609, %v635
      %v637 = vmul.f32 %v587, %v635
      %v638 = vmul.f32 %v610, %v635
      %v639 = vmul.f32 %v588, %v635
      %v640 = vmul.f32 %v611, %v635
      %v641 = vmul.f32 %v589, %v635
      %v642 = vmul.f32 %v612, %v635
      %v643 = vmul.f32 %v590, %v635
      %v644 = vmul.f32 %v613, %v635
      %v645 = vmul.f32 %v591, %v635
      %v646 = vmul.f32 %v614, %v635
      %v647 = vmul.f32 %v592, %v635
      %v648 = vmul.f32 %v615, %v635
      %v649 = vmul.f32 %v593, %v635
      %v650 = vmul.f32 %v616, %v635
      %v651 = vmul.f32 %v594, %v635
      %v652 = vmul.f32 %v617, %v635
      %v653 = vmul.f32 %v595, %v635
      %v654 = vmul.f32 %v618, %v635
      %v655 = vmul.f32 %v596, %v635
      %v656 = vmul.f32 %v619, %v635
      %v657 = vmul.f32 %v597, %v635
      %v658 = vmul.f32 %v620, %v635
      %v659 = vmul.f32 %v598, %v635
      %v660 = vmul.f32 %v621, %v635
      %v661 = vmul.f32 %v599, %v635
      %v662 = vmul.f32 %v622, %v635
      %v663 = vmul.f32 %v600, %v635
      %v664 = vmul.f32 %v623, %v635
      %v665 = vmul.f32 %v601, %v635
      %v666 = vmul.f32 %v624, %v635
      %v667 = vmul.f32 %v602, %v635
      %v668 = vld [vmem:[%s1 + $0x7] sm:$0x1]
      %v669 = vlaneseq
      %v670 = vshrl.u32 %v669, 7
      %v671 = vsub.s32 0, %v670
      %v672 = vrot.slane %v668, %v671
      %v673 = vmul.f32 %v610, %v672
      %v674 = vmul.f32 %v588, %v672
      %v675 = vmul.f32 %v611, %v672
      %v676 = vmul.f32 %v589, %v672
      %v677 = vmul.f32 %v612, %v672
      %v678 = vmul.f32 %v590, %v672
      %v679 = vmul.f32 %v613, %v672
      %v680 = vmul.f32 %v591, %v672
      %v681 = vmul.f32 %v614, %v672
      %v682 = vmul.f32 %v592, %v672
      %v683 = vmul.f32 %v615, %v672
      %v684 = vmul.f32 %v593, %v672
      %v685 = vmul.f32 %v616, %v672
      %v686 = vmul.f32 %v594, %v672
      %v687 = vmul.f32 %v617, %v672
      %v688 = vmul.f32 %v595, %v672
      %v689 = vmul.f32 %v618, %v672
      %v690 = vmul.f32 %v596, %v672
      %v691 = vmul.f32 %v619, %v672
      %v692 = vmul.f32 %v597, %v672
      %v693 = vmul.f32 %v620, %v672
      %v694 = vmul.f32 %v598, %v672
      %v695 = vmul.f32 %v621, %v672
      %v696 = vmul.f32 %v599, %v672
      %v697 = vmul.f32 %v622, %v672
      %v698 = vmul.f32 %v600, %v672
      %v699 = vmul.f32 %v623, %v672
      %v700 = vmul.f32 %v601, %v672
      %v701 = vmul.f32 %v624, %v672
      %v702 = vmul.f32 %v602, %v672
      %v703 = vmul.f32 %v625, %v672
      %v704 = vmul.f32 %v603, %v672
      %v705 = vadd.f32 %v636, %v673
      %v706 = vadd.f32 %v637, %v674
      %v707 = vadd.f32 %v638, %v675
      %v708 = vadd.f32 %v639, %v676
      %v709 = vadd.f32 %v640, %v677
      %v710 = vadd.f32 %v641, %v678
      %v711 = vadd.f32 %v642, %v679
      %v712 = vadd.f32 %v643, %v680
      %v713 = vadd.f32 %v644, %v681
      %v714 = vadd.f32 %v645, %v682
      %v715 = vadd.f32 %v646, %v683
      %v716 = vadd.f32 %v647, %v684
      %v717 = vadd.f32 %v648, %v685
      %v718 = vadd.f32 %v649, %v686
      %v719 = vadd.f32 %v650, %v687
      %v720 = vadd.f32 %v651, %v688
      %v721 = vadd.f32 %v652, %v689
      %v722 = vadd.f32 %v653, %v690
      %v723 = vadd.f32 %v654, %v691
      %v724 = vadd.f32 %v655, %v692
      %v725 = vadd.f32 %v656, %v693
      %v726 = vadd.f32 %v657, %v694
      %v727 = vadd.f32 %v658, %v695
      %v728 = vadd.f32 %v659, %v696
      %v729 = vadd.f32 %v660, %v697
      %v730 = vadd.f32 %v661, %v698
      %v731 = vadd.f32 %v662, %v699
      %v732 = vadd.f32 %v663, %v700
      %v733 = vadd.f32 %v664, %v701
      %v734 = vadd.f32 %v665, %v702
      %v735 = vadd.f32 %v666, %v703
      %v736 = vadd.f32 %v667, %v704
      %v737 = vld [vmem:[%s1 + $0xe] sm:$0x1]
      %v738 = vlaneseq
      %v739 = vshrl.u32 %v738, 7
      %v740 = vsub.s32 0, %v739
      %v741 = vrot.slane %v737, %v740
      %v742 = vmul.f32 %v611, %v741
      %v743 = vmul.f32 %v589, %v741
      %v744 = vmul.f32 %v612, %v741
      %v745 = vmul.f32 %v590, %v741
      %v746 = vmul.f32 %v613, %v741
      %v747 = vmul.f32 %v591, %v741
      %v748 = vmul.f32 %v614, %v741
      %v749 = vmul.f32 %v592, %v741
      %v750 = vmul.f32 %v615, %v741
      %v751 = vmul.f32 %v593, %v741
      %v752 = vmul.f32 %v616, %v741
      %v753 = vmul.f32 %v594, %v741
      %v754 = vmul.f32 %v617, %v741
      %v755 = vmul.f32 %v595, %v741
      %v756 = vmul.f32 %v618, %v741
      %v757 = vmul.f32 %v596, %v741
      %v758 = vmul.f32 %v619, %v741
      %v759 = vmul.f32 %v597, %v741
      %v760 = vmul.f32 %v620, %v741
      %v761 = vmul.f32 %v598, %v741
      %v762 = vmul.f32 %v621, %v741
      %v763 = vmul.f32 %v599, %v741
      %v764 = vmul.f32 %v622, %v741
      %v765 = vmul.f32 %v600, %v741
      %v766 = vmul.f32 %v623, %v741
      %v767 = vmul.f32 %v601, %v741
      %v768 = vmul.f32 %v624, %v741
      %v769 = vmul.f32 %v602, %v741
      %v770 = vmul.f32 %v625, %v741
      %v771 = vmul.f32 %v603, %v741
      %v772 = vmul.f32 %v626, %v741
      %v773 = vmul.f32 %v604, %v741
      %v774 = vadd.f32 %v705, %v742
      %v775 = vadd.f32 %v706, %v743
      %v776 = vadd.f32 %v707, %v744
      %v777 = vadd.f32 %v708, %v745
      %v778 = vadd.f32 %v709, %v746
      %v779 = vadd.f32 %v710, %v747
      %v780 = vadd.f32 %v711, %v748
      %v781 = vadd.f32 %v712, %v749
      %v782 = vadd.f32 %v713, %v750
      %v783 = vadd.f32 %v714, %v751
      %v784 = vadd.f32 %v715, %v752
      %v785 = vadd.f32 %v716, %v753
      %v786 = vadd.f32 %v717, %v754
      %v787 = vadd.f32 %v718, %v755
      %v788 = vadd.f32 %v719, %v756
      %v789 = vadd.f32 %v720, %v757
      %v790 = vadd.f32 %v721, %v758
      %v791 = vadd.f32 %v722, %v759
      %v792 = vadd.f32 %v723, %v760
      %v793 = vadd.f32 %v724, %v761
      %v794 = vadd.f32 %v725, %v762
      %v795 = vadd.f32 %v726, %v763
      %v796 = vadd.f32 %v727, %v764
      %v797 = vadd.f32 %v728, %v765
      %v798 = vadd.f32 %v729, %v766
      %v799 = vadd.f32 %v730, %v767
      %v800 = vadd.f32 %v731, %v768
      %v801 = vadd.f32 %v732, %v769
      %v802 = vadd.f32 %v733, %v770
      %v803 = vadd.f32 %v734, %v771
      %v804 = vadd.f32 %v735, %v772
      %v805 = vadd.f32 %v736, %v773
      %v806 = vld [vmem:[%s1 + $0x15] sm:$0x1]
      %v807 = vlaneseq
      %v808 = vshrl.u32 %v807, 7
      %v809 = vsub.s32 0, %v808
      %v810 = vrot.slane %v806, %v809
      %v811 = vmul.f32 %v612, %v810
      %v812 = vmul.f32 %v590, %v810
      %v813 = vmul.f32 %v613, %v810
      %v814 = vmul.f32 %v591, %v810
      %v815 = vmul.f32 %v614, %v810
      %v816 = vmul.f32 %v592, %v810
      %v817 = vmul.f32 %v615, %v810
      %v818 = vmul.f32 %v593, %v810
      %v819 = vmul.f32 %v616, %v810
      %v820 = vmul.f32 %v594, %v810
      %v821 = vmul.f32 %v617, %v810
      %v822 = vmul.f32 %v595, %v810
      %v823 = vmul.f32 %v618, %v810
      %v824 = vmul.f32 %v596, %v810
      %v825 = vmul.f32 %v619, %v810
      %v826 = vmul.f32 %v597, %v810
      %v827 = vmul.f32 %v620, %v810
      %v828 = vmul.f32 %v598, %v810
      %v829 = vmul.f32 %v621, %v810
      %v830 = vmul.f32 %v599, %v810
      %v831 = vmul.f32 %v622, %v810
      %v832 = vmul.f32 %v600, %v810
      %v833 = vmul.f32 %v623, %v810
      %v834 = vmul.f32 %v601, %v810
      %v835 = vmul.f32 %v624, %v810
      %v836 = vmul.f32 %v602, %v810
      %v837 = vmul.f32 %v625, %v810
      %v838 = vmul.f32 %v603, %v810
      %v839 = vmul.f32 %v626, %v810
      %v840 = vmul.f32 %v604, %v810
      %v841 = vmul.f32 %v627, %v810
      %v842 = vmul.f32 %v605, %v810
      %v843 = vadd.f32 %v774, %v811
      %v844 = vadd.f32 %v775, %v812
      %v845 = vadd.f32 %v776, %v813
      %v846 = vadd.f32 %v777, %v814
      %v847 = vadd.f32 %v778, %v815
      %v848 = vadd.f32 %v779, %v816
      %v849 = vadd.f32 %v780, %v817
      %v850 = vadd.f32 %v781, %v818
      %v851 = vadd.f32 %v782, %v819
      %v852 = vadd.f32 %v783, %v820
      %v853 = vadd.f32 %v784, %v821
      %v854 = vadd.f32 %v785, %v822
      %v855 = vadd.f32 %v786, %v823
      %v856 = vadd.f32 %v787, %v824
      %v857 = vadd.f32 %v788, %v825
      %v858 = vadd.f32 %v789, %v826
      %v859 = vadd.f32 %v790, %v827
      %v860 = vadd.f32 %v791, %v828
      %v861 = vadd.f32 %v792, %v829
      %v862 = vadd.f32 %v793, %v830
      %v863 = vadd.f32 %v794, %v831
      %v864 = vadd.f32 %v795, %v832
      %v865 = vadd.f32 %v796, %v833
      %v866 = vadd.f32 %v797, %v834
      %v867 = vadd.f32 %v798, %v835
      %v868 = vadd.f32 %v799, %v836
      %v869 = vadd.f32 %v800, %v837
      %v870 = vadd.f32 %v801, %v838
      %v871 = vadd.f32 %v802, %v839
      %v872 = vadd.f32 %v803, %v840
      %v873 = vadd.f32 %v804, %v841
      %v874 = vadd.f32 %v805, %v842
      %v875 = vld [vmem:[%s1 + $0x1c] sm:$0x1]
      %v876 = vlaneseq
      %v877 = vshrl.u32 %v876, 7
      %v878 = vsub.s32 0, %v877
      %v879 = vrot.slane %v875, %v878
      %v880 = vmul.f32 %v613, %v879
      %v881 = vmul.f32 %v591, %v879
      %v882 = vmul.f32 %v614, %v879
      %v883 = vmul.f32 %v592, %v879
      %v884 = vmul.f32 %v615, %v879
      %v885 = vmul.f32 %v593, %v879
      %v886 = vmul.f32 %v616, %v879
      %v887 = vmul.f32 %v594, %v879
      %v888 = vmul.f32 %v617, %v879
      %v889 = vmul.f32 %v595, %v879
      %v890 = vmul.f32 %v618, %v879
      %v891 = vmul.f32 %v596, %v879
      %v892 = vmul.f32 %v619, %v879
      %v893 = vmul.f32 %v597, %v879
      %v894 = vmul.f32 %v620, %v879
      %v895 = vmul.f32 %v598, %v879
      %v896 = vmul.f32 %v621, %v879
      %v897 = vmul.f32 %v599, %v879
      %v898 = vmul.f32 %v622, %v879
      %v899 = vmul.f32 %v600, %v879
      %v900 = vmul.f32 %v623, %v879
      %v901 = vmul.f32 %v601, %v879
      %v902 = vmul.f32 %v624, %v879
      %v903 = vmul.f32 %v602, %v879
      %v904 = vmul.f32 %v625, %v879
      %v905 = vmul.f32 %v603, %v879
      %v906 = vmul.f32 %v626, %v879
      %v907 = vmul.f32 %v604, %v879
      %v908 = vmul.f32 %v627, %v879
      %v909 = vmul.f32 %v605, %v879
      %v910 = vmul.f32 %v628, %v879
      %v911 = vmul.f32 %v606, %v879
      %v912 = vadd.f32 %v843, %v880
      %v913 = vadd.f32 %v844, %v881
      %v914 = vadd.f32 %v845, %v882
      %v915 = vadd.f32 %v846, %v883
      %v916 = vadd.f32 %v847, %v884
      %v917 = vadd.f32 %v848, %v885
      %v918 = vadd.f32 %v849, %v886
      %v919 = vadd.f32 %v850, %v887
      %v920 = vadd.f32 %v851, %v888
      %v921 = vadd.f32 %v852, %v889
      %v922 = vadd.f32 %v853, %v890
      %v923 = vadd.f32 %v854, %v891
      %v924 = vadd.f32 %v855, %v892
      %v925 = vadd.f32 %v856, %v893
      %v926 = vadd.f32 %v857, %v894
      %v927 = vadd.f32 %v858, %v895
      %v928 = vadd.f32 %v859, %v896
      %v929 = vadd.f32 %v860, %v897
      %v930 = vadd.f32 %v861, %v898
      %v931 = vadd.f32 %v862, %v899
      %v932 = vadd.f32 %v863, %v900
      %v933 = vadd.f32 %v864, %v901
      %v934 = vadd.f32 %v865, %v902
      %v935 = vadd.f32 %v866, %v903
      %v936 = vadd.f32 %v867, %v904
      %v937 = vadd.f32 %v868, %v905
      %v938 = vadd.f32 %v869, %v906
      %v939 = vadd.f32 %v870, %v907
      %v940 = vadd.f32 %v871, %v908
      %v941 = vadd.f32 %v872, %v909
      %v942 = vadd.f32 %v873, %v910
      %v943 = vadd.f32 %v874, %v911
      %v944 = vld [vmem:[%s1 + $0x23] sm:$0x1]
      %v945 = vlaneseq
      %v946 = vshrl.u32 %v945, 7
      %v947 = vsub.s32 0, %v946
      %v948 = vrot.slane %v944, %v947
      %v949 = vmul.f32 %v614, %v948
      %v950 = vmul.f32 %v592, %v948
      %v951 = vmul.f32 %v615, %v948
      %v952 = vmul.f32 %v593, %v948
      %v953 = vmul.f32 %v616, %v948
      %v954 = vmul.f32 %v594, %v948
      %v955 = vmul.f32 %v617, %v948
      %v956 = vmul.f32 %v595, %v948
      %v957 = vmul.f32 %v618, %v948
      %v958 = vmul.f32 %v596, %v948
      %v959 = vmul.f32 %v619, %v948
      %v960 = vmul.f32 %v597, %v948
      %v961 = vmul.f32 %v620, %v948
      %v962 = vmul.f32 %v598, %v948
      %v963 = vmul.f32 %v621, %v948
      %v964 = vmul.f32 %v599, %v948
      %v965 = vmul.f32 %v622, %v948
      %v966 = vmul.f32 %v600, %v948
      %v967 = vmul.f32 %v623, %v948
      %v968 = vmul.f32 %v601, %v948
      %v969 = vmul.f32 %v624, %v948
      %v970 = vmul.f32 %v602, %v948
      %v971 = vmul.f32 %v625, %v948
      %v972 = vmul.f32 %v603, %v948
      %v973 = vmul.f32 %v626, %v948
      %v974 = vmul.f32 %v604, %v948
      %v975 = vmul.f32 %v627, %v948
      %v976 = vmul.f32 %v605, %v948
      %v977 = vmul.f32 %v628, %v948
      %v978 = vmul.f32 %v606, %v948
      %v979 = vmul.f32 %v629, %v948
      %v980 = vmul.f32 %v607, %v948
      %v981 = vadd.f32 %v912, %v949
      %v982 = vadd.f32 %v913, %v950
      %v983 = vadd.f32 %v914, %v951
      %v984 = vadd.f32 %v915, %v952
      %v985 = vadd.f32 %v916, %v953
      %v986 = vadd.f32 %v917, %v954
      %v987 = vadd.f32 %v918, %v955
      %v988 = vadd.f32 %v919, %v956
      %v989 = vadd.f32 %v920, %v957
      %v990 = vadd.f32 %v921, %v958
      %v991 = vadd.f32 %v922, %v959
      %v992 = vadd.f32 %v923, %v960
      %v993 = vadd.f32 %v924, %v961
      %v994 = vadd.f32 %v925, %v962
      %v995 = vadd.f32 %v926, %v963
      %v996 = vadd.f32 %v927, %v964
      %v997 = vadd.f32 %v928, %v965
      %v998 = vadd.f32 %v929, %v966
      %v999 = vadd.f32 %v930, %v967
      %v1000 = vadd.f32 %v931, %v968
      %v1001 = vadd.f32 %v932, %v969
      %v1002 = vadd.f32 %v933, %v970
      %v1003 = vadd.f32 %v934, %v971
      %v1004 = vadd.f32 %v935, %v972
      %v1005 = vadd.f32 %v936, %v973
      %v1006 = vadd.f32 %v937, %v974
      %v1007 = vadd.f32 %v938, %v975
      %v1008 = vadd.f32 %v939, %v976
      %v1009 = vadd.f32 %v940, %v977
      %v1010 = vadd.f32 %v941, %v978
      %v1011 = vadd.f32 %v942, %v979
      %v1012 = vadd.f32 %v943, %v980
      %v1013 = vld [vmem:[%s1 + $0x2a] sm:$0x1]
      %v1014 = vlaneseq
      %v1015 = vshrl.u32 %v1014, 7
      %v1016 = vsub.s32 0, %v1015
      %v1017 = vrot.slane %v1013, %v1016
      %v1018 = vmul.f32 %v615, %v1017
      %v1019 = vmul.f32 %v593, %v1017
      %v1020 = vmul.f32 %v616, %v1017
      %v1021 = vmul.f32 %v594, %v1017
      %v1022 = vmul.f32 %v617, %v1017
      %v1023 = vmul.f32 %v595, %v1017
      %v1024 = vmul.f32 %v618, %v1017
      %v1025 = vmul.f32 %v596, %v1017
      %v1026 = vmul.f32 %v619, %v1017
      %v1027 = vmul.f32 %v597, %v1017
      %v1028 = vmul.f32 %v620, %v1017
      %v1029 = vmul.f32 %v598, %v1017
      %v1030 = vmul.f32 %v621, %v1017
      %v1031 = vmul.f32 %v599, %v1017
      %v1032 = vmul.f32 %v622, %v1017
      %v1033 = vmul.f32 %v600, %v1017
      %v1034 = vmul.f32 %v623, %v1017
      %v1035 = vmul.f32 %v601, %v1017
      %v1036 = vmul.f32 %v624, %v1017
      %v1037 = vmul.f32 %v602, %v1017
      %v1038 = vmul.f32 %v625, %v1017
      %v1039 = vmul.f32 %v603, %v1017
      %v1040 = vmul.f32 %v626, %v1017
      %v1041 = vmul.f32 %v604, %v1017
      %v1042 = vmul.f32 %v627, %v1017
      %v1043 = vmul.f32 %v605, %v1017
      %v1044 = vmul.f32 %v628, %v1017
      %v1045 = vmul.f32 %v606, %v1017
      %v1046 = vmul.f32 %v629, %v1017
      %v1047 = vmul.f32 %v607, %v1017
      %v1048 = vmul.f32 %v630, %v1017
      %v1049 = vmul.f32 %v608, %v1017
      %v1050 = vadd.f32 %v981, %v1018
      %v1051 = vadd.f32 %v982, %v1019
      %v1052 = vadd.f32 %v983, %v1020
      %v1053 = vadd.f32 %v984, %v1021
      %v1054 = vadd.f32 %v985, %v1022
      %v1055 = vadd.f32 %v986, %v1023
      %v1056 = vadd.f32 %v987, %v1024
      %v1057 = vadd.f32 %v988, %v1025
      %v1058 = vadd.f32 %v989, %v1026
      %v1059 = vadd.f32 %v990, %v1027
      %v1060 = vadd.f32 %v991, %v1028
      %v1061 = vadd.f32 %v992, %v1029
      %v1062 = vadd.f32 %v993, %v1030
      %v1063 = vadd.f32 %v994, %v1031
      %v1064 = vadd.f32 %v995, %v1032
      %v1065 = vadd.f32 %v996, %v1033
      %v1066 = vadd.f32 %v997, %v1034
      %v1067 = vadd.f32 %v998, %v1035
      %v1068 = vadd.f32 %v999, %v1036
      %v1069 = vadd.f32 %v1000, %v1037
      %v1070 = vadd.f32 %v1001, %v1038
      %v1071 = vadd.f32 %v1002, %v1039
      %v1072 = vadd.f32 %v1003, %v1040
      %v1073 = vadd.f32 %v1004, %v1041
      %v1074 = vadd.f32 %v1005, %v1042
      %v1075 = vadd.f32 %v1006, %v1043
      %v1076 = vadd.f32 %v1007, %v1044
      %v1077 = vadd.f32 %v1008, %v1045
      %v1078 = vadd.f32 %v1009, %v1046
      %v1079 = vadd.f32 %v1010, %v1047
      %v1080 = vadd.f32 %v1011, %v1048
      %v1081 = vadd.f32 %v1012, %v1049
      %v1082 = vrot.slane %v430, 6
      %v1083 = vrot.slane %v434, 6
      %v1084 = vrot.slane %v438, 6
      %v1085 = vrot.slane %v442, 6
      %v1086 = vrot.slane %v446, 6
      %v1087 = vrot.slane %v450, 6
      %v1088 = vrot.slane %v454, 6
      %v1089 = vrot.slane %v458, 6
      %v1090 = vrot.slane %v462, 6
      %v1091 = vrot.slane %v466, 6
      %v1092 = vrot.slane %v470, 6
      %v1093 = vrot.slane %v474, 6
      %v1094 = vrot.slane %v478, 6
      %v1095 = vrot.slane %v482, 6
      %v1096 = vrot.slane %v486, 6
      %v1097 = vrot.slane %v490, 6
      %v1098 = vrot.slane %v494, 6
      %v1099 = vrot.slane %v498, 6
      %v1100 = vrot.slane %v502, 6
      %v1101 = vrot.slane %v506, 6
      %v1102 = vrot.slane %v510, 6
      %v1103 = vrot.slane %v514, 6
      %v1104 = vrot.slane %v431, 6
      %v1105 = vrot.slane %v435, 6
      %v1106 = vrot.slane %v439, 6
      %v1107 = vrot.slane %v443, 6
      %v1108 = vrot.slane %v447, 6
      %v1109 = vrot.slane %v451, 6
      %v1110 = vrot.slane %v455, 6
      %v1111 = vrot.slane %v459, 6
      %v1112 = vrot.slane %v463, 6
      %v1113 = vrot.slane %v467, 6
      %v1114 = vrot.slane %v471, 6
      %v1115 = vrot.slane %v475, 6
      %v1116 = vrot.slane %v479, 6
      %v1117 = vrot.slane %v483, 6
      %v1118 = vrot.slane %v487, 6
      %v1119 = vrot.slane %v491, 6
      %v1120 = vrot.slane %v495, 6
      %v1121 = vrot.slane %v499, 6
      %v1122 = vrot.slane %v503, 6
      %v1123 = vrot.slane %v507, 6
      %v1124 = vrot.slane %v511, 6
      %v1125 = vrot.slane %v515, 6
      %v1126 = vrot.slane %v432, 6
      %v1127 = vrot.slane %v436, 6
      %v1128 = vrot.slane %v440, 6
      %v1129 = vrot.slane %v444, 6
      %v1130 = vrot.slane %v448, 6
      %v1131 = vrot.slane %v452, 6
      %v1132 = vrot.slane %v456, 6
      %v1133 = vrot.slane %v460, 6
      %v1134 = vrot.slane %v464, 6
      %v1135 = vrot.slane %v468, 6
      %v1136 = vrot.slane %v472, 6
      %v1137 = vrot.slane %v476, 6
      %v1138 = vrot.slane %v480, 6
      %v1139 = vrot.slane %v484, 6
      %v1140 = vrot.slane %v488, 6
      %v1141 = vrot.slane %v492, 6
      %v1142 = vrot.slane %v496, 6
      %v1143 = vrot.slane %v500, 6
      %v1144 = vrot.slane %v504, 6
      %v1145 = vrot.slane %v508, 6
      %v1146 = vrot.slane %v512, 6
      %v1147 = vrot.slane %v516, 6
      %vm1148 = vcmp.lt.s32.totalorder %v585, 2
      %v1149 = vsel %vm1148, %v1104, %v1126
      %v1150 = vsel %vm1148, %v1105, %v1127
      %v1151 = vsel %vm1148, %v1106, %v1128
      %v1152 = vsel %vm1148, %v1107, %v1129
      %v1153 = vsel %vm1148, %v1108, %v1130
      %v1154 = vsel %vm1148, %v1109, %v1131
      %v1155 = vsel %vm1148, %v1110, %v1132
      %v1156 = vsel %vm1148, %v1111, %v1133
      %v1157 = vsel %vm1148, %v1112, %v1134
      %v1158 = vsel %vm1148, %v1113, %v1135
      %v1159 = vsel %vm1148, %v1114, %v1136
      %v1160 = vsel %vm1148, %v1115, %v1137
      %v1161 = vsel %vm1148, %v1116, %v1138
      %v1162 = vsel %vm1148, %v1117, %v1139
      %v1163 = vsel %vm1148, %v1118, %v1140
      %v1164 = vsel %vm1148, %v1119, %v1141
      %v1165 = vsel %vm1148, %v1120, %v1142
      %v1166 = vsel %vm1148, %v1121, %v1143
      %v1167 = vsel %vm1148, %v1122, %v1144
      %v1168 = vsel %vm1148, %v1123, %v1145
      %v1169 = vsel %vm1148, %v1124, %v1146
      %v1170 = vsel %vm1148, %v1125, %v1147
      %v1171 = vsel %vm1148, %v1082, %v1104
      %v1172 = vsel %vm1148, %v1083, %v1105
      %v1173 = vsel %vm1148, %v1084, %v1106
      %v1174 = vsel %vm1148, %v1085, %v1107
      %v1175 = vsel %vm1148, %v1086, %v1108
      %v1176 = vsel %vm1148, %v1087, %v1109
      %v1177 = vsel %vm1148, %v1088, %v1110
      %v1178 = vsel %vm1148, %v1089, %v1111
      %v1179 = vsel %vm1148, %v1090, %v1112
      %v1180 = vsel %vm1148, %v1091, %v1113
      %v1181 = vsel %vm1148, %v1092, %v1114
      %v1182 = vsel %vm1148, %v1093, %v1115
      %v1183 = vsel %vm1148, %v1094, %v1116
      %v1184 = vsel %vm1148, %v1095, %v1117
      %v1185 = vsel %vm1148, %v1096, %v1118
      %v1186 = vsel %vm1148, %v1097, %v1119
      %v1187 = vsel %vm1148, %v1098, %v1120
      %v1188 = vsel %vm1148, %v1099, %v1121
      %v1189 = vsel %vm1148, %v1100, %v1122
      %v1190 = vsel %vm1148, %v1101, %v1123
      %v1191 = vsel %vm1148, %v1102, %v1124
      %v1192 = vsel %vm1148, %v1103, %v1125
      %v1193 = vld [vmem:[%s1 + $0x1] sm:$0x1]
      %v1194 = vlaneseq
      %v1195 = vshrl.u32 %v1194, 7
      %v1196 = vsub.s32 0, %v1195
      %v1197 = vrot.slane %v1193, %v1196
      %v1198 = vmul.f32 %v1171, %v1197
      %v1199 = vmul.f32 %v1149, %v1197
      %v1200 = vmul.f32 %v1172, %v1197
      %v1201 = vmul.f32 %v1150, %v1197
      %v1202 = vmul.f32 %v1173, %v1197
      %v1203 = vmul.f32 %v1151, %v1197
      %v1204 = vmul.f32 %v1174, %v1197
      %v1205 = vmul.f32 %v1152, %v1197
      %v1206 = vmul.f32 %v1175, %v1197
      %v1207 = vmul.f32 %v1153, %v1197
      %v1208 = vmul.f32 %v1176, %v1197
      %v1209 = vmul.f32 %v1154, %v1197
      %v1210 = vmul.f32 %v1177, %v1197
      %v1211 = vmul.f32 %v1155, %v1197
      %v1212 = vmul.f32 %v1178, %v1197
      %v1213 = vmul.f32 %v1156, %v1197
      %v1214 = vmul.f32 %v1179, %v1197
      %v1215 = vmul.f32 %v1157, %v1197
      %v1216 = vmul.f32 %v1180, %v1197
      %v1217 = vmul.f32 %v1158, %v1197
      %v1218 = vmul.f32 %v1181, %v1197
      %v1219 = vmul.f32 %v1159, %v1197
      %v1220 = vmul.f32 %v1182, %v1197
      %v1221 = vmul.f32 %v1160, %v1197
      %v1222 = vmul.f32 %v1183, %v1197
      %v1223 = vmul.f32 %v1161, %v1197
      %v1224 = vmul.f32 %v1184, %v1197
      %v1225 = vmul.f32 %v1162, %v1197
      %v1226 = vmul.f32 %v1185, %v1197
      %v1227 = vmul.f32 %v1163, %v1197
      %v1228 = vmul.f32 %v1186, %v1197
      %v1229 = vmul.f32 %v1164, %v1197
      %v1230 = vld [vmem:[%s1 + $0x8] sm:$0x1]
      %v1231 = vlaneseq
      %v1232 = vshrl.u32 %v1231, 7
      %v1233 = vsub.s32 0, %v1232
      %v1234 = vrot.slane %v1230, %v1233
      %v1235 = vmul.f32 %v1172, %v1234
      %v1236 = vmul.f32 %v1150, %v1234
      %v1237 = vmul.f32 %v1173, %v1234
      %v1238 = vmul.f32 %v1151, %v1234
      %v1239 = vmul.f32 %v1174, %v1234
      %v1240 = vmul.f32 %v1152, %v1234
      %v1241 = vmul.f32 %v1175, %v1234
      %v1242 = vmul.f32 %v1153, %v1234
      %v1243 = vmul.f32 %v1176, %v1234
      %v1244 = vmul.f32 %v1154, %v1234
      %v1245 = vmul.f32 %v1177, %v1234
      %v1246 = vmul.f32 %v1155, %v1234
      %v1247 = vmul.f32 %v1178, %v1234
      %v1248 = vmul.f32 %v1156, %v1234
      %v1249 = vmul.f32 %v1179, %v1234
      %v1250 = vmul.f32 %v1157, %v1234
      %v1251 = vmul.f32 %v1180, %v1234
      %v1252 = vmul.f32 %v1158, %v1234
      %v1253 = vmul.f32 %v1181, %v1234
      %v1254 = vmul.f32 %v1159, %v1234
      %v1255 = vmul.f32 %v1182, %v1234
      %v1256 = vmul.f32 %v1160, %v1234
      %v1257 = vmul.f32 %v1183, %v1234
      %v1258 = vmul.f32 %v1161, %v1234
      %v1259 = vmul.f32 %v1184, %v1234
      %v1260 = vmul.f32 %v1162, %v1234
      %v1261 = vmul.f32 %v1185, %v1234
      %v1262 = vmul.f32 %v1163, %v1234
      %v1263 = vmul.f32 %v1186, %v1234
      %v1264 = vmul.f32 %v1164, %v1234
      %v1265 = vmul.f32 %v1187, %v1234
      %v1266 = vmul.f32 %v1165, %v1234
      %v1267 = vadd.f32 %v1198, %v1235
      %v1268 = vadd.f32 %v1199, %v1236
      %v1269 = vadd.f32 %v1200, %v1237
      %v1270 = vadd.f32 %v1201, %v1238
      %v1271 = vadd.f32 %v1202, %v1239
      %v1272 = vadd.f32 %v1203, %v1240
      %v1273 = vadd.f32 %v1204, %v1241
      %v1274 = vadd.f32 %v1205, %v1242
      %v1275 = vadd.f32 %v1206, %v1243
      %v1276 = vadd.f32 %v1207, %v1244
      %v1277 = vadd.f32 %v1208, %v1245
      %v1278 = vadd.f32 %v1209, %v1246
      %v1279 = vadd.f32 %v1210, %v1247
      %v1280 = vadd.f32 %v1211, %v1248
      %v1281 = vadd.f32 %v1212, %v1249
      %v1282 = vadd.f32 %v1213, %v1250
      %v1283 = vadd.f32 %v1214, %v1251
      %v1284 = vadd.f32 %v1215, %v1252
      %v1285 = vadd.f32 %v1216, %v1253
      %v1286 = vadd.f32 %v1217, %v1254
      %v1287 = vadd.f32 %v1218, %v1255
      %v1288 = vadd.f32 %v1219, %v1256
      %v1289 = vadd.f32 %v1220, %v1257
      %v1290 = vadd.f32 %v1221, %v1258
      %v1291 = vadd.f32 %v1222, %v1259
      %v1292 = vadd.f32 %v1223, %v1260
      %v1293 = vadd.f32 %v1224, %v1261
      %v1294 = vadd.f32 %v1225, %v1262
      %v1295 = vadd.f32 %v1226, %v1263
      %v1296 = vadd.f32 %v1227, %v1264
      %v1297 = vadd.f32 %v1228, %v1265
      %v1298 = vadd.f32 %v1229, %v1266
      %v1299 = vld [vmem:[%s1 + $0xf] sm:$0x1]
      %v1300 = vlaneseq
      %v1301 = vshrl.u32 %v1300, 7
      %v1302 = vsub.s32 0, %v1301
      %v1303 = vrot.slane %v1299, %v1302
      %v1304 = vmul.f32 %v1173, %v1303
      %v1305 = vmul.f32 %v1151, %v1303
      %v1306 = vmul.f32 %v1174, %v1303
      %v1307 = vmul.f32 %v1152, %v1303
      %v1308 = vmul.f32 %v1175, %v1303
      %v1309 = vmul.f32 %v1153, %v1303
      %v1310 = vmul.f32 %v1176, %v1303
      %v1311 = vmul.f32 %v1154, %v1303
      %v1312 = vmul.f32 %v1177, %v1303
      %v1313 = vmul.f32 %v1155, %v1303
      %v1314 = vmul.f32 %v1178, %v1303
      %v1315 = vmul.f32 %v1156, %v1303
      %v1316 = vmul.f32 %v1179, %v1303
      %v1317 = vmul.f32 %v1157, %v1303
      %v1318 = vmul.f32 %v1180, %v1303
      %v1319 = vmul.f32 %v1158, %v1303
      %v1320 = vmul.f32 %v1181, %v1303
      %v1321 = vmul.f32 %v1159, %v1303
      %v1322 = vmul.f32 %v1182, %v1303
      %v1323 = vmul.f32 %v1160, %v1303
      %v1324 = vmul.f32 %v1183, %v1303
      %v1325 = vmul.f32 %v1161, %v1303
      %v1326 = vmul.f32 %v1184, %v1303
      %v1327 = vmul.f32 %v1162, %v1303
      %v1328 = vmul.f32 %v1185, %v1303
      %v1329 = vmul.f32 %v1163, %v1303
      %v1330 = vmul.f32 %v1186, %v1303
      %v1331 = vmul.f32 %v1164, %v1303
      %v1332 = vmul.f32 %v1187, %v1303
      %v1333 = vmul.f32 %v1165, %v1303
      %v1334 = vmul.f32 %v1188, %v1303
      %v1335 = vmul.f32 %v1166, %v1303
      %v1336 = vadd.f32 %v1267, %v1304
      %v1337 = vadd.f32 %v1268, %v1305
      %v1338 = vadd.f32 %v1269, %v1306
      %v1339 = vadd.f32 %v1270, %v1307
      %v1340 = vadd.f32 %v1271, %v1308
      %v1341 = vadd.f32 %v1272, %v1309
      %v1342 = vadd.f32 %v1273, %v1310
      %v1343 = vadd.f32 %v1274, %v1311
      %v1344 = vadd.f32 %v1275, %v1312
      %v1345 = vadd.f32 %v1276, %v1313
      %v1346 = vadd.f32 %v1277, %v1314
      %v1347 = vadd.f32 %v1278, %v1315
      %v1348 = vadd.f32 %v1279, %v1316
      %v1349 = vadd.f32 %v1280, %v1317
      %v1350 = vadd.f32 %v1281, %v1318
      %v1351 = vadd.f32 %v1282, %v1319
      %v1352 = vadd.f32 %v1283, %v1320
      %v1353 = vadd.f32 %v1284, %v1321
      %v1354 = vadd.f32 %v1285, %v1322
      %v1355 = vadd.f32 %v1286, %v1323
      %v1356 = vadd.f32 %v1287, %v1324
      %v1357 = vadd.f32 %v1288, %v1325
      %v1358 = vadd.f32 %v1289, %v1326
      %v1359 = vadd.f32 %v1290, %v1327
      %v1360 = vadd.f32 %v1291, %v1328
      %v1361 = vadd.f32 %v1292, %v1329
      %v1362 = vadd.f32 %v1293, %v1330
      %v1363 = vadd.f32 %v1294, %v1331
      %v1364 = vadd.f32 %v1295, %v1332
      %v1365 = vadd.f32 %v1296, %v1333
      %v1366 = vadd.f32 %v1297, %v1334
      %v1367 = vadd.f32 %v1298, %v1335
      %v1368 = vld [vmem:[%s1 + $0x16] sm:$0x1]
      %v1369 = vlaneseq
      %v1370 = vshrl.u32 %v1369, 7
      %v1371 = vsub.s32 0, %v1370
      %v1372 = vrot.slane %v1368, %v1371
      %v1373 = vmul.f32 %v1174, %v1372
      %v1374 = vmul.f32 %v1152, %v1372
      %v1375 = vmul.f32 %v1175, %v1372
      %v1376 = vmul.f32 %v1153, %v1372
      %v1377 = vmul.f32 %v1176, %v1372
      %v1378 = vmul.f32 %v1154, %v1372
      %v1379 = vmul.f32 %v1177, %v1372
      %v1380 = vmul.f32 %v1155, %v1372
      %v1381 = vmul.f32 %v1178, %v1372
      %v1382 = vmul.f32 %v1156, %v1372
      %v1383 = vmul.f32 %v1179, %v1372
      %v1384 = vmul.f32 %v1157, %v1372
      %v1385 = vmul.f32 %v1180, %v1372
      %v1386 = vmul.f32 %v1158, %v1372
      %v1387 = vmul.f32 %v1181, %v1372
      %v1388 = vmul.f32 %v1159, %v1372
      %v1389 = vmul.f32 %v1182, %v1372
      %v1390 = vmul.f32 %v1160, %v1372
      %v1391 = vmul.f32 %v1183, %v1372
      %v1392 = vmul.f32 %v1161, %v1372
      %v1393 = vmul.f32 %v1184, %v1372
      %v1394 = vmul.f32 %v1162, %v1372
      %v1395 = vmul.f32 %v1185, %v1372
      %v1396 = vmul.f32 %v1163, %v1372
      %v1397 = vmul.f32 %v1186, %v1372
      %v1398 = vmul.f32 %v1164, %v1372
      %v1399 = vmul.f32 %v1187, %v1372
      %v1400 = vmul.f32 %v1165, %v1372
      %v1401 = vmul.f32 %v1188, %v1372
      %v1402 = vmul.f32 %v1166, %v1372
      %v1403 = vmul.f32 %v1189, %v1372
      %v1404 = vmul.f32 %v1167, %v1372
      %v1405 = vadd.f32 %v1336, %v1373
      %v1406 = vadd.f32 %v1337, %v1374
      %v1407 = vadd.f32 %v1338, %v1375
      %v1408 = vadd.f32 %v1339, %v1376
      %v1409 = vadd.f32 %v1340, %v1377
      %v1410 = vadd.f32 %v1341, %v1378
      %v1411 = vadd.f32 %v1342, %v1379
      %v1412 = vadd.f32 %v1343, %v1380
      %v1413 = vadd.f32 %v1344, %v1381
      %v1414 = vadd.f32 %v1345, %v1382
      %v1415 = vadd.f32 %v1346, %v1383
      %v1416 = vadd.f32 %v1347, %v1384
      %v1417 = vadd.f32 %v1348, %v1385
      %v1418 = vadd.f32 %v1349, %v1386
      %v1419 = vadd.f32 %v1350, %v1387
      %v1420 = vadd.f32 %v1351, %v1388
      %v1421 = vadd.f32 %v1352, %v1389
      %v1422 = vadd.f32 %v1353, %v1390
      %v1423 = vadd.f32 %v1354, %v1391
      %v1424 = vadd.f32 %v1355, %v1392
      %v1425 = vadd.f32 %v1356, %v1393
      %v1426 = vadd.f32 %v1357, %v1394
      %v1427 = vadd.f32 %v1358, %v1395
      %v1428 = vadd.f32 %v1359, %v1396
      %v1429 = vadd.f32 %v1360, %v1397
      %v1430 = vadd.f32 %v1361, %v1398
      %v1431 = vadd.f32 %v1362, %v1399
      %v1432 = vadd.f32 %v1363, %v1400
      %v1433 = vadd.f32 %v1364, %v1401
      %v1434 = vadd.f32 %v1365, %v1402
      %v1435 = vadd.f32 %v1366, %v1403
      %v1436 = vadd.f32 %v1367, %v1404
      %v1437 = vld [vmem:[%s1 + $0x1d] sm:$0x1]
      %v1438 = vlaneseq
      %v1439 = vshrl.u32 %v1438, 7
      %v1440 = vsub.s32 0, %v1439
      %v1441 = vrot.slane %v1437, %v1440
      %v1442 = vmul.f32 %v1175, %v1441
      %v1443 = vmul.f32 %v1153, %v1441
      %v1444 = vmul.f32 %v1176, %v1441
      %v1445 = vmul.f32 %v1154, %v1441
      %v1446 = vmul.f32 %v1177, %v1441
      %v1447 = vmul.f32 %v1155, %v1441
      %v1448 = vmul.f32 %v1178, %v1441
      %v1449 = vmul.f32 %v1156, %v1441
      %v1450 = vmul.f32 %v1179, %v1441
      %v1451 = vmul.f32 %v1157, %v1441
      %v1452 = vmul.f32 %v1180, %v1441
      %v1453 = vmul.f32 %v1158, %v1441
      %v1454 = vmul.f32 %v1181, %v1441
      %v1455 = vmul.f32 %v1159, %v1441
      %v1456 = vmul.f32 %v1182, %v1441
      %v1457 = vmul.f32 %v1160, %v1441
      %v1458 = vmul.f32 %v1183, %v1441
      %v1459 = vmul.f32 %v1161, %v1441
      %v1460 = vmul.f32 %v1184, %v1441
      %v1461 = vmul.f32 %v1162, %v1441
      %v1462 = vmul.f32 %v1185, %v1441
      %v1463 = vmul.f32 %v1163, %v1441
      %v1464 = vmul.f32 %v1186, %v1441
      %v1465 = vmul.f32 %v1164, %v1441
      %v1466 = vmul.f32 %v1187, %v1441
      %v1467 = vmul.f32 %v1165, %v1441
      %v1468 = vmul.f32 %v1188, %v1441
      %v1469 = vmul.f32 %v1166, %v1441
      %v1470 = vmul.f32 %v1189, %v1441
      %v1471 = vmul.f32 %v1167, %v1441
      %v1472 = vmul.f32 %v1190, %v1441
      %v1473 = vmul.f32 %v1168, %v1441
      %v1474 = vadd.f32 %v1405, %v1442
      %v1475 = vadd.f32 %v1406, %v1443
      %v1476 = vadd.f32 %v1407, %v1444
      %v1477 = vadd.f32 %v1408, %v1445
      %v1478 = vadd.f32 %v1409, %v1446
      %v1479 = vadd.f32 %v1410, %v1447
      %v1480 = vadd.f32 %v1411, %v1448
      %v1481 = vadd.f32 %v1412, %v1449
      %v1482 = vadd.f32 %v1413, %v1450
      %v1483 = vadd.f32 %v1414, %v1451
      %v1484 = vadd.f32 %v1415, %v1452
      %v1485 = vadd.f32 %v1416, %v1453
      %v1486 = vadd.f32 %v1417, %v1454
      %v1487 = vadd.f32 %v1418, %v1455
      %v1488 = vadd.f32 %v1419, %v1456
      %v1489 = vadd.f32 %v1420, %v1457
      %v1490 = vadd.f32 %v1421, %v1458
      %v1491 = vadd.f32 %v1422, %v1459
      %v1492 = vadd.f32 %v1423, %v1460
      %v1493 = vadd.f32 %v1424, %v1461
      %v1494 = vadd.f32 %v1425, %v1462
      %v1495 = vadd.f32 %v1426, %v1463
      %v1496 = vadd.f32 %v1427, %v1464
      %v1497 = vadd.f32 %v1428, %v1465
      %v1498 = vadd.f32 %v1429, %v1466
      %v1499 = vadd.f32 %v1430, %v1467
      %v1500 = vadd.f32 %v1431, %v1468
      %v1501 = vadd.f32 %v1432, %v1469
      %v1502 = vadd.f32 %v1433, %v1470
      %v1503 = vadd.f32 %v1434, %v1471
      %v1504 = vadd.f32 %v1435, %v1472
      %v1505 = vadd.f32 %v1436, %v1473
      %v1506 = vld [vmem:[%s1 + $0x24] sm:$0x1]
      %v1507 = vlaneseq
      %v1508 = vshrl.u32 %v1507, 7
      %v1509 = vsub.s32 0, %v1508
      %v1510 = vrot.slane %v1506, %v1509
      %v1511 = vmul.f32 %v1176, %v1510
      %v1512 = vmul.f32 %v1154, %v1510
      %v1513 = vmul.f32 %v1177, %v1510
      %v1514 = vmul.f32 %v1155, %v1510
      %v1515 = vmul.f32 %v1178, %v1510
      %v1516 = vmul.f32 %v1156, %v1510
      %v1517 = vmul.f32 %v1179, %v1510
      %v1518 = vmul.f32 %v1157, %v1510
      %v1519 = vmul.f32 %v1180, %v1510
      %v1520 = vmul.f32 %v1158, %v1510
      %v1521 = vmul.f32 %v1181, %v1510
      %v1522 = vmul.f32 %v1159, %v1510
      %v1523 = vmul.f32 %v1182, %v1510
      %v1524 = vmul.f32 %v1160, %v1510
      %v1525 = vmul.f32 %v1183, %v1510
      %v1526 = vmul.f32 %v1161, %v1510
      %v1527 = vmul.f32 %v1184, %v1510
      %v1528 = vmul.f32 %v1162, %v1510
      %v1529 = vmul.f32 %v1185, %v1510
      %v1530 = vmul.f32 %v1163, %v1510
      %v1531 = vmul.f32 %v1186, %v1510
      %v1532 = vmul.f32 %v1164, %v1510
      %v1533 = vmul.f32 %v1187, %v1510
      %v1534 = vmul.f32 %v1165, %v1510
      %v1535 = vmul.f32 %v1188, %v1510
      %v1536 = vmul.f32 %v1166, %v1510
      %v1537 = vmul.f32 %v1189, %v1510
      %v1538 = vmul.f32 %v1167, %v1510
      %v1539 = vmul.f32 %v1190, %v1510
      %v1540 = vmul.f32 %v1168, %v1510
      %v1541 = vmul.f32 %v1191, %v1510
      %v1542 = vmul.f32 %v1169, %v1510
      %v1543 = vadd.f32 %v1474, %v1511
      %v1544 = vadd.f32 %v1475, %v1512
      %v1545 = vadd.f32 %v1476, %v1513
      %v1546 = vadd.f32 %v1477, %v1514
      %v1547 = vadd.f32 %v1478, %v1515
      %v1548 = vadd.f32 %v1479, %v1516
      %v1549 = vadd.f32 %v1480, %v1517
      %v1550 = vadd.f32 %v1481, %v1518
      %v1551 = vadd.f32 %v1482, %v1519
      %v1552 = vadd.f32 %v1483, %v1520
      %v1553 = vadd.f32 %v1484, %v1521
      %v1554 = vadd.f32 %v1485, %v1522
      %v1555 = vadd.f32 %v1486, %v1523
      %v1556 = vadd.f32 %v1487, %v1524
      %v1557 = vadd.f32 %v1488, %v1525
      %v1558 = vadd.f32 %v1489, %v1526
      %v1559 = vadd.f32 %v1490, %v1527
      %v1560 = vadd.f32 %v1491, %v1528
      %v1561 = vadd.f32 %v1492, %v1529
      %v1562 = vadd.f32 %v1493, %v1530
      %v1563 = vadd.f32 %v1494, %v1531
      %v1564 = vadd.f32 %v1495, %v1532
      %v1565 = vadd.f32 %v1496, %v1533
      %v1566 = vadd.f32 %v1497, %v1534
      %v1567 = vadd.f32 %v1498, %v1535
      %v1568 = vadd.f32 %v1499, %v1536
      %v1569 = vadd.f32 %v1500, %v1537
      %v1570 = vadd.f32 %v1501, %v1538
      %v1571 = vadd.f32 %v1502, %v1539
      %v1572 = vadd.f32 %v1503, %v1540
      %v1573 = vadd.f32 %v1504, %v1541
      %v1574 = vadd.f32 %v1505, %v1542
      %v1575 = vld [vmem:[%s1 + $0x2b] sm:$0x1]
      %v1576 = vlaneseq
      %v1577 = vshrl.u32 %v1576, 7
      %v1578 = vsub.s32 0, %v1577
      %v1579 = vrot.slane %v1575, %v1578
      %v1580 = vmul.f32 %v1177, %v1579
      %v1581 = vmul.f32 %v1155, %v1579
      %v1582 = vmul.f32 %v1178, %v1579
      %v1583 = vmul.f32 %v1156, %v1579
      %v1584 = vmul.f32 %v1179, %v1579
      %v1585 = vmul.f32 %v1157, %v1579
      %v1586 = vmul.f32 %v1180, %v1579
      %v1587 = vmul.f32 %v1158, %v1579
      %v1588 = vmul.f32 %v1181, %v1579
      %v1589 = vmul.f32 %v1159, %v1579
      %v1590 = vmul.f32 %v1182, %v1579
      %v1591 = vmul.f32 %v1160, %v1579
      %v1592 = vmul.f32 %v1183, %v1579
      %v1593 = vmul.f32 %v1161, %v1579
      %v1594 = vmul.f32 %v1184, %v1579
      %v1595 = vmul.f32 %v1162, %v1579
      %v1596 = vmul.f32 %v1185, %v1579
      %v1597 = vmul.f32 %v1163, %v1579
      %v1598 = vmul.f32 %v1186, %v1579
      %v1599 = vmul.f32 %v1164, %v1579
      %v1600 = vmul.f32 %v1187, %v1579
      %v1601 = vmul.f32 %v1165, %v1579
      %v1602 = vmul.f32 %v1188, %v1579
      %v1603 = vmul.f32 %v1166, %v1579
      %v1604 = vmul.f32 %v1189, %v1579
      %v1605 = vmul.f32 %v1167, %v1579
      %v1606 = vmul.f32 %v1190, %v1579
      %v1607 = vmul.f32 %v1168, %v1579
      %v1608 = vmul.f32 %v1191, %v1579
      %v1609 = vmul.f32 %v1169, %v1579
      %v1610 = vmul.f32 %v1192, %v1579
      %v1611 = vmul.f32 %v1170, %v1579
      %v1612 = vadd.f32 %v1543, %v1580
      %v1613 = vadd.f32 %v1544, %v1581
      %v1614 = vadd.f32 %v1545, %v1582
      %v1615 = vadd.f32 %v1546, %v1583
      %v1616 = vadd.f32 %v1547, %v1584
      %v1617 = vadd.f32 %v1548, %v1585
      %v1618 = vadd.f32 %v1549, %v1586
      %v1619 = vadd.f32 %v1550, %v1587
      %v1620 = vadd.f32 %v1551, %v1588
      %v1621 = vadd.f32 %v1552, %v1589
      %v1622 = vadd.f32 %v1553, %v1590
      %v1623 = vadd.f32 %v1554, %v1591
      %v1624 = vadd.f32 %v1555, %v1592
      %v1625 = vadd.f32 %v1556, %v1593
      %v1626 = vadd.f32 %v1557, %v1594
      %v1627 = vadd.f32 %v1558, %v1595
      %v1628 = vadd.f32 %v1559, %v1596
      %v1629 = vadd.f32 %v1560, %v1597
      %v1630 = vadd.f32 %v1561, %v1598
      %v1631 = vadd.f32 %v1562, %v1599
      %v1632 = vadd.f32 %v1563, %v1600
      %v1633 = vadd.f32 %v1564, %v1601
      %v1634 = vadd.f32 %v1565, %v1602
      %v1635 = vadd.f32 %v1566, %v1603
      %v1636 = vadd.f32 %v1567, %v1604
      %v1637 = vadd.f32 %v1568, %v1605
      %v1638 = vadd.f32 %v1569, %v1606
      %v1639 = vadd.f32 %v1570, %v1607
      %v1640 = vadd.f32 %v1571, %v1608
      %v1641 = vadd.f32 %v1572, %v1609
      %v1642 = vadd.f32 %v1573, %v1610
      %v1643 = vadd.f32 %v1574, %v1611
      %v1644 = vadd.f32 %v1050, %v1612
      %v1645 = vadd.f32 %v1051, %v1613
      %v1646 = vadd.f32 %v1052, %v1614
      %v1647 = vadd.f32 %v1053, %v1615
      %v1648 = vadd.f32 %v1054, %v1616
      %v1649 = vadd.f32 %v1055, %v1617
      %v1650 = vadd.f32 %v1056, %v1618
      %v1651 = vadd.f32 %v1057, %v1619
      %v1652 = vadd.f32 %v1058, %v1620
      %v1653 = vadd.f32 %v1059, %v1621
      %v1654 = vadd.f32 %v1060, %v1622
      %v1655 = vadd.f32 %v1061, %v1623
      %v1656 = vadd.f32 %v1062, %v1624
      %v1657 = vadd.f32 %v1063, %v1625
      %v1658 = vadd.f32 %v1064, %v1626
      %v1659 = vadd.f32 %v1065, %v1627
      %v1660 = vadd.f32 %v1066, %v1628
      %v1661 = vadd.f32 %v1067, %v1629
      %v1662 = vadd.f32 %v1068, %v1630
      %v1663 = vadd.f32 %v1069, %v1631
      %v1664 = vadd.f32 %v1070, %v1632
      %v1665 = vadd.f32 %v1071, %v1633
      %v1666 = vadd.f32 %v1072, %v1634
      %v1667 = vadd.f32 %v1073, %v1635
      %v1668 = vadd.f32 %v1074, %v1636
      %v1669 = vadd.f32 %v1075, %v1637
      %v1670 = vadd.f32 %v1076, %v1638
      %v1671 = vadd.f32 %v1077, %v1639
      %v1672 = vadd.f32 %v1078, %v1640
      %v1673 = vadd.f32 %v1079, %v1641
      %v1674 = vadd.f32 %v1080, %v1642
      %v1675 = vadd.f32 %v1081, %v1643
      %v1676 = vrot.slane %v430, 7
      %v1677 = vrot.slane %v434, 7
      %v1678 = vrot.slane %v438, 7
      %v1679 = vrot.slane %v442, 7
      %v1680 = vrot.slane %v446, 7
      %v1681 = vrot.slane %v450, 7
      %v1682 = vrot.slane %v454, 7
      %v1683 = vrot.slane %v458, 7
      %v1684 = vrot.slane %v462, 7
      %v1685 = vrot.slane %v466, 7
      %v1686 = vrot.slane %v470, 7
      %v1687 = vrot.slane %v474, 7
      %v1688 = vrot.slane %v478, 7
      %v1689 = vrot.slane %v482, 7
      %v1690 = vrot.slane %v486, 7
      %v1691 = vrot.slane %v490, 7
      %v1692 = vrot.slane %v494, 7
      %v1693 = vrot.slane %v498, 7
      %v1694 = vrot.slane %v502, 7
      %v1695 = vrot.slane %v506, 7
      %v1696 = vrot.slane %v510, 7
      %v1697 = vrot.slane %v514, 7
      %v1698 = vrot.slane %v431, 7
      %v1699 = vrot.slane %v435, 7
      %v1700 = vrot.slane %v439, 7
      %v1701 = vrot.slane %v443, 7
      %v1702 = vrot.slane %v447, 7
      %v1703 = vrot.slane %v451, 7
      %v1704 = vrot.slane %v455, 7
      %v1705 = vrot.slane %v459, 7
      %v1706 = vrot.slane %v463, 7
      %v1707 = vrot.slane %v467, 7
      %v1708 = vrot.slane %v471, 7
      %v1709 = vrot.slane %v475, 7
      %v1710 = vrot.slane %v479, 7
      %v1711 = vrot.slane %v483, 7
      %v1712 = vrot.slane %v487, 7
      %v1713 = vrot.slane %v491, 7
      %v1714 = vrot.slane %v495, 7
      %v1715 = vrot.slane %v499, 7
      %v1716 = vrot.slane %v503, 7
      %v1717 = vrot.slane %v507, 7
      %v1718 = vrot.slane %v511, 7
      %v1719 = vrot.slane %v515, 7
      %v1720 = vrot.slane %v432, 7
      %v1721 = vrot.slane %v436, 7
      %v1722 = vrot.slane %v440, 7
      %v1723 = vrot.slane %v444, 7
      %v1724 = vrot.slane %v448, 7
      %v1725 = vrot.slane %v452, 7
      %v1726 = vrot.slane %v456, 7
      %v1727 = vrot.slane %v460, 7
      %v1728 = vrot.slane %v464, 7
      %v1729 = vrot.slane %v468, 7
      %v1730 = vrot.slane %v472, 7
      %v1731 = vrot.slane %v476, 7
      %v1732 = vrot.slane %v480, 7
      %v1733 = vrot.slane %v484, 7
      %v1734 = vrot.slane %v488, 7
      %v1735 = vrot.slane %v492, 7
      %v1736 = vrot.slane %v496, 7
      %v1737 = vrot.slane %v500, 7
      %v1738 = vrot.slane %v504, 7
      %v1739 = vrot.slane %v508, 7
      %v1740 = vrot.slane %v512, 7
      %v1741 = vrot.slane %v516, 7
      %vm1742 = vcmp.lt.s32.totalorder %v585, 1
      %v1743 = vsel %vm1742, %v1698, %v1720
      %v1744 = vsel %vm1742, %v1699, %v1721
      %v1745 = vsel %vm1742, %v1700, %v1722
      %v1746 = vsel %vm1742, %v1701, %v1723
      %v1747 = vsel %vm1742, %v1702, %v1724
      %v1748 = vsel %vm1742, %v1703, %v1725
      %v1749 = vsel %vm1742, %v1704, %v1726
      %v1750 = vsel %vm1742, %v1705, %v1727
      %v1751 = vsel %vm1742, %v1706, %v1728
      %v1752 = vsel %vm1742, %v1707, %v1729
      %v1753 = vsel %vm1742, %v1708, %v1730
      %v1754 = vsel %vm1742, %v1709, %v1731
      %v1755 = vsel %vm1742, %v1710, %v1732
      %v1756 = vsel %vm1742, %v1711, %v1733
      %v1757 = vsel %vm1742, %v1712, %v1734
      %v1758 = vsel %vm1742, %v1713, %v1735
      %v1759 = vsel %vm1742, %v1714, %v1736
      %v1760 = vsel %vm1742, %v1715, %v1737
      %v1761 = vsel %vm1742, %v1716, %v1738
      %v1762 = vsel %vm1742, %v1717, %v1739
      %v1763 = vsel %vm1742, %v1718, %v1740
      %v1764 = vsel %vm1742, %v1719, %v1741
      %v1765 = vsel %vm1742, %v1676, %v1698
      %v1766 = vsel %vm1742, %v1677, %v1699
      %v1767 = vsel %vm1742, %v1678, %v1700
      %v1768 = vsel %vm1742, %v1679, %v1701
      %v1769 = vsel %vm1742, %v1680, %v1702
      %v1770 = vsel %vm1742, %v1681, %v1703
      %v1771 = vsel %vm1742, %v1682, %v1704
      %v1772 = vsel %vm1742, %v1683, %v1705
      %v1773 = vsel %vm1742, %v1684, %v1706
      %v1774 = vsel %vm1742, %v1685, %v1707
      %v1775 = vsel %vm1742, %v1686, %v1708
      %v1776 = vsel %vm1742, %v1687, %v1709
      %v1777 = vsel %vm1742, %v1688, %v1710
      %v1778 = vsel %vm1742, %v1689, %v1711
      %v1779 = vsel %vm1742, %v1690, %v1712
      %v1780 = vsel %vm1742, %v1691, %v1713
      %v1781 = vsel %vm1742, %v1692, %v1714
      %v1782 = vsel %vm1742, %v1693, %v1715
      %v1783 = vsel %vm1742, %v1694, %v1716
      %v1784 = vsel %vm1742, %v1695, %v1717
      %v1785 = vsel %vm1742, %v1696, %v1718
      %v1786 = vsel %vm1742, %v1697, %v1719
      %v1787 = vld [vmem:[%s1 + $0x2] sm:$0x1]
      %v1788 = vlaneseq
      %v1789 = vshrl.u32 %v1788, 7
      %v1790 = vsub.s32 0, %v1789
      %v1791 = vrot.slane %v1787, %v1790
      %v1792 = vmul.f32 %v1765, %v1791
      %v1793 = vmul.f32 %v1743, %v1791
      %v1794 = vmul.f32 %v1766, %v1791
      %v1795 = vmul.f32 %v1744, %v1791
      %v1796 = vmul.f32 %v1767, %v1791
      %v1797 = vmul.f32 %v1745, %v1791
      %v1798 = vmul.f32 %v1768, %v1791
      %v1799 = vmul.f32 %v1746, %v1791
      %v1800 = vmul.f32 %v1769, %v1791
      %v1801 = vmul.f32 %v1747, %v1791
      %v1802 = vmul.f32 %v1770, %v1791
      %v1803 = vmul.f32 %v1748, %v1791
      %v1804 = vmul.f32 %v1771, %v1791
      %v1805 = vmul.f32 %v1749, %v1791
      %v1806 = vmul.f32 %v1772, %v1791
      %v1807 = vmul.f32 %v1750, %v1791
      %v1808 = vmul.f32 %v1773, %v1791
      %v1809 = vmul.f32 %v1751, %v1791
      %v1810 = vmul.f32 %v1774, %v1791
      %v1811 = vmul.f32 %v1752, %v1791
      %v1812 = vmul.f32 %v1775, %v1791
      %v1813 = vmul.f32 %v1753, %v1791
      %v1814 = vmul.f32 %v1776, %v1791
      %v1815 = vmul.f32 %v1754, %v1791
      %v1816 = vmul.f32 %v1777, %v1791
      %v1817 = vmul.f32 %v1755, %v1791
      %v1818 = vmul.f32 %v1778, %v1791
      %v1819 = vmul.f32 %v1756, %v1791
      %v1820 = vmul.f32 %v1779, %v1791
      %v1821 = vmul.f32 %v1757, %v1791
      %v1822 = vmul.f32 %v1780, %v1791
      %v1823 = vmul.f32 %v1758, %v1791
      %v1824 = vld [vmem:[%s1 + $0x9] sm:$0x1]
      %v1825 = vlaneseq
      %v1826 = vshrl.u32 %v1825, 7
      %v1827 = vsub.s32 0, %v1826
      %v1828 = vrot.slane %v1824, %v1827
      %v1829 = vmul.f32 %v1766, %v1828
      %v1830 = vmul.f32 %v1744, %v1828
      %v1831 = vmul.f32 %v1767, %v1828
      %v1832 = vmul.f32 %v1745, %v1828
      %v1833 = vmul.f32 %v1768, %v1828
      %v1834 = vmul.f32 %v1746, %v1828
      %v1835 = vmul.f32 %v1769, %v1828
      %v1836 = vmul.f32 %v1747, %v1828
      %v1837 = vmul.f32 %v1770, %v1828
      %v1838 = vmul.f32 %v1748, %v1828
      %v1839 = vmul.f32 %v1771, %v1828
      %v1840 = vmul.f32 %v1749, %v1828
      %v1841 = vmul.f32 %v1772, %v1828
      %v1842 = vmul.f32 %v1750, %v1828
      %v1843 = vmul.f32 %v1773, %v1828
      %v1844 = vmul.f32 %v1751, %v1828
      %v1845 = vmul.f32 %v1774, %v1828
      %v1846 = vmul.f32 %v1752, %v1828
      %v1847 = vmul.f32 %v1775, %v1828
      %v1848 = vmul.f32 %v1753, %v1828
      %v1849 = vmul.f32 %v1776, %v1828
      %v1850 = vmul.f32 %v1754, %v1828
      %v1851 = vmul.f32 %v1777, %v1828
      %v1852 = vmul.f32 %v1755, %v1828
      %v1853 = vmul.f32 %v1778, %v1828
      %v1854 = vmul.f32 %v1756, %v1828
      %v1855 = vmul.f32 %v1779, %v1828
      %v1856 = vmul.f32 %v1757, %v1828
      %v1857 = vmul.f32 %v1780, %v1828
      %v1858 = vmul.f32 %v1758, %v1828
      %v1859 = vmul.f32 %v1781, %v1828
      %v1860 = vmul.f32 %v1759, %v1828
      %v1861 = vadd.f32 %v1792, %v1829
      %v1862 = vadd.f32 %v1793, %v1830
      %v1863 = vadd.f32 %v1794, %v1831
      %v1864 = vadd.f32 %v1795, %v1832
      %v1865 = vadd.f32 %v1796, %v1833
      %v1866 = vadd.f32 %v1797, %v1834
      %v1867 = vadd.f32 %v1798, %v1835
      %v1868 = vadd.f32 %v1799, %v1836
      %v1869 = vadd.f32 %v1800, %v1837
      %v1870 = vadd.f32 %v1801, %v1838
      %v1871 = vadd.f32 %v1802, %v1839
      %v1872 = vadd.f32 %v1803, %v1840
      %v1873 = vadd.f32 %v1804, %v1841
      %v1874 = vadd.f32 %v1805, %v1842
      %v1875 = vadd.f32 %v1806, %v1843
      %v1876 = vadd.f32 %v1807, %v1844
      %v1877 = vadd.f32 %v1808, %v1845
      %v1878 = vadd.f32 %v1809, %v1846
      %v1879 = vadd.f32 %v1810, %v1847
      %v1880 = vadd.f32 %v1811, %v1848
      %v1881 = vadd.f32 %v1812, %v1849
      %v1882 = vadd.f32 %v1813, %v1850
      %v1883 = vadd.f32 %v1814, %v1851
      %v1884 = vadd.f32 %v1815, %v1852
      %v1885 = vadd.f32 %v1816, %v1853
      %v1886 = vadd.f32 %v1817, %v1854
      %v1887 = vadd.f32 %v1818, %v1855
      %v1888 = vadd.f32 %v1819, %v1856
      %v1889 = vadd.f32 %v1820, %v1857
      %v1890 = vadd.f32 %v1821, %v1858
      %v1891 = vadd.f32 %v1822, %v1859
      %v1892 = vadd.f32 %v1823, %v1860
      %v1893 = vld [vmem:[%s1 + $0x10] sm:$0x1]
      %v1894 = vlaneseq
      %v1895 = vshrl.u32 %v1894, 7
      %v1896 = vsub.s32 0, %v1895
      %v1897 = vrot.slane %v1893, %v1896
      %v1898 = vmul.f32 %v1767, %v1897
      %v1899 = vmul.f32 %v1745, %v1897
      %v1900 = vmul.f32 %v1768, %v1897
      %v1901 = vmul.f32 %v1746, %v1897
      %v1902 = vmul.f32 %v1769, %v1897
      %v1903 = vmul.f32 %v1747, %v1897
      %v1904 = vmul.f32 %v1770, %v1897
      %v1905 = vmul.f32 %v1748, %v1897
      %v1906 = vmul.f32 %v1771, %v1897
      %v1907 = vmul.f32 %v1749, %v1897
      %v1908 = vmul.f32 %v1772, %v1897
      %v1909 = vmul.f32 %v1750, %v1897
      %v1910 = vmul.f32 %v1773, %v1897
      %v1911 = vmul.f32 %v1751, %v1897
      %v1912 = vmul.f32 %v1774, %v1897
      %v1913 = vmul.f32 %v1752, %v1897
      %v1914 = vmul.f32 %v1775, %v1897
      %v1915 = vmul.f32 %v1753, %v1897
      %v1916 = vmul.f32 %v1776, %v1897
      %v1917 = vmul.f32 %v1754, %v1897
      %v1918 = vmul.f32 %v1777, %v1897
      %v1919 = vmul.f32 %v1755, %v1897
      %v1920 = vmul.f32 %v1778, %v1897
      %v1921 = vmul.f32 %v1756, %v1897
      %v1922 = vmul.f32 %v1779, %v1897
      %v1923 = vmul.f32 %v1757, %v1897
      %v1924 = vmul.f32 %v1780, %v1897
      %v1925 = vmul.f32 %v1758, %v1897
      %v1926 = vmul.f32 %v1781, %v1897
      %v1927 = vmul.f32 %v1759, %v1897
      %v1928 = vmul.f32 %v1782, %v1897
      %v1929 = vmul.f32 %v1760, %v1897
      %v1930 = vadd.f32 %v1861, %v1898
      %v1931 = vadd.f32 %v1862, %v1899
      %v1932 = vadd.f32 %v1863, %v1900
      %v1933 = vadd.f32 %v1864, %v1901
      %v1934 = vadd.f32 %v1865, %v1902
      %v1935 = vadd.f32 %v1866, %v1903
      %v1936 = vadd.f32 %v1867, %v1904
      %v1937 = vadd.f32 %v1868, %v1905
      %v1938 = vadd.f32 %v1869, %v1906
      %v1939 = vadd.f32 %v1870, %v1907
      %v1940 = vadd.f32 %v1871, %v1908
      %v1941 = vadd.f32 %v1872, %v1909
      %v1942 = vadd.f32 %v1873, %v1910
      %v1943 = vadd.f32 %v1874, %v1911
      %v1944 = vadd.f32 %v1875, %v1912
      %v1945 = vadd.f32 %v1876, %v1913
      %v1946 = vadd.f32 %v1877, %v1914
      %v1947 = vadd.f32 %v1878, %v1915
      %v1948 = vadd.f32 %v1879, %v1916
      %v1949 = vadd.f32 %v1880, %v1917
      %v1950 = vadd.f32 %v1881, %v1918
      %v1951 = vadd.f32 %v1882, %v1919
      %v1952 = vadd.f32 %v1883, %v1920
      %v1953 = vadd.f32 %v1884, %v1921
      %v1954 = vadd.f32 %v1885, %v1922
      %v1955 = vadd.f32 %v1886, %v1923
      %v1956 = vadd.f32 %v1887, %v1924
      %v1957 = vadd.f32 %v1888, %v1925
      %v1958 = vadd.f32 %v1889, %v1926
      %v1959 = vadd.f32 %v1890, %v1927
      %v1960 = vadd.f32 %v1891, %v1928
      %v1961 = vadd.f32 %v1892, %v1929
      %v1962 = vld [vmem:[%s1 + $0x17] sm:$0x1]
      %v1963 = vlaneseq
      %v1964 = vshrl.u32 %v1963, 7
      %v1965 = vsub.s32 0, %v1964
      %v1966 = vrot.slane %v1962, %v1965
      %v1967 = vmul.f32 %v1768, %v1966
      %v1968 = vmul.f32 %v1746, %v1966
      %v1969 = vmul.f32 %v1769, %v1966
      %v1970 = vmul.f32 %v1747, %v1966
      %v1971 = vmul.f32 %v1770, %v1966
      %v1972 = vmul.f32 %v1748, %v1966
      %v1973 = vmul.f32 %v1771, %v1966
      %v1974 = vmul.f32 %v1749, %v1966
      %v1975 = vmul.f32 %v1772, %v1966
      %v1976 = vmul.f32 %v1750, %v1966
      %v1977 = vmul.f32 %v1773, %v1966
      %v1978 = vmul.f32 %v1751, %v1966
      %v1979 = vmul.f32 %v1774, %v1966
      %v1980 = vmul.f32 %v1752, %v1966
      %v1981 = vmul.f32 %v1775, %v1966
      %v1982 = vmul.f32 %v1753, %v1966
      %v1983 = vmul.f32 %v1776, %v1966
      %v1984 = vmul.f32 %v1754, %v1966
      %v1985 = vmul.f32 %v1777, %v1966
      %v1986 = vmul.f32 %v1755, %v1966
      %v1987 = vmul.f32 %v1778, %v1966
      %v1988 = vmul.f32 %v1756, %v1966
      %v1989 = vmul.f32 %v1779, %v1966
      %v1990 = vmul.f32 %v1757, %v1966
      %v1991 = vmul.f32 %v1780, %v1966
      %v1992 = vmul.f32 %v1758, %v1966
      %v1993 = vmul.f32 %v1781, %v1966
      %v1994 = vmul.f32 %v1759, %v1966
      %v1995 = vmul.f32 %v1782, %v1966
      %v1996 = vmul.f32 %v1760, %v1966
      %v1997 = vmul.f32 %v1783, %v1966
      %v1998 = vmul.f32 %v1761, %v1966
      %v1999 = vadd.f32 %v1930, %v1967
      %v2000 = vadd.f32 %v1931, %v1968
      %v2001 = vadd.f32 %v1932, %v1969
      %v2002 = vadd.f32 %v1933, %v1970
      %v2003 = vadd.f32 %v1934, %v1971
      %v2004 = vadd.f32 %v1935, %v1972
      %v2005 = vadd.f32 %v1936, %v1973
      %v2006 = vadd.f32 %v1937, %v1974
      %v2007 = vadd.f32 %v1938, %v1975
      %v2008 = vadd.f32 %v1939, %v1976
      %v2009 = vadd.f32 %v1940, %v1977
      %v2010 = vadd.f32 %v1941, %v1978
      %v2011 = vadd.f32 %v1942, %v1979
      %v2012 = vadd.f32 %v1943, %v1980
      %v2013 = vadd.f32 %v1944, %v1981
      %v2014 = vadd.f32 %v1945, %v1982
      %v2015 = vadd.f32 %v1946, %v1983
      %v2016 = vadd.f32 %v1947, %v1984
      %v2017 = vadd.f32 %v1948, %v1985
      %v2018 = vadd.f32 %v1949, %v1986
      %v2019 = vadd.f32 %v1950, %v1987
      %v2020 = vadd.f32 %v1951, %v1988
      %v2021 = vadd.f32 %v1952, %v1989
      %v2022 = vadd.f32 %v1953, %v1990
      %v2023 = vadd.f32 %v1954, %v1991
      %v2024 = vadd.f32 %v1955, %v1992
      %v2025 = vadd.f32 %v1956, %v1993
      %v2026 = vadd.f32 %v1957, %v1994
      %v2027 = vadd.f32 %v1958, %v1995
      %v2028 = vadd.f32 %v1959, %v1996
      %v2029 = vadd.f32 %v1960, %v1997
      %v2030 = vadd.f32 %v1961, %v1998
      %v2031 = vld [vmem:[%s1 + $0x1e] sm:$0x1]
      %v2032 = vlaneseq
      %v2033 = vshrl.u32 %v2032, 7
      %v2034 = vsub.s32 0, %v2033
      %v2035 = vrot.slane %v2031, %v2034
      %v2036 = vmul.f32 %v1769, %v2035
      %v2037 = vmul.f32 %v1747, %v2035
      %v2038 = vmul.f32 %v1770, %v2035
      %v2039 = vmul.f32 %v1748, %v2035
      %v2040 = vmul.f32 %v1771, %v2035
      %v2041 = vmul.f32 %v1749, %v2035
      %v2042 = vmul.f32 %v1772, %v2035
      %v2043 = vmul.f32 %v1750, %v2035
      %v2044 = vmul.f32 %v1773, %v2035
      %v2045 = vmul.f32 %v1751, %v2035
      %v2046 = vmul.f32 %v1774, %v2035
      %v2047 = vmul.f32 %v1752, %v2035
      %v2048 = vmul.f32 %v1775, %v2035
      %v2049 = vmul.f32 %v1753, %v2035
      %v2050 = vmul.f32 %v1776, %v2035
      %v2051 = vmul.f32 %v1754, %v2035
      %v2052 = vmul.f32 %v1777, %v2035
      %v2053 = vmul.f32 %v1755, %v2035
      %v2054 = vmul.f32 %v1778, %v2035
      %v2055 = vmul.f32 %v1756, %v2035
      %v2056 = vmul.f32 %v1779, %v2035
      %v2057 = vmul.f32 %v1757, %v2035
      %v2058 = vmul.f32 %v1780, %v2035
      %v2059 = vmul.f32 %v1758, %v2035
      %v2060 = vmul.f32 %v1781, %v2035
      %v2061 = vmul.f32 %v1759, %v2035
      %v2062 = vmul.f32 %v1782, %v2035
      %v2063 = vmul.f32 %v1760, %v2035
      %v2064 = vmul.f32 %v1783, %v2035
      %v2065 = vmul.f32 %v1761, %v2035
      %v2066 = vmul.f32 %v1784, %v2035
      %v2067 = vmul.f32 %v1762, %v2035
      %v2068 = vadd.f32 %v1999, %v2036
      %v2069 = vadd.f32 %v2000, %v2037
      %v2070 = vadd.f32 %v2001, %v2038
      %v2071 = vadd.f32 %v2002, %v2039
      %v2072 = vadd.f32 %v2003, %v2040
      %v2073 = vadd.f32 %v2004, %v2041
      %v2074 = vadd.f32 %v2005, %v2042
      %v2075 = vadd.f32 %v2006, %v2043
      %v2076 = vadd.f32 %v2007, %v2044
      %v2077 = vadd.f32 %v2008, %v2045
      %v2078 = vadd.f32 %v2009, %v2046
      %v2079 = vadd.f32 %v2010, %v2047
      %v2080 = vadd.f32 %v2011, %v2048
      %v2081 = vadd.f32 %v2012, %v2049
      %v2082 = vadd.f32 %v2013, %v2050
      %v2083 = vadd.f32 %v2014, %v2051
      %v2084 = vadd.f32 %v2015, %v2052
      %v2085 = vadd.f32 %v2016, %v2053
      %v2086 = vadd.f32 %v2017, %v2054
      %v2087 = vadd.f32 %v2018, %v2055
      %v2088 = vadd.f32 %v2019, %v2056
      %v2089 = vadd.f32 %v2020, %v2057
      %v2090 = vadd.f32 %v2021, %v2058
      %v2091 = vadd.f32 %v2022, %v2059
      %v2092 = vadd.f32 %v2023, %v2060
      %v2093 = vadd.f32 %v2024, %v2061
      %v2094 = vadd.f32 %v2025, %v2062
      %v2095 = vadd.f32 %v2026, %v2063
      %v2096 = vadd.f32 %v2027, %v2064
      %v2097 = vadd.f32 %v2028, %v2065
      %v2098 = vadd.f32 %v2029, %v2066
      %v2099 = vadd.f32 %v2030, %v2067
      %v2100 = vld [vmem:[%s1 + $0x25] sm:$0x1]
      %v2101 = vlaneseq
      %v2102 = vshrl.u32 %v2101, 7
      %v2103 = vsub.s32 0, %v2102
      %v2104 = vrot.slane %v2100, %v2103
      %v2105 = vmul.f32 %v1770, %v2104
      %v2106 = vmul.f32 %v1748, %v2104
      %v2107 = vmul.f32 %v1771, %v2104
      %v2108 = vmul.f32 %v1749, %v2104
      %v2109 = vmul.f32 %v1772, %v2104
      %v2110 = vmul.f32 %v1750, %v2104
      %v2111 = vmul.f32 %v1773, %v2104
      %v2112 = vmul.f32 %v1751, %v2104
      %v2113 = vmul.f32 %v1774, %v2104
      %v2114 = vmul.f32 %v1752, %v2104
      %v2115 = vmul.f32 %v1775, %v2104
      %v2116 = vmul.f32 %v1753, %v2104
      %v2117 = vmul.f32 %v1776, %v2104
      %v2118 = vmul.f32 %v1754, %v2104
      %v2119 = vmul.f32 %v1777, %v2104
      %v2120 = vmul.f32 %v1755, %v2104
      %v2121 = vmul.f32 %v1778, %v2104
      %v2122 = vmul.f32 %v1756, %v2104
      %v2123 = vmul.f32 %v1779, %v2104
      %v2124 = vmul.f32 %v1757, %v2104
      %v2125 = vmul.f32 %v1780, %v2104
      %v2126 = vmul.f32 %v1758, %v2104
      %v2127 = vmul.f32 %v1781, %v2104
      %v2128 = vmul.f32 %v1759, %v2104
      %v2129 = vmul.f32 %v1782, %v2104
      %v2130 = vmul.f32 %v1760, %v2104
      %v2131 = vmul.f32 %v1783, %v2104
      %v2132 = vmul.f32 %v1761, %v2104
      %v2133 = vmul.f32 %v1784, %v2104
      %v2134 = vmul.f32 %v1762, %v2104
      %v2135 = vmul.f32 %v1785, %v2104
      %v2136 = vmul.f32 %v1763, %v2104
      %v2137 = vadd.f32 %v2068, %v2105
      %v2138 = vadd.f32 %v2069, %v2106
      %v2139 = vadd.f32 %v2070, %v2107
      %v2140 = vadd.f32 %v2071, %v2108
      %v2141 = vadd.f32 %v2072, %v2109
      %v2142 = vadd.f32 %v2073, %v2110
      %v2143 = vadd.f32 %v2074, %v2111
      %v2144 = vadd.f32 %v2075, %v2112
      %v2145 = vadd.f32 %v2076, %v2113
      %v2146 = vadd.f32 %v2077, %v2114
      %v2147 = vadd.f32 %v2078, %v2115
      %v2148 = vadd.f32 %v2079, %v2116
      %v2149 = vadd.f32 %v2080, %v2117
      %v2150 = vadd.f32 %v2081, %v2118
      %v2151 = vadd.f32 %v2082, %v2119
      %v2152 = vadd.f32 %v2083, %v2120
      %v2153 = vadd.f32 %v2084, %v2121
      %v2154 = vadd.f32 %v2085, %v2122
      %v2155 = vadd.f32 %v2086, %v2123
      %v2156 = vadd.f32 %v2087, %v2124
      %v2157 = vadd.f32 %v2088, %v2125
      %v2158 = vadd.f32 %v2089, %v2126
      %v2159 = vadd.f32 %v2090, %v2127
      %v2160 = vadd.f32 %v2091, %v2128
      %v2161 = vadd.f32 %v2092, %v2129
      %v2162 = vadd.f32 %v2093, %v2130
      %v2163 = vadd.f32 %v2094, %v2131
      %v2164 = vadd.f32 %v2095, %v2132
      %v2165 = vadd.f32 %v2096, %v2133
      %v2166 = vadd.f32 %v2097, %v2134
      %v2167 = vadd.f32 %v2098, %v2135
      %v2168 = vadd.f32 %v2099, %v2136
      %v2169 = vld [vmem:[%s1 + $0x2c] sm:$0x1]
      %v2170 = vlaneseq
      %v2171 = vshrl.u32 %v2170, 7
      %v2172 = vsub.s32 0, %v2171
      %v2173 = vrot.slane %v2169, %v2172
      %v2174 = vmul.f32 %v1771, %v2173
      %v2175 = vmul.f32 %v1749, %v2173
      %v2176 = vmul.f32 %v1772, %v2173
      %v2177 = vmul.f32 %v1750, %v2173
      %v2178 = vmul.f32 %v1773, %v2173
      %v2179 = vmul.f32 %v1751, %v2173
      %v2180 = vmul.f32 %v1774, %v2173
      %v2181 = vmul.f32 %v1752, %v2173
      %v2182 = vmul.f32 %v1775, %v2173
      %v2183 = vmul.f32 %v1753, %v2173
      %v2184 = vmul.f32 %v1776, %v2173
      %v2185 = vmul.f32 %v1754, %v2173
      %v2186 = vmul.f32 %v1777, %v2173
      %v2187 = vmul.f32 %v1755, %v2173
      %v2188 = vmul.f32 %v1778, %v2173
      %v2189 = vmul.f32 %v1756, %v2173
      %v2190 = vmul.f32 %v1779, %v2173
      %v2191 = vmul.f32 %v1757, %v2173
      %v2192 = vmul.f32 %v1780, %v2173
      %v2193 = vmul.f32 %v1758, %v2173
      %v2194 = vmul.f32 %v1781, %v2173
      %v2195 = vmul.f32 %v1759, %v2173
      %v2196 = vmul.f32 %v1782, %v2173
      %v2197 = vmul.f32 %v1760, %v2173
      %v2198 = vmul.f32 %v1783, %v2173
      %v2199 = vmul.f32 %v1761, %v2173
      %v2200 = vmul.f32 %v1784, %v2173
      %v2201 = vmul.f32 %v1762, %v2173
      %v2202 = vmul.f32 %v1785, %v2173
      %v2203 = vmul.f32 %v1763, %v2173
      %v2204 = vmul.f32 %v1786, %v2173
      %v2205 = vmul.f32 %v1764, %v2173
      %v2206 = vadd.f32 %v2137, %v2174
      %v2207 = vadd.f32 %v2138, %v2175
      %v2208 = vadd.f32 %v2139, %v2176
      %v2209 = vadd.f32 %v2140, %v2177
      %v2210 = vadd.f32 %v2141, %v2178
      %v2211 = vadd.f32 %v2142, %v2179
      %v2212 = vadd.f32 %v2143, %v2180
      %v2213 = vadd.f32 %v2144, %v2181
      %v2214 = vadd.f32 %v2145, %v2182
      %v2215 = vadd.f32 %v2146, %v2183
      %v2216 = vadd.f32 %v2147, %v2184
      %v2217 = vadd.f32 %v2148, %v2185
      %v2218 = vadd.f32 %v2149, %v2186
      %v2219 = vadd.f32 %v2150, %v2187
      %v2220 = vadd.f32 %v2151, %v2188
      %v2221 = vadd.f32 %v2152, %v2189
      %v2222 = vadd.f32 %v2153, %v2190
      %v2223 = vadd.f32 %v2154, %v2191
      %v2224 = vadd.f32 %v2155, %v2192
      %v2225 = vadd.f32 %v2156, %v2193
      %v2226 = vadd.f32 %v2157, %v2194
      %v2227 = vadd.f32 %v2158, %v2195
      %v2228 = vadd.f32 %v2159, %v2196
      %v2229 = vadd.f32 %v2160, %v2197
      %v2230 = vadd.f32 %v2161, %v2198
      %v2231 = vadd.f32 %v2162, %v2199
      %v2232 = vadd.f32 %v2163, %v2200
      %v2233 = vadd.f32 %v2164, %v2201
      %v2234 = vadd.f32 %v2165, %v2202
      %v2235 = vadd.f32 %v2166, %v2203
      %v2236 = vadd.f32 %v2167, %v2204
      %v2237 = vadd.f32 %v2168, %v2205
      %v2238 = vadd.f32 %v1644, %v2206
      %v2239 = vadd.f32 %v1645, %v2207
      %v2240 = vadd.f32 %v1646, %v2208
      %v2241 = vadd.f32 %v1647, %v2209
      %v2242 = vadd.f32 %v1648, %v2210
      %v2243 = vadd.f32 %v1649, %v2211
      %v2244 = vadd.f32 %v1650, %v2212
      %v2245 = vadd.f32 %v1651, %v2213
      %v2246 = vadd.f32 %v1652, %v2214
      %v2247 = vadd.f32 %v1653, %v2215
      %v2248 = vadd.f32 %v1654, %v2216
      %v2249 = vadd.f32 %v1655, %v2217
      %v2250 = vadd.f32 %v1656, %v2218
      %v2251 = vadd.f32 %v1657, %v2219
      %v2252 = vadd.f32 %v1658, %v2220
      %v2253 = vadd.f32 %v1659, %v2221
      %v2254 = vadd.f32 %v1660, %v2222
      %v2255 = vadd.f32 %v1661, %v2223
      %v2256 = vadd.f32 %v1662, %v2224
      %v2257 = vadd.f32 %v1663, %v2225
      %v2258 = vadd.f32 %v1664, %v2226
      %v2259 = vadd.f32 %v1665, %v2227
      %v2260 = vadd.f32 %v1666, %v2228
      %v2261 = vadd.f32 %v1667, %v2229
      %v2262 = vadd.f32 %v1668, %v2230
      %v2263 = vadd.f32 %v1669, %v2231
      %v2264 = vadd.f32 %v1670, %v2232
      %v2265 = vadd.f32 %v1671, %v2233
      %v2266 = vadd.f32 %v1672, %v2234
      %v2267 = vadd.f32 %v1673, %v2235
      %v2268 = vadd.f32 %v1674, %v2236
      %v2269 = vadd.f32 %v1675, %v2237
      %v2270 = vld [vmem:[%s1 + $0x3] sm:$0x1]
      %v2271 = vlaneseq
      %v2272 = vshrl.u32 %v2271, 7
      %v2273 = vsub.s32 0, %v2272
      %v2274 = vrot.slane %v2270, %v2273
      %v2275 = vmul.f32 %v431, %v2274
      %v2276 = vmul.f32 %v432, %v2274
      %v2277 = vmul.f32 %v435, %v2274
      %v2278 = vmul.f32 %v436, %v2274
      %v2279 = vmul.f32 %v439, %v2274
      %v2280 = vmul.f32 %v440, %v2274
      %v2281 = vmul.f32 %v443, %v2274
      %v2282 = vmul.f32 %v444, %v2274
      %v2283 = vmul.f32 %v447, %v2274
      %v2284 = vmul.f32 %v448, %v2274
      %v2285 = vmul.f32 %v451, %v2274
      %v2286 = vmul.f32 %v452, %v2274
      %v2287 = vmul.f32 %v455, %v2274
      %v2288 = vmul.f32 %v456, %v2274
      %v2289 = vmul.f32 %v459, %v2274
      %v2290 = vmul.f32 %v460, %v2274
      %v2291 = vmul.f32 %v463, %v2274
      %v2292 = vmul.f32 %v464, %v2274
      %v2293 = vmul.f32 %v467, %v2274
      %v2294 = vmul.f32 %v468, %v2274
      %v2295 = vmul.f32 %v471, %v2274
      %v2296 = vmul.f32 %v472, %v2274
      %v2297 = vmul.f32 %v475, %v2274
      %v2298 = vmul.f32 %v476, %v2274
      %v2299 = vmul.f32 %v479, %v2274
      %v2300 = vmul.f32 %v480, %v2274
      %v2301 = vmul.f32 %v483, %v2274
      %v2302 = vmul.f32 %v484, %v2274
      %v2303 = vmul.f32 %v487, %v2274
      %v2304 = vmul.f32 %v488, %v2274
      %v2305 = vmul.f32 %v491, %v2274
      %v2306 = vmul.f32 %v492, %v2274
      %v2307 = vld [vmem:[%s1 + $0xa] sm:$0x1]
      %v2308 = vlaneseq
      %v2309 = vshrl.u32 %v2308, 7
      %v2310 = vsub.s32 0, %v2309
      %v2311 = vrot.slane %v2307, %v2310
      %v2312 = vmul.f32 %v435, %v2311
      %v2313 = vmul.f32 %v436, %v2311
      %v2314 = vmul.f32 %v439, %v2311
      %v2315 = vmul.f32 %v440, %v2311
      %v2316 = vmul.f32 %v443, %v2311
      %v2317 = vmul.f32 %v444, %v2311
      %v2318 = vmul.f32 %v447, %v2311
      %v2319 = vmul.f32 %v448, %v2311
      %v2320 = vmul.f32 %v451, %v2311
      %v2321 = vmul.f32 %v452, %v2311
      %v2322 = vmul.f32 %v455, %v2311
      %v2323 = vmul.f32 %v456, %v2311
      %v2324 = vmul.f32 %v459, %v2311
      %v2325 = vmul.f32 %v460, %v2311
      %v2326 = vmul.f32 %v463, %v2311
      %v2327 = vmul.f32 %v464, %v2311
      %v2328 = vmul.f32 %v467, %v2311
      %v2329 = vmul.f32 %v468, %v2311
      %v2330 = vmul.f32 %v471, %v2311
      %v2331 = vmul.f32 %v472, %v2311
      %v2332 = vmul.f32 %v475, %v2311
      %v2333 = vmul.f32 %v476, %v2311
      %v2334 = vmul.f32 %v479, %v2311
      %v2335 = vmul.f32 %v480, %v2311
      %v2336 = vmul.f32 %v483, %v2311
      %v2337 = vmul.f32 %v484, %v2311
      %v2338 = vmul.f32 %v487, %v2311
      %v2339 = vmul.f32 %v488, %v2311
      %v2340 = vmul.f32 %v491, %v2311
      %v2341 = vmul.f32 %v492, %v2311
      %v2342 = vmul.f32 %v495, %v2311
      %v2343 = vmul.f32 %v496, %v2311
      %v2344 = vadd.f32 %v2275, %v2312
      %v2345 = vadd.f32 %v2276, %v2313
      %v2346 = vadd.f32 %v2277, %v2314
      %v2347 = vadd.f32 %v2278, %v2315
      %v2348 = vadd.f32 %v2279, %v2316
      %v2349 = vadd.f32 %v2280, %v2317
      %v2350 = vadd.f32 %v2281, %v2318
      %v2351 = vadd.f32 %v2282, %v2319
      %v2352 = vadd.f32 %v2283, %v2320
      %v2353 = vadd.f32 %v2284, %v2321
      %v2354 = vadd.f32 %v2285, %v2322
      %v2355 = vadd.f32 %v2286, %v2323
      %v2356 = vadd.f32 %v2287, %v2324
      %v2357 = vadd.f32 %v2288, %v2325
      %v2358 = vadd.f32 %v2289, %v2326
      %v2359 = vadd.f32 %v2290, %v2327
      %v2360 = vadd.f32 %v2291, %v2328
      %v2361 = vadd.f32 %v2292, %v2329
      %v2362 = vadd.f32 %v2293, %v2330
      %v2363 = vadd.f32 %v2294, %v2331
      %v2364 = vadd.f32 %v2295, %v2332
      %v2365 = vadd.f32 %v2296, %v2333
      %v2366 = vadd.f32 %v2297, %v2334
      %v2367 = vadd.f32 %v2298, %v2335
      %v2368 = vadd.f32 %v2299, %v2336
      %v2369 = vadd.f32 %v2300, %v2337
      %v2370 = vadd.f32 %v2301, %v2338
      %v2371 = vadd.f32 %v2302, %v2339
      %v2372 = vadd.f32 %v2303, %v2340
      %v2373 = vadd.f32 %v2304, %v2341
      %v2374 = vadd.f32 %v2305, %v2342
      %v2375 = vadd.f32 %v2306, %v2343
      %v2376 = vld [vmem:[%s1 + $0x11] sm:$0x1]
      %v2377 = vlaneseq
      %v2378 = vshrl.u32 %v2377, 7
      %v2379 = vsub.s32 0, %v2378
      %v2380 = vrot.slane %v2376, %v2379
      %v2381 = vmul.f32 %v439, %v2380
      %v2382 = vmul.f32 %v440, %v2380
      %v2383 = vmul.f32 %v443, %v2380
      %v2384 = vmul.f32 %v444, %v2380
      %v2385 = vmul.f32 %v447, %v2380
      %v2386 = vmul.f32 %v448, %v2380
      %v2387 = vmul.f32 %v451, %v2380
      %v2388 = vmul.f32 %v452, %v2380
      %v2389 = vmul.f32 %v455, %v2380
      %v2390 = vmul.f32 %v456, %v2380
      %v2391 = vmul.f32 %v459, %v2380
      %v2392 = vmul.f32 %v460, %v2380
      %v2393 = vmul.f32 %v463, %v2380
      %v2394 = vmul.f32 %v464, %v2380
      %v2395 = vmul.f32 %v467, %v2380
      %v2396 = vmul.f32 %v468, %v2380
      %v2397 = vmul.f32 %v471, %v2380
      %v2398 = vmul.f32 %v472, %v2380
      %v2399 = vmul.f32 %v475, %v2380
      %v2400 = vmul.f32 %v476, %v2380
      %v2401 = vmul.f32 %v479, %v2380
      %v2402 = vmul.f32 %v480, %v2380
      %v2403 = vmul.f32 %v483, %v2380
      %v2404 = vmul.f32 %v484, %v2380
      %v2405 = vmul.f32 %v487, %v2380
      %v2406 = vmul.f32 %v488, %v2380
      %v2407 = vmul.f32 %v491, %v2380
      %v2408 = vmul.f32 %v492, %v2380
      %v2409 = vmul.f32 %v495, %v2380
      %v2410 = vmul.f32 %v496, %v2380
      %v2411 = vmul.f32 %v499, %v2380
      %v2412 = vmul.f32 %v500, %v2380
      %v2413 = vadd.f32 %v2344, %v2381
      %v2414 = vadd.f32 %v2345, %v2382
      %v2415 = vadd.f32 %v2346, %v2383
      %v2416 = vadd.f32 %v2347, %v2384
      %v2417 = vadd.f32 %v2348, %v2385
      %v2418 = vadd.f32 %v2349, %v2386
      %v2419 = vadd.f32 %v2350, %v2387
      %v2420 = vadd.f32 %v2351, %v2388
      %v2421 = vadd.f32 %v2352, %v2389
      %v2422 = vadd.f32 %v2353, %v2390
      %v2423 = vadd.f32 %v2354, %v2391
      %v2424 = vadd.f32 %v2355, %v2392
      %v2425 = vadd.f32 %v2356, %v2393
      %v2426 = vadd.f32 %v2357, %v2394
      %v2427 = vadd.f32 %v2358, %v2395
      %v2428 = vadd.f32 %v2359, %v2396
      %v2429 = vadd.f32 %v2360, %v2397
      %v2430 = vadd.f32 %v2361, %v2398
      %v2431 = vadd.f32 %v2362, %v2399
      %v2432 = vadd.f32 %v2363, %v2400
      %v2433 = vadd.f32 %v2364, %v2401
      %v2434 = vadd.f32 %v2365, %v2402
      %v2435 = vadd.f32 %v2366, %v2403
      %v2436 = vadd.f32 %v2367, %v2404
      %v2437 = vadd.f32 %v2368, %v2405
      %v2438 = vadd.f32 %v2369, %v2406
      %v2439 = vadd.f32 %v2370, %v2407
      %v2440 = vadd.f32 %v2371, %v2408
      %v2441 = vadd.f32 %v2372, %v2409
      %v2442 = vadd.f32 %v2373, %v2410
      %v2443 = vadd.f32 %v2374, %v2411
      %v2444 = vadd.f32 %v2375, %v2412
      %v2445 = vld [vmem:[%s1 + $0x18] sm:$0x1]
      %v2446 = vlaneseq
      %v2447 = vshrl.u32 %v2446, 7
      %v2448 = vsub.s32 0, %v2447
      %v2449 = vrot.slane %v2445, %v2448
      %v2450 = vmul.f32 %v443, %v2449
      %v2451 = vmul.f32 %v444, %v2449
      %v2452 = vmul.f32 %v447, %v2449
      %v2453 = vmul.f32 %v448, %v2449
      %v2454 = vmul.f32 %v451, %v2449
      %v2455 = vmul.f32 %v452, %v2449
      %v2456 = vmul.f32 %v455, %v2449
      %v2457 = vmul.f32 %v456, %v2449
      %v2458 = vmul.f32 %v459, %v2449
      %v2459 = vmul.f32 %v460, %v2449
      %v2460 = vmul.f32 %v463, %v2449
      %v2461 = vmul.f32 %v464, %v2449
      %v2462 = vmul.f32 %v467, %v2449
      %v2463 = vmul.f32 %v468, %v2449
      %v2464 = vmul.f32 %v471, %v2449
      %v2465 = vmul.f32 %v472, %v2449
      %v2466 = vmul.f32 %v475, %v2449
      %v2467 = vmul.f32 %v476, %v2449
      %v2468 = vmul.f32 %v479, %v2449
      %v2469 = vmul.f32 %v480, %v2449
      %v2470 = vmul.f32 %v483, %v2449
      %v2471 = vmul.f32 %v484, %v2449
      %v2472 = vmul.f32 %v487, %v2449
      %v2473 = vmul.f32 %v488, %v2449
      %v2474 = vmul.f32 %v491, %v2449
      %v2475 = vmul.f32 %v492, %v2449
      %v2476 = vmul.f32 %v495, %v2449
      %v2477 = vmul.f32 %v496, %v2449
      %v2478 = vmul.f32 %v499, %v2449
      %v2479 = vmul.f32 %v500, %v2449
      %v2480 = vmul.f32 %v503, %v2449
      %v2481 = vmul.f32 %v504, %v2449
      %v2482 = vadd.f32 %v2413, %v2450
      %v2483 = vadd.f32 %v2414, %v2451
      %v2484 = vadd.f32 %v2415, %v2452
      %v2485 = vadd.f32 %v2416, %v2453
      %v2486 = vadd.f32 %v2417, %v2454
      %v2487 = vadd.f32 %v2418, %v2455
      %v2488 = vadd.f32 %v2419, %v2456
      %v2489 = vadd.f32 %v2420, %v2457
      %v2490 = vadd.f32 %v2421, %v2458
      %v2491 = vadd.f32 %v2422, %v2459
      %v2492 = vadd.f32 %v2423, %v2460
      %v2493 = vadd.f32 %v2424, %v2461
      %v2494 = vadd.f32 %v2425, %v2462
      %v2495 = vadd.f32 %v2426, %v2463
      %v2496 = vadd.f32 %v2427, %v2464
      %v2497 = vadd.f32 %v2428, %v2465
      %v2498 = vadd.f32 %v2429, %v2466
      %v2499 = vadd.f32 %v2430, %v2467
      %v2500 = vadd.f32 %v2431, %v2468
      %v2501 = vadd.f32 %v2432, %v2469
      %v2502 = vadd.f32 %v2433, %v2470
      %v2503 = vadd.f32 %v2434, %v2471
      %v2504 = vadd.f32 %v2435, %v2472
      %v2505 = vadd.f32 %v2436, %v2473
      %v2506 = vadd.f32 %v2437, %v2474
      %v2507 = vadd.f32 %v2438, %v2475
      %v2508 = vadd.f32 %v2439, %v2476
      %v2509 = vadd.f32 %v2440, %v2477
      %v2510 = vadd.f32 %v2441, %v2478
      %v2511 = vadd.f32 %v2442, %v2479
      %v2512 = vadd.f32 %v2443, %v2480
      %v2513 = vadd.f32 %v2444, %v2481
      %v2514 = vld [vmem:[%s1 + $0x1f] sm:$0x1]
      %v2515 = vlaneseq
      %v2516 = vshrl.u32 %v2515, 7
      %v2517 = vsub.s32 0, %v2516
      %v2518 = vrot.slane %v2514, %v2517
      %v2519 = vmul.f32 %v447, %v2518
      %v2520 = vmul.f32 %v448, %v2518
      %v2521 = vmul.f32 %v451, %v2518
      %v2522 = vmul.f32 %v452, %v2518
      %v2523 = vmul.f32 %v455, %v2518
      %v2524 = vmul.f32 %v456, %v2518
      %v2525 = vmul.f32 %v459, %v2518
      %v2526 = vmul.f32 %v460, %v2518
      %v2527 = vmul.f32 %v463, %v2518
      %v2528 = vmul.f32 %v464, %v2518
      %v2529 = vmul.f32 %v467, %v2518
      %v2530 = vmul.f32 %v468, %v2518
      %v2531 = vmul.f32 %v471, %v2518
      %v2532 = vmul.f32 %v472, %v2518
      %v2533 = vmul.f32 %v475, %v2518
      %v2534 = vmul.f32 %v476, %v2518
      %v2535 = vmul.f32 %v479, %v2518
      %v2536 = vmul.f32 %v480, %v2518
      %v2537 = vmul.f32 %v483, %v2518
      %v2538 = vmul.f32 %v484, %v2518
      %v2539 = vmul.f32 %v487, %v2518
      %v2540 = vmul.f32 %v488, %v2518
      %v2541 = vmul.f32 %v491, %v2518
      %v2542 = vmul.f32 %v492, %v2518
      %v2543 = vmul.f32 %v495, %v2518
      %v2544 = vmul.f32 %v496, %v2518
      %v2545 = vmul.f32 %v499, %v2518
      %v2546 = vmul.f32 %v500, %v2518
      %v2547 = vmul.f32 %v503, %v2518
      %v2548 = vmul.f32 %v504, %v2518
      %v2549 = vmul.f32 %v507, %v2518
      %v2550 = vmul.f32 %v508, %v2518
      %v2551 = vadd.f32 %v2482, %v2519
      %v2552 = vadd.f32 %v2483, %v2520
      %v2553 = vadd.f32 %v2484, %v2521
      %v2554 = vadd.f32 %v2485, %v2522
      %v2555 = vadd.f32 %v2486, %v2523
      %v2556 = vadd.f32 %v2487, %v2524
      %v2557 = vadd.f32 %v2488, %v2525
      %v2558 = vadd.f32 %v2489, %v2526
      %v2559 = vadd.f32 %v2490, %v2527
      %v2560 = vadd.f32 %v2491, %v2528
      %v2561 = vadd.f32 %v2492, %v2529
      %v2562 = vadd.f32 %v2493, %v2530
      %v2563 = vadd.f32 %v2494, %v2531
      %v2564 = vadd.f32 %v2495, %v2532
      %v2565 = vadd.f32 %v2496, %v2533
      %v2566 = vadd.f32 %v2497, %v2534
      %v2567 = vadd.f32 %v2498, %v2535
      %v2568 = vadd.f32 %v2499, %v2536
      %v2569 = vadd.f32 %v2500, %v2537
      %v2570 = vadd.f32 %v2501, %v2538
      %v2571 = vadd.f32 %v2502, %v2539
      %v2572 = vadd.f32 %v2503, %v2540
      %v2573 = vadd.f32 %v2504, %v2541
      %v2574 = vadd.f32 %v2505, %v2542
      %v2575 = vadd.f32 %v2506, %v2543
      %v2576 = vadd.f32 %v2507, %v2544
      %v2577 = vadd.f32 %v2508, %v2545
      %v2578 = vadd.f32 %v2509, %v2546
      %v2579 = vadd.f32 %v2510, %v2547
      %v2580 = vadd.f32 %v2511, %v2548
      %v2581 = vadd.f32 %v2512, %v2549
      %v2582 = vadd.f32 %v2513, %v2550
      %v2583 = vld [vmem:[%s1 + $0x26] sm:$0x1]
      %v2584 = vlaneseq
      %v2585 = vshrl.u32 %v2584, 7
      %v2586 = vsub.s32 0, %v2585
      %v2587 = vrot.slane %v2583, %v2586
      %v2588 = vmul.f32 %v451, %v2587
      %v2589 = vmul.f32 %v452, %v2587
      %v2590 = vmul.f32 %v455, %v2587
      %v2591 = vmul.f32 %v456, %v2587
      %v2592 = vmul.f32 %v459, %v2587
      %v2593 = vmul.f32 %v460, %v2587
      %v2594 = vmul.f32 %v463, %v2587
      %v2595 = vmul.f32 %v464, %v2587
      %v2596 = vmul.f32 %v467, %v2587
      %v2597 = vmul.f32 %v468, %v2587
      %v2598 = vmul.f32 %v471, %v2587
      %v2599 = vmul.f32 %v472, %v2587
      %v2600 = vmul.f32 %v475, %v2587
      %v2601 = vmul.f32 %v476, %v2587
      %v2602 = vmul.f32 %v479, %v2587
      %v2603 = vmul.f32 %v480, %v2587
      %v2604 = vmul.f32 %v483, %v2587
      %v2605 = vmul.f32 %v484, %v2587
      %v2606 = vmul.f32 %v487, %v2587
      %v2607 = vmul.f32 %v488, %v2587
      %v2608 = vmul.f32 %v491, %v2587
      %v2609 = vmul.f32 %v492, %v2587
      %v2610 = vmul.f32 %v495, %v2587
      %v2611 = vmul.f32 %v496, %v2587
      %v2612 = vmul.f32 %v499, %v2587
      %v2613 = vmul.f32 %v500, %v2587
      %v2614 = vmul.f32 %v503, %v2587
      %v2615 = vmul.f32 %v504, %v2587
      %v2616 = vmul.f32 %v507, %v2587
      %v2617 = vmul.f32 %v508, %v2587
      %v2618 = vmul.f32 %v511, %v2587
      %v2619 = vmul.f32 %v512, %v2587
      %v2620 = vadd.f32 %v2551, %v2588
      %v2621 = vadd.f32 %v2552, %v2589
      %v2622 = vadd.f32 %v2553, %v2590
      %v2623 = vadd.f32 %v2554, %v2591
      %v2624 = vadd.f32 %v2555, %v2592
      %v2625 = vadd.f32 %v2556, %v2593
      %v2626 = vadd.f32 %v2557, %v2594
      %v2627 = vadd.f32 %v2558, %v2595
      %v2628 = vadd.f32 %v2559, %v2596
      %v2629 = vadd.f32 %v2560, %v2597
      %v2630 = vadd.f32 %v2561, %v2598
      %v2631 = vadd.f32 %v2562, %v2599
      %v2632 = vadd.f32 %v2563, %v2600
      %v2633 = vadd.f32 %v2564, %v2601
      %v2634 = vadd.f32 %v2565, %v2602
      %v2635 = vadd.f32 %v2566, %v2603
      %v2636 = vadd.f32 %v2567, %v2604
      %v2637 = vadd.f32 %v2568, %v2605
      %v2638 = vadd.f32 %v2569, %v2606
      %v2639 = vadd.f32 %v2570, %v2607
      %v2640 = vadd.f32 %v2571, %v2608
      %v2641 = vadd.f32 %v2572, %v2609
      %v2642 = vadd.f32 %v2573, %v2610
      %v2643 = vadd.f32 %v2574, %v2611
      %v2644 = vadd.f32 %v2575, %v2612
      %v2645 = vadd.f32 %v2576, %v2613
      %v2646 = vadd.f32 %v2577, %v2614
      %v2647 = vadd.f32 %v2578, %v2615
      %v2648 = vadd.f32 %v2579, %v2616
      %v2649 = vadd.f32 %v2580, %v2617
      %v2650 = vadd.f32 %v2581, %v2618
      %v2651 = vadd.f32 %v2582, %v2619
      %v2652 = vld [vmem:[%s1 + $0x2d] sm:$0x1]
      %v2653 = vlaneseq
      %v2654 = vshrl.u32 %v2653, 7
      %v2655 = vsub.s32 0, %v2654
      %v2656 = vrot.slane %v2652, %v2655
      %v2657 = vmul.f32 %v455, %v2656
      %v2658 = vmul.f32 %v456, %v2656
      %v2659 = vmul.f32 %v459, %v2656
      %v2660 = vmul.f32 %v460, %v2656
      %v2661 = vmul.f32 %v463, %v2656
      %v2662 = vmul.f32 %v464, %v2656
      %v2663 = vmul.f32 %v467, %v2656
      %v2664 = vmul.f32 %v468, %v2656
      %v2665 = vmul.f32 %v471, %v2656
      %v2666 = vmul.f32 %v472, %v2656
      %v2667 = vmul.f32 %v475, %v2656
      %v2668 = vmul.f32 %v476, %v2656
      %v2669 = vmul.f32 %v479, %v2656
      %v2670 = vmul.f32 %v480, %v2656
      %v2671 = vmul.f32 %v483, %v2656
      %v2672 = vmul.f32 %v484, %v2656
      %v2673 = vmul.f32 %v487, %v2656
      %v2674 = vmul.f32 %v488, %v2656
      %v2675 = vmul.f32 %v491, %v2656
      %v2676 = vmul.f32 %v492, %v2656
      %v2677 = vmul.f32 %v495, %v2656
      %v2678 = vmul.f32 %v496, %v2656
      %v2679 = vmul.f32 %v499, %v2656
      %v2680 = vmul.f32 %v500, %v2656
      %v2681 = vmul.f32 %v503, %v2656
      %v2682 = vmul.f32 %v504, %v2656
      %v2683 = vmul.f32 %v507, %v2656
      %v2684 = vmul.f32 %v508, %v2656
      %v2685 = vmul.f32 %v511, %v2656
      %v2686 = vmul.f32 %v512, %v2656
      %v2687 = vmul.f32 %v515, %v2656
      %v2688 = vmul.f32 %v516, %v2656
      %v2689 = vadd.f32 %v2620, %v2657
      %v2690 = vadd.f32 %v2621, %v2658
      %v2691 = vadd.f32 %v2622, %v2659
      %v2692 = vadd.f32 %v2623, %v2660
      %v2693 = vadd.f32 %v2624, %v2661
      %v2694 = vadd.f32 %v2625, %v2662
      %v2695 = vadd.f32 %v2626, %v2663
      %v2696 = vadd.f32 %v2627, %v2664
      %v2697 = vadd.f32 %v2628, %v2665
      %v2698 = vadd.f32 %v2629, %v2666
      %v2699 = vadd.f32 %v2630, %v2667
      %v2700 = vadd.f32 %v2631, %v2668
      %v2701 = vadd.f32 %v2632, %v2669
      %v2702 = vadd.f32 %v2633, %v2670
      %v2703 = vadd.f32 %v2634, %v2671
      %v2704 = vadd.f32 %v2635, %v2672
      %v2705 = vadd.f32 %v2636, %v2673
      %v2706 = vadd.f32 %v2637, %v2674
      %v2707 = vadd.f32 %v2638, %v2675
      %v2708 = vadd.f32 %v2639, %v2676
      %v2709 = vadd.f32 %v2640, %v2677
      %v2710 = vadd.f32 %v2641, %v2678
      %v2711 = vadd.f32 %v2642, %v2679
      %v2712 = vadd.f32 %v2643, %v2680
      %v2713 = vadd.f32 %v2644, %v2681
      %v2714 = vadd.f32 %v2645, %v2682
      %v2715 = vadd.f32 %v2646, %v2683
      %v2716 = vadd.f32 %v2647, %v2684
      %v2717 = vadd.f32 %v2648, %v2685
      %v2718 = vadd.f32 %v2649, %v2686
      %v2719 = vadd.f32 %v2650, %v2687
      %v2720 = vadd.f32 %v2651, %v2688
      %v2721 = vadd.f32 %v2238, %v2689
      %v2722 = vadd.f32 %v2239, %v2690
      %v2723 = vadd.f32 %v2240, %v2691
      %v2724 = vadd.f32 %v2241, %v2692
      %v2725 = vadd.f32 %v2242, %v2693
      %v2726 = vadd.f32 %v2243, %v2694
      %v2727 = vadd.f32 %v2244, %v2695
      %v2728 = vadd.f32 %v2245, %v2696
      %v2729 = vadd.f32 %v2246, %v2697
      %v2730 = vadd.f32 %v2247, %v2698
      %v2731 = vadd.f32 %v2248, %v2699
      %v2732 = vadd.f32 %v2249, %v2700
      %v2733 = vadd.f32 %v2250, %v2701
      %v2734 = vadd.f32 %v2251, %v2702
      %v2735 = vadd.f32 %v2252, %v2703
      %v2736 = vadd.f32 %v2253, %v2704
      %v2737 = vadd.f32 %v2254, %v2705
      %v2738 = vadd.f32 %v2255, %v2706
      %v2739 = vadd.f32 %v2256, %v2707
      %v2740 = vadd.f32 %v2257, %v2708
      %v2741 = vadd.f32 %v2258, %v2709
      %v2742 = vadd.f32 %v2259, %v2710
      %v2743 = vadd.f32 %v2260, %v2711
      %v2744 = vadd.f32 %v2261, %v2712
      %v2745 = vadd.f32 %v2262, %v2713
      %v2746 = vadd.f32 %v2263, %v2714
      %v2747 = vadd.f32 %v2264, %v2715
      %v2748 = vadd.f32 %v2265, %v2716
      %v2749 = vadd.f32 %v2266, %v2717
      %v2750 = vadd.f32 %v2267, %v2718
      %v2751 = vadd.f32 %v2268, %v2719
      %v2752 = vadd.f32 %v2269, %v2720
      %v2753 = vrot.slane %v431, 1
      %v2754 = vrot.slane %v435, 1
      %v2755 = vrot.slane %v439, 1
      %v2756 = vrot.slane %v443, 1
      %v2757 = vrot.slane %v447, 1
      %v2758 = vrot.slane %v451, 1
      %v2759 = vrot.slane %v455, 1
      %v2760 = vrot.slane %v459, 1
      %v2761 = vrot.slane %v463, 1
      %v2762 = vrot.slane %v467, 1
      %v2763 = vrot.slane %v471, 1
      %v2764 = vrot.slane %v475, 1
      %v2765 = vrot.slane %v479, 1
      %v2766 = vrot.slane %v483, 1
      %v2767 = vrot.slane %v487, 1
      %v2768 = vrot.slane %v491, 1
      %v2769 = vrot.slane %v495, 1
      %v2770 = vrot.slane %v499, 1
      %v2771 = vrot.slane %v503, 1
      %v2772 = vrot.slane %v507, 1
      %v2773 = vrot.slane %v511, 1
      %v2774 = vrot.slane %v515, 1
      %v2775 = vrot.slane %v432, 1
      %v2776 = vrot.slane %v436, 1
      %v2777 = vrot.slane %v440, 1
      %v2778 = vrot.slane %v444, 1
      %v2779 = vrot.slane %v448, 1
      %v2780 = vrot.slane %v452, 1
      %v2781 = vrot.slane %v456, 1
      %v2782 = vrot.slane %v460, 1
      %v2783 = vrot.slane %v464, 1
      %v2784 = vrot.slane %v468, 1
      %v2785 = vrot.slane %v472, 1
      %v2786 = vrot.slane %v476, 1
      %v2787 = vrot.slane %v480, 1
      %v2788 = vrot.slane %v484, 1
      %v2789 = vrot.slane %v488, 1
      %v2790 = vrot.slane %v492, 1
      %v2791 = vrot.slane %v496, 1
      %v2792 = vrot.slane %v500, 1
      %v2793 = vrot.slane %v504, 1
      %v2794 = vrot.slane %v508, 1
      %v2795 = vrot.slane %v512, 1
      %v2796 = vrot.slane %v516, 1
      %v2797 = vrot.slane %v433, 1
      %v2798 = vrot.slane %v437, 1
      %v2799 = vrot.slane %v441, 1
      %v2800 = vrot.slane %v445, 1
      %v2801 = vrot.slane %v449, 1
      %v2802 = vrot.slane %v453, 1
      %v2803 = vrot.slane %v457, 1
      %v2804 = vrot.slane %v461, 1
      %v2805 = vrot.slane %v465, 1
      %v2806 = vrot.slane %v469, 1
      %v2807 = vrot.slane %v473, 1
      %v2808 = vrot.slane %v477, 1
      %v2809 = vrot.slane %v481, 1
      %v2810 = vrot.slane %v485, 1
      %v2811 = vrot.slane %v489, 1
      %v2812 = vrot.slane %v493, 1
      %v2813 = vrot.slane %v497, 1
      %v2814 = vrot.slane %v501, 1
      %v2815 = vrot.slane %v505, 1
      %v2816 = vrot.slane %v509, 1
      %v2817 = vrot.slane %v513, 1
      %v2818 = vrot.slane %v517, 1
      %vm2819 = vcmp.lt.s32.totalorder %v585, 7
      %v2820 = vsel %vm2819, %v2775, %v2797
      %v2821 = vsel %vm2819, %v2776, %v2798
      %v2822 = vsel %vm2819, %v2777, %v2799
      %v2823 = vsel %vm2819, %v2778, %v2800
      %v2824 = vsel %vm2819, %v2779, %v2801
      %v2825 = vsel %vm2819, %v2780, %v2802
      %v2826 = vsel %vm2819, %v2781, %v2803
      %v2827 = vsel %vm2819, %v2782, %v2804
      %v2828 = vsel %vm2819, %v2783, %v2805
      %v2829 = vsel %vm2819, %v2784, %v2806
      %v2830 = vsel %vm2819, %v2785, %v2807
      %v2831 = vsel %vm2819, %v2786, %v2808
      %v2832 = vsel %vm2819, %v2787, %v2809
      %v2833 = vsel %vm2819, %v2788, %v2810
      %v2834 = vsel %vm2819, %v2789, %v2811
      %v2835 = vsel %vm2819, %v2790, %v2812
      %v2836 = vsel %vm2819, %v2791, %v2813
      %v2837 = vsel %vm2819, %v2792, %v2814
      %v2838 = vsel %vm2819, %v2793, %v2815
      %v2839 = vsel %vm2819, %v2794, %v2816
      %v2840 = vsel %vm2819, %v2795, %v2817
      %v2841 = vsel %vm2819, %v2796, %v2818
      %v2842 = vsel %vm2819, %v2753, %v2775
      %v2843 = vsel %vm2819, %v2754, %v2776
      %v2844 = vsel %vm2819, %v2755, %v2777
      %v2845 = vsel %vm2819, %v2756, %v2778
      %v2846 = vsel %vm2819, %v2757, %v2779
      %v2847 = vsel %vm2819, %v2758, %v2780
      %v2848 = vsel %vm2819, %v2759, %v2781
      %v2849 = vsel %vm2819, %v2760, %v2782
      %v2850 = vsel %vm2819, %v2761, %v2783
      %v2851 = vsel %vm2819, %v2762, %v2784
      %v2852 = vsel %vm2819, %v2763, %v2785
      %v2853 = vsel %vm2819, %v2764, %v2786
      %v2854 = vsel %vm2819, %v2765, %v2787
      %v2855 = vsel %vm2819, %v2766, %v2788
      %v2856 = vsel %vm2819, %v2767, %v2789
      %v2857 = vsel %vm2819, %v2768, %v2790
      %v2858 = vsel %vm2819, %v2769, %v2791
      %v2859 = vsel %vm2819, %v2770, %v2792
      %v2860 = vsel %vm2819, %v2771, %v2793
      %v2861 = vsel %vm2819, %v2772, %v2794
      %v2862 = vsel %vm2819, %v2773, %v2795
      %v2863 = vsel %vm2819, %v2774, %v2796
      %v2864 = vld [vmem:[%s1 + $0x4] sm:$0x1]
      %v2865 = vlaneseq
      %v2866 = vshrl.u32 %v2865, 7
      %v2867 = vsub.s32 0, %v2866
      %v2868 = vrot.slane %v2864, %v2867
      %v2869 = vmul.f32 %v2842, %v2868
      %v2870 = vmul.f32 %v2820, %v2868
      %v2871 = vmul.f32 %v2843, %v2868
      %v2872 = vmul.f32 %v2821, %v2868
      %v2873 = vmul.f32 %v2844, %v2868
      %v2874 = vmul.f32 %v2822, %v2868
      %v2875 = vmul.f32 %v2845, %v2868
      %v2876 = vmul.f32 %v2823, %v2868
      %v2877 = vmul.f32 %v2846, %v2868
      %v2878 = vmul.f32 %v2824, %v2868
      %v2879 = vmul.f32 %v2847, %v2868
      %v2880 = vmul.f32 %v2825, %v2868
      %v2881 = vmul.f32 %v2848, %v2868
      %v2882 = vmul.f32 %v2826, %v2868
      %v2883 = vmul.f32 %v2849, %v2868
      %v2884 = vmul.f32 %v2827, %v2868
      %v2885 = vmul.f32 %v2850, %v2868
      %v2886 = vmul.f32 %v2828, %v2868
      %v2887 = vmul.f32 %v2851, %v2868
      %v2888 = vmul.f32 %v2829, %v2868
      %v2889 = vmul.f32 %v2852, %v2868
      %v2890 = vmul.f32 %v2830, %v2868
      %v2891 = vmul.f32 %v2853, %v2868
      %v2892 = vmul.f32 %v2831, %v2868
      %v2893 = vmul.f32 %v2854, %v2868
      %v2894 = vmul.f32 %v2832, %v2868
      %v2895 = vmul.f32 %v2855, %v2868
      %v2896 = vmul.f32 %v2833, %v2868
      %v2897 = vmul.f32 %v2856, %v2868
      %v2898 = vmul.f32 %v2834, %v2868
      %v2899 = vmul.f32 %v2857, %v2868
      %v2900 = vmul.f32 %v2835, %v2868
      %v2901 = vld [vmem:[%s1 + $0xb] sm:$0x1]
      %v2902 = vlaneseq
      %v2903 = vshrl.u32 %v2902, 7
      %v2904 = vsub.s32 0, %v2903
      %v2905 = vrot.slane %v2901, %v2904
      %v2906 = vmul.f32 %v2843, %v2905
      %v2907 = vmul.f32 %v2821, %v2905
      %v2908 = vmul.f32 %v2844, %v2905
      %v2909 = vmul.f32 %v2822, %v2905
      %v2910 = vmul.f32 %v2845, %v2905
      %v2911 = vmul.f32 %v2823, %v2905
      %v2912 = vmul.f32 %v2846, %v2905
      %v2913 = vmul.f32 %v2824, %v2905
      %v2914 = vmul.f32 %v2847, %v2905
      %v2915 = vmul.f32 %v2825, %v2905
      %v2916 = vmul.f32 %v2848, %v2905
      %v2917 = vmul.f32 %v2826, %v2905
      %v2918 = vmul.f32 %v2849, %v2905
      %v2919 = vmul.f32 %v2827, %v2905
      %v2920 = vmul.f32 %v2850, %v2905
      %v2921 = vmul.f32 %v2828, %v2905
      %v2922 = vmul.f32 %v2851, %v2905
      %v2923 = vmul.f32 %v2829, %v2905
      %v2924 = vmul.f32 %v2852, %v2905
      %v2925 = vmul.f32 %v2830, %v2905
      %v2926 = vmul.f32 %v2853, %v2905
      %v2927 = vmul.f32 %v2831, %v2905
      %v2928 = vmul.f32 %v2854, %v2905
      %v2929 = vmul.f32 %v2832, %v2905
      %v2930 = vmul.f32 %v2855, %v2905
      %v2931 = vmul.f32 %v2833, %v2905
      %v2932 = vmul.f32 %v2856, %v2905
      %v2933 = vmul.f32 %v2834, %v2905
      %v2934 = vmul.f32 %v2857, %v2905
      %v2935 = vmul.f32 %v2835, %v2905
      %v2936 = vmul.f32 %v2858, %v2905
      %v2937 = vmul.f32 %v2836, %v2905
      %v2938 = vadd.f32 %v2869, %v2906
      %v2939 = vadd.f32 %v2870, %v2907
      %v2940 = vadd.f32 %v2871, %v2908
      %v2941 = vadd.f32 %v2872, %v2909
      %v2942 = vadd.f32 %v2873, %v2910
      %v2943 = vadd.f32 %v2874, %v2911
      %v2944 = vadd.f32 %v2875, %v2912
      %v2945 = vadd.f32 %v2876, %v2913
      %v2946 = vadd.f32 %v2877, %v2914
      %v2947 = vadd.f32 %v2878, %v2915
      %v2948 = vadd.f32 %v2879, %v2916
      %v2949 = vadd.f32 %v2880, %v2917
      %v2950 = vadd.f32 %v2881, %v2918
      %v2951 = vadd.f32 %v2882, %v2919
      %v2952 = vadd.f32 %v2883, %v2920
      %v2953 = vadd.f32 %v2884, %v2921
      %v2954 = vadd.f32 %v2885, %v2922
      %v2955 = vadd.f32 %v2886, %v2923
      %v2956 = vadd.f32 %v2887, %v2924
      %v2957 = vadd.f32 %v2888, %v2925
      %v2958 = vadd.f32 %v2889, %v2926
      %v2959 = vadd.f32 %v2890, %v2927
      %v2960 = vadd.f32 %v2891, %v2928
      %v2961 = vadd.f32 %v2892, %v2929
      %v2962 = vadd.f32 %v2893, %v2930
      %v2963 = vadd.f32 %v2894, %v2931
      %v2964 = vadd.f32 %v2895, %v2932
      %v2965 = vadd.f32 %v2896, %v2933
      %v2966 = vadd.f32 %v2897, %v2934
      %v2967 = vadd.f32 %v2898, %v2935
      %v2968 = vadd.f32 %v2899, %v2936
      %v2969 = vadd.f32 %v2900, %v2937
      %v2970 = vld [vmem:[%s1 + $0x12] sm:$0x1]
      %v2971 = vlaneseq
      %v2972 = vshrl.u32 %v2971, 7
      %v2973 = vsub.s32 0, %v2972
      %v2974 = vrot.slane %v2970, %v2973
      %v2975 = vmul.f32 %v2844, %v2974
      %v2976 = vmul.f32 %v2822, %v2974
      %v2977 = vmul.f32 %v2845, %v2974
      %v2978 = vmul.f32 %v2823, %v2974
      %v2979 = vmul.f32 %v2846, %v2974
      %v2980 = vmul.f32 %v2824, %v2974
      %v2981 = vmul.f32 %v2847, %v2974
      %v2982 = vmul.f32 %v2825, %v2974
      %v2983 = vmul.f32 %v2848, %v2974
      %v2984 = vmul.f32 %v2826, %v2974
      %v2985 = vmul.f32 %v2849, %v2974
      %v2986 = vmul.f32 %v2827, %v2974
      %v2987 = vmul.f32 %v2850, %v2974
      %v2988 = vmul.f32 %v2828, %v2974
      %v2989 = vmul.f32 %v2851, %v2974
      %v2990 = vmul.f32 %v2829, %v2974
      %v2991 = vmul.f32 %v2852, %v2974
      %v2992 = vmul.f32 %v2830, %v2974
      %v2993 = vmul.f32 %v2853, %v2974
      %v2994 = vmul.f32 %v2831, %v2974
      %v2995 = vmul.f32 %v2854, %v2974
      %v2996 = vmul.f32 %v2832, %v2974
      %v2997 = vmul.f32 %v2855, %v2974
      %v2998 = vmul.f32 %v2833, %v2974
      %v2999 = vmul.f32 %v2856, %v2974
      %v3000 = vmul.f32 %v2834, %v2974
      %v3001 = vmul.f32 %v2857, %v2974
      %v3002 = vmul.f32 %v2835, %v2974
      %v3003 = vmul.f32 %v2858, %v2974
      %v3004 = vmul.f32 %v2836, %v2974
      %v3005 = vmul.f32 %v2859, %v2974
      %v3006 = vmul.f32 %v2837, %v2974
      %v3007 = vadd.f32 %v2938, %v2975
      %v3008 = vadd.f32 %v2939, %v2976
      %v3009 = vadd.f32 %v2940, %v2977
      %v3010 = vadd.f32 %v2941, %v2978
      %v3011 = vadd.f32 %v2942, %v2979
      %v3012 = vadd.f32 %v2943, %v2980
      %v3013 = vadd.f32 %v2944, %v2981
      %v3014 = vadd.f32 %v2945, %v2982
      %v3015 = vadd.f32 %v2946, %v2983
      %v3016 = vadd.f32 %v2947, %v2984
      %v3017 = vadd.f32 %v2948, %v2985
      %v3018 = vadd.f32 %v2949, %v2986
      %v3019 = vadd.f32 %v2950, %v2987
      %v3020 = vadd.f32 %v2951, %v2988
      %v3021 = vadd.f32 %v2952, %v2989
      %v3022 = vadd.f32 %v2953, %v2990
      %v3023 = vadd.f32 %v2954, %v2991
      %v3024 = vadd.f32 %v2955, %v2992
      %v3025 = vadd.f32 %v2956, %v2993
      %v3026 = vadd.f32 %v2957, %v2994
      %v3027 = vadd.f32 %v2958, %v2995
      %v3028 = vadd.f32 %v2959, %v2996
      %v3029 = vadd.f32 %v2960, %v2997
      %v3030 = vadd.f32 %v2961, %v2998
      %v3031 = vadd.f32 %v2962, %v2999
      %v3032 = vadd.f32 %v2963, %v3000
      %v3033 = vadd.f32 %v2964, %v3001
      %v3034 = vadd.f32 %v2965, %v3002
      %v3035 = vadd.f32 %v2966, %v3003
      %v3036 = vadd.f32 %v2967, %v3004
      %v3037 = vadd.f32 %v2968, %v3005
      %v3038 = vadd.f32 %v2969, %v3006
      %v3039 = vld [vmem:[%s1 + $0x19] sm:$0x1]
      %v3040 = vlaneseq
      %v3041 = vshrl.u32 %v3040, 7
      %v3042 = vsub.s32 0, %v3041
      %v3043 = vrot.slane %v3039, %v3042
      %v3044 = vmul.f32 %v2845, %v3043
      %v3045 = vmul.f32 %v2823, %v3043
      %v3046 = vmul.f32 %v2846, %v3043
      %v3047 = vmul.f32 %v2824, %v3043
      %v3048 = vmul.f32 %v2847, %v3043
      %v3049 = vmul.f32 %v2825, %v3043
      %v3050 = vmul.f32 %v2848, %v3043
      %v3051 = vmul.f32 %v2826, %v3043
      %v3052 = vmul.f32 %v2849, %v3043
      %v3053 = vmul.f32 %v2827, %v3043
      %v3054 = vmul.f32 %v2850, %v3043
      %v3055 = vmul.f32 %v2828, %v3043
      %v3056 = vmul.f32 %v2851, %v3043
      %v3057 = vmul.f32 %v2829, %v3043
      %v3058 = vmul.f32 %v2852, %v3043
      %v3059 = vmul.f32 %v2830, %v3043
      %v3060 = vmul.f32 %v2853, %v3043
      %v3061 = vmul.f32 %v2831, %v3043
      %v3062 = vmul.f32 %v2854, %v3043
      %v3063 = vmul.f32 %v2832, %v3043
      %v3064 = vmul.f32 %v2855, %v3043
      %v3065 = vmul.f32 %v2833, %v3043
      %v3066 = vmul.f32 %v2856, %v3043
      %v3067 = vmul.f32 %v2834, %v3043
      %v3068 = vmul.f32 %v2857, %v3043
      %v3069 = vmul.f32 %v2835, %v3043
      %v3070 = vmul.f32 %v2858, %v3043
      %v3071 = vmul.f32 %v2836, %v3043
      %v3072 = vmul.f32 %v2859, %v3043
      %v3073 = vmul.f32 %v2837, %v3043
      %v3074 = vmul.f32 %v2860, %v3043
      %v3075 = vmul.f32 %v2838, %v3043
      %v3076 = vadd.f32 %v3007, %v3044
      %v3077 = vadd.f32 %v3008, %v3045
      %v3078 = vadd.f32 %v3009, %v3046
      %v3079 = vadd.f32 %v3010, %v3047
      %v3080 = vadd.f32 %v3011, %v3048
      %v3081 = vadd.f32 %v3012, %v3049
      %v3082 = vadd.f32 %v3013, %v3050
      %v3083 = vadd.f32 %v3014, %v3051
      %v3084 = vadd.f32 %v3015, %v3052
      %v3085 = vadd.f32 %v3016, %v3053
      %v3086 = vadd.f32 %v3017, %v3054
      %v3087 = vadd.f32 %v3018, %v3055
      %v3088 = vadd.f32 %v3019, %v3056
      %v3089 = vadd.f32 %v3020, %v3057
      %v3090 = vadd.f32 %v3021, %v3058
      %v3091 = vadd.f32 %v3022, %v3059
      %v3092 = vadd.f32 %v3023, %v3060
      %v3093 = vadd.f32 %v3024, %v3061
      %v3094 = vadd.f32 %v3025, %v3062
      %v3095 = vadd.f32 %v3026, %v3063
      %v3096 = vadd.f32 %v3027, %v3064
      %v3097 = vadd.f32 %v3028, %v3065
      %v3098 = vadd.f32 %v3029, %v3066
      %v3099 = vadd.f32 %v3030, %v3067
      %v3100 = vadd.f32 %v3031, %v3068
      %v3101 = vadd.f32 %v3032, %v3069
      %v3102 = vadd.f32 %v3033, %v3070
      %v3103 = vadd.f32 %v3034, %v3071
      %v3104 = vadd.f32 %v3035, %v3072
      %v3105 = vadd.f32 %v3036, %v3073
      %v3106 = vadd.f32 %v3037, %v3074
      %v3107 = vadd.f32 %v3038, %v3075
      %v3108 = vld [vmem:[%s1 + $0x20] sm:$0x1]
      %v3109 = vlaneseq
      %v3110 = vshrl.u32 %v3109, 7
      %v3111 = vsub.s32 0, %v3110
      %v3112 = vrot.slane %v3108, %v3111
      %v3113 = vmul.f32 %v2846, %v3112
      %v3114 = vmul.f32 %v2824, %v3112
      %v3115 = vmul.f32 %v2847, %v3112
      %v3116 = vmul.f32 %v2825, %v3112
      %v3117 = vmul.f32 %v2848, %v3112
      %v3118 = vmul.f32 %v2826, %v3112
      %v3119 = vmul.f32 %v2849, %v3112
      %v3120 = vmul.f32 %v2827, %v3112
      %v3121 = vmul.f32 %v2850, %v3112
      %v3122 = vmul.f32 %v2828, %v3112
      %v3123 = vmul.f32 %v2851, %v3112
      %v3124 = vmul.f32 %v2829, %v3112
      %v3125 = vmul.f32 %v2852, %v3112
      %v3126 = vmul.f32 %v2830, %v3112
      %v3127 = vmul.f32 %v2853, %v3112
      %v3128 = vmul.f32 %v2831, %v3112
      %v3129 = vmul.f32 %v2854, %v3112
      %v3130 = vmul.f32 %v2832, %v3112
      %v3131 = vmul.f32 %v2855, %v3112
      %v3132 = vmul.f32 %v2833, %v3112
      %v3133 = vmul.f32 %v2856, %v3112
      %v3134 = vmul.f32 %v2834, %v3112
      %v3135 = vmul.f32 %v2857, %v3112
      %v3136 = vmul.f32 %v2835, %v3112
      %v3137 = vmul.f32 %v2858, %v3112
      %v3138 = vmul.f32 %v2836, %v3112
      %v3139 = vmul.f32 %v2859, %v3112
      %v3140 = vmul.f32 %v2837, %v3112
      %v3141 = vmul.f32 %v2860, %v3112
      %v3142 = vmul.f32 %v2838, %v3112
      %v3143 = vmul.f32 %v2861, %v3112
      %v3144 = vmul.f32 %v2839, %v3112
      %v3145 = vadd.f32 %v3076, %v3113
      %v3146 = vadd.f32 %v3077, %v3114
      %v3147 = vadd.f32 %v3078, %v3115
      %v3148 = vadd.f32 %v3079, %v3116
      %v3149 = vadd.f32 %v3080, %v3117
      %v3150 = vadd.f32 %v3081, %v3118
      %v3151 = vadd.f32 %v3082, %v3119
      %v3152 = vadd.f32 %v3083, %v3120
      %v3153 = vadd.f32 %v3084, %v3121
      %v3154 = vadd.f32 %v3085, %v3122
      %v3155 = vadd.f32 %v3086, %v3123
      %v3156 = vadd.f32 %v3087, %v3124
      %v3157 = vadd.f32 %v3088, %v3125
      %v3158 = vadd.f32 %v3089, %v3126
      %v3159 = vadd.f32 %v3090, %v3127
      %v3160 = vadd.f32 %v3091, %v3128
      %v3161 = vadd.f32 %v3092, %v3129
      %v3162 = vadd.f32 %v3093, %v3130
      %v3163 = vadd.f32 %v3094, %v3131
      %v3164 = vadd.f32 %v3095, %v3132
      %v3165 = vadd.f32 %v3096, %v3133
      %v3166 = vadd.f32 %v3097, %v3134
      %v3167 = vadd.f32 %v3098, %v3135
      %v3168 = vadd.f32 %v3099, %v3136
      %v3169 = vadd.f32 %v3100, %v3137
      %v3170 = vadd.f32 %v3101, %v3138
      %v3171 = vadd.f32 %v3102, %v3139
      %v3172 = vadd.f32 %v3103, %v3140
      %v3173 = vadd.f32 %v3104, %v3141
      %v3174 = vadd.f32 %v3105, %v3142
      %v3175 = vadd.f32 %v3106, %v3143
      %v3176 = vadd.f32 %v3107, %v3144
      %v3177 = vld [vmem:[%s1 + $0x27] sm:$0x1]
      %v3178 = vlaneseq
      %v3179 = vshrl.u32 %v3178, 7
      %v3180 = vsub.s32 0, %v3179
      %v3181 = vrot.slane %v3177, %v3180
      %v3182 = vmul.f32 %v2847, %v3181
      %v3183 = vmul.f32 %v2825, %v3181
      %v3184 = vmul.f32 %v2848, %v3181
      %v3185 = vmul.f32 %v2826, %v3181
      %v3186 = vmul.f32 %v2849, %v3181
      %v3187 = vmul.f32 %v2827, %v3181
      %v3188 = vmul.f32 %v2850, %v3181
      %v3189 = vmul.f32 %v2828, %v3181
      %v3190 = vmul.f32 %v2851, %v3181
      %v3191 = vmul.f32 %v2829, %v3181
      %v3192 = vmul.f32 %v2852, %v3181
      %v3193 = vmul.f32 %v2830, %v3181
      %v3194 = vmul.f32 %v2853, %v3181
      %v3195 = vmul.f32 %v2831, %v3181
      %v3196 = vmul.f32 %v2854, %v3181
      %v3197 = vmul.f32 %v2832, %v3181
      %v3198 = vmul.f32 %v2855, %v3181
      %v3199 = vmul.f32 %v2833, %v3181
      %v3200 = vmul.f32 %v2856, %v3181
      %v3201 = vmul.f32 %v2834, %v3181
      %v3202 = vmul.f32 %v2857, %v3181
      %v3203 = vmul.f32 %v2835, %v3181
      %v3204 = vmul.f32 %v2858, %v3181
      %v3205 = vmul.f32 %v2836, %v3181
      %v3206 = vmul.f32 %v2859, %v3181
      %v3207 = vmul.f32 %v2837, %v3181
      %v3208 = vmul.f32 %v2860, %v3181
      %v3209 = vmul.f32 %v2838, %v3181
      %v3210 = vmul.f32 %v2861, %v3181
      %v3211 = vmul.f32 %v2839, %v3181
      %v3212 = vmul.f32 %v2862, %v3181
      %v3213 = vmul.f32 %v2840, %v3181
      %v3214 = vadd.f32 %v3145, %v3182
      %v3215 = vadd.f32 %v3146, %v3183
      %v3216 = vadd.f32 %v3147, %v3184
      %v3217 = vadd.f32 %v3148, %v3185
      %v3218 = vadd.f32 %v3149, %v3186
      %v3219 = vadd.f32 %v3150, %v3187
      %v3220 = vadd.f32 %v3151, %v3188
      %v3221 = vadd.f32 %v3152, %v3189
      %v3222 = vadd.f32 %v3153, %v3190
      %v3223 = vadd.f32 %v3154, %v3191
      %v3224 = vadd.f32 %v3155, %v3192
      %v3225 = vadd.f32 %v3156, %v3193
      %v3226 = vadd.f32 %v3157, %v3194
      %v3227 = vadd.f32 %v3158, %v3195
      %v3228 = vadd.f32 %v3159, %v3196
      %v3229 = vadd.f32 %v3160, %v3197
      %v3230 = vadd.f32 %v3161, %v3198
      %v3231 = vadd.f32 %v3162, %v3199
      %v3232 = vadd.f32 %v3163, %v3200
      %v3233 = vadd.f32 %v3164, %v3201
      %v3234 = vadd.f32 %v3165, %v3202
      %v3235 = vadd.f32 %v3166, %v3203
      %v3236 = vadd.f32 %v3167, %v3204
      %v3237 = vadd.f32 %v3168, %v3205
      %v3238 = vadd.f32 %v3169, %v3206
      %v3239 = vadd.f32 %v3170, %v3207
      %v3240 = vadd.f32 %v3171, %v3208
      %v3241 = vadd.f32 %v3172, %v3209
      %v3242 = vadd.f32 %v3173, %v3210
      %v3243 = vadd.f32 %v3174, %v3211
      %v3244 = vadd.f32 %v3175, %v3212
      %v3245 = vadd.f32 %v3176, %v3213
      %v3246 = vld [vmem:[%s1 + $0x2e] sm:$0x1]
      %v3247 = vlaneseq
      %v3248 = vshrl.u32 %v3247, 7
      %v3249 = vsub.s32 0, %v3248
      %v3250 = vrot.slane %v3246, %v3249
      %v3251 = vmul.f32 %v2848, %v3250
      %v3252 = vmul.f32 %v2826, %v3250
      %v3253 = vmul.f32 %v2849, %v3250
      %v3254 = vmul.f32 %v2827, %v3250
      %v3255 = vmul.f32 %v2850, %v3250
      %v3256 = vmul.f32 %v2828, %v3250
      %v3257 = vmul.f32 %v2851, %v3250
      %v3258 = vmul.f32 %v2829, %v3250
      %v3259 = vmul.f32 %v2852, %v3250
      %v3260 = vmul.f32 %v2830, %v3250
      %v3261 = vmul.f32 %v2853, %v3250
      %v3262 = vmul.f32 %v2831, %v3250
      %v3263 = vmul.f32 %v2854, %v3250
      %v3264 = vmul.f32 %v2832, %v3250
      %v3265 = vmul.f32 %v2855, %v3250
      %v3266 = vmul.f32 %v2833, %v3250
      %v3267 = vmul.f32 %v2856, %v3250
      %v3268 = vmul.f32 %v2834, %v3250
      %v3269 = vmul.f32 %v2857, %v3250
      %v3270 = vmul.f32 %v2835, %v3250
      %v3271 = vmul.f32 %v2858, %v3250
      %v3272 = vmul.f32 %v2836, %v3250
      %v3273 = vmul.f32 %v2859, %v3250
      %v3274 = vmul.f32 %v2837, %v3250
      %v3275 = vmul.f32 %v2860, %v3250
      %v3276 = vmul.f32 %v2838, %v3250
      %v3277 = vmul.f32 %v2861, %v3250
      %v3278 = vmul.f32 %v2839, %v3250
      %v3279 = vmul.f32 %v2862, %v3250
      %v3280 = vmul.f32 %v2840, %v3250
      %v3281 = vmul.f32 %v2863, %v3250
      %v3282 = vmul.f32 %v2841, %v3250
      %v3283 = vadd.f32 %v3214, %v3251
      %v3284 = vadd.f32 %v3215, %v3252
      %v3285 = vadd.f32 %v3216, %v3253
      %v3286 = vadd.f32 %v3217, %v3254
      %v3287 = vadd.f32 %v3218, %v3255
      %v3288 = vadd.f32 %v3219, %v3256
      %v3289 = vadd.f32 %v3220, %v3257
      %v3290 = vadd.f32 %v3221, %v3258
      %v3291 = vadd.f32 %v3222, %v3259
      %v3292 = vadd.f32 %v3223, %v3260
      %v3293 = vadd.f32 %v3224, %v3261
      %v3294 = vadd.f32 %v3225, %v3262
      %v3295 = vadd.f32 %v3226, %v3263
      %v3296 = vadd.f32 %v3227, %v3264
      %v3297 = vadd.f32 %v3228, %v3265
      %v3298 = vadd.f32 %v3229, %v3266
      %v3299 = vadd.f32 %v3230, %v3267
      %v3300 = vadd.f32 %v3231, %v3268
      %v3301 = vadd.f32 %v3232, %v3269
      %v3302 = vadd.f32 %v3233, %v3270
      %v3303 = vadd.f32 %v3234, %v3271
      %v3304 = vadd.f32 %v3235, %v3272
      %v3305 = vadd.f32 %v3236, %v3273
      %v3306 = vadd.f32 %v3237, %v3274
      %v3307 = vadd.f32 %v3238, %v3275
      %v3308 = vadd.f32 %v3239, %v3276
      %v3309 = vadd.f32 %v3240, %v3277
      %v3310 = vadd.f32 %v3241, %v3278
      %v3311 = vadd.f32 %v3242, %v3279
      %v3312 = vadd.f32 %v3243, %v3280
      %v3313 = vadd.f32 %v3244, %v3281
      %v3314 = vadd.f32 %v3245, %v3282
      %v3315 = vadd.f32 %v2721, %v3283
      %v3316 = vadd.f32 %v2722, %v3284
      %v3317 = vadd.f32 %v2723, %v3285
      %v3318 = vadd.f32 %v2724, %v3286
      %v3319 = vadd.f32 %v2725, %v3287
      %v3320 = vadd.f32 %v2726, %v3288
      %v3321 = vadd.f32 %v2727, %v3289
      %v3322 = vadd.f32 %v2728, %v3290
      %v3323 = vadd.f32 %v2729, %v3291
      %v3324 = vadd.f32 %v2730, %v3292
      %v3325 = vadd.f32 %v2731, %v3293
      %v3326 = vadd.f32 %v2732, %v3294
      %v3327 = vadd.f32 %v2733, %v3295
      %v3328 = vadd.f32 %v2734, %v3296
      %v3329 = vadd.f32 %v2735, %v3297
      %v3330 = vadd.f32 %v2736, %v3298
      %v3331 = vadd.f32 %v2737, %v3299
      %v3332 = vadd.f32 %v2738, %v3300
      %v3333 = vadd.f32 %v2739, %v3301
      %v3334 = vadd.f32 %v2740, %v3302
      %v3335 = vadd.f32 %v2741, %v3303
      %v3336 = vadd.f32 %v2742, %v3304
      %v3337 = vadd.f32 %v2743, %v3305
      %v3338 = vadd.f32 %v2744, %v3306
      %v3339 = vadd.f32 %v2745, %v3307
      %v3340 = vadd.f32 %v2746, %v3308
      %v3341 = vadd.f32 %v2747, %v3309
      %v3342 = vadd.f32 %v2748, %v3310
      %v3343 = vadd.f32 %v2749, %v3311
      %v3344 = vadd.f32 %v2750, %v3312
      %v3345 = vadd.f32 %v2751, %v3313
      %v3346 = vadd.f32 %v2752, %v3314
      %v3347 = vrot.slane %v431, 2
      %v3348 = vrot.slane %v435, 2
      %v3349 = vrot.slane %v439, 2
      %v3350 = vrot.slane %v443, 2
      %v3351 = vrot.slane %v447, 2
      %v3352 = vrot.slane %v451, 2
      %v3353 = vrot.slane %v455, 2
      %v3354 = vrot.slane %v459, 2
      %v3355 = vrot.slane %v463, 2
      %v3356 = vrot.slane %v467, 2
      %v3357 = vrot.slane %v471, 2
      %v3358 = vrot.slane %v475, 2
      %v3359 = vrot.slane %v479, 2
      %v3360 = vrot.slane %v483, 2
      %v3361 = vrot.slane %v487, 2
      %v3362 = vrot.slane %v491, 2
      %v3363 = vrot.slane %v495, 2
      %v3364 = vrot.slane %v499, 2
      %v3365 = vrot.slane %v503, 2
      %v3366 = vrot.slane %v507, 2
      %v3367 = vrot.slane %v511, 2
      %v3368 = vrot.slane %v515, 2
      %v3369 = vrot.slane %v432, 2
      %v3370 = vrot.slane %v436, 2
      %v3371 = vrot.slane %v440, 2
      %v3372 = vrot.slane %v444, 2
      %v3373 = vrot.slane %v448, 2
      %v3374 = vrot.slane %v452, 2
      %v3375 = vrot.slane %v456, 2
      %v3376 = vrot.slane %v460, 2
      %v3377 = vrot.slane %v464, 2
      %v3378 = vrot.slane %v468, 2
      %v3379 = vrot.slane %v472, 2
      %v3380 = vrot.slane %v476, 2
      %v3381 = vrot.slane %v480, 2
      %v3382 = vrot.slane %v484, 2
      %v3383 = vrot.slane %v488, 2
      %v3384 = vrot.slane %v492, 2
      %v3385 = vrot.slane %v496, 2
      %v3386 = vrot.slane %v500, 2
      %v3387 = vrot.slane %v504, 2
      %v3388 = vrot.slane %v508, 2
      %v3389 = vrot.slane %v512, 2
      %v3390 = vrot.slane %v516, 2
      %v3391 = vrot.slane %v433, 2
      %v3392 = vrot.slane %v437, 2
      %v3393 = vrot.slane %v441, 2
      %v3394 = vrot.slane %v445, 2
      %v3395 = vrot.slane %v449, 2
      %v3396 = vrot.slane %v453, 2
      %v3397 = vrot.slane %v457, 2
      %v3398 = vrot.slane %v461, 2
      %v3399 = vrot.slane %v465, 2
      %v3400 = vrot.slane %v469, 2
      %v3401 = vrot.slane %v473, 2
      %v3402 = vrot.slane %v477, 2
      %v3403 = vrot.slane %v481, 2
      %v3404 = vrot.slane %v485, 2
      %v3405 = vrot.slane %v489, 2
      %v3406 = vrot.slane %v493, 2
      %v3407 = vrot.slane %v497, 2
      %v3408 = vrot.slane %v501, 2
      %v3409 = vrot.slane %v505, 2
      %v3410 = vrot.slane %v509, 2
      %v3411 = vrot.slane %v513, 2
      %v3412 = vrot.slane %v517, 2
      %vm3413 = vcmp.lt.s32.totalorder %v585, 6
      %v3414 = vsel %vm3413, %v3369, %v3391
      %v3415 = vsel %vm3413, %v3370, %v3392
      %v3416 = vsel %vm3413, %v3371, %v3393
      %v3417 = vsel %vm3413, %v3372, %v3394
      %v3418 = vsel %vm3413, %v3373, %v3395
      %v3419 = vsel %vm3413, %v3374, %v3396
      %v3420 = vsel %vm3413, %v3375, %v3397
      %v3421 = vsel %vm3413, %v3376, %v3398
      %v3422 = vsel %vm3413, %v3377, %v3399
      %v3423 = vsel %vm3413, %v3378, %v3400
      %v3424 = vsel %vm3413, %v3379, %v3401
      %v3425 = vsel %vm3413, %v3380, %v3402
      %v3426 = vsel %vm3413, %v3381, %v3403
      %v3427 = vsel %vm3413, %v3382, %v3404
      %v3428 = vsel %vm3413, %v3383, %v3405
      %v3429 = vsel %vm3413, %v3384, %v3406
      %v3430 = vsel %vm3413, %v3385, %v3407
      %v3431 = vsel %vm3413, %v3386, %v3408
      %v3432 = vsel %vm3413, %v3387, %v3409
      %v3433 = vsel %vm3413, %v3388, %v3410
      %v3434 = vsel %vm3413, %v3389, %v3411
      %v3435 = vsel %vm3413, %v3390, %v3412
      %v3436 = vsel %vm3413, %v3347, %v3369
      %v3437 = vsel %vm3413, %v3348, %v3370
      %v3438 = vsel %vm3413, %v3349, %v3371
      %v3439 = vsel %vm3413, %v3350, %v3372
      %v3440 = vsel %vm3413, %v3351, %v3373
      %v3441 = vsel %vm3413, %v3352, %v3374
      %v3442 = vsel %vm3413, %v3353, %v3375
      %v3443 = vsel %vm3413, %v3354, %v3376
      %v3444 = vsel %vm3413, %v3355, %v3377
      %v3445 = vsel %vm3413, %v3356, %v3378
      %v3446 = vsel %vm3413, %v3357, %v3379
      %v3447 = vsel %vm3413, %v3358, %v3380
      %v3448 = vsel %vm3413, %v3359, %v3381
      %v3449 = vsel %vm3413, %v3360, %v3382
      %v3450 = vsel %vm3413, %v3361, %v3383
      %v3451 = vsel %vm3413, %v3362, %v3384
      %v3452 = vsel %vm3413, %v3363, %v3385
      %v3453 = vsel %vm3413, %v3364, %v3386
      %v3454 = vsel %vm3413, %v3365, %v3387
      %v3455 = vsel %vm3413, %v3366, %v3388
      %v3456 = vsel %vm3413, %v3367, %v3389
      %v3457 = vsel %vm3413, %v3368, %v3390
      %v3458 = vld [vmem:[%s1 + $0x5] sm:$0x1]
      %v3459 = vlaneseq
      %v3460 = vshrl.u32 %v3459, 7
      %v3461 = vsub.s32 0, %v3460
      %v3462 = vrot.slane %v3458, %v3461
      %v3463 = vmul.f32 %v3436, %v3462
      %v3464 = vmul.f32 %v3414, %v3462
      %v3465 = vmul.f32 %v3437, %v3462
      %v3466 = vmul.f32 %v3415, %v3462
      %v3467 = vmul.f32 %v3438, %v3462
      %v3468 = vmul.f32 %v3416, %v3462
      %v3469 = vmul.f32 %v3439, %v3462
      %v3470 = vmul.f32 %v3417, %v3462
      %v3471 = vmul.f32 %v3440, %v3462
      %v3472 = vmul.f32 %v3418, %v3462
      %v3473 = vmul.f32 %v3441, %v3462
      %v3474 = vmul.f32 %v3419, %v3462
      %v3475 = vmul.f32 %v3442, %v3462
      %v3476 = vmul.f32 %v3420, %v3462
      %v3477 = vmul.f32 %v3443, %v3462
      %v3478 = vmul.f32 %v3421, %v3462
      %v3479 = vmul.f32 %v3444, %v3462
      %v3480 = vmul.f32 %v3422, %v3462
      %v3481 = vmul.f32 %v3445, %v3462
      %v3482 = vmul.f32 %v3423, %v3462
      %v3483 = vmul.f32 %v3446, %v3462
      %v3484 = vmul.f32 %v3424, %v3462
      %v3485 = vmul.f32 %v3447, %v3462
      %v3486 = vmul.f32 %v3425, %v3462
      %v3487 = vmul.f32 %v3448, %v3462
      %v3488 = vmul.f32 %v3426, %v3462
      %v3489 = vmul.f32 %v3449, %v3462
      %v3490 = vmul.f32 %v3427, %v3462
      %v3491 = vmul.f32 %v3450, %v3462
      %v3492 = vmul.f32 %v3428, %v3462
      %v3493 = vmul.f32 %v3451, %v3462
      %v3494 = vmul.f32 %v3429, %v3462
      %v3495 = vld [vmem:[%s1 + $0xc] sm:$0x1]
      %v3496 = vlaneseq
      %v3497 = vshrl.u32 %v3496, 7
      %v3498 = vsub.s32 0, %v3497
      %v3499 = vrot.slane %v3495, %v3498
      %v3500 = vmul.f32 %v3437, %v3499
      %v3501 = vmul.f32 %v3415, %v3499
      %v3502 = vmul.f32 %v3438, %v3499
      %v3503 = vmul.f32 %v3416, %v3499
      %v3504 = vmul.f32 %v3439, %v3499
      %v3505 = vmul.f32 %v3417, %v3499
      %v3506 = vmul.f32 %v3440, %v3499
      %v3507 = vmul.f32 %v3418, %v3499
      %v3508 = vmul.f32 %v3441, %v3499
      %v3509 = vmul.f32 %v3419, %v3499
      %v3510 = vmul.f32 %v3442, %v3499
      %v3511 = vmul.f32 %v3420, %v3499
      %v3512 = vmul.f32 %v3443, %v3499
      %v3513 = vmul.f32 %v3421, %v3499
      %v3514 = vmul.f32 %v3444, %v3499
      %v3515 = vmul.f32 %v3422, %v3499
      %v3516 = vmul.f32 %v3445, %v3499
      %v3517 = vmul.f32 %v3423, %v3499
      %v3518 = vmul.f32 %v3446, %v3499
      %v3519 = vmul.f32 %v3424, %v3499
      %v3520 = vmul.f32 %v3447, %v3499
      %v3521 = vmul.f32 %v3425, %v3499
      %v3522 = vmul.f32 %v3448, %v3499
      %v3523 = vmul.f32 %v3426, %v3499
      %v3524 = vmul.f32 %v3449, %v3499
      %v3525 = vmul.f32 %v3427, %v3499
      %v3526 = vmul.f32 %v3450, %v3499
      %v3527 = vmul.f32 %v3428, %v3499
      %v3528 = vmul.f32 %v3451, %v3499
      %v3529 = vmul.f32 %v3429, %v3499
      %v3530 = vmul.f32 %v3452, %v3499
      %v3531 = vmul.f32 %v3430, %v3499
      %v3532 = vadd.f32 %v3463, %v3500
      %v3533 = vadd.f32 %v3464, %v3501
      %v3534 = vadd.f32 %v3465, %v3502
      %v3535 = vadd.f32 %v3466, %v3503
      %v3536 = vadd.f32 %v3467, %v3504
      %v3537 = vadd.f32 %v3468, %v3505
      %v3538 = vadd.f32 %v3469, %v3506
      %v3539 = vadd.f32 %v3470, %v3507
      %v3540 = vadd.f32 %v3471, %v3508
      %v3541 = vadd.f32 %v3472, %v3509
      %v3542 = vadd.f32 %v3473, %v3510
      %v3543 = vadd.f32 %v3474, %v3511
      %v3544 = vadd.f32 %v3475, %v3512
      %v3545 = vadd.f32 %v3476, %v3513
      %v3546 = vadd.f32 %v3477, %v3514
      %v3547 = vadd.f32 %v3478, %v3515
      %v3548 = vadd.f32 %v3479, %v3516
      %v3549 = vadd.f32 %v3480, %v3517
      %v3550 = vadd.f32 %v3481, %v3518
      %v3551 = vadd.f32 %v3482, %v3519
      %v3552 = vadd.f32 %v3483, %v3520
      %v3553 = vadd.f32 %v3484, %v3521
      %v3554 = vadd.f32 %v3485, %v3522
      %v3555 = vadd.f32 %v3486, %v3523
      %v3556 = vadd.f32 %v3487, %v3524
      %v3557 = vadd.f32 %v3488, %v3525
      %v3558 = vadd.f32 %v3489, %v3526
      %v3559 = vadd.f32 %v3490, %v3527
      %v3560 = vadd.f32 %v3491, %v3528
      %v3561 = vadd.f32 %v3492, %v3529
      %v3562 = vadd.f32 %v3493, %v3530
      %v3563 = vadd.f32 %v3494, %v3531
      %v3564 = vld [vmem:[%s1 + $0x13] sm:$0x1]
      %v3565 = vlaneseq
      %v3566 = vshrl.u32 %v3565, 7
      %v3567 = vsub.s32 0, %v3566
      %v3568 = vrot.slane %v3564, %v3567
      %v3569 = vmul.f32 %v3438, %v3568
      %v3570 = vmul.f32 %v3416, %v3568
      %v3571 = vmul.f32 %v3439, %v3568
      %v3572 = vmul.f32 %v3417, %v3568
      %v3573 = vmul.f32 %v3440, %v3568
      %v3574 = vmul.f32 %v3418, %v3568
      %v3575 = vmul.f32 %v3441, %v3568
      %v3576 = vmul.f32 %v3419, %v3568
      %v3577 = vmul.f32 %v3442, %v3568
      %v3578 = vmul.f32 %v3420, %v3568
      %v3579 = vmul.f32 %v3443, %v3568
      %v3580 = vmul.f32 %v3421, %v3568
      %v3581 = vmul.f32 %v3444, %v3568
      %v3582 = vmul.f32 %v3422, %v3568
      %v3583 = vmul.f32 %v3445, %v3568
      %v3584 = vmul.f32 %v3423, %v3568
      %v3585 = vmul.f32 %v3446, %v3568
      %v3586 = vmul.f32 %v3424, %v3568
      %v3587 = vmul.f32 %v3447, %v3568
      %v3588 = vmul.f32 %v3425, %v3568
      %v3589 = vmul.f32 %v3448, %v3568
      %v3590 = vmul.f32 %v3426, %v3568
      %v3591 = vmul.f32 %v3449, %v3568
      %v3592 = vmul.f32 %v3427, %v3568
      %v3593 = vmul.f32 %v3450, %v3568
      %v3594 = vmul.f32 %v3428, %v3568
      %v3595 = vmul.f32 %v3451, %v3568
      %v3596 = vmul.f32 %v3429, %v3568
      %v3597 = vmul.f32 %v3452, %v3568
      %v3598 = vmul.f32 %v3430, %v3568
      %v3599 = vmul.f32 %v3453, %v3568
      %v3600 = vmul.f32 %v3431, %v3568
      %v3601 = vadd.f32 %v3532, %v3569
      %v3602 = vadd.f32 %v3533, %v3570
      %v3603 = vadd.f32 %v3534, %v3571
      %v3604 = vadd.f32 %v3535, %v3572
      %v3605 = vadd.f32 %v3536, %v3573
      %v3606 = vadd.f32 %v3537, %v3574
      %v3607 = vadd.f32 %v3538, %v3575
      %v3608 = vadd.f32 %v3539, %v3576
      %v3609 = vadd.f32 %v3540, %v3577
      %v3610 = vadd.f32 %v3541, %v3578
      %v3611 = vadd.f32 %v3542, %v3579
      %v3612 = vadd.f32 %v3543, %v3580
      %v3613 = vadd.f32 %v3544, %v3581
      %v3614 = vadd.f32 %v3545, %v3582
      %v3615 = vadd.f32 %v3546, %v3583
      %v3616 = vadd.f32 %v3547, %v3584
      %v3617 = vadd.f32 %v3548, %v3585
      %v3618 = vadd.f32 %v3549, %v3586
      %v3619 = vadd.f32 %v3550, %v3587
      %v3620 = vadd.f32 %v3551, %v3588
      %v3621 = vadd.f32 %v3552, %v3589
      %v3622 = vadd.f32 %v3553, %v3590
      %v3623 = vadd.f32 %v3554, %v3591
      %v3624 = vadd.f32 %v3555, %v3592
      %v3625 = vadd.f32 %v3556, %v3593
      %v3626 = vadd.f32 %v3557, %v3594
      %v3627 = vadd.f32 %v3558, %v3595
      %v3628 = vadd.f32 %v3559, %v3596
      %v3629 = vadd.f32 %v3560, %v3597
      %v3630 = vadd.f32 %v3561, %v3598
      %v3631 = vadd.f32 %v3562, %v3599
      %v3632 = vadd.f32 %v3563, %v3600
      %v3633 = vld [vmem:[%s1 + $0x1a] sm:$0x1]
      %v3634 = vlaneseq
      %v3635 = vshrl.u32 %v3634, 7
      %v3636 = vsub.s32 0, %v3635
      %v3637 = vrot.slane %v3633, %v3636
      %v3638 = vmul.f32 %v3439, %v3637
      %v3639 = vmul.f32 %v3417, %v3637
      %v3640 = vmul.f32 %v3440, %v3637
      %v3641 = vmul.f32 %v3418, %v3637
      %v3642 = vmul.f32 %v3441, %v3637
      %v3643 = vmul.f32 %v3419, %v3637
      %v3644 = vmul.f32 %v3442, %v3637
      %v3645 = vmul.f32 %v3420, %v3637
      %v3646 = vmul.f32 %v3443, %v3637
      %v3647 = vmul.f32 %v3421, %v3637
      %v3648 = vmul.f32 %v3444, %v3637
      %v3649 = vmul.f32 %v3422, %v3637
      %v3650 = vmul.f32 %v3445, %v3637
      %v3651 = vmul.f32 %v3423, %v3637
      %v3652 = vmul.f32 %v3446, %v3637
      %v3653 = vmul.f32 %v3424, %v3637
      %v3654 = vmul.f32 %v3447, %v3637
      %v3655 = vmul.f32 %v3425, %v3637
      %v3656 = vmul.f32 %v3448, %v3637
      %v3657 = vmul.f32 %v3426, %v3637
      %v3658 = vmul.f32 %v3449, %v3637
      %v3659 = vmul.f32 %v3427, %v3637
      %v3660 = vmul.f32 %v3450, %v3637
      %v3661 = vmul.f32 %v3428, %v3637
      %v3662 = vmul.f32 %v3451, %v3637
      %v3663 = vmul.f32 %v3429, %v3637
      %v3664 = vmul.f32 %v3452, %v3637
      %v3665 = vmul.f32 %v3430, %v3637
      %v3666 = vmul.f32 %v3453, %v3637
      %v3667 = vmul.f32 %v3431, %v3637
      %v3668 = vmul.f32 %v3454, %v3637
      %v3669 = vmul.f32 %v3432, %v3637
      %v3670 = vadd.f32 %v3601, %v3638
      %v3671 = vadd.f32 %v3602, %v3639
      %v3672 = vadd.f32 %v3603, %v3640
      %v3673 = vadd.f32 %v3604, %v3641
      %v3674 = vadd.f32 %v3605, %v3642
      %v3675 = vadd.f32 %v3606, %v3643
      %v3676 = vadd.f32 %v3607, %v3644
      %v3677 = vadd.f32 %v3608, %v3645
      %v3678 = vadd.f32 %v3609, %v3646
      %v3679 = vadd.f32 %v3610, %v3647
      %v3680 = vadd.f32 %v3611, %v3648
      %v3681 = vadd.f32 %v3612, %v3649
      %v3682 = vadd.f32 %v3613, %v3650
      %v3683 = vadd.f32 %v3614, %v3651
      %v3684 = vadd.f32 %v3615, %v3652
      %v3685 = vadd.f32 %v3616, %v3653
      %v3686 = vadd.f32 %v3617, %v3654
      %v3687 = vadd.f32 %v3618, %v3655
      %v3688 = vadd.f32 %v3619, %v3656
      %v3689 = vadd.f32 %v3620, %v3657
      %v3690 = vadd.f32 %v3621, %v3658
      %v3691 = vadd.f32 %v3622, %v3659
      %v3692 = vadd.f32 %v3623, %v3660
      %v3693 = vadd.f32 %v3624, %v3661
      %v3694 = vadd.f32 %v3625, %v3662
      %v3695 = vadd.f32 %v3626, %v3663
      %v3696 = vadd.f32 %v3627, %v3664
      %v3697 = vadd.f32 %v3628, %v3665
      %v3698 = vadd.f32 %v3629, %v3666
      %v3699 = vadd.f32 %v3630, %v3667
      %v3700 = vadd.f32 %v3631, %v3668
      %v3701 = vadd.f32 %v3632, %v3669
      %v3702 = vld [vmem:[%s1 + $0x21] sm:$0x1]
      %v3703 = vlaneseq
      %v3704 = vshrl.u32 %v3703, 7
      %v3705 = vsub.s32 0, %v3704
      %v3706 = vrot.slane %v3702, %v3705
      %v3707 = vmul.f32 %v3440, %v3706
      %v3708 = vmul.f32 %v3418, %v3706
      %v3709 = vmul.f32 %v3441, %v3706
      %v3710 = vmul.f32 %v3419, %v3706
      %v3711 = vmul.f32 %v3442, %v3706
      %v3712 = vmul.f32 %v3420, %v3706
      %v3713 = vmul.f32 %v3443, %v3706
      %v3714 = vmul.f32 %v3421, %v3706
      %v3715 = vmul.f32 %v3444, %v3706
      %v3716 = vmul.f32 %v3422, %v3706
      %v3717 = vmul.f32 %v3445, %v3706
      %v3718 = vmul.f32 %v3423, %v3706
      %v3719 = vmul.f32 %v3446, %v3706
      %v3720 = vmul.f32 %v3424, %v3706
      %v3721 = vmul.f32 %v3447, %v3706
      %v3722 = vmul.f32 %v3425, %v3706
      %v3723 = vmul.f32 %v3448, %v3706
      %v3724 = vmul.f32 %v3426, %v3706
      %v3725 = vmul.f32 %v3449, %v3706
      %v3726 = vmul.f32 %v3427, %v3706
      %v3727 = vmul.f32 %v3450, %v3706
      %v3728 = vmul.f32 %v3428, %v3706
      %v3729 = vmul.f32 %v3451, %v3706
      %v3730 = vmul.f32 %v3429, %v3706
      %v3731 = vmul.f32 %v3452, %v3706
      %v3732 = vmul.f32 %v3430, %v3706
      %v3733 = vmul.f32 %v3453, %v3706
      %v3734 = vmul.f32 %v3431, %v3706
      %v3735 = vmul.f32 %v3454, %v3706
      %v3736 = vmul.f32 %v3432, %v3706
      %v3737 = vmul.f32 %v3455, %v3706
      %v3738 = vmul.f32 %v3433, %v3706
      %v3739 = vadd.f32 %v3670, %v3707
      %v3740 = vadd.f32 %v3671, %v3708
      %v3741 = vadd.f32 %v3672, %v3709
      %v3742 = vadd.f32 %v3673, %v3710
      %v3743 = vadd.f32 %v3674, %v3711
      %v3744 = vadd.f32 %v3675, %v3712
      %v3745 = vadd.f32 %v3676, %v3713
      %v3746 = vadd.f32 %v3677, %v3714
      %v3747 = vadd.f32 %v3678, %v3715
      %v3748 = vadd.f32 %v3679, %v3716
      %v3749 = vadd.f32 %v3680, %v3717
      %v3750 = vadd.f32 %v3681, %v3718
      %v3751 = vadd.f32 %v3682, %v3719
      %v3752 = vadd.f32 %v3683, %v3720
      %v3753 = vadd.f32 %v3684, %v3721
      %v3754 = vadd.f32 %v3685, %v3722
      %v3755 = vadd.f32 %v3686, %v3723
      %v3756 = vadd.f32 %v3687, %v3724
      %v3757 = vadd.f32 %v3688, %v3725
      %v3758 = vadd.f32 %v3689, %v3726
      %v3759 = vadd.f32 %v3690, %v3727
      %v3760 = vadd.f32 %v3691, %v3728
      %v3761 = vadd.f32 %v3692, %v3729
      %v3762 = vadd.f32 %v3693, %v3730
      %v3763 = vadd.f32 %v3694, %v3731
      %v3764 = vadd.f32 %v3695, %v3732
      %v3765 = vadd.f32 %v3696, %v3733
      %v3766 = vadd.f32 %v3697, %v3734
      %v3767 = vadd.f32 %v3698, %v3735
      %v3768 = vadd.f32 %v3699, %v3736
      %v3769 = vadd.f32 %v3700, %v3737
      %v3770 = vadd.f32 %v3701, %v3738
      %v3771 = vld [vmem:[%s1 + $0x28] sm:$0x1]
      %v3772 = vlaneseq
      %v3773 = vshrl.u32 %v3772, 7
      %v3774 = vsub.s32 0, %v3773
      %v3775 = vrot.slane %v3771, %v3774
      %v3776 = vmul.f32 %v3441, %v3775
      %v3777 = vmul.f32 %v3419, %v3775
      %v3778 = vmul.f32 %v3442, %v3775
      %v3779 = vmul.f32 %v3420, %v3775
      %v3780 = vmul.f32 %v3443, %v3775
      %v3781 = vmul.f32 %v3421, %v3775
      %v3782 = vmul.f32 %v3444, %v3775
      %v3783 = vmul.f32 %v3422, %v3775
      %v3784 = vmul.f32 %v3445, %v3775
      %v3785 = vmul.f32 %v3423, %v3775
      %v3786 = vmul.f32 %v3446, %v3775
      %v3787 = vmul.f32 %v3424, %v3775
      %v3788 = vmul.f32 %v3447, %v3775
      %v3789 = vmul.f32 %v3425, %v3775
      %v3790 = vmul.f32 %v3448, %v3775
      %v3791 = vmul.f32 %v3426, %v3775
      %v3792 = vmul.f32 %v3449, %v3775
      %v3793 = vmul.f32 %v3427, %v3775
      %v3794 = vmul.f32 %v3450, %v3775
      %v3795 = vmul.f32 %v3428, %v3775
      %v3796 = vmul.f32 %v3451, %v3775
      %v3797 = vmul.f32 %v3429, %v3775
      %v3798 = vmul.f32 %v3452, %v3775
      %v3799 = vmul.f32 %v3430, %v3775
      %v3800 = vmul.f32 %v3453, %v3775
      %v3801 = vmul.f32 %v3431, %v3775
      %v3802 = vmul.f32 %v3454, %v3775
      %v3803 = vmul.f32 %v3432, %v3775
      %v3804 = vmul.f32 %v3455, %v3775
      %v3805 = vmul.f32 %v3433, %v3775
      %v3806 = vmul.f32 %v3456, %v3775
      %v3807 = vmul.f32 %v3434, %v3775
      %v3808 = vadd.f32 %v3739, %v3776
      %v3809 = vadd.f32 %v3740, %v3777
      %v3810 = vadd.f32 %v3741, %v3778
      %v3811 = vadd.f32 %v3742, %v3779
      %v3812 = vadd.f32 %v3743, %v3780
      %v3813 = vadd.f32 %v3744, %v3781
      %v3814 = vadd.f32 %v3745, %v3782
      %v3815 = vadd.f32 %v3746, %v3783
      %v3816 = vadd.f32 %v3747, %v3784
      %v3817 = vadd.f32 %v3748, %v3785
      %v3818 = vadd.f32 %v3749, %v3786
      %v3819 = vadd.f32 %v3750, %v3787
      %v3820 = vadd.f32 %v3751, %v3788
      %v3821 = vadd.f32 %v3752, %v3789
      %v3822 = vadd.f32 %v3753, %v3790
      %v3823 = vadd.f32 %v3754, %v3791
      %v3824 = vadd.f32 %v3755, %v3792
      %v3825 = vadd.f32 %v3756, %v3793
      %v3826 = vadd.f32 %v3757, %v3794
      %v3827 = vadd.f32 %v3758, %v3795
      %v3828 = vadd.f32 %v3759, %v3796
      %v3829 = vadd.f32 %v3760, %v3797
      %v3830 = vadd.f32 %v3761, %v3798
      %v3831 = vadd.f32 %v3762, %v3799
      %v3832 = vadd.f32 %v3763, %v3800
      %v3833 = vadd.f32 %v3764, %v3801
      %v3834 = vadd.f32 %v3765, %v3802
      %v3835 = vadd.f32 %v3766, %v3803
      %v3836 = vadd.f32 %v3767, %v3804
      %v3837 = vadd.f32 %v3768, %v3805
      %v3838 = vadd.f32 %v3769, %v3806
      %v3839 = vadd.f32 %v3770, %v3807
      %v3840 = vld [vmem:[%s1 + $0x2f] sm:$0x1]
      %v3841 = vlaneseq
      %v3842 = vshrl.u32 %v3841, 7
      %v3843 = vsub.s32 0, %v3842
      %v3844 = vrot.slane %v3840, %v3843
      %v3845 = vmul.f32 %v3442, %v3844
      %v3846 = vmul.f32 %v3420, %v3844
      %v3847 = vmul.f32 %v3443, %v3844
      %v3848 = vmul.f32 %v3421, %v3844
      %v3849 = vmul.f32 %v3444, %v3844
      %v3850 = vmul.f32 %v3422, %v3844
      %v3851 = vmul.f32 %v3445, %v3844
      %v3852 = vmul.f32 %v3423, %v3844
      %v3853 = vmul.f32 %v3446, %v3844
      %v3854 = vmul.f32 %v3424, %v3844
      %v3855 = vmul.f32 %v3447, %v3844
      %v3856 = vmul.f32 %v3425, %v3844
      %v3857 = vmul.f32 %v3448, %v3844
      %v3858 = vmul.f32 %v3426, %v3844
      %v3859 = vmul.f32 %v3449, %v3844
      %v3860 = vmul.f32 %v3427, %v3844
      %v3861 = vmul.f32 %v3450, %v3844
      %v3862 = vmul.f32 %v3428, %v3844
      %v3863 = vmul.f32 %v3451, %v3844
      %v3864 = vmul.f32 %v3429, %v3844
      %v3865 = vmul.f32 %v3452, %v3844
      %v3866 = vmul.f32 %v3430, %v3844
      %v3867 = vmul.f32 %v3453, %v3844
      %v3868 = vmul.f32 %v3431, %v3844
      %v3869 = vmul.f32 %v3454, %v3844
      %v3870 = vmul.f32 %v3432, %v3844
      %v3871 = vmul.f32 %v3455, %v3844
      %v3872 = vmul.f32 %v3433, %v3844
      %v3873 = vmul.f32 %v3456, %v3844
      %v3874 = vmul.f32 %v3434, %v3844
      %v3875 = vmul.f32 %v3457, %v3844
      %v3876 = vmul.f32 %v3435, %v3844
      %v3877 = vadd.f32 %v3808, %v3845
      %v3878 = vadd.f32 %v3809, %v3846
      %v3879 = vadd.f32 %v3810, %v3847
      %v3880 = vadd.f32 %v3811, %v3848
      %v3881 = vadd.f32 %v3812, %v3849
      %v3882 = vadd.f32 %v3813, %v3850
      %v3883 = vadd.f32 %v3814, %v3851
      %v3884 = vadd.f32 %v3815, %v3852
      %v3885 = vadd.f32 %v3816, %v3853
      %v3886 = vadd.f32 %v3817, %v3854
      %v3887 = vadd.f32 %v3818, %v3855
      %v3888 = vadd.f32 %v3819, %v3856
      %v3889 = vadd.f32 %v3820, %v3857
      %v3890 = vadd.f32 %v3821, %v3858
      %v3891 = vadd.f32 %v3822, %v3859
      %v3892 = vadd.f32 %v3823, %v3860
      %v3893 = vadd.f32 %v3824, %v3861
      %v3894 = vadd.f32 %v3825, %v3862
      %v3895 = vadd.f32 %v3826, %v3863
      %v3896 = vadd.f32 %v3827, %v3864
      %v3897 = vadd.f32 %v3828, %v3865
      %v3898 = vadd.f32 %v3829, %v3866
      %v3899 = vadd.f32 %v3830, %v3867
      %v3900 = vadd.f32 %v3831, %v3868
      %v3901 = vadd.f32 %v3832, %v3869
      %v3902 = vadd.f32 %v3833, %v3870
      %v3903 = vadd.f32 %v3834, %v3871
      %v3904 = vadd.f32 %v3835, %v3872
      %v3905 = vadd.f32 %v3836, %v3873
      %v3906 = vadd.f32 %v3837, %v3874
      %v3907 = vadd.f32 %v3838, %v3875
      %v3908 = vadd.f32 %v3839, %v3876
      %v3909 = vadd.f32 %v3315, %v3877
      %v3910 = vadd.f32 %v3316, %v3878
      %v3911 = vadd.f32 %v3317, %v3879
      %v3912 = vadd.f32 %v3318, %v3880
      %v3913 = vadd.f32 %v3319, %v3881
      %v3914 = vadd.f32 %v3320, %v3882
      %v3915 = vadd.f32 %v3321, %v3883
      %v3916 = vadd.f32 %v3322, %v3884
      %v3917 = vadd.f32 %v3323, %v3885
      %v3918 = vadd.f32 %v3324, %v3886
      %v3919 = vadd.f32 %v3325, %v3887
      %v3920 = vadd.f32 %v3326, %v3888
      %v3921 = vadd.f32 %v3327, %v3889
      %v3922 = vadd.f32 %v3328, %v3890
      %v3923 = vadd.f32 %v3329, %v3891
      %v3924 = vadd.f32 %v3330, %v3892
      %v3925 = vadd.f32 %v3331, %v3893
      %v3926 = vadd.f32 %v3332, %v3894
      %v3927 = vadd.f32 %v3333, %v3895
      %v3928 = vadd.f32 %v3334, %v3896
      %v3929 = vadd.f32 %v3335, %v3897
      %v3930 = vadd.f32 %v3336, %v3898
      %v3931 = vadd.f32 %v3337, %v3899
      %v3932 = vadd.f32 %v3338, %v3900
      %v3933 = vadd.f32 %v3339, %v3901
      %v3934 = vadd.f32 %v3340, %v3902
      %v3935 = vadd.f32 %v3341, %v3903
      %v3936 = vadd.f32 %v3342, %v3904
      %v3937 = vadd.f32 %v3343, %v3905
      %v3938 = vadd.f32 %v3344, %v3906
      %v3939 = vadd.f32 %v3345, %v3907
      %v3940 = vadd.f32 %v3346, %v3908
      %v3941 = vrot.slane %v431, 3
      %v3942 = vrot.slane %v435, 3
      %v3943 = vrot.slane %v439, 3
      %v3944 = vrot.slane %v443, 3
      %v3945 = vrot.slane %v447, 3
      %v3946 = vrot.slane %v451, 3
      %v3947 = vrot.slane %v455, 3
      %v3948 = vrot.slane %v459, 3
      %v3949 = vrot.slane %v463, 3
      %v3950 = vrot.slane %v467, 3
      %v3951 = vrot.slane %v471, 3
      %v3952 = vrot.slane %v475, 3
      %v3953 = vrot.slane %v479, 3
      %v3954 = vrot.slane %v483, 3
      %v3955 = vrot.slane %v487, 3
      %v3956 = vrot.slane %v491, 3
      %v3957 = vrot.slane %v495, 3
      %v3958 = vrot.slane %v499, 3
      %v3959 = vrot.slane %v503, 3
      %v3960 = vrot.slane %v507, 3
      %v3961 = vrot.slane %v511, 3
      %v3962 = vrot.slane %v515, 3
      %v3963 = vrot.slane %v432, 3
      %v3964 = vrot.slane %v436, 3
      %v3965 = vrot.slane %v440, 3
      %v3966 = vrot.slane %v444, 3
      %v3967 = vrot.slane %v448, 3
      %v3968 = vrot.slane %v452, 3
      %v3969 = vrot.slane %v456, 3
      %v3970 = vrot.slane %v460, 3
      %v3971 = vrot.slane %v464, 3
      %v3972 = vrot.slane %v468, 3
      %v3973 = vrot.slane %v472, 3
      %v3974 = vrot.slane %v476, 3
      %v3975 = vrot.slane %v480, 3
      %v3976 = vrot.slane %v484, 3
      %v3977 = vrot.slane %v488, 3
      %v3978 = vrot.slane %v492, 3
      %v3979 = vrot.slane %v496, 3
      %v3980 = vrot.slane %v500, 3
      %v3981 = vrot.slane %v504, 3
      %v3982 = vrot.slane %v508, 3
      %v3983 = vrot.slane %v512, 3
      %v3984 = vrot.slane %v516, 3
      %v3985 = vrot.slane %v433, 3
      %v3986 = vrot.slane %v437, 3
      %v3987 = vrot.slane %v441, 3
      %v3988 = vrot.slane %v445, 3
      %v3989 = vrot.slane %v449, 3
      %v3990 = vrot.slane %v453, 3
      %v3991 = vrot.slane %v457, 3
      %v3992 = vrot.slane %v461, 3
      %v3993 = vrot.slane %v465, 3
      %v3994 = vrot.slane %v469, 3
      %v3995 = vrot.slane %v473, 3
      %v3996 = vrot.slane %v477, 3
      %v3997 = vrot.slane %v481, 3
      %v3998 = vrot.slane %v485, 3
      %v3999 = vrot.slane %v489, 3
      %v4000 = vrot.slane %v493, 3
      %v4001 = vrot.slane %v497, 3
      %v4002 = vrot.slane %v501, 3
      %v4003 = vrot.slane %v505, 3
      %v4004 = vrot.slane %v509, 3
      %v4005 = vrot.slane %v513, 3
      %v4006 = vrot.slane %v517, 3
      %vm4007 = vcmp.lt.s32.totalorder %v585, 5
      %v4008 = vsel %vm4007, %v3963, %v3985
      %v4009 = vsel %vm4007, %v3964, %v3986
      %v4010 = vsel %vm4007, %v3965, %v3987
      %v4011 = vsel %vm4007, %v3966, %v3988
      %v4012 = vsel %vm4007, %v3967, %v3989
      %v4013 = vsel %vm4007, %v3968, %v3990
      %v4014 = vsel %vm4007, %v3969, %v3991
      %v4015 = vsel %vm4007, %v3970, %v3992
      %v4016 = vsel %vm4007, %v3971, %v3993
      %v4017 = vsel %vm4007, %v3972, %v3994
      %v4018 = vsel %vm4007, %v3973, %v3995
      %v4019 = vsel %vm4007, %v3974, %v3996
      %v4020 = vsel %vm4007, %v3975, %v3997
      %v4021 = vsel %vm4007, %v3976, %v3998
      %v4022 = vsel %vm4007, %v3977, %v3999
      %v4023 = vsel %vm4007, %v3978, %v4000
      %v4024 = vsel %vm4007, %v3979, %v4001
      %v4025 = vsel %vm4007, %v3980, %v4002
      %v4026 = vsel %vm4007, %v3981, %v4003
      %v4027 = vsel %vm4007, %v3982, %v4004
      %v4028 = vsel %vm4007, %v3983, %v4005
      %v4029 = vsel %vm4007, %v3984, %v4006
      %v4030 = vsel %vm4007, %v3941, %v3963
      %v4031 = vsel %vm4007, %v3942, %v3964
      %v4032 = vsel %vm4007, %v3943, %v3965
      %v4033 = vsel %vm4007, %v3944, %v3966
      %v4034 = vsel %vm4007, %v3945, %v3967
      %v4035 = vsel %vm4007, %v3946, %v3968
      %v4036 = vsel %vm4007, %v3947, %v3969
      %v4037 = vsel %vm4007, %v3948, %v3970
      %v4038 = vsel %vm4007, %v3949, %v3971
      %v4039 = vsel %vm4007, %v3950, %v3972
      %v4040 = vsel %vm4007, %v3951, %v3973
      %v4041 = vsel %vm4007, %v3952, %v3974
      %v4042 = vsel %vm4007, %v3953, %v3975
      %v4043 = vsel %vm4007, %v3954, %v3976
      %v4044 = vsel %vm4007, %v3955, %v3977
      %v4045 = vsel %vm4007, %v3956, %v3978
      %v4046 = vsel %vm4007, %v3957, %v3979
      %v4047 = vsel %vm4007, %v3958, %v3980
      %v4048 = vsel %vm4007, %v3959, %v3981
      %v4049 = vsel %vm4007, %v3960, %v3982
      %v4050 = vsel %vm4007, %v3961, %v3983
      %v4051 = vsel %vm4007, %v3962, %v3984
      %v4052 = vld [vmem:[%s1 + $0x6] sm:$0x1]
      %v4053 = vlaneseq
      %v4054 = vshrl.u32 %v4053, 7
      %v4055 = vsub.s32 0, %v4054
      %v4056 = vrot.slane %v4052, %v4055
      %v4057 = vmul.f32 %v4030, %v4056
      %v4058 = vmul.f32 %v4008, %v4056
      %v4059 = vmul.f32 %v4031, %v4056
      %v4060 = vmul.f32 %v4009, %v4056
      %v4061 = vmul.f32 %v4032, %v4056
      %v4062 = vmul.f32 %v4010, %v4056
      %v4063 = vmul.f32 %v4033, %v4056
      %v4064 = vmul.f32 %v4011, %v4056
      %v4065 = vmul.f32 %v4034, %v4056
      %v4066 = vmul.f32 %v4012, %v4056
      %v4067 = vmul.f32 %v4035, %v4056
      %v4068 = vmul.f32 %v4013, %v4056
      %v4069 = vmul.f32 %v4036, %v4056
      %v4070 = vmul.f32 %v4014, %v4056
      %v4071 = vmul.f32 %v4037, %v4056
      %v4072 = vmul.f32 %v4015, %v4056
      %v4073 = vmul.f32 %v4038, %v4056
      %v4074 = vmul.f32 %v4016, %v4056
      %v4075 = vmul.f32 %v4039, %v4056
      %v4076 = vmul.f32 %v4017, %v4056
      %v4077 = vmul.f32 %v4040, %v4056
      %v4078 = vmul.f32 %v4018, %v4056
      %v4079 = vmul.f32 %v4041, %v4056
      %v4080 = vmul.f32 %v4019, %v4056
      %v4081 = vmul.f32 %v4042, %v4056
      %v4082 = vmul.f32 %v4020, %v4056
      %v4083 = vmul.f32 %v4043, %v4056
      %v4084 = vmul.f32 %v4021, %v4056
      %v4085 = vmul.f32 %v4044, %v4056
      %v4086 = vmul.f32 %v4022, %v4056
      %v4087 = vmul.f32 %v4045, %v4056
      %v4088 = vmul.f32 %v4023, %v4056
      %v4089 = vld [vmem:[%s1 + $0xd] sm:$0x1]
      %v4090 = vlaneseq
      %v4091 = vshrl.u32 %v4090, 7
      %v4092 = vsub.s32 0, %v4091
      %v4093 = vrot.slane %v4089, %v4092
      %v4094 = vmul.f32 %v4031, %v4093
      %v4095 = vmul.f32 %v4009, %v4093
      %v4096 = vmul.f32 %v4032, %v4093
      %v4097 = vmul.f32 %v4010, %v4093
      %v4098 = vmul.f32 %v4033, %v4093
      %v4099 = vmul.f32 %v4011, %v4093
      %v4100 = vmul.f32 %v4034, %v4093
      %v4101 = vmul.f32 %v4012, %v4093
      %v4102 = vmul.f32 %v4035, %v4093
      %v4103 = vmul.f32 %v4013, %v4093
      %v4104 = vmul.f32 %v4036, %v4093
      %v4105 = vmul.f32 %v4014, %v4093
      %v4106 = vmul.f32 %v4037, %v4093
      %v4107 = vmul.f32 %v4015, %v4093
      %v4108 = vmul.f32 %v4038, %v4093
      %v4109 = vmul.f32 %v4016, %v4093
      %v4110 = vmul.f32 %v4039, %v4093
      %v4111 = vmul.f32 %v4017, %v4093
      %v4112 = vmul.f32 %v4040, %v4093
      %v4113 = vmul.f32 %v4018, %v4093
      %v4114 = vmul.f32 %v4041, %v4093
      %v4115 = vmul.f32 %v4019, %v4093
      %v4116 = vmul.f32 %v4042, %v4093
      %v4117 = vmul.f32 %v4020, %v4093
      %v4118 = vmul.f32 %v4043, %v4093
      %v4119 = vmul.f32 %v4021, %v4093
      %v4120 = vmul.f32 %v4044, %v4093
      %v4121 = vmul.f32 %v4022, %v4093
      %v4122 = vmul.f32 %v4045, %v4093
      %v4123 = vmul.f32 %v4023, %v4093
      %v4124 = vmul.f32 %v4046, %v4093
      %v4125 = vmul.f32 %v4024, %v4093
      %v4126 = vadd.f32 %v4057, %v4094
      %v4127 = vadd.f32 %v4058, %v4095
      %v4128 = vadd.f32 %v4059, %v4096
      %v4129 = vadd.f32 %v4060, %v4097
      %v4130 = vadd.f32 %v4061, %v4098
      %v4131 = vadd.f32 %v4062, %v4099
      %v4132 = vadd.f32 %v4063, %v4100
      %v4133 = vadd.f32 %v4064, %v4101
      %v4134 = vadd.f32 %v4065, %v4102
      %v4135 = vadd.f32 %v4066, %v4103
      %v4136 = vadd.f32 %v4067, %v4104
      %v4137 = vadd.f32 %v4068, %v4105
      %v4138 = vadd.f32 %v4069, %v4106
      %v4139 = vadd.f32 %v4070, %v4107
      %v4140 = vadd.f32 %v4071, %v4108
      %v4141 = vadd.f32 %v4072, %v4109
      %v4142 = vadd.f32 %v4073, %v4110
      %v4143 = vadd.f32 %v4074, %v4111
      %v4144 = vadd.f32 %v4075, %v4112
      %v4145 = vadd.f32 %v4076, %v4113
      %v4146 = vadd.f32 %v4077, %v4114
      %v4147 = vadd.f32 %v4078, %v4115
      %v4148 = vadd.f32 %v4079, %v4116
      %v4149 = vadd.f32 %v4080, %v4117
      %v4150 = vadd.f32 %v4081, %v4118
      %v4151 = vadd.f32 %v4082, %v4119
      %v4152 = vadd.f32 %v4083, %v4120
      %v4153 = vadd.f32 %v4084, %v4121
      %v4154 = vadd.f32 %v4085, %v4122
      %v4155 = vadd.f32 %v4086, %v4123
      %v4156 = vadd.f32 %v4087, %v4124
      %v4157 = vadd.f32 %v4088, %v4125
      %v4158 = vld [vmem:[%s1 + $0x14] sm:$0x1]
      %v4159 = vlaneseq
      %v4160 = vshrl.u32 %v4159, 7
      %v4161 = vsub.s32 0, %v4160
      %v4162 = vrot.slane %v4158, %v4161
      %v4163 = vmul.f32 %v4032, %v4162
      %v4164 = vmul.f32 %v4010, %v4162
      %v4165 = vmul.f32 %v4033, %v4162
      %v4166 = vmul.f32 %v4011, %v4162
      %v4167 = vmul.f32 %v4034, %v4162
      %v4168 = vmul.f32 %v4012, %v4162
      %v4169 = vmul.f32 %v4035, %v4162
      %v4170 = vmul.f32 %v4013, %v4162
      %v4171 = vmul.f32 %v4036, %v4162
      %v4172 = vmul.f32 %v4014, %v4162
      %v4173 = vmul.f32 %v4037, %v4162
      %v4174 = vmul.f32 %v4015, %v4162
      %v4175 = vmul.f32 %v4038, %v4162
      %v4176 = vmul.f32 %v4016, %v4162
      %v4177 = vmul.f32 %v4039, %v4162
      %v4178 = vmul.f32 %v4017, %v4162
      %v4179 = vmul.f32 %v4040, %v4162
      %v4180 = vmul.f32 %v4018, %v4162
      %v4181 = vmul.f32 %v4041, %v4162
      %v4182 = vmul.f32 %v4019, %v4162
      %v4183 = vmul.f32 %v4042, %v4162
      %v4184 = vmul.f32 %v4020, %v4162
      %v4185 = vmul.f32 %v4043, %v4162
      %v4186 = vmul.f32 %v4021, %v4162
      %v4187 = vmul.f32 %v4044, %v4162
      %v4188 = vmul.f32 %v4022, %v4162
      %v4189 = vmul.f32 %v4045, %v4162
      %v4190 = vmul.f32 %v4023, %v4162
      %v4191 = vmul.f32 %v4046, %v4162
      %v4192 = vmul.f32 %v4024, %v4162
      %v4193 = vmul.f32 %v4047, %v4162
      %v4194 = vmul.f32 %v4025, %v4162
      %v4195 = vadd.f32 %v4126, %v4163
      %v4196 = vadd.f32 %v4127, %v4164
      %v4197 = vadd.f32 %v4128, %v4165
      %v4198 = vadd.f32 %v4129, %v4166
      %v4199 = vadd.f32 %v4130, %v4167
      %v4200 = vadd.f32 %v4131, %v4168
      %v4201 = vadd.f32 %v4132, %v4169
      %v4202 = vadd.f32 %v4133, %v4170
      %v4203 = vadd.f32 %v4134, %v4171
      %v4204 = vadd.f32 %v4135, %v4172
      %v4205 = vadd.f32 %v4136, %v4173
      %v4206 = vadd.f32 %v4137, %v4174
      %v4207 = vadd.f32 %v4138, %v4175
      %v4208 = vadd.f32 %v4139, %v4176
      %v4209 = vadd.f32 %v4140, %v4177
      %v4210 = vadd.f32 %v4141, %v4178
      %v4211 = vadd.f32 %v4142, %v4179
      %v4212 = vadd.f32 %v4143, %v4180
      %v4213 = vadd.f32 %v4144, %v4181
      %v4214 = vadd.f32 %v4145, %v4182
      %v4215 = vadd.f32 %v4146, %v4183
      %v4216 = vadd.f32 %v4147, %v4184
      %v4217 = vadd.f32 %v4148, %v4185
      %v4218 = vadd.f32 %v4149, %v4186
      %v4219 = vadd.f32 %v4150, %v4187
      %v4220 = vadd.f32 %v4151, %v4188
      %v4221 = vadd.f32 %v4152, %v4189
      %v4222 = vadd.f32 %v4153, %v4190
      %v4223 = vadd.f32 %v4154, %v4191
      %v4224 = vadd.f32 %v4155, %v4192
      %v4225 = vadd.f32 %v4156, %v4193
      %v4226 = vadd.f32 %v4157, %v4194
      %v4227 = vld [vmem:[%s1 + $0x1b] sm:$0x1]
      %v4228 = vlaneseq
      %v4229 = vshrl.u32 %v4228, 7
      %v4230 = vsub.s32 0, %v4229
      %v4231 = vrot.slane %v4227, %v4230
      %v4232 = vmul.f32 %v4033, %v4231
      %v4233 = vmul.f32 %v4011, %v4231
      %v4234 = vmul.f32 %v4034, %v4231
      %v4235 = vmul.f32 %v4012, %v4231
      %v4236 = vmul.f32 %v4035, %v4231
      %v4237 = vmul.f32 %v4013, %v4231
      %v4238 = vmul.f32 %v4036, %v4231
      %v4239 = vmul.f32 %v4014, %v4231
      %v4240 = vmul.f32 %v4037, %v4231
      %v4241 = vmul.f32 %v4015, %v4231
      %v4242 = vmul.f32 %v4038, %v4231
      %v4243 = vmul.f32 %v4016, %v4231
      %v4244 = vmul.f32 %v4039, %v4231
      %v4245 = vmul.f32 %v4017, %v4231
      %v4246 = vmul.f32 %v4040, %v4231
      %v4247 = vmul.f32 %v4018, %v4231
      %v4248 = vmul.f32 %v4041, %v4231
      %v4249 = vmul.f32 %v4019, %v4231
      %v4250 = vmul.f32 %v4042, %v4231
      %v4251 = vmul.f32 %v4020, %v4231
      %v4252 = vmul.f32 %v4043, %v4231
      %v4253 = vmul.f32 %v4021, %v4231
      %v4254 = vmul.f32 %v4044, %v4231
      %v4255 = vmul.f32 %v4022, %v4231
      %v4256 = vmul.f32 %v4045, %v4231
      %v4257 = vmul.f32 %v4023, %v4231
      %v4258 = vmul.f32 %v4046, %v4231
      %v4259 = vmul.f32 %v4024, %v4231
      %v4260 = vmul.f32 %v4047, %v4231
      %v4261 = vmul.f32 %v4025, %v4231
      %v4262 = vmul.f32 %v4048, %v4231
      %v4263 = vmul.f32 %v4026, %v4231
      %v4264 = vadd.f32 %v4195, %v4232
      %v4265 = vadd.f32 %v4196, %v4233
      %v4266 = vadd.f32 %v4197, %v4234
      %v4267 = vadd.f32 %v4198, %v4235
      %v4268 = vadd.f32 %v4199, %v4236
      %v4269 = vadd.f32 %v4200, %v4237
      %v4270 = vadd.f32 %v4201, %v4238
      %v4271 = vadd.f32 %v4202, %v4239
      %v4272 = vadd.f32 %v4203, %v4240
      %v4273 = vadd.f32 %v4204, %v4241
      %v4274 = vadd.f32 %v4205, %v4242
      %v4275 = vadd.f32 %v4206, %v4243
      %v4276 = vadd.f32 %v4207, %v4244
      %v4277 = vadd.f32 %v4208, %v4245
      %v4278 = vadd.f32 %v4209, %v4246
      %v4279 = vadd.f32 %v4210, %v4247
      %v4280 = vadd.f32 %v4211, %v4248
      %v4281 = vadd.f32 %v4212, %v4249
      %v4282 = vadd.f32 %v4213, %v4250
      %v4283 = vadd.f32 %v4214, %v4251
      %v4284 = vadd.f32 %v4215, %v4252
      %v4285 = vadd.f32 %v4216, %v4253
      %v4286 = vadd.f32 %v4217, %v4254
      %v4287 = vadd.f32 %v4218, %v4255
      %v4288 = vadd.f32 %v4219, %v4256
      %v4289 = vadd.f32 %v4220, %v4257
      %v4290 = vadd.f32 %v4221, %v4258
      %v4291 = vadd.f32 %v4222, %v4259
      %v4292 = vadd.f32 %v4223, %v4260
      %v4293 = vadd.f32 %v4224, %v4261
      %v4294 = vadd.f32 %v4225, %v4262
      %v4295 = vadd.f32 %v4226, %v4263
      %v4296 = vld [vmem:[%s1 + $0x22] sm:$0x1]
      %v4297 = vlaneseq
      %v4298 = vshrl.u32 %v4297, 7
      %v4299 = vsub.s32 0, %v4298
      %v4300 = vrot.slane %v4296, %v4299
      %v4301 = vmul.f32 %v4034, %v4300
      %v4302 = vmul.f32 %v4012, %v4300
      %v4303 = vmul.f32 %v4035, %v4300
      %v4304 = vmul.f32 %v4013, %v4300
      %v4305 = vmul.f32 %v4036, %v4300
      %v4306 = vmul.f32 %v4014, %v4300
      %v4307 = vmul.f32 %v4037, %v4300
      %v4308 = vmul.f32 %v4015, %v4300
      %v4309 = vmul.f32 %v4038, %v4300
      %v4310 = vmul.f32 %v4016, %v4300
      %v4311 = vmul.f32 %v4039, %v4300
      %v4312 = vmul.f32 %v4017, %v4300
      %v4313 = vmul.f32 %v4040, %v4300
      %v4314 = vmul.f32 %v4018, %v4300
      %v4315 = vmul.f32 %v4041, %v4300
      %v4316 = vmul.f32 %v4019, %v4300
      %v4317 = vmul.f32 %v4042, %v4300
      %v4318 = vmul.f32 %v4020, %v4300
      %v4319 = vmul.f32 %v4043, %v4300
      %v4320 = vmul.f32 %v4021, %v4300
      %v4321 = vmul.f32 %v4044, %v4300
      %v4322 = vmul.f32 %v4022, %v4300
      %v4323 = vmul.f32 %v4045, %v4300
      %v4324 = vmul.f32 %v4023, %v4300
      %v4325 = vmul.f32 %v4046, %v4300
      %v4326 = vmul.f32 %v4024, %v4300
      %v4327 = vmul.f32 %v4047, %v4300
      %v4328 = vmul.f32 %v4025, %v4300
      %v4329 = vmul.f32 %v4048, %v4300
      %v4330 = vmul.f32 %v4026, %v4300
      %v4331 = vmul.f32 %v4049, %v4300
      %v4332 = vmul.f32 %v4027, %v4300
      %v4333 = vadd.f32 %v4264, %v4301
      %v4334 = vadd.f32 %v4265, %v4302
      %v4335 = vadd.f32 %v4266, %v4303
      %v4336 = vadd.f32 %v4267, %v4304
      %v4337 = vadd.f32 %v4268, %v4305
      %v4338 = vadd.f32 %v4269, %v4306
      %v4339 = vadd.f32 %v4270, %v4307
      %v4340 = vadd.f32 %v4271, %v4308
      %v4341 = vadd.f32 %v4272, %v4309
      %v4342 = vadd.f32 %v4273, %v4310
      %v4343 = vadd.f32 %v4274, %v4311
      %v4344 = vadd.f32 %v4275, %v4312
      %v4345 = vadd.f32 %v4276, %v4313
      %v4346 = vadd.f32 %v4277, %v4314
      %v4347 = vadd.f32 %v4278, %v4315
      %v4348 = vadd.f32 %v4279, %v4316
      %v4349 = vadd.f32 %v4280, %v4317
      %v4350 = vadd.f32 %v4281, %v4318
      %v4351 = vadd.f32 %v4282, %v4319
      %v4352 = vadd.f32 %v4283, %v4320
      %v4353 = vadd.f32 %v4284, %v4321
      %v4354 = vadd.f32 %v4285, %v4322
      %v4355 = vadd.f32 %v4286, %v4323
      %v4356 = vadd.f32 %v4287, %v4324
      %v4357 = vadd.f32 %v4288, %v4325
      %v4358 = vadd.f32 %v4289, %v4326
      %v4359 = vadd.f32 %v4290, %v4327
      %v4360 = vadd.f32 %v4291, %v4328
      %v4361 = vadd.f32 %v4292, %v4329
      %v4362 = vadd.f32 %v4293, %v4330
      %v4363 = vadd.f32 %v4294, %v4331
      %v4364 = vadd.f32 %v4295, %v4332
      %v4365 = vld [vmem:[%s1 + $0x29] sm:$0x1]
      %v4366 = vlaneseq
      %v4367 = vshrl.u32 %v4366, 7
      %v4368 = vsub.s32 0, %v4367
      %v4369 = vrot.slane %v4365, %v4368
      %v4370 = vmul.f32 %v4035, %v4369
      %v4371 = vmul.f32 %v4013, %v4369
      %v4372 = vmul.f32 %v4036, %v4369
      %v4373 = vmul.f32 %v4014, %v4369
      %v4374 = vmul.f32 %v4037, %v4369
      %v4375 = vmul.f32 %v4015, %v4369
      %v4376 = vmul.f32 %v4038, %v4369
      %v4377 = vmul.f32 %v4016, %v4369
      %v4378 = vmul.f32 %v4039, %v4369
      %v4379 = vmul.f32 %v4017, %v4369
      %v4380 = vmul.f32 %v4040, %v4369
      %v4381 = vmul.f32 %v4018, %v4369
      %v4382 = vmul.f32 %v4041, %v4369
      %v4383 = vmul.f32 %v4019, %v4369
      %v4384 = vmul.f32 %v4042, %v4369
      %v4385 = vmul.f32 %v4020, %v4369
      %v4386 = vmul.f32 %v4043, %v4369
      %v4387 = vmul.f32 %v4021, %v4369
      %v4388 = vmul.f32 %v4044, %v4369
      %v4389 = vmul.f32 %v4022, %v4369
      %v4390 = vmul.f32 %v4045, %v4369
      %v4391 = vmul.f32 %v4023, %v4369
      %v4392 = vmul.f32 %v4046, %v4369
      %v4393 = vmul.f32 %v4024, %v4369
      %v4394 = vmul.f32 %v4047, %v4369
      %v4395 = vmul.f32 %v4025, %v4369
      %v4396 = vmul.f32 %v4048, %v4369
      %v4397 = vmul.f32 %v4026, %v4369
      %v4398 = vmul.f32 %v4049, %v4369
      %v4399 = vmul.f32 %v4027, %v4369
      %v4400 = vmul.f32 %v4050, %v4369
      %v4401 = vmul.f32 %v4028, %v4369
      %v4402 = vadd.f32 %v4333, %v4370
      %v4403 = vadd.f32 %v4334, %v4371
      %v4404 = vadd.f32 %v4335, %v4372
      %v4405 = vadd.f32 %v4336, %v4373
      %v4406 = vadd.f32 %v4337, %v4374
      %v4407 = vadd.f32 %v4338, %v4375
      %v4408 = vadd.f32 %v4339, %v4376
      %v4409 = vadd.f32 %v4340, %v4377
      %v4410 = vadd.f32 %v4341, %v4378
      %v4411 = vadd.f32 %v4342, %v4379
      %v4412 = vadd.f32 %v4343, %v4380
      %v4413 = vadd.f32 %v4344, %v4381
      %v4414 = vadd.f32 %v4345, %v4382
      %v4415 = vadd.f32 %v4346, %v4383
      %v4416 = vadd.f32 %v4347, %v4384
      %v4417 = vadd.f32 %v4348, %v4385
      %v4418 = vadd.f32 %v4349, %v4386
      %v4419 = vadd.f32 %v4350, %v4387
      %v4420 = vadd.f32 %v4351, %v4388
      %v4421 = vadd.f32 %v4352, %v4389
      %v4422 = vadd.f32 %v4353, %v4390
      %v4423 = vadd.f32 %v4354, %v4391
      %v4424 = vadd.f32 %v4355, %v4392
      %v4425 = vadd.f32 %v4356, %v4393
      %v4426 = vadd.f32 %v4357, %v4394
      %v4427 = vadd.f32 %v4358, %v4395
      %v4428 = vadd.f32 %v4359, %v4396
      %v4429 = vadd.f32 %v4360, %v4397
      %v4430 = vadd.f32 %v4361, %v4398
      %v4431 = vadd.f32 %v4362, %v4399
      %v4432 = vadd.f32 %v4363, %v4400
      %v4433 = vadd.f32 %v4364, %v4401
      %v4434 = vld [vmem:[%s1 + $0x30] sm:$0x1]
      %v4435 = vlaneseq
      %v4436 = vshrl.u32 %v4435, 7
      %v4437 = vsub.s32 0, %v4436
      %v4438 = vrot.slane %v4434, %v4437
      %v4439 = vmul.f32 %v4036, %v4438
      %v4440 = vmul.f32 %v4014, %v4438
      %v4441 = vmul.f32 %v4037, %v4438
      %v4442 = vmul.f32 %v4015, %v4438
      %v4443 = vmul.f32 %v4038, %v4438
      %v4444 = vmul.f32 %v4016, %v4438
      %v4445 = vmul.f32 %v4039, %v4438
      %v4446 = vmul.f32 %v4017, %v4438
      %v4447 = vmul.f32 %v4040, %v4438
      %v4448 = vmul.f32 %v4018, %v4438
      %v4449 = vmul.f32 %v4041, %v4438
      %v4450 = vmul.f32 %v4019, %v4438
      %v4451 = vmul.f32 %v4042, %v4438
      %v4452 = vmul.f32 %v4020, %v4438
      %v4453 = vmul.f32 %v4043, %v4438
      %v4454 = vmul.f32 %v4021, %v4438
      %v4455 = vmul.f32 %v4044, %v4438
      %v4456 = vmul.f32 %v4022, %v4438
      %v4457 = vmul.f32 %v4045, %v4438
      %v4458 = vmul.f32 %v4023, %v4438
      %v4459 = vmul.f32 %v4046, %v4438
      %v4460 = vmul.f32 %v4024, %v4438
      %v4461 = vmul.f32 %v4047, %v4438
      %v4462 = vmul.f32 %v4025, %v4438
      %v4463 = vmul.f32 %v4048, %v4438
      %v4464 = vmul.f32 %v4026, %v4438
      %v4465 = vmul.f32 %v4049, %v4438
      %v4466 = vmul.f32 %v4027, %v4438
      %v4467 = vmul.f32 %v4050, %v4438
      %v4468 = vmul.f32 %v4028, %v4438
      %v4469 = vmul.f32 %v4051, %v4438
      %v4470 = vmul.f32 %v4029, %v4438
      %v4471 = vadd.f32 %v4402, %v4439
      %v4472 = vadd.f32 %v4403, %v4440
      %v4473 = vadd.f32 %v4404, %v4441
      %v4474 = vadd.f32 %v4405, %v4442
      %v4475 = vadd.f32 %v4406, %v4443
      %v4476 = vadd.f32 %v4407, %v4444
      %v4477 = vadd.f32 %v4408, %v4445
      %v4478 = vadd.f32 %v4409, %v4446
      %v4479 = vadd.f32 %v4410, %v4447
      %v4480 = vadd.f32 %v4411, %v4448
      %v4481 = vadd.f32 %v4412, %v4449
      %v4482 = vadd.f32 %v4413, %v4450
      %v4483 = vadd.f32 %v4414, %v4451
      %v4484 = vadd.f32 %v4415, %v4452
      %v4485 = vadd.f32 %v4416, %v4453
      %v4486 = vadd.f32 %v4417, %v4454
      %v4487 = vadd.f32 %v4418, %v4455
      %v4488 = vadd.f32 %v4419, %v4456
      %v4489 = vadd.f32 %v4420, %v4457
      %v4490 = vadd.f32 %v4421, %v4458
      %v4491 = vadd.f32 %v4422, %v4459
      %v4492 = vadd.f32 %v4423, %v4460
      %v4493 = vadd.f32 %v4424, %v4461
      %v4494 = vadd.f32 %v4425, %v4462
      %v4495 = vadd.f32 %v4426, %v4463
      %v4496 = vadd.f32 %v4427, %v4464
      %v4497 = vadd.f32 %v4428, %v4465
      %v4498 = vadd.f32 %v4429, %v4466
      %v4499 = vadd.f32 %v4430, %v4467
      %v4500 = vadd.f32 %v4431, %v4468
      %v4501 = vadd.f32 %v4432, %v4469
      %v4502 = vadd.f32 %v4433, %v4470
      %v4503 = vadd.f32 %v3909, %v4471
      %v4504 = vadd.f32 %v3910, %v4472
      %v4505 = vadd.f32 %v3911, %v4473
      %v4506 = vadd.f32 %v3912, %v4474
      %v4507 = vadd.f32 %v3913, %v4475
      %v4508 = vadd.f32 %v3914, %v4476
      %v4509 = vadd.f32 %v3915, %v4477
      %v4510 = vadd.f32 %v3916, %v4478
      %v4511 = vadd.f32 %v3917, %v4479
      %v4512 = vadd.f32 %v3918, %v4480
      %v4513 = vadd.f32 %v3919, %v4481
      %v4514 = vadd.f32 %v3920, %v4482
      %v4515 = vadd.f32 %v3921, %v4483
      %v4516 = vadd.f32 %v3922, %v4484
      %v4517 = vadd.f32 %v3923, %v4485
      %v4518 = vadd.f32 %v3924, %v4486
      %v4519 = vadd.f32 %v3925, %v4487
      %v4520 = vadd.f32 %v3926, %v4488
      %v4521 = vadd.f32 %v3927, %v4489
      %v4522 = vadd.f32 %v3928, %v4490
      %v4523 = vadd.f32 %v3929, %v4491
      %v4524 = vadd.f32 %v3930, %v4492
      %v4525 = vadd.f32 %v3931, %v4493
      %v4526 = vadd.f32 %v3932, %v4494
      %v4527 = vadd.f32 %v3933, %v4495
      %v4528 = vadd.f32 %v3934, %v4496
      %v4529 = vadd.f32 %v3935, %v4497
      %v4530 = vadd.f32 %v3936, %v4498
      %v4531 = vadd.f32 %v3937, %v4499
      %v4532 = vadd.f32 %v3938, %v4500
      %v4533 = vadd.f32 %v3939, %v4501
      %v4534 = vadd.f32 %v3940, %v4502
      %v4535 = vld [vmem:[%s2] sm:$0x1]
      %v4537 = vlaneseq
      %v4538 = vshrl.u32 %v4537, 7
      %v4539 = vsub.s32 0, %v4538
      %v4540 = vrot.slane %v4535, %v4539
      %v4542 = vadd.f32 %v4503, %v4540
      %v4543 = vadd.f32 %v4504, %v4540
      %v4544 = vadd.f32 %v4505, %v4540
      %v4545 = vadd.f32 %v4506, %v4540
      %v4546 = vadd.f32 %v4507, %v4540
      %v4547 = vadd.f32 %v4508, %v4540
      %v4548 = vadd.f32 %v4509, %v4540
      %v4549 = vadd.f32 %v4510, %v4540
      %v4550 = vadd.f32 %v4511, %v4540
      %v4551 = vadd.f32 %v4512, %v4540
      %v4552 = vadd.f32 %v4513, %v4540
      %v4553 = vadd.f32 %v4514, %v4540
      %v4554 = vadd.f32 %v4515, %v4540
      %v4555 = vadd.f32 %v4516, %v4540
      %v4556 = vadd.f32 %v4517, %v4540
      %v4557 = vadd.f32 %v4518, %v4540
      %v4558 = vadd.f32 %v4519, %v4540
      %v4559 = vadd.f32 %v4520, %v4540
      %v4560 = vadd.f32 %v4521, %v4540
      %v4561 = vadd.f32 %v4522, %v4540
      %v4562 = vadd.f32 %v4523, %v4540
      %v4563 = vadd.f32 %v4524, %v4540
      %v4564 = vadd.f32 %v4525, %v4540
      %v4565 = vadd.f32 %v4526, %v4540
      %v4566 = vadd.f32 %v4527, %v4540
      %v4567 = vadd.f32 %v4528, %v4540
      %v4568 = vadd.f32 %v4529, %v4540
      %v4569 = vadd.f32 %v4530, %v4540
      %v4570 = vadd.f32 %v4531, %v4540
      %v4571 = vadd.f32 %v4532, %v4540
      %v4572 = vadd.f32 %v4533, %v4540
      %v4573 = vadd.f32 %v4534, %v4540
      %v4574 = vsel %vm307, %v4542, 0.0
      %4575 = vadd.xlane.f32.xlu0 %v4574
      %v4576 = vpop.xlane.xlu0 %4575
      %v4577 = vsel %vm307, %v4543, 0.0
      %4578 = vadd.xlane.f32.xlu0 %v4577
      %v4579 = vpop.xlane.xlu0 %4578
      %v4580 = vsel %vm307, %v4544, 0.0
      %4581 = vadd.xlane.f32.xlu0 %v4580
      %v4582 = vpop.xlane.xlu0 %4581
      %v4583 = vsel %vm307, %v4545, 0.0
      %4584 = vadd.xlane.f32.xlu0 %v4583
      %v4585 = vpop.xlane.xlu0 %4584
      %v4586 = vsel %vm307, %v4546, 0.0
      %4587 = vadd.xlane.f32.xlu0 %v4586
      %v4588 = vpop.xlane.xlu0 %4587
      %v4589 = vsel %vm307, %v4547, 0.0
      %4590 = vadd.xlane.f32.xlu0 %v4589
      %v4591 = vpop.xlane.xlu0 %4590
      %v4592 = vsel %vm307, %v4548, 0.0
      %4593 = vadd.xlane.f32.xlu0 %v4592
      %v4594 = vpop.xlane.xlu0 %4593
      %v4595 = vsel %vm307, %v4549, 0.0
      %4596 = vadd.xlane.f32.xlu0 %v4595
      %v4597 = vpop.xlane.xlu0 %4596
      %v4598 = vsel %vm307, %v4550, 0.0
      %4599 = vadd.xlane.f32.xlu0 %v4598
      %v4600 = vpop.xlane.xlu0 %4599
      %v4601 = vsel %vm307, %v4551, 0.0
      %4602 = vadd.xlane.f32.xlu0 %v4601
      %v4603 = vpop.xlane.xlu0 %4602
      %v4604 = vsel %vm307, %v4552, 0.0
      %4605 = vadd.xlane.f32.xlu0 %v4604
      %v4606 = vpop.xlane.xlu0 %4605
      %v4607 = vsel %vm307, %v4553, 0.0
      %4608 = vadd.xlane.f32.xlu0 %v4607
      %v4609 = vpop.xlane.xlu0 %4608
      %v4610 = vsel %vm307, %v4554, 0.0
      %4611 = vadd.xlane.f32.xlu0 %v4610
      %v4612 = vpop.xlane.xlu0 %4611
      %v4613 = vsel %vm307, %v4555, 0.0
      %4614 = vadd.xlane.f32.xlu0 %v4613
      %v4615 = vpop.xlane.xlu0 %4614
      %v4616 = vsel %vm307, %v4556, 0.0
      %4617 = vadd.xlane.f32.xlu0 %v4616
      %v4618 = vpop.xlane.xlu0 %4617
      %v4619 = vsel %vm307, %v4557, 0.0
      %4620 = vadd.xlane.f32.xlu0 %v4619
      %v4621 = vpop.xlane.xlu0 %4620
      %v4622 = vsel %vm307, %v4558, 0.0
      %4623 = vadd.xlane.f32.xlu0 %v4622
      %v4624 = vpop.xlane.xlu0 %4623
      %v4625 = vsel %vm307, %v4559, 0.0
      %4626 = vadd.xlane.f32.xlu0 %v4625
      %v4627 = vpop.xlane.xlu0 %4626
      %v4628 = vsel %vm307, %v4560, 0.0
      %4629 = vadd.xlane.f32.xlu0 %v4628
      %v4630 = vpop.xlane.xlu0 %4629
      %v4631 = vsel %vm307, %v4561, 0.0
      %4632 = vadd.xlane.f32.xlu0 %v4631
      %v4633 = vpop.xlane.xlu0 %4632
      %v4634 = vsel %vm307, %v4562, 0.0
      %4635 = vadd.xlane.f32.xlu0 %v4634
      %v4636 = vpop.xlane.xlu0 %4635
      %v4637 = vsel %vm307, %v4563, 0.0
      %4638 = vadd.xlane.f32.xlu0 %v4637
      %v4639 = vpop.xlane.xlu0 %4638
      %v4640 = vsel %vm307, %v4564, 0.0
      %4641 = vadd.xlane.f32.xlu0 %v4640
      %v4642 = vpop.xlane.xlu0 %4641
      %v4643 = vsel %vm307, %v4565, 0.0
      %4644 = vadd.xlane.f32.xlu0 %v4643
      %v4645 = vpop.xlane.xlu0 %4644
      %v4646 = vsel %vm307, %v4566, 0.0
      %4647 = vadd.xlane.f32.xlu0 %v4646
      %v4648 = vpop.xlane.xlu0 %4647
      %v4649 = vsel %vm307, %v4567, 0.0
      %4650 = vadd.xlane.f32.xlu0 %v4649
      %v4651 = vpop.xlane.xlu0 %4650
      %v4652 = vsel %vm307, %v4568, 0.0
      %4653 = vadd.xlane.f32.xlu0 %v4652
      %v4654 = vpop.xlane.xlu0 %4653
      %v4655 = vsel %vm307, %v4569, 0.0
      %4656 = vadd.xlane.f32.xlu0 %v4655
      %v4657 = vpop.xlane.xlu0 %4656
      %v4658 = vsel %vm307, %v4570, 0.0
      %4659 = vadd.xlane.f32.xlu0 %v4658
      %v4660 = vpop.xlane.xlu0 %4659
      %v4661 = vsel %vm307, %v4571, 0.0
      %4662 = vadd.xlane.f32.xlu0 %v4661
      %v4663 = vpop.xlane.xlu0 %4662
      %v4664 = vsel %vm307, %v4572, 0.0
      %4665 = vadd.xlane.f32.xlu0 %v4664
      %v4666 = vpop.xlane.xlu0 %4665
      %v4667 = vsel %vm307, %v4573, 0.0
      %4668 = vadd.xlane.f32.xlu0 %v4667
      %v4669 = vpop.xlane.xlu0 %4668
      %v4670 = vrcp.pop 8.0
      %v4671 = vmul.f32 %v4576, %v4670
      %v4672 = vmul.f32 %v4579, %v4670
      %v4673 = vmul.f32 %v4582, %v4670
      %v4674 = vmul.f32 %v4585, %v4670
      %v4675 = vmul.f32 %v4588, %v4670
      %v4676 = vmul.f32 %v4591, %v4670
      %v4677 = vmul.f32 %v4594, %v4670
      %v4678 = vmul.f32 %v4597, %v4670
      %v4679 = vmul.f32 %v4600, %v4670
      %v4680 = vmul.f32 %v4603, %v4670
      %v4681 = vmul.f32 %v4606, %v4670
      %v4682 = vmul.f32 %v4609, %v4670
      %v4683 = vmul.f32 %v4612, %v4670
      %v4684 = vmul.f32 %v4615, %v4670
      %v4685 = vmul.f32 %v4618, %v4670
      %v4686 = vmul.f32 %v4621, %v4670
      %v4687 = vmul.f32 %v4624, %v4670
      %v4688 = vmul.f32 %v4627, %v4670
      %v4689 = vmul.f32 %v4630, %v4670
      %v4690 = vmul.f32 %v4633, %v4670
      %v4691 = vmul.f32 %v4636, %v4670
      %v4692 = vmul.f32 %v4639, %v4670
      %v4693 = vmul.f32 %v4642, %v4670
      %v4694 = vmul.f32 %v4645, %v4670
      %v4695 = vmul.f32 %v4648, %v4670
      %v4696 = vmul.f32 %v4651, %v4670
      %v4697 = vmul.f32 %v4654, %v4670
      %v4698 = vmul.f32 %v4657, %v4670
      %v4699 = vmul.f32 %v4660, %v4670
      %v4700 = vmul.f32 %v4663, %v4670
      %v4701 = vmul.f32 %v4666, %v4670
      %v4702 = vmul.f32 %v4669, %v4670
      %v4703 = vmul.f32 %v4542, %v4542
      %v4704 = vmul.f32 %v4543, %v4543
      %v4705 = vmul.f32 %v4544, %v4544
      %v4706 = vmul.f32 %v4545, %v4545
      %v4707 = vmul.f32 %v4546, %v4546
      %v4708 = vmul.f32 %v4547, %v4547
      %v4709 = vmul.f32 %v4548, %v4548
      %v4710 = vmul.f32 %v4549, %v4549
      %v4711 = vmul.f32 %v4550, %v4550
      %v4712 = vmul.f32 %v4551, %v4551
      %v4713 = vmul.f32 %v4552, %v4552
      %v4714 = vmul.f32 %v4553, %v4553
      %v4715 = vmul.f32 %v4554, %v4554
      %v4716 = vmul.f32 %v4555, %v4555
      %v4717 = vmul.f32 %v4556, %v4556
      %v4718 = vmul.f32 %v4557, %v4557
      %v4719 = vmul.f32 %v4558, %v4558
      %v4720 = vmul.f32 %v4559, %v4559
      %v4721 = vmul.f32 %v4560, %v4560
      %v4722 = vmul.f32 %v4561, %v4561
      %v4723 = vmul.f32 %v4562, %v4562
      %v4724 = vmul.f32 %v4563, %v4563
      %v4725 = vmul.f32 %v4564, %v4564
      %v4726 = vmul.f32 %v4565, %v4565
      %v4727 = vmul.f32 %v4566, %v4566
      %v4728 = vmul.f32 %v4567, %v4567
      %v4729 = vmul.f32 %v4568, %v4568
      %v4730 = vmul.f32 %v4569, %v4569
      %v4731 = vmul.f32 %v4570, %v4570
      %v4732 = vmul.f32 %v4571, %v4571
      %v4733 = vmul.f32 %v4572, %v4572
      %v4734 = vmul.f32 %v4573, %v4573
      %v4735 = vsel %vm307, %v4703, 0.0
      %4736 = vadd.xlane.f32.xlu0 %v4735
      %v4737 = vpop.xlane.xlu0 %4736
      %v4738 = vsel %vm307, %v4704, 0.0
      %4739 = vadd.xlane.f32.xlu0 %v4738
      %v4740 = vpop.xlane.xlu0 %4739
      %v4741 = vsel %vm307, %v4705, 0.0
      %4742 = vadd.xlane.f32.xlu0 %v4741
      %v4743 = vpop.xlane.xlu0 %4742
      %v4744 = vsel %vm307, %v4706, 0.0
      %4745 = vadd.xlane.f32.xlu0 %v4744
      %v4746 = vpop.xlane.xlu0 %4745
      %v4747 = vsel %vm307, %v4707, 0.0
      %4748 = vadd.xlane.f32.xlu0 %v4747
      %v4749 = vpop.xlane.xlu0 %4748
      %v4750 = vsel %vm307, %v4708, 0.0
      %4751 = vadd.xlane.f32.xlu0 %v4750
      %v4752 = vpop.xlane.xlu0 %4751
      %v4753 = vsel %vm307, %v4709, 0.0
      %4754 = vadd.xlane.f32.xlu0 %v4753
      %v4755 = vpop.xlane.xlu0 %4754
      %v4756 = vsel %vm307, %v4710, 0.0
      %4757 = vadd.xlane.f32.xlu0 %v4756
      %v4758 = vpop.xlane.xlu0 %4757
      %v4759 = vsel %vm307, %v4711, 0.0
      %4760 = vadd.xlane.f32.xlu0 %v4759
      %v4761 = vpop.xlane.xlu0 %4760
      %v4762 = vsel %vm307, %v4712, 0.0
      %4763 = vadd.xlane.f32.xlu0 %v4762
      %v4764 = vpop.xlane.xlu0 %4763
      %v4765 = vsel %vm307, %v4713, 0.0
      %4766 = vadd.xlane.f32.xlu0 %v4765
      %v4767 = vpop.xlane.xlu0 %4766
      %v4768 = vsel %vm307, %v4714, 0.0
      %4769 = vadd.xlane.f32.xlu0 %v4768
      %v4770 = vpop.xlane.xlu0 %4769
      %v4771 = vsel %vm307, %v4715, 0.0
      %4772 = vadd.xlane.f32.xlu0 %v4771
      %v4773 = vpop.xlane.xlu0 %4772
      %v4774 = vsel %vm307, %v4716, 0.0
      %4775 = vadd.xlane.f32.xlu0 %v4774
      %v4776 = vpop.xlane.xlu0 %4775
      %v4777 = vsel %vm307, %v4717, 0.0
      %4778 = vadd.xlane.f32.xlu0 %v4777
      %v4779 = vpop.xlane.xlu0 %4778
      %v4780 = vsel %vm307, %v4718, 0.0
      %4781 = vadd.xlane.f32.xlu0 %v4780
      %v4782 = vpop.xlane.xlu0 %4781
      %v4783 = vsel %vm307, %v4719, 0.0
      %4784 = vadd.xlane.f32.xlu0 %v4783
      %v4785 = vpop.xlane.xlu0 %4784
      %v4786 = vsel %vm307, %v4720, 0.0
      %4787 = vadd.xlane.f32.xlu0 %v4786
      %v4788 = vpop.xlane.xlu0 %4787
      %v4789 = vsel %vm307, %v4721, 0.0
      %4790 = vadd.xlane.f32.xlu0 %v4789
      %v4791 = vpop.xlane.xlu0 %4790
      %v4792 = vsel %vm307, %v4722, 0.0
      %4793 = vadd.xlane.f32.xlu0 %v4792
      %v4794 = vpop.xlane.xlu0 %4793
      %v4795 = vsel %vm307, %v4723, 0.0
      %4796 = vadd.xlane.f32.xlu0 %v4795
      %v4797 = vpop.xlane.xlu0 %4796
      %v4798 = vsel %vm307, %v4724, 0.0
      %4799 = vadd.xlane.f32.xlu0 %v4798
      %v4800 = vpop.xlane.xlu0 %4799
      %v4801 = vsel %vm307, %v4725, 0.0
      %4802 = vadd.xlane.f32.xlu0 %v4801
      %v4803 = vpop.xlane.xlu0 %4802
      %v4804 = vsel %vm307, %v4726, 0.0
      %4805 = vadd.xlane.f32.xlu0 %v4804
      %v4806 = vpop.xlane.xlu0 %4805
      %v4807 = vsel %vm307, %v4727, 0.0
      %4808 = vadd.xlane.f32.xlu0 %v4807
      %v4809 = vpop.xlane.xlu0 %4808
      %v4810 = vsel %vm307, %v4728, 0.0
      %4811 = vadd.xlane.f32.xlu0 %v4810
      %v4812 = vpop.xlane.xlu0 %4811
      %v4813 = vsel %vm307, %v4729, 0.0
      %4814 = vadd.xlane.f32.xlu0 %v4813
      %v4815 = vpop.xlane.xlu0 %4814
      %v4816 = vsel %vm307, %v4730, 0.0
      %4817 = vadd.xlane.f32.xlu0 %v4816
      %v4818 = vpop.xlane.xlu0 %4817
      %v4819 = vsel %vm307, %v4731, 0.0
      %4820 = vadd.xlane.f32.xlu0 %v4819
      %v4821 = vpop.xlane.xlu0 %4820
      %v4822 = vsel %vm307, %v4732, 0.0
      %4823 = vadd.xlane.f32.xlu0 %v4822
      %v4824 = vpop.xlane.xlu0 %4823
      %v4825 = vsel %vm307, %v4733, 0.0
      %4826 = vadd.xlane.f32.xlu0 %v4825
      %v4827 = vpop.xlane.xlu0 %4826
      %v4828 = vsel %vm307, %v4734, 0.0
      %4829 = vadd.xlane.f32.xlu0 %v4828
      %v4830 = vpop.xlane.xlu0 %4829
      %v4831 = vmul.f32 %v4737, %v4670
      %v4832 = vmul.f32 %v4740, %v4670
      %v4833 = vmul.f32 %v4743, %v4670
      %v4834 = vmul.f32 %v4746, %v4670
      %v4835 = vmul.f32 %v4749, %v4670
      %v4836 = vmul.f32 %v4752, %v4670
      %v4837 = vmul.f32 %v4755, %v4670
      %v4838 = vmul.f32 %v4758, %v4670
      %v4839 = vmul.f32 %v4761, %v4670
      %v4840 = vmul.f32 %v4764, %v4670
      %v4841 = vmul.f32 %v4767, %v4670
      %v4842 = vmul.f32 %v4770, %v4670
      %v4843 = vmul.f32 %v4773, %v4670
      %v4844 = vmul.f32 %v4776, %v4670
      %v4845 = vmul.f32 %v4779, %v4670
      %v4846 = vmul.f32 %v4782, %v4670
      %v4847 = vmul.f32 %v4785, %v4670
      %v4848 = vmul.f32 %v4788, %v4670
      %v4849 = vmul.f32 %v4791, %v4670
      %v4850 = vmul.f32 %v4794, %v4670
      %v4851 = vmul.f32 %v4797, %v4670
      %v4852 = vmul.f32 %v4800, %v4670
      %v4853 = vmul.f32 %v4803, %v4670
      %v4854 = vmul.f32 %v4806, %v4670
      %v4855 = vmul.f32 %v4809, %v4670
      %v4856 = vmul.f32 %v4812, %v4670
      %v4857 = vmul.f32 %v4815, %v4670
      %v4858 = vmul.f32 %v4818, %v4670
      %v4859 = vmul.f32 %v4821, %v4670
      %v4860 = vmul.f32 %v4824, %v4670
      %v4861 = vmul.f32 %v4827, %v4670
      %v4862 = vmul.f32 %v4830, %v4670
      %v4863 = vmul.f32 %v4671, %v4671
      %v4864 = vmul.f32 %v4672, %v4672
      %v4865 = vmul.f32 %v4673, %v4673
      %v4866 = vmul.f32 %v4674, %v4674
      %v4867 = vmul.f32 %v4675, %v4675
      %v4868 = vmul.f32 %v4676, %v4676
      %v4869 = vmul.f32 %v4677, %v4677
      %v4870 = vmul.f32 %v4678, %v4678
      %v4871 = vmul.f32 %v4679, %v4679
      %v4872 = vmul.f32 %v4680, %v4680
      %v4873 = vmul.f32 %v4681, %v4681
      %v4874 = vmul.f32 %v4682, %v4682
      %v4875 = vmul.f32 %v4683, %v4683
      %v4876 = vmul.f32 %v4684, %v4684
      %v4877 = vmul.f32 %v4685, %v4685
      %v4878 = vmul.f32 %v4686, %v4686
      %v4879 = vmul.f32 %v4687, %v4687
      %v4880 = vmul.f32 %v4688, %v4688
      %v4881 = vmul.f32 %v4689, %v4689
      %v4882 = vmul.f32 %v4690, %v4690
      %v4883 = vmul.f32 %v4691, %v4691
      %v4884 = vmul.f32 %v4692, %v4692
      %v4885 = vmul.f32 %v4693, %v4693
      %v4886 = vmul.f32 %v4694, %v4694
      %v4887 = vmul.f32 %v4695, %v4695
      %v4888 = vmul.f32 %v4696, %v4696
      %v4889 = vmul.f32 %v4697, %v4697
      %v4890 = vmul.f32 %v4698, %v4698
      %v4891 = vmul.f32 %v4699, %v4699
      %v4892 = vmul.f32 %v4700, %v4700
      %v4893 = vmul.f32 %v4701, %v4701
      %v4894 = vmul.f32 %v4702, %v4702
      %v4895 = vsub.f32 %v4831, %v4863
      %v4896 = vsub.f32 %v4832, %v4864
      %v4897 = vsub.f32 %v4833, %v4865
      %v4898 = vsub.f32 %v4834, %v4866
      %v4899 = vsub.f32 %v4835, %v4867
      %v4900 = vsub.f32 %v4836, %v4868
      %v4901 = vsub.f32 %v4837, %v4869
      %v4902 = vsub.f32 %v4838, %v4870
      %v4903 = vsub.f32 %v4839, %v4871
      %v4904 = vsub.f32 %v4840, %v4872
      %v4905 = vsub.f32 %v4841, %v4873
      %v4906 = vsub.f32 %v4842, %v4874
      %v4907 = vsub.f32 %v4843, %v4875
      %v4908 = vsub.f32 %v4844, %v4876
      %v4909 = vsub.f32 %v4845, %v4877
      %v4910 = vsub.f32 %v4846, %v4878
      %v4911 = vsub.f32 %v4847, %v4879
      %v4912 = vsub.f32 %v4848, %v4880
      %v4913 = vsub.f32 %v4849, %v4881
      %v4914 = vsub.f32 %v4850, %v4882
      %v4915 = vsub.f32 %v4851, %v4883
      %v4916 = vsub.f32 %v4852, %v4884
      %v4917 = vsub.f32 %v4853, %v4885
      %v4918 = vsub.f32 %v4854, %v4886
      %v4919 = vsub.f32 %v4855, %v4887
      %v4920 = vsub.f32 %v4856, %v4888
      %v4921 = vsub.f32 %v4857, %v4889
      %v4922 = vsub.f32 %v4858, %v4890
      %v4923 = vsub.f32 %v4859, %v4891
      %v4924 = vsub.f32 %v4860, %v4892
      %v4925 = vsub.f32 %v4861, %v4893
      %v4926 = vsub.f32 %v4862, %v4894
      %v4927 = vmax.f32 %v4895, 0.0
      %v4928 = vmax.f32 %v4896, 0.0
      %v4929 = vmax.f32 %v4897, 0.0
      %v4930 = vmax.f32 %v4898, 0.0
      %v4931 = vmax.f32 %v4899, 0.0
      %v4932 = vmax.f32 %v4900, 0.0
      %v4933 = vmax.f32 %v4901, 0.0
      %v4934 = vmax.f32 %v4902, 0.0
      %v4935 = vmax.f32 %v4903, 0.0
      %v4936 = vmax.f32 %v4904, 0.0
      %v4937 = vmax.f32 %v4905, 0.0
      %v4938 = vmax.f32 %v4906, 0.0
      %v4939 = vmax.f32 %v4907, 0.0
      %v4940 = vmax.f32 %v4908, 0.0
      %v4941 = vmax.f32 %v4909, 0.0
      %v4942 = vmax.f32 %v4910, 0.0
      %v4943 = vmax.f32 %v4911, 0.0
      %v4944 = vmax.f32 %v4912, 0.0
      %v4945 = vmax.f32 %v4913, 0.0
      %v4946 = vmax.f32 %v4914, 0.0
      %v4947 = vmax.f32 %v4915, 0.0
      %v4948 = vmax.f32 %v4916, 0.0
      %v4949 = vmax.f32 %v4917, 0.0
      %v4950 = vmax.f32 %v4918, 0.0
      %v4951 = vmax.f32 %v4919, 0.0
      %v4952 = vmax.f32 %v4920, 0.0
      %v4953 = vmax.f32 %v4921, 0.0
      %v4954 = vmax.f32 %v4922, 0.0
      %v4955 = vmax.f32 %v4923, 0.0
      %v4956 = vmax.f32 %v4924, 0.0
      %v4957 = vmax.f32 %v4925, 0.0
      %v4958 = vmax.f32 %v4926, 0.0
      %v4959 = vsub.f32 %v4542, %v4671
      %v4960 = vsub.f32 %v4543, %v4672
      %v4961 = vsub.f32 %v4544, %v4673
      %v4962 = vsub.f32 %v4545, %v4674
      %v4963 = vsub.f32 %v4546, %v4675
      %v4964 = vsub.f32 %v4547, %v4676
      %v4965 = vsub.f32 %v4548, %v4677
      %v4966 = vsub.f32 %v4549, %v4678
      %v4967 = vsub.f32 %v4550, %v4679
      %v4968 = vsub.f32 %v4551, %v4680
      %v4969 = vsub.f32 %v4552, %v4681
      %v4970 = vsub.f32 %v4553, %v4682
      %v4971 = vsub.f32 %v4554, %v4683
      %v4972 = vsub.f32 %v4555, %v4684
      %v4973 = vsub.f32 %v4556, %v4685
      %v4974 = vsub.f32 %v4557, %v4686
      %v4975 = vsub.f32 %v4558, %v4687
      %v4976 = vsub.f32 %v4559, %v4688
      %v4977 = vsub.f32 %v4560, %v4689
      %v4978 = vsub.f32 %v4561, %v4690
      %v4979 = vsub.f32 %v4562, %v4691
      %v4980 = vsub.f32 %v4563, %v4692
      %v4981 = vsub.f32 %v4564, %v4693
      %v4982 = vsub.f32 %v4565, %v4694
      %v4983 = vsub.f32 %v4566, %v4695
      %v4984 = vsub.f32 %v4567, %v4696
      %v4985 = vsub.f32 %v4568, %v4697
      %v4986 = vsub.f32 %v4569, %v4698
      %v4987 = vsub.f32 %v4570, %v4699
      %v4988 = vsub.f32 %v4571, %v4700
      %v4989 = vsub.f32 %v4572, %v4701
      %v4990 = vsub.f32 %v4573, %v4702
      %v4991 = vadd.f32 %v4927, 1e-06
      %v4992 = vadd.f32 %v4928, 1e-06
      %v4993 = vadd.f32 %v4929, 1e-06
      %v4994 = vadd.f32 %v4930, 1e-06
      %v4995 = vadd.f32 %v4931, 1e-06
      %v4996 = vadd.f32 %v4932, 1e-06
      %v4997 = vadd.f32 %v4933, 1e-06
      %v4998 = vadd.f32 %v4934, 1e-06
      %v4999 = vadd.f32 %v4935, 1e-06
      %v5000 = vadd.f32 %v4936, 1e-06
      %v5001 = vadd.f32 %v4937, 1e-06
      %v5002 = vadd.f32 %v4938, 1e-06
      %v5003 = vadd.f32 %v4939, 1e-06
      %v5004 = vadd.f32 %v4940, 1e-06
      %v5005 = vadd.f32 %v4941, 1e-06
      %v5006 = vadd.f32 %v4942, 1e-06
      %v5007 = vadd.f32 %v4943, 1e-06
      %v5008 = vadd.f32 %v4944, 1e-06
      %v5009 = vadd.f32 %v4945, 1e-06
      %v5010 = vadd.f32 %v4946, 1e-06
      %v5011 = vadd.f32 %v4947, 1e-06
      %v5012 = vadd.f32 %v4948, 1e-06
      %v5013 = vadd.f32 %v4949, 1e-06
      %v5014 = vadd.f32 %v4950, 1e-06
      %v5015 = vadd.f32 %v4951, 1e-06
      %v5016 = vadd.f32 %v4952, 1e-06
      %v5017 = vadd.f32 %v4953, 1e-06
      %v5018 = vadd.f32 %v4954, 1e-06
      %v5019 = vadd.f32 %v4955, 1e-06
      %v5020 = vadd.f32 %v4956, 1e-06
      %v5021 = vadd.f32 %v4957, 1e-06
      %v5022 = vadd.f32 %v4958, 1e-06
      %v5023 = vrsqrt.pop %v4991
      %v5024 = vrsqrt.pop %v4992
      %v5025 = vrsqrt.pop %v4993
      %v5026 = vrsqrt.pop %v4994
      %v5027 = vrsqrt.pop %v4995
      %v5028 = vrsqrt.pop %v4996
      %v5029 = vrsqrt.pop %v4997
      %v5030 = vrsqrt.pop %v4998
      %v5031 = vrsqrt.pop %v4999
      %v5032 = vrsqrt.pop %v5000
      %v5033 = vrsqrt.pop %v5001
      %v5034 = vrsqrt.pop %v5002
      %v5035 = vrsqrt.pop %v5003
      %v5036 = vrsqrt.pop %v5004
      %v5037 = vrsqrt.pop %v5005
      %v5038 = vrsqrt.pop %v5006
      %v5039 = vrsqrt.pop %v5007
      %v5040 = vrsqrt.pop %v5008
      %v5041 = vrsqrt.pop %v5009
      %v5042 = vrsqrt.pop %v5010
      %v5043 = vrsqrt.pop %v5011
      %v5044 = vrsqrt.pop %v5012
      %v5045 = vrsqrt.pop %v5013
      %v5046 = vrsqrt.pop %v5014
      %v5047 = vrsqrt.pop %v5015
      %v5048 = vrsqrt.pop %v5016
      %v5049 = vrsqrt.pop %v5017
      %v5050 = vrsqrt.pop %v5018
      %v5051 = vrsqrt.pop %v5019
      %v5052 = vrsqrt.pop %v5020
      %v5053 = vrsqrt.pop %v5021
      %v5054 = vrsqrt.pop %v5022
      %v5055 = vmul.f32 %v4959, %v5023
      %v5056 = vmul.f32 %v4960, %v5024
      %v5057 = vmul.f32 %v4961, %v5025
      %v5058 = vmul.f32 %v4962, %v5026
      %v5059 = vmul.f32 %v4963, %v5027
      %v5060 = vmul.f32 %v4964, %v5028
      %v5061 = vmul.f32 %v4965, %v5029
      %v5062 = vmul.f32 %v4966, %v5030
      %v5063 = vmul.f32 %v4967, %v5031
      %v5064 = vmul.f32 %v4968, %v5032
      %v5065 = vmul.f32 %v4969, %v5033
      %v5066 = vmul.f32 %v4970, %v5034
      %v5067 = vmul.f32 %v4971, %v5035
      %v5068 = vmul.f32 %v4972, %v5036
      %v5069 = vmul.f32 %v4973, %v5037
      %v5070 = vmul.f32 %v4974, %v5038
      %v5071 = vmul.f32 %v4975, %v5039
      %v5072 = vmul.f32 %v4976, %v5040
      %v5073 = vmul.f32 %v4977, %v5041
      %v5074 = vmul.f32 %v4978, %v5042
      %v5075 = vmul.f32 %v4979, %v5043
      %v5076 = vmul.f32 %v4980, %v5044
      %v5077 = vmul.f32 %v4981, %v5045
      %v5078 = vmul.f32 %v4982, %v5046
      %v5079 = vmul.f32 %v4983, %v5047
      %v5080 = vmul.f32 %v4984, %v5048
      %v5081 = vmul.f32 %v4985, %v5049
      %v5082 = vmul.f32 %v4986, %v5050
      %v5083 = vmul.f32 %v4987, %v5051
      %v5084 = vmul.f32 %v4988, %v5052
      %v5085 = vmul.f32 %v4989, %v5053
      %v5086 = vmul.f32 %v4990, %v5054
      %v5087 = vpack.c.bf16 %v5056, %v5055
      %v5088 = vpack.c.bf16 %v5058, %v5057
      %v5089 = vpack.c.bf16 %v5060, %v5059
      %v5090 = vpack.c.bf16 %v5062, %v5061
      %v5091 = vpack.c.bf16 %v5064, %v5063
      %v5092 = vpack.c.bf16 %v5066, %v5065
      %v5093 = vpack.c.bf16 %v5068, %v5067
      %v5094 = vpack.c.bf16 %v5070, %v5069
      %v5095 = vpack.c.bf16 %v5072, %v5071
      %v5096 = vpack.c.bf16 %v5074, %v5073
      %v5097 = vpack.c.bf16 %v5076, %v5075
      %v5098 = vpack.c.bf16 %v5078, %v5077
      %v5099 = vpack.c.bf16 %v5080, %v5079
      %v5100 = vpack.c.bf16 %v5082, %v5081
      %v5101 = vpack.c.bf16 %v5084, %v5083
      %v5102 = vpack.c.bf16 %v5086, %v5085
      %v5103 = vld [vmem:[%s3] sm:$0xf]
      %v5104 = vld [vmem:[%s4] sm:$0x1]
      %v5106 = vlaneseq
      %v5107 = vshrl.u32 %v5106, 7
      %v5108 = vsub.s32 0, %v5107
      %v5109 = vrot.slane %v5104, %v5108
      %v5112 = vsel %vm307, %v5087, 0
      %v5115 = vsel %vm307, %v5088, 0
      %v5118 = vsel %vm307, %v5089, 0
      %v5121 = vsel %vm307, %v5090, 0
      %v5124 = vsel %vm307, %v5091, 0
      %v5127 = vsel %vm307, %v5092, 0
      %v5130 = vsel %vm307, %v5093, 0
      %v5133 = vsel %vm307, %v5094, 0
      %v5136 = vsel %vm307, %v5095, 0
      %v5139 = vsel %vm307, %v5096, 0
      %v5142 = vsel %vm307, %v5097, 0
      %v5145 = vsel %vm307, %v5098, 0
      %v5148 = vsel %vm307, %v5099, 0
      %v5151 = vsel %vm307, %v5100, 0
      %v5154 = vsel %vm307, %v5101, 0
      %v5157 = vsel %vm307, %v5102, 0
      %vm5159 = vcmask 1043456
      %v5161 = vsel %vm5159, %v5103, 0
      %5163 = vmatprep.subr.bf16.mxu0 0
      %5164 = vmatpush1.bf16.msra.mxu0 %v5161
      %5165 = vmatprep.subr.bf16.mxu0 0
      %5166 = vmatpush1.bf16.msra.mxu0 0
      %5167 = vmatprep.subr.bf16.mxu0 0
      %5168 = vmatpush1.bf16.msra.mxu0 0
      %5169 = vmatprep.subr.bf16.mxu0 0
      %5170 = vmatpush1.bf16.msra.mxu0 0
      %5171 = vmatprep.subr.bf16.mxu0 0
      %5172 = vmatpush1.bf16.msra.mxu0 0
      %5173 = vmatprep.subr.bf16.mxu0 0
      %5174 = vmatpush1.bf16.msra.mxu0 0
      %5175 = vmatprep.subr.bf16.mxu0 0
      %5176 = vmatpush1.bf16.msra.mxu0 0
      %5177 = vmatprep.subr.bf16.mxu0 0
      %5178 = vmatpush1.bf16.msra.mxu0 0
      %5179 = vmatprep.subr.bf16.mxu0 0
      %5180 = vmatpush1.bf16.msra.mxu0 0
      %5181 = vmatprep.subr.bf16.mxu0 0
      %5182 = vmatpush1.bf16.msra.mxu0 0
      %5183 = vmatprep.subr.bf16.mxu0 0
      %5184 = vmatpush1.bf16.msra.mxu0 0
      %5185 = vmatprep.subr.bf16.mxu0 0
      %5186 = vmatpush1.bf16.msra.mxu0 0
      %5187 = vmatprep.subr.bf16.mxu0 0
      %5188 = vmatpush1.bf16.msra.mxu0 0
      %5189 = vmatprep.subr.bf16.mxu0 0
      %5190 = vmatpush1.bf16.msra.mxu0 0
      %5191 = vmatprep.subr.bf16.mxu0 0
      %5192 = vmatpush1.bf16.msra.mxu0 0
      %5193 = vmatprep.subr.bf16.mxu0 0
      %5194 = vmatpush1.bf16.msra.mxu0 0
      %5195 = vmatprep.mubr.bf16.mxu0 0
      %5196 = vmatmul.mubr.bf16.gmra.mrb[0].mxu0 %v5112
      %v5197 = vpop.f32.mrb[0].mxu0
      %v5198 = vadd.f32 %v5109, %v5197
      %v5199 = vpop.f32.mrb[0].mxu0
      %v5200 = vpop.f32.mrb[0].mxu0
      %v5201 = vadd.f32 %v5109, %v5200
      %v5202 = vpop.f32.mrb[0].mxu0
      %5203 = vmatprep.mubr.bf16.mxu0 0
      %5204 = vmatmul.mubr.bf16.gmra.mrb[0].mxu0 %v5115
      %v5205 = vpop.f32.mrb[0].mxu0
      %v5206 = vadd.f32 %v5109, %v5205
      %v5207 = vpop.f32.mrb[0].mxu0
      %v5208 = vpop.f32.mrb[0].mxu0
      %v5209 = vadd.f32 %v5109, %v5208
      %v5210 = vpop.f32.mrb[0].mxu0
      %5211 = vmatprep.mubr.bf16.mxu0 0
      %5212 = vmatmul.mubr.bf16.gmra.mrb[0].mxu0 %v5118
      %v5213 = vpop.f32.mrb[0].mxu0
      %v5214 = vadd.f32 %v5109, %v5213
      %v5215 = vpop.f32.mrb[0].mxu0
      %v5216 = vpop.f32.mrb[0].mxu0
      %v5217 = vadd.f32 %v5109, %v5216
      %v5218 = vpop.f32.mrb[0].mxu0
      %5219 = vmatprep.mubr.bf16.mxu0 0
      %5220 = vmatmul.mubr.bf16.gmra.mrb[0].mxu0 %v5121
      %v5221 = vpop.f32.mrb[0].mxu0
      %v5222 = vadd.f32 %v5109, %v5221
      %v5223 = vpop.f32.mrb[0].mxu0
      %v5224 = vpop.f32.mrb[0].mxu0
      %v5225 = vadd.f32 %v5109, %v5224
      %v5226 = vpop.f32.mrb[0].mxu0
      %5227 = vmatprep.mubr.bf16.mxu0 0
      %5228 = vmatmul.mubr.bf16.gmra.mrb[0].mxu0 %v5124
      %v5229 = vpop.f32.mrb[0].mxu0
      %v5230 = vadd.f32 %v5109, %v5229
      %v5231 = vpop.f32.mrb[0].mxu0
      %v5232 = vpop.f32.mrb[0].mxu0
      %v5233 = vadd.f32 %v5109, %v5232
      %v5234 = vpop.f32.mrb[0].mxu0
      %5235 = vmatprep.mubr.bf16.mxu0 0
      %5236 = vmatmul.mubr.bf16.gmra.mrb[0].mxu0 %v5127
      %v5237 = vpop.f32.mrb[0].mxu0
      %v5238 = vadd.f32 %v5109, %v5237
      %v5239 = vpop.f32.mrb[0].mxu0
      %v5240 = vpop.f32.mrb[0].mxu0
      %v5241 = vadd.f32 %v5109, %v5240
      %v5242 = vpop.f32.mrb[0].mxu0
      %5243 = vmatprep.mubr.bf16.mxu0 0
      %5244 = vmatmul.mubr.bf16.gmra.mrb[0].mxu0 %v5130
      %v5245 = vpop.f32.mrb[0].mxu0
      %v5246 = vadd.f32 %v5109, %v5245
      %v5247 = vpop.f32.mrb[0].mxu0
      %v5248 = vpop.f32.mrb[0].mxu0
      %v5249 = vadd.f32 %v5109, %v5248
      %v5250 = vpop.f32.mrb[0].mxu0
      %5251 = vmatprep.mubr.bf16.mxu0 0
      %5252 = vmatmul.mubr.bf16.gmra.mrb[0].mxu0 %v5133
      %v5253 = vpop.f32.mrb[0].mxu0
      %v5254 = vadd.f32 %v5109, %v5253
      %v5255 = vpop.f32.mrb[0].mxu0
      %v5256 = vpop.f32.mrb[0].mxu0
      %v5257 = vadd.f32 %v5109, %v5256
      %v5258 = vpop.f32.mrb[0].mxu0
      %5259 = vmatprep.mubr.bf16.mxu0 0
      %5260 = vmatmul.mubr.bf16.gmra.mrb[0].mxu0 %v5136
      %v5261 = vpop.f32.mrb[0].mxu0
      %v5262 = vadd.f32 %v5109, %v5261
      %v5263 = vpop.f32.mrb[0].mxu0
      %v5264 = vpop.f32.mrb[0].mxu0
      %v5265 = vadd.f32 %v5109, %v5264
      %v5266 = vpop.f32.mrb[0].mxu0
      %5267 = vmatprep.mubr.bf16.mxu0 0
      %5268 = vmatmul.mubr.bf16.gmra.mrb[0].mxu0 %v5139
      %v5269 = vpop.f32.mrb[0].mxu0
      %v5270 = vadd.f32 %v5109, %v5269
      %v5271 = vpop.f32.mrb[0].mxu0
      %v5272 = vpop.f32.mrb[0].mxu0
      %v5273 = vadd.f32 %v5109, %v5272
      %v5274 = vpop.f32.mrb[0].mxu0
      %5275 = vmatprep.mubr.bf16.mxu0 0
      %5276 = vmatmul.mubr.bf16.gmra.mrb[0].mxu0 %v5142
      %v5277 = vpop.f32.mrb[0].mxu0
      %v5278 = vadd.f32 %v5109, %v5277
      %v5279 = vpop.f32.mrb[0].mxu0
      %v5280 = vpop.f32.mrb[0].mxu0
      %v5281 = vadd.f32 %v5109, %v5280
      %v5282 = vpop.f32.mrb[0].mxu0
      %5283 = vmatprep.mubr.bf16.mxu0 0
      %5284 = vmatmul.mubr.bf16.gmra.mrb[0].mxu0 %v5145
      %v5285 = vpop.f32.mrb[0].mxu0
      %v5286 = vadd.f32 %v5109, %v5285
      %v5287 = vpop.f32.mrb[0].mxu0
      %v5288 = vpop.f32.mrb[0].mxu0
      %v5289 = vadd.f32 %v5109, %v5288
      %v5290 = vpop.f32.mrb[0].mxu0
      %5291 = vmatprep.mubr.bf16.mxu0 0
      %5292 = vmatmul.mubr.bf16.gmra.mrb[0].mxu0 %v5148
      %v5293 = vpop.f32.mrb[0].mxu0
      %v5294 = vadd.f32 %v5109, %v5293
      %v5295 = vpop.f32.mrb[0].mxu0
      %v5296 = vpop.f32.mrb[0].mxu0
      %v5297 = vadd.f32 %v5109, %v5296
      %v5298 = vpop.f32.mrb[0].mxu0
      %5299 = vmatprep.mubr.bf16.mxu0 0
      %5300 = vmatmul.mubr.bf16.gmra.mrb[0].mxu0 %v5151
      %v5301 = vpop.f32.mrb[0].mxu0
      %v5302 = vadd.f32 %v5109, %v5301
      %v5303 = vpop.f32.mrb[0].mxu0
      %v5304 = vpop.f32.mrb[0].mxu0
      %v5305 = vadd.f32 %v5109, %v5304
      %v5306 = vpop.f32.mrb[0].mxu0
      %5307 = vmatprep.mubr.bf16.mxu0 0
      %5308 = vmatmul.mubr.bf16.gmra.mrb[0].mxu0 %v5154
      %v5309 = vpop.f32.mrb[0].mxu0
      %v5310 = vadd.f32 %v5109, %v5309
      %v5311 = vpop.f32.mrb[0].mxu0
      %v5312 = vpop.f32.mrb[0].mxu0
      %v5313 = vadd.f32 %v5109, %v5312
      %v5314 = vpop.f32.mrb[0].mxu0
      %5315 = vmatprep.mubr.bf16.mxu0 0
      %5316 = vmatmul.mubr.bf16.gmra.mrb[0].mxu0 %v5157
      %v5317 = vpop.f32.mrb[0].mxu0
      %v5318 = vadd.f32 %v5109, %v5317
      %v5319 = vpop.f32.mrb[0].mxu0
      %v5320 = vpop.f32.mrb[0].mxu0
      %v5321 = vadd.f32 %v5109, %v5320
      %v5322 = vpop.f32.mrb[0].mxu0
      %5323 = vdwg.mxu0
      %v5324 = vmul.f32 %v5198, %v5198
      %v5325 = vmul.f32 %v5201, %v5201
      %v5326 = vmul.f32 %v5206, %v5206
      %v5327 = vmul.f32 %v5209, %v5209
      %v5328 = vmul.f32 %v5214, %v5214
      %v5329 = vmul.f32 %v5217, %v5217
      %v5330 = vmul.f32 %v5222, %v5222
      %v5331 = vmul.f32 %v5225, %v5225
      %v5332 = vmul.f32 %v5230, %v5230
      %v5333 = vmul.f32 %v5233, %v5233
      %v5334 = vmul.f32 %v5238, %v5238
      %v5335 = vmul.f32 %v5241, %v5241
      %v5336 = vmul.f32 %v5246, %v5246
      %v5337 = vmul.f32 %v5249, %v5249
      %v5338 = vmul.f32 %v5254, %v5254
      %v5339 = vmul.f32 %v5257, %v5257
      %v5340 = vmul.f32 %v5262, %v5262
      %v5341 = vmul.f32 %v5265, %v5265
      %v5342 = vmul.f32 %v5270, %v5270
      %v5343 = vmul.f32 %v5273, %v5273
      %v5344 = vmul.f32 %v5278, %v5278
      %v5345 = vmul.f32 %v5281, %v5281
      %v5346 = vmul.f32 %v5286, %v5286
      %v5347 = vmul.f32 %v5289, %v5289
      %v5348 = vmul.f32 %v5294, %v5294
      %v5349 = vmul.f32 %v5297, %v5297
      %v5350 = vmul.f32 %v5302, %v5302
      %v5351 = vmul.f32 %v5305, %v5305
      %v5352 = vmul.f32 %v5310, %v5310
      %v5353 = vmul.f32 %v5313, %v5313
      %v5354 = vmul.f32 %v5318, %v5318
      %v5355 = vmul.f32 %v5321, %v5321
      %v5356 = vmul.f32 %v5198, %v5324
      %v5357 = vmul.f32 %v5201, %v5325
      %v5358 = vmul.f32 %v5206, %v5326
      %v5359 = vmul.f32 %v5209, %v5327
      %v5360 = vmul.f32 %v5214, %v5328
      %v5361 = vmul.f32 %v5217, %v5329
      %v5362 = vmul.f32 %v5222, %v5330
      %v5363 = vmul.f32 %v5225, %v5331
      %v5364 = vmul.f32 %v5230, %v5332
      %v5365 = vmul.f32 %v5233, %v5333
      %v5366 = vmul.f32 %v5238, %v5334
      %v5367 = vmul.f32 %v5241, %v5335
      %v5368 = vmul.f32 %v5246, %v5336
      %v5369 = vmul.f32 %v5249, %v5337
      %v5370 = vmul.f32 %v5254, %v5338
      %v5371 = vmul.f32 %v5257, %v5339
      %v5372 = vmul.f32 %v5262, %v5340
      %v5373 = vmul.f32 %v5265, %v5341
      %v5374 = vmul.f32 %v5270, %v5342
      %v5375 = vmul.f32 %v5273, %v5343
      %v5376 = vmul.f32 %v5278, %v5344
      %v5377 = vmul.f32 %v5281, %v5345
      %v5378 = vmul.f32 %v5286, %v5346
      %v5379 = vmul.f32 %v5289, %v5347
      %v5380 = vmul.f32 %v5294, %v5348
      %v5381 = vmul.f32 %v5297, %v5349
      %v5382 = vmul.f32 %v5302, %v5350
      %v5383 = vmul.f32 %v5305, %v5351
      %v5384 = vmul.f32 %v5310, %v5352
      %v5385 = vmul.f32 %v5313, %v5353
      %v5386 = vmul.f32 %v5318, %v5354
      %v5387 = vmul.f32 %v5321, %v5355
      %v5388 = vmul.f32 %v5356, 0.044715
      %v5389 = vmul.f32 %v5357, 0.044715
      %v5390 = vmul.f32 %v5358, 0.044715
      %v5391 = vmul.f32 %v5359, 0.044715
      %v5392 = vmul.f32 %v5360, 0.044715
      %v5393 = vmul.f32 %v5361, 0.044715
      %v5394 = vmul.f32 %v5362, 0.044715
      %v5395 = vmul.f32 %v5363, 0.044715
      %v5396 = vmul.f32 %v5364, 0.044715
      %v5397 = vmul.f32 %v5365, 0.044715
      %v5398 = vmul.f32 %v5366, 0.044715
      %v5399 = vmul.f32 %v5367, 0.044715
      %v5400 = vmul.f32 %v5368, 0.044715
      %v5401 = vmul.f32 %v5369, 0.044715
      %v5402 = vmul.f32 %v5370, 0.044715
      %v5403 = vmul.f32 %v5371, 0.044715
      %v5404 = vmul.f32 %v5372, 0.044715
      %v5405 = vmul.f32 %v5373, 0.044715
      %v5406 = vmul.f32 %v5374, 0.044715
      %v5407 = vmul.f32 %v5375, 0.044715
      %v5408 = vmul.f32 %v5376, 0.044715
      %v5409 = vmul.f32 %v5377, 0.044715
      %v5410 = vmul.f32 %v5378, 0.044715
      %v5411 = vmul.f32 %v5379, 0.044715
      %v5412 = vmul.f32 %v5380, 0.044715
      %v5413 = vmul.f32 %v5381, 0.044715
      %v5414 = vmul.f32 %v5382, 0.044715
      %v5415 = vmul.f32 %v5383, 0.044715
      %v5416 = vmul.f32 %v5384, 0.044715
      %v5417 = vmul.f32 %v5385, 0.044715
      %v5418 = vmul.f32 %v5386, 0.044715
      %v5419 = vmul.f32 %v5387, 0.044715
      %v5420 = vadd.f32 %v5198, %v5388
      %v5421 = vadd.f32 %v5201, %v5389
      %v5422 = vadd.f32 %v5206, %v5390
      %v5423 = vadd.f32 %v5209, %v5391
      %v5424 = vadd.f32 %v5214, %v5392
      %v5425 = vadd.f32 %v5217, %v5393
      %v5426 = vadd.f32 %v5222, %v5394
      %v5427 = vadd.f32 %v5225, %v5395
      %v5428 = vadd.f32 %v5230, %v5396
      %v5429 = vadd.f32 %v5233, %v5397
      %v5430 = vadd.f32 %v5238, %v5398
      %v5431 = vadd.f32 %v5241, %v5399
      %v5432 = vadd.f32 %v5246, %v5400
      %v5433 = vadd.f32 %v5249, %v5401
      %v5434 = vadd.f32 %v5254, %v5402
      %v5435 = vadd.f32 %v5257, %v5403
      %v5436 = vadd.f32 %v5262, %v5404
      %v5437 = vadd.f32 %v5265, %v5405
      %v5438 = vadd.f32 %v5270, %v5406
      %v5439 = vadd.f32 %v5273, %v5407
      %v5440 = vadd.f32 %v5278, %v5408
      %v5441 = vadd.f32 %v5281, %v5409
      %v5442 = vadd.f32 %v5286, %v5410
      %v5443 = vadd.f32 %v5289, %v5411
      %v5444 = vadd.f32 %v5294, %v5412
      %v5445 = vadd.f32 %v5297, %v5413
      %v5446 = vadd.f32 %v5302, %v5414
      %v5447 = vadd.f32 %v5305, %v5415
      %v5448 = vadd.f32 %v5310, %v5416
      %v5449 = vadd.f32 %v5313, %v5417
      %v5450 = vadd.f32 %v5318, %v5418
      %v5451 = vadd.f32 %v5321, %v5419
      %v5452 = vmul.f32 %v5420, 0.7978846
      %v5453 = vmul.f32 %v5421, 0.7978846
      %v5454 = vmul.f32 %v5422, 0.7978846
      %v5455 = vmul.f32 %v5423, 0.7978846
      %v5456 = vmul.f32 %v5424, 0.7978846
      %v5457 = vmul.f32 %v5425, 0.7978846
      %v5458 = vmul.f32 %v5426, 0.7978846
      %v5459 = vmul.f32 %v5427, 0.7978846
      %v5460 = vmul.f32 %v5428, 0.7978846
      %v5461 = vmul.f32 %v5429, 0.7978846
      %v5462 = vmul.f32 %v5430, 0.7978846
      %v5463 = vmul.f32 %v5431, 0.7978846
      %v5464 = vmul.f32 %v5432, 0.7978846
      %v5465 = vmul.f32 %v5433, 0.7978846
      %v5466 = vmul.f32 %v5434, 0.7978846
      %v5467 = vmul.f32 %v5435, 0.7978846
      %v5468 = vmul.f32 %v5436, 0.7978846
      %v5469 = vmul.f32 %v5437, 0.7978846
      %v5470 = vmul.f32 %v5438, 0.7978846
      %v5471 = vmul.f32 %v5439, 0.7978846
      %v5472 = vmul.f32 %v5440, 0.7978846
      %v5473 = vmul.f32 %v5441, 0.7978846
      %v5474 = vmul.f32 %v5442, 0.7978846
      %v5475 = vmul.f32 %v5443, 0.7978846
      %v5476 = vmul.f32 %v5444, 0.7978846
      %v5477 = vmul.f32 %v5445, 0.7978846
      %v5478 = vmul.f32 %v5446, 0.7978846
      %v5479 = vmul.f32 %v5447, 0.7978846
      %v5480 = vmul.f32 %v5448, 0.7978846
      %v5481 = vmul.f32 %v5449, 0.7978846
      %v5482 = vmul.f32 %v5450, 0.7978846
      %v5483 = vmul.f32 %v5451, 0.7978846
      %v5484 = vtanh.pop %v5452
      %v5485 = vtanh.pop %v5453
      %v5486 = vtanh.pop %v5454
      %v5487 = vtanh.pop %v5455
      %v5488 = vtanh.pop %v5456
      %v5489 = vtanh.pop %v5457
      %v5490 = vtanh.pop %v5458
      %v5491 = vtanh.pop %v5459
      %v5492 = vtanh.pop %v5460
      %v5493 = vtanh.pop %v5461
      %v5494 = vtanh.pop %v5462
      %v5495 = vtanh.pop %v5463
      %v5496 = vtanh.pop %v5464
      %v5497 = vtanh.pop %v5465
      %v5498 = vtanh.pop %v5466
      %v5499 = vtanh.pop %v5467
      %v5500 = vtanh.pop %v5468
      %v5501 = vtanh.pop %v5469
      %v5502 = vtanh.pop %v5470
      %v5503 = vtanh.pop %v5471
      %v5504 = vtanh.pop %v5472
      %v5505 = vtanh.pop %v5473
      %v5506 = vtanh.pop %v5474
      %v5507 = vtanh.pop %v5475
      %v5508 = vtanh.pop %v5476
      %v5509 = vtanh.pop %v5477
      %v5510 = vtanh.pop %v5478
      %v5511 = vtanh.pop %v5479
      %v5512 = vtanh.pop %v5480
      %v5513 = vtanh.pop %v5481
      %v5514 = vtanh.pop %v5482
      %v5515 = vtanh.pop %v5483
      %v5516 = vadd.f32 %v5484, 1.0
      %v5517 = vadd.f32 %v5485, 1.0
      %v5518 = vadd.f32 %v5486, 1.0
      %v5519 = vadd.f32 %v5487, 1.0
      %v5520 = vadd.f32 %v5488, 1.0
      %v5521 = vadd.f32 %v5489, 1.0
      %v5522 = vadd.f32 %v5490, 1.0
      %v5523 = vadd.f32 %v5491, 1.0
      %v5524 = vadd.f32 %v5492, 1.0
      %v5525 = vadd.f32 %v5493, 1.0
      %v5526 = vadd.f32 %v5494, 1.0
      %v5527 = vadd.f32 %v5495, 1.0
      %v5528 = vadd.f32 %v5496, 1.0
      %v5529 = vadd.f32 %v5497, 1.0
      %v5530 = vadd.f32 %v5498, 1.0
      %v5531 = vadd.f32 %v5499, 1.0
      %v5532 = vadd.f32 %v5500, 1.0
      %v5533 = vadd.f32 %v5501, 1.0
      %v5534 = vadd.f32 %v5502, 1.0
      %v5535 = vadd.f32 %v5503, 1.0
      %v5536 = vadd.f32 %v5504, 1.0
      %v5537 = vadd.f32 %v5505, 1.0
      %v5538 = vadd.f32 %v5506, 1.0
      %v5539 = vadd.f32 %v5507, 1.0
      %v5540 = vadd.f32 %v5508, 1.0
      %v5541 = vadd.f32 %v5509, 1.0
      %v5542 = vadd.f32 %v5510, 1.0
      %v5543 = vadd.f32 %v5511, 1.0
      %v5544 = vadd.f32 %v5512, 1.0
      %v5545 = vadd.f32 %v5513, 1.0
      %v5546 = vadd.f32 %v5514, 1.0
      %v5547 = vadd.f32 %v5515, 1.0
      %v5548 = vmul.f32 %v5516, 0.5
      %v5549 = vmul.f32 %v5517, 0.5
      %v5550 = vmul.f32 %v5518, 0.5
      %v5551 = vmul.f32 %v5519, 0.5
      %v5552 = vmul.f32 %v5520, 0.5
      %v5553 = vmul.f32 %v5521, 0.5
      %v5554 = vmul.f32 %v5522, 0.5
      %v5555 = vmul.f32 %v5523, 0.5
      %v5556 = vmul.f32 %v5524, 0.5
      %v5557 = vmul.f32 %v5525, 0.5
      %v5558 = vmul.f32 %v5526, 0.5
      %v5559 = vmul.f32 %v5527, 0.5
      %v5560 = vmul.f32 %v5528, 0.5
      %v5561 = vmul.f32 %v5529, 0.5
      %v5562 = vmul.f32 %v5530, 0.5
      %v5563 = vmul.f32 %v5531, 0.5
      %v5564 = vmul.f32 %v5532, 0.5
      %v5565 = vmul.f32 %v5533, 0.5
      %v5566 = vmul.f32 %v5534, 0.5
      %v5567 = vmul.f32 %v5535, 0.5
      %v5568 = vmul.f32 %v5536, 0.5
      %v5569 = vmul.f32 %v5537, 0.5
      %v5570 = vmul.f32 %v5538, 0.5
      %v5571 = vmul.f32 %v5539, 0.5
      %v5572 = vmul.f32 %v5540, 0.5
      %v5573 = vmul.f32 %v5541, 0.5
      %v5574 = vmul.f32 %v5542, 0.5
      %v5575 = vmul.f32 %v5543, 0.5
      %v5576 = vmul.f32 %v5544, 0.5
      %v5577 = vmul.f32 %v5545, 0.5
      %v5578 = vmul.f32 %v5546, 0.5
      %v5579 = vmul.f32 %v5547, 0.5
      %v5580 = vmul.f32 %v5198, %v5548
      %v5581 = vmul.f32 %v5201, %v5549
      %v5582 = vmul.f32 %v5206, %v5550
      %v5583 = vmul.f32 %v5209, %v5551
      %v5584 = vmul.f32 %v5214, %v5552
      %v5585 = vmul.f32 %v5217, %v5553
      %v5586 = vmul.f32 %v5222, %v5554
      %v5587 = vmul.f32 %v5225, %v5555
      %v5588 = vmul.f32 %v5230, %v5556
      %v5589 = vmul.f32 %v5233, %v5557
      %v5590 = vmul.f32 %v5238, %v5558
      %v5591 = vmul.f32 %v5241, %v5559
      %v5592 = vmul.f32 %v5246, %v5560
      %v5593 = vmul.f32 %v5249, %v5561
      %v5594 = vmul.f32 %v5254, %v5562
      %v5595 = vmul.f32 %v5257, %v5563
      %v5596 = vmul.f32 %v5262, %v5564
      %v5597 = vmul.f32 %v5265, %v5565
      %v5598 = vmul.f32 %v5270, %v5566
      %v5599 = vmul.f32 %v5273, %v5567
      %v5600 = vmul.f32 %v5278, %v5568
      %v5601 = vmul.f32 %v5281, %v5569
      %v5602 = vmul.f32 %v5286, %v5570
      %v5603 = vmul.f32 %v5289, %v5571
      %v5604 = vmul.f32 %v5294, %v5572
      %v5605 = vmul.f32 %v5297, %v5573
      %v5606 = vmul.f32 %v5302, %v5574
      %v5607 = vmul.f32 %v5305, %v5575
      %v5608 = vmul.f32 %v5310, %v5576
      %v5609 = vmul.f32 %v5313, %v5577
      %v5610 = vmul.f32 %v5318, %v5578
      %v5611 = vmul.f32 %v5321, %v5579
      %v5612 = vmul.f32 %v5580, %v5580
      %v5613 = vmul.f32 %v5581, %v5581
      %v5614 = vmul.f32 %v5582, %v5582
      %v5615 = vmul.f32 %v5583, %v5583
      %v5616 = vmul.f32 %v5584, %v5584
      %v5617 = vmul.f32 %v5585, %v5585
      %v5618 = vmul.f32 %v5586, %v5586
      %v5619 = vmul.f32 %v5587, %v5587
      %v5620 = vmul.f32 %v5588, %v5588
      %v5621 = vmul.f32 %v5589, %v5589
      %v5622 = vmul.f32 %v5590, %v5590
      %v5623 = vmul.f32 %v5591, %v5591
      %v5624 = vmul.f32 %v5592, %v5592
      %v5625 = vmul.f32 %v5593, %v5593
      %v5626 = vmul.f32 %v5594, %v5594
      %v5627 = vmul.f32 %v5595, %v5595
      %v5628 = vmul.f32 %v5596, %v5596
      %v5629 = vmul.f32 %v5597, %v5597
      %v5630 = vmul.f32 %v5598, %v5598
      %v5631 = vmul.f32 %v5599, %v5599
      %v5632 = vmul.f32 %v5600, %v5600
      %v5633 = vmul.f32 %v5601, %v5601
      %v5634 = vmul.f32 %v5602, %v5602
      %v5635 = vmul.f32 %v5603, %v5603
      %v5636 = vmul.f32 %v5604, %v5604
      %v5637 = vmul.f32 %v5605, %v5605
      %v5638 = vmul.f32 %v5606, %v5606
      %v5639 = vmul.f32 %v5607, %v5607
      %v5640 = vmul.f32 %v5608, %v5608
      %v5641 = vmul.f32 %v5609, %v5609
      %v5642 = vmul.f32 %v5610, %v5610
      %v5643 = vmul.f32 %v5611, %v5611
      %vm5644 = vcmask 261120
      %v5645 = vsel %vm5644, %v5612, 0.0
      %v5646 = vsel %vm5644, %v5613, 0.0
      %v5647 = vadd.f32 %v5645, %v5646
      %v5648 = vsel %vm5644, %v5614, 0.0
      %v5649 = vadd.f32 %v5647, %v5648
      %v5650 = vsel %vm5644, %v5615, 0.0
      %v5651 = vadd.f32 %v5649, %v5650
      %v5652 = vsel %vm5644, %v5616, 0.0
      %v5653 = vadd.f32 %v5651, %v5652
      %v5654 = vsel %vm5644, %v5617, 0.0
      %v5655 = vadd.f32 %v5653, %v5654
      %v5656 = vsel %vm5644, %v5618, 0.0
      %v5657 = vadd.f32 %v5655, %v5656
      %v5658 = vsel %vm5644, %v5619, 0.0
      %v5659 = vadd.f32 %v5657, %v5658
      %v5660 = vsel %vm5644, %v5620, 0.0
      %v5661 = vadd.f32 %v5659, %v5660
      %v5662 = vsel %vm5644, %v5621, 0.0
      %v5663 = vadd.f32 %v5661, %v5662
      %v5664 = vsel %vm5644, %v5622, 0.0
      %v5665 = vadd.f32 %v5663, %v5664
      %v5666 = vsel %vm5644, %v5623, 0.0
      %v5667 = vadd.f32 %v5665, %v5666
      %v5668 = vsel %vm5644, %v5624, 0.0
      %v5669 = vadd.f32 %v5667, %v5668
      %v5670 = vsel %vm5644, %v5625, 0.0
      %v5671 = vadd.f32 %v5669, %v5670
      %v5672 = vsel %vm5644, %v5626, 0.0
      %v5673 = vadd.f32 %v5671, %v5672
      %v5674 = vsel %vm5644, %v5627, 0.0
      %v5675 = vadd.f32 %v5673, %v5674
      %v5676 = vsel %vm5644, %v5628, 0.0
      %v5677 = vadd.f32 %v5675, %v5676
      %v5678 = vsel %vm5644, %v5629, 0.0
      %v5679 = vadd.f32 %v5677, %v5678
      %v5680 = vsel %vm5644, %v5630, 0.0
      %v5681 = vadd.f32 %v5679, %v5680
      %v5682 = vsel %vm5644, %v5631, 0.0
      %v5683 = vadd.f32 %v5681, %v5682
      %v5684 = vsel %vm5644, %v5632, 0.0
      %v5685 = vadd.f32 %v5683, %v5684
      %v5686 = vsel %vm5644, %v5633, 0.0
      %v5687 = vadd.f32 %v5685, %v5686
      %v5688 = vsel %vm5644, %v5634, 0.0
      %v5689 = vadd.f32 %v5687, %v5688
      %v5690 = vsel %vm5644, %v5635, 0.0
      %v5691 = vadd.f32 %v5689, %v5690
      %v5692 = vsel %vm5644, %v5636, 0.0
      %v5693 = vadd.f32 %v5691, %v5692
      %v5694 = vsel %vm5644, %v5637, 0.0
      %v5695 = vadd.f32 %v5693, %v5694
      %v5696 = vsel %vm5644, %v5638, 0.0
      %v5697 = vadd.f32 %v5695, %v5696
      %v5698 = vsel %vm5644, %v5639, 0.0
      %v5699 = vadd.f32 %v5697, %v5698
      %v5700 = vsel %vm5644, %v5640, 0.0
      %v5701 = vadd.f32 %v5699, %v5700
      %v5702 = vsel %vm5644, %v5641, 0.0
      %v5703 = vadd.f32 %v5701, %v5702
      %v5704 = vsel %vm5644, %v5642, 0.0
      %v5705 = vadd.f32 %v5703, %v5704
      %v5706 = vsel %vm5644, %v5643, 0.0
      %v5707 = vadd.f32 %v5705, %v5706
      %v5708 = vrot.slane %v5707, 4
      %v5709 = vadd.f32 %v5707, %v5708
      %v5710 = vrot.slane %v5709, 2
      %v5711 = vadd.f32 %v5709, %v5710
      %v5712 = vrot.slane %v5711, 1
      %v5713 = vadd.f32 %v5711, %v5712
      %v5714 = vrsqrt.pop %v5713
      %v5715 = vmul.f32 %v5713, %v5714
      %vm5716 = vcmp.eq.f32.partialorder %v5713, inf
      %v5717 = vsel %vm5716, %v5713, %v5715
      %vm5718 = vcmp.eq.f32.partialorder %v5713, 0.0
      %v5719 = vand.u32 %v5713, 2147483648
      %v5720 = vsel %vm5718, %v5719, %v5717
      %v5721 = vsel %vm5644, %v5720, 0.0
      %5722 = vadd.xlane.f32.xlu0 %v5721
      %v5723 = vpop.xlane.xlu0 %5722
      %v5724 = vrcp.pop 32.0
      %v5725 = vmul.f32 %v5723, %v5724
      %v5726 = vadd.f32 %v5725, 1e-06
      %v5727 = vrcp.pop %v5726
      %v5728 = vmul.f32 %v5720, %v5727
      %v5729 = vld [vmem:[%s5] sm:$0x1]
      %v5730 = vmul.f32 %v5729, %v5728
      %v5731 = vadd.f32 %v5730, 1.0
      %v5733 = vlaneseq
      %v5734 = vshrl.u32 %v5733, 7
      %v5735 = vsub.s32 0, %v5734
      %v5736 = vrot.slane %v5731, %v5735
      %v5738 = vmul.f32 %v5580, %v5736
      %v5739 = vmul.f32 %v5581, %v5736
      %v5740 = vmul.f32 %v5582, %v5736
      %v5741 = vmul.f32 %v5583, %v5736
      %v5742 = vmul.f32 %v5584, %v5736
      %v5743 = vmul.f32 %v5585, %v5736
      %v5744 = vmul.f32 %v5586, %v5736
      %v5745 = vmul.f32 %v5587, %v5736
      %v5746 = vmul.f32 %v5588, %v5736
      %v5747 = vmul.f32 %v5589, %v5736
      %v5748 = vmul.f32 %v5590, %v5736
      %v5749 = vmul.f32 %v5591, %v5736
      %v5750 = vmul.f32 %v5592, %v5736
      %v5751 = vmul.f32 %v5593, %v5736
      %v5752 = vmul.f32 %v5594, %v5736
      %v5753 = vmul.f32 %v5595, %v5736
      %v5754 = vmul.f32 %v5596, %v5736
      %v5755 = vmul.f32 %v5597, %v5736
      %v5756 = vmul.f32 %v5598, %v5736
      %v5757 = vmul.f32 %v5599, %v5736
      %v5758 = vmul.f32 %v5600, %v5736
      %v5759 = vmul.f32 %v5601, %v5736
      %v5760 = vmul.f32 %v5602, %v5736
      %v5761 = vmul.f32 %v5603, %v5736
      %v5762 = vmul.f32 %v5604, %v5736
      %v5763 = vmul.f32 %v5605, %v5736
      %v5764 = vmul.f32 %v5606, %v5736
      %v5765 = vmul.f32 %v5607, %v5736
      %v5766 = vmul.f32 %v5608, %v5736
      %v5767 = vmul.f32 %v5609, %v5736
      %v5768 = vmul.f32 %v5610, %v5736
      %v5769 = vmul.f32 %v5611, %v5736
      %v5770 = vpack.c.bf16 %v5739, %v5738
      %v5771 = vpack.c.bf16 %v5741, %v5740
      %v5772 = vpack.c.bf16 %v5743, %v5742
      %v5773 = vpack.c.bf16 %v5745, %v5744
      %v5774 = vpack.c.bf16 %v5747, %v5746
      %v5775 = vpack.c.bf16 %v5749, %v5748
      %v5776 = vpack.c.bf16 %v5751, %v5750
      %v5777 = vpack.c.bf16 %v5753, %v5752
      %v5778 = vpack.c.bf16 %v5755, %v5754
      %v5779 = vpack.c.bf16 %v5757, %v5756
      %v5780 = vpack.c.bf16 %v5759, %v5758
      %v5781 = vpack.c.bf16 %v5761, %v5760
      %v5782 = vpack.c.bf16 %v5763, %v5762
      %v5783 = vpack.c.bf16 %v5765, %v5764
      %v5784 = vpack.c.bf16 %v5767, %v5766
      %v5785 = vpack.c.bf16 %v5769, %v5768
      %v5786 = vld [vmem:[%s6] sm:$0xf]
      %v5787 = vld [vmem:[%s6 + $0x4] sm:$0xf]
      %v5788 = vld [vmem:[%s6 + $0x8] sm:$0xf]
      %v5789 = vld [vmem:[%s6 + $0xc] sm:$0xf]
      %v5790 = vld [vmem:[%s7] sm:$0x1]
      %v5792 = vlaneseq
      %v5793 = vshrl.u32 %v5792, 7
      %v5794 = vsub.s32 0, %v5793
      %v5795 = vrot.slane %v5790, %v5794
      %v5801 = vunpack.c.l.b16 %v5786
      %v5802 = vunpack.c.l.b16 %v5787
      %v5803 = vunpack.c.l.b16 %v5788
      %v5804 = vunpack.c.l.b16 %v5789
      %v5805 = vpack.c.b16 %v5802, %v5801
      %v5806 = vpack.c.b16 %v5804, %v5803
      %v5810 = vsel %vm5644, %v5770, 0
      %v5813 = vsel %vm5644, %v5771, 0
      %v5816 = vsel %vm5644, %v5772, 0
      %v5819 = vsel %vm5644, %v5773, 0
      %v5822 = vsel %vm5644, %v5774, 0
      %v5825 = vsel %vm5644, %v5775, 0
      %v5828 = vsel %vm5644, %v5776, 0
      %v5831 = vsel %vm5644, %v5777, 0
      %v5834 = vsel %vm5644, %v5778, 0
      %v5837 = vsel %vm5644, %v5779, 0
      %v5840 = vsel %vm5644, %v5780, 0
      %v5843 = vsel %vm5644, %v5781, 0
      %v5846 = vsel %vm5644, %v5782, 0
      %v5849 = vsel %vm5644, %v5783, 0
      %v5852 = vsel %vm5644, %v5784, 0
      %v5855 = vsel %vm5644, %v5785, 0
      %5857 = vmatprep.subr.bf16.mxu0 0
      %5858 = vmatpush1.bf16.msra.mxu0 %v5805
      %5859 = vmatprep.subr.bf16.mxu0 0
      %5860 = vmatpush1.bf16.msra.mxu0 %v5806
      %5861 = vmatprep.subr.bf16.mxu0 0
      %5862 = vmatpush1.bf16.msra.mxu0 0
      %5863 = vmatprep.subr.bf16.mxu0 0
      %5864 = vmatpush1.bf16.msra.mxu0 0
      %5865 = vmatprep.subr.bf16.mxu0 0
      %5866 = vmatpush1.bf16.msra.mxu0 0
      %5867 = vmatprep.subr.bf16.mxu0 0
      %5868 = vmatpush1.bf16.msra.mxu0 0
      %5869 = vmatprep.subr.bf16.mxu0 0
      %5870 = vmatpush1.bf16.msra.mxu0 0
      %5871 = vmatprep.subr.bf16.mxu0 0
      %5872 = vmatpush1.bf16.msra.mxu0 0
      %5873 = vmatprep.subr.bf16.mxu0 0
      %5874 = vmatpush1.bf16.msra.mxu0 0
      %5875 = vmatprep.subr.bf16.mxu0 0
      %5876 = vmatpush1.bf16.msra.mxu0 0
      %5877 = vmatprep.subr.bf16.mxu0 0
      %5878 = vmatpush1.bf16.msra.mxu0 0
      %5879 = vmatprep.subr.bf16.mxu0 0
      %5880 = vmatpush1.bf16.msra.mxu0 0
      %5881 = vmatprep.subr.bf16.mxu0 0
      %5882 = vmatpush1.bf16.msra.mxu0 0
      %5883 = vmatprep.subr.bf16.mxu0 0
      %5884 = vmatpush1.bf16.msra.mxu0 0
      %5885 = vmatprep.subr.bf16.mxu0 0
      %5886 = vmatpush1.bf16.msra.mxu0 0
      %5887 = vmatprep.subr.bf16.mxu0 0
      %5888 = vmatpush1.bf16.msra.mxu0 0
      %5889 = vmatprep.mubr.bf16.mxu0 0
      %5890 = vmatmul.mubr.bf16.gmra.mrb[0].mxu0 %v5810
      %v5891 = vpop.f32.mrb[0].mxu0
      %v5892 = vadd.f32 %v5795, %v5891
      %v5893 = vpop.f32.mrb[0].mxu0
      %v5894 = vpop.f32.mrb[0].mxu0
      %v5895 = vadd.f32 %v5795, %v5894
      %v5896 = vpop.f32.mrb[0].mxu0
      %5897 = vmatprep.mubr.bf16.mxu0 0
      %5898 = vmatmul.mubr.bf16.gmra.mrb[0].mxu0 %v5813
      %v5899 = vpop.f32.mrb[0].mxu0
      %v5900 = vadd.f32 %v5795, %v5899
      %v5901 = vpop.f32.mrb[0].mxu0
      %v5902 = vpop.f32.mrb[0].mxu0
      %v5903 = vadd.f32 %v5795, %v5902
      %v5904 = vpop.f32.mrb[0].mxu0
      %5905 = vmatprep.mubr.bf16.mxu0 0
      %5906 = vmatmul.mubr.bf16.gmra.mrb[0].mxu0 %v5816
      %v5907 = vpop.f32.mrb[0].mxu0
      %v5908 = vadd.f32 %v5795, %v5907
      %v5909 = vpop.f32.mrb[0].mxu0
      %v5910 = vpop.f32.mrb[0].mxu0
      %v5911 = vadd.f32 %v5795, %v5910
      %v5912 = vpop.f32.mrb[0].mxu0
      %5913 = vmatprep.mubr.bf16.mxu0 0
      %5914 = vmatmul.mubr.bf16.gmra.mrb[0].mxu0 %v5819
      %v5915 = vpop.f32.mrb[0].mxu0
      %v5916 = vadd.f32 %v5795, %v5915
      %v5917 = vpop.f32.mrb[0].mxu0
      %v5918 = vpop.f32.mrb[0].mxu0
      %v5919 = vadd.f32 %v5795, %v5918
      %v5920 = vpop.f32.mrb[0].mxu0
      %5921 = vmatprep.mubr.bf16.mxu0 0
      %5922 = vmatmul.mubr.bf16.gmra.mrb[0].mxu0 %v5822
      %v5923 = vpop.f32.mrb[0].mxu0
      %v5924 = vadd.f32 %v5795, %v5923
      %v5925 = vpop.f32.mrb[0].mxu0
      %v5926 = vpop.f32.mrb[0].mxu0
      %v5927 = vadd.f32 %v5795, %v5926
      %v5928 = vpop.f32.mrb[0].mxu0
      %5929 = vmatprep.mubr.bf16.mxu0 0
      %5930 = vmatmul.mubr.bf16.gmra.mrb[0].mxu0 %v5825
      %v5931 = vpop.f32.mrb[0].mxu0
      %v5932 = vadd.f32 %v5795, %v5931
      %v5933 = vpop.f32.mrb[0].mxu0
      %v5934 = vpop.f32.mrb[0].mxu0
      %v5935 = vadd.f32 %v5795, %v5934
      %v5936 = vpop.f32.mrb[0].mxu0
      %5937 = vmatprep.mubr.bf16.mxu0 0
      %5938 = vmatmul.mubr.bf16.gmra.mrb[0].mxu0 %v5828
      %v5939 = vpop.f32.mrb[0].mxu0
      %v5940 = vadd.f32 %v5795, %v5939
      %v5941 = vpop.f32.mrb[0].mxu0
      %v5942 = vpop.f32.mrb[0].mxu0
      %v5943 = vadd.f32 %v5795, %v5942
      %v5944 = vpop.f32.mrb[0].mxu0
      %5945 = vmatprep.mubr.bf16.mxu0 0
      %5946 = vmatmul.mubr.bf16.gmra.mrb[0].mxu0 %v5831
      %v5947 = vpop.f32.mrb[0].mxu0
      %v5948 = vadd.f32 %v5795, %v5947
      %v5949 = vpop.f32.mrb[0].mxu0
      %v5950 = vpop.f32.mrb[0].mxu0
      %v5951 = vadd.f32 %v5795, %v5950
      %v5952 = vpop.f32.mrb[0].mxu0
      %5953 = vmatprep.mubr.bf16.mxu0 0
      %5954 = vmatmul.mubr.bf16.gmra.mrb[0].mxu0 %v5834
      %v5955 = vpop.f32.mrb[0].mxu0
      %v5956 = vadd.f32 %v5795, %v5955
      %v5957 = vpop.f32.mrb[0].mxu0
      %v5958 = vpop.f32.mrb[0].mxu0
      %v5959 = vadd.f32 %v5795, %v5958
      %v5960 = vpop.f32.mrb[0].mxu0
      %5961 = vmatprep.mubr.bf16.mxu0 0
      %5962 = vmatmul.mubr.bf16.gmra.mrb[0].mxu0 %v5837
      %v5963 = vpop.f32.mrb[0].mxu0
      %v5964 = vadd.f32 %v5795, %v5963
      %v5965 = vpop.f32.mrb[0].mxu0
      %v5966 = vpop.f32.mrb[0].mxu0
      %v5967 = vadd.f32 %v5795, %v5966
      %v5968 = vpop.f32.mrb[0].mxu0
      %5969 = vmatprep.mubr.bf16.mxu0 0
      %5970 = vmatmul.mubr.bf16.gmra.mrb[0].mxu0 %v5840
      %v5971 = vpop.f32.mrb[0].mxu0
      %v5972 = vadd.f32 %v5795, %v5971
      %v5973 = vpop.f32.mrb[0].mxu0
      %v5974 = vpop.f32.mrb[0].mxu0
      %v5975 = vadd.f32 %v5795, %v5974
      %v5976 = vpop.f32.mrb[0].mxu0
      %5977 = vmatprep.mubr.bf16.mxu0 0
      %5978 = vmatmul.mubr.bf16.gmra.mrb[0].mxu0 %v5843
      %v5979 = vpop.f32.mrb[0].mxu0
      %v5980 = vadd.f32 %v5795, %v5979
      %v5981 = vpop.f32.mrb[0].mxu0
      %v5982 = vpop.f32.mrb[0].mxu0
      %v5983 = vadd.f32 %v5795, %v5982
      %v5984 = vpop.f32.mrb[0].mxu0
      %5985 = vmatprep.mubr.bf16.mxu0 0
      %5986 = vmatmul.mubr.bf16.gmra.mrb[0].mxu0 %v5846
      %v5987 = vpop.f32.mrb[0].mxu0
      %v5988 = vadd.f32 %v5795, %v5987
      %v5989 = vpop.f32.mrb[0].mxu0
      %v5990 = vpop.f32.mrb[0].mxu0
      %v5991 = vadd.f32 %v5795, %v5990
      %v5992 = vpop.f32.mrb[0].mxu0
      %5993 = vmatprep.mubr.bf16.mxu0 0
      %5994 = vmatmul.mubr.bf16.gmra.mrb[0].mxu0 %v5849
      %v5995 = vpop.f32.mrb[0].mxu0
      %v5996 = vadd.f32 %v5795, %v5995
      %v5997 = vpop.f32.mrb[0].mxu0
      %v5998 = vpop.f32.mrb[0].mxu0
      %v5999 = vadd.f32 %v5795, %v5998
      %v6000 = vpop.f32.mrb[0].mxu0
      %6001 = vmatprep.mubr.bf16.mxu0 0
      %6002 = vmatmul.mubr.bf16.gmra.mrb[0].mxu0 %v5852
      %v6003 = vpop.f32.mrb[0].mxu0
      %v6004 = vadd.f32 %v5795, %v6003
      %v6005 = vpop.f32.mrb[0].mxu0
      %v6006 = vpop.f32.mrb[0].mxu0
      %v6007 = vadd.f32 %v5795, %v6006
      %v6008 = vpop.f32.mrb[0].mxu0
      %6009 = vmatprep.mubr.bf16.mxu0 0
      %6010 = vmatmul.mubr.bf16.gmra.mrb[0].mxu0 %v5855
      %v6011 = vpop.f32.mrb[0].mxu0
      %v6012 = vadd.f32 %v5795, %v6011
      %v6013 = vpop.f32.mrb[0].mxu0
      %v6014 = vpop.f32.mrb[0].mxu0
      %v6015 = vadd.f32 %v5795, %v6014
      %v6016 = vpop.f32.mrb[0].mxu0
      %6017 = vdwg.mxu0
      %v6018 = vld [vmem:[%s300] sm:$0xff]
      %v6019 = vld [vmem:[%s300 + $0x8] sm:$0xff]
      %v6020 = vld [vmem:[%s300 + $0x10] sm:$0xff]
      %v6021 = vld [vmem:[%s300 + $0x18] sm:$0xff]
      %v6022 = vld [vmem:[%s300 + $0x20] sm:$0xff]
      %v6023 = vld [vmem:[%s300 + $0x28] sm:$0xff]
      %v6024 = vld [vmem:[%s300 + $0x30] sm:$0xff]
      %v6025 = vld [vmem:[%s300 + $0x38] sm:$0xff]
      %v6026 = vld [vmem:[%s300 + $0x40] sm:$0xff]
      %v6027 = vld [vmem:[%s300 + $0x48] sm:$0xff]
      %v6028 = vld [vmem:[%s300 + $0x50] sm:$0xff]
      %v6029 = vld [vmem:[%s300 + $0x58] sm:$0xff]
      %v6030 = vld [vmem:[%s300 + $0x60] sm:$0xff]
      %v6031 = vld [vmem:[%s300 + $0x68] sm:$0xff]
      %v6032 = vld [vmem:[%s300 + $0x70] sm:$0xff]
      %v6033 = vld [vmem:[%s300 + $0x78] sm:$0xff]
      %v6034 = vld [vmem:[%s300 + $0x80] sm:$0xff]
      %v6035 = vld [vmem:[%s300 + $0x88] sm:$0xff]
      %v6036 = vld [vmem:[%s300 + $0x90] sm:$0xff]
      %v6037 = vld [vmem:[%s300 + $0x98] sm:$0xff]
      %v6038 = vld [vmem:[%s300 + $0xa0] sm:$0xff]
      %v6039 = vld [vmem:[%s300 + $0xa8] sm:$0xff]
      %v6040 = vld [vmem:[%s300 + $0xb0] sm:$0xff]
      %v6041 = vld [vmem:[%s300 + $0xb8] sm:$0xff]
      %v6042 = vld [vmem:[%s300 + $0xc0] sm:$0xff]
      %v6043 = vld [vmem:[%s300 + $0xc8] sm:$0xff]
      %v6044 = vld [vmem:[%s300 + $0xd0] sm:$0xff]
      %v6045 = vld [vmem:[%s300 + $0xd8] sm:$0xff]
      %v6046 = vld [vmem:[%s300 + $0xe0] sm:$0xff]
      %v6047 = vld [vmem:[%s300 + $0xe8] sm:$0xff]
      %v6048 = vld [vmem:[%s300 + $0xf0] sm:$0xff]
      %v6049 = vld [vmem:[%s300 + $0xf8] sm:$0xff]
      %v6050 = vadd.f32 %v6018, %v5892
      %v6051 = vadd.f32 %v6019, %v5895
      %v6052 = vadd.f32 %v6020, %v5900
      %v6053 = vadd.f32 %v6021, %v5903
      %v6054 = vadd.f32 %v6022, %v5908
      %v6055 = vadd.f32 %v6023, %v5911
      %v6056 = vadd.f32 %v6024, %v5916
      %v6057 = vadd.f32 %v6025, %v5919
      %v6058 = vadd.f32 %v6026, %v5924
      %v6059 = vadd.f32 %v6027, %v5927
      %v6060 = vadd.f32 %v6028, %v5932
      %v6061 = vadd.f32 %v6029, %v5935
      %v6062 = vadd.f32 %v6030, %v5940
      %v6063 = vadd.f32 %v6031, %v5943
      %v6064 = vadd.f32 %v6032, %v5948
      %v6065 = vadd.f32 %v6033, %v5951
      %v6066 = vadd.f32 %v6034, %v5956
      %v6067 = vadd.f32 %v6035, %v5959
      %v6068 = vadd.f32 %v6036, %v5964
      %v6069 = vadd.f32 %v6037, %v5967
      %v6070 = vadd.f32 %v6038, %v5972
      %v6071 = vadd.f32 %v6039, %v5975
      %v6072 = vadd.f32 %v6040, %v5980
      %v6073 = vadd.f32 %v6041, %v5983
      %v6074 = vadd.f32 %v6042, %v5988
      %v6075 = vadd.f32 %v6043, %v5991
      %v6076 = vadd.f32 %v6044, %v5996
      %v6077 = vadd.f32 %v6045, %v5999
      %v6078 = vadd.f32 %v6046, %v6004
      %v6079 = vadd.f32 %v6047, %v6007
      %v6080 = vadd.f32 %v6048, %v6012
      %v6081 = vadd.f32 %v6049, %v6015
      %6082 = vst.msk [vmem:[%s305] sm:$0xff] %vm307, %v6050
      %6083 = vst.msk [vmem:[%s305 + $0x8] sm:$0xff] %vm307, %v6051
      %6084 = vst.msk [vmem:[%s305 + $0x10] sm:$0xff] %vm307, %v6052
      %6085 = vst.msk [vmem:[%s305 + $0x18] sm:$0xff] %vm307, %v6053
      %6086 = vst.msk [vmem:[%s305 + $0x20] sm:$0xff] %vm307, %v6054
      %6087 = vst.msk [vmem:[%s305 + $0x28] sm:$0xff] %vm307, %v6055
      %6088 = vst.msk [vmem:[%s305 + $0x30] sm:$0xff] %vm307, %v6056
      %6089 = vst.msk [vmem:[%s305 + $0x38] sm:$0xff] %vm307, %v6057
      %6090 = vst.msk [vmem:[%s305 + $0x40] sm:$0xff] %vm307, %v6058
      %6091 = vst.msk [vmem:[%s305 + $0x48] sm:$0xff] %vm307, %v6059
      %6092 = vst.msk [vmem:[%s305 + $0x50] sm:$0xff] %vm307, %v6060
      %6093 = vst.msk [vmem:[%s305 + $0x58] sm:$0xff] %vm307, %v6061
      %6094 = vst.msk [vmem:[%s305 + $0x60] sm:$0xff] %vm307, %v6062
      %6095 = vst.msk [vmem:[%s305 + $0x68] sm:$0xff] %vm307, %v6063
      %6096 = vst.msk [vmem:[%s305 + $0x70] sm:$0xff] %vm307, %v6064
      %6097 = vst.msk [vmem:[%s305 + $0x78] sm:$0xff] %vm307, %v6065
      %6098 = vst.msk [vmem:[%s305 + $0x80] sm:$0xff] %vm307, %v6066
      %6099 = vst.msk [vmem:[%s305 + $0x88] sm:$0xff] %vm307, %v6067
      %6100 = vst.msk [vmem:[%s305 + $0x90] sm:$0xff] %vm307, %v6068
      %6101 = vst.msk [vmem:[%s305 + $0x98] sm:$0xff] %vm307, %v6069
      %6102 = vst.msk [vmem:[%s305 + $0xa0] sm:$0xff] %vm307, %v6070
      %6103 = vst.msk [vmem:[%s305 + $0xa8] sm:$0xff] %vm307, %v6071
      %6104 = vst.msk [vmem:[%s305 + $0xb0] sm:$0xff] %vm307, %v6072
      %6105 = vst.msk [vmem:[%s305 + $0xb8] sm:$0xff] %vm307, %v6073
      %6106 = vst.msk [vmem:[%s305 + $0xc0] sm:$0xff] %vm307, %v6074
      %6107 = vst.msk [vmem:[%s305 + $0xc8] sm:$0xff] %vm307, %v6075
      %6108 = vst.msk [vmem:[%s305 + $0xd0] sm:$0xff] %vm307, %v6076
      %6109 = vst.msk [vmem:[%s305 + $0xd8] sm:$0xff] %vm307, %v6077
      %6110 = vst.msk [vmem:[%s305 + $0xe0] sm:$0xff] %vm307, %v6078
      %6111 = vst.msk [vmem:[%s305 + $0xe8] sm:$0xff] %vm307, %v6079
      %6112 = vst.msk [vmem:[%s305 + $0xf0] sm:$0xff] %vm307, %v6080
      %6113 = vst.msk [vmem:[%s305 + $0xf8] sm:$0xff] %vm307, %v6081
      %p6114 = scmp.lt.s32.totalorder %s19, 1
      %s6115 = scalar_select %p6114, %s19, 1
      %s6116 = smul.addr %s6115, 32
      %s6117 = smul.addr %s6116, 8
      %s6118 = scalar_lea.vmem %s8, %s6117
      // Predicated region
      $region53: #{tpu_custom_call.1} parent=51 // pred_check
        %p6119 = pneg %p210
      $region54: #{tpu_custom_call.1} parent=51 // pred_check_branch
        %6121 = sbr.rel (%p6119) target = $region56
      $region55: #{tpu_custom_call.1} parent=51 // pred_region
        _
      $region56: #{tpu_custom_call.1} parent=51 // pred_fallthru
        _
    $region52: #{tpu_custom_call.1} parent=5 // pred_fallthru
      _
    %p6122 = scmp.le.s32.totalorder 2, %s14
    // Predicated region
    $region57: #{tpu_custom_call.1} parent=5 // pred_check
      %p6123 = pneg %p6122
    $region58: #{tpu_custom_call.1} parent=5 // pred_check_branch
      %6125 = sbr.rel (%p6123) target = $region60
    $region59: #{tpu_custom_call.1} parent=5 // pred_region
      %s6126 = ssub.s32 %s14, 2
      // Predicated region
      $region61: #{tpu_custom_call.1} parent=59 // pred_check
        %p6127 = pneg %p216
      $region62: #{tpu_custom_call.1} parent=59 // pred_check_branch
        %6129 = sbr.rel (%p6127) target = $region64
      $region63: #{tpu_custom_call.1} parent=59 // pred_region
        %p6130 = scmp.lt.s32.totalorder %s20, 1
        %s6131 = scalar_select %p6130, %s20, 1
        %s6132 = smul.addr %s6131, 32
        %s6133 = smul.addr %s6132, 8
        %s6134 = scalar_lea.vmem %s8, %s6133
      $region64: #{tpu_custom_call.1} parent=59 // pred_fallthru
        _
    $region60: #{tpu_custom_call.1} parent=5 // pred_fallthru
      _
  $region6: #{tpu_custom_call.1} parent=0 // loop_footer
    %s18 = sadd.s32 1, %s14
  $region7: #{tpu_custom_call.1} parent=0 // loop_footer_branch
    %13 = sbr.rel target = $region3
  $region8: #{tpu_custom_call.1} parent=0 // loop_exit
    _

</llo_original>
